<compile_context>
chip_gen: v6e
topology: v6e:2x2x1
jax: 0.10.0
libtpu: 0.0.40
codegen_flags: <defaults>
</compile_context>

<pallas_src>
from functools import partial

import jax
import jax.numpy as jnp
from jax.experimental import pallas as pl
from jax.experimental.pallas import tpu as pltpu


def _pdhg_kernel(a_nmk_ref, a_mnk_ref, b_ref, x_ref, *, n_iters, power_iters):
    """Solve min 0.5*||A x - b||_1 s.t. x >= 0 for K batch columns (on lanes).

    Primal-dual hybrid gradient (Chambolle-Pock):
        y    <- clip(y + sigma * (A @ xbar - b), -0.5, 0.5)
        x    <- max(x - tau * (A^T @ y), 0)
        xbar <- 2*x_new - x_old
    with tau = sigma = 0.9 / ||A||_2 per batch column (power iteration).
    """
    n, m, K = a_nmk_ref.shape
    f32 = jnp.float32
    b = b_ref[...].astype(f32)                                  # (m, K)

    def matvec(x):
        # A @ x : (n, K) -> (m, K).  Accumulate over the leading axis of the
        # (n, m, K) layout: pure VALU multiply+add per n-slice.
        acc = a_nmk_ref[0].astype(f32) * x[0:1, :]
        for i in range(1, n):
            acc = acc + a_nmk_ref[i].astype(f32) * x[i:i + 1, :]
        return acc

    def rmatvec(y):
        # A^T @ y : (m, K) -> (n, K).  Accumulate over the leading axis of the
        # (m, n, K) layout: pure VALU multiply+add per m-slice.
        acc = a_mnk_ref[0].astype(f32) * y[0:1, :]
        for i in range(1, m):
            acc = acc + a_mnk_ref[i].astype(f32) * y[i:i + 1, :]
        return acc

    # --- Step size: per-column ||A||_2 via power iteration on A^T A. -------
    v0 = jnp.ones((n, K), f32)

    def power_body(_, v):
        w = rmatvec(matvec(v))
        nrm2 = jnp.sum(w * w, axis=0, keepdims=True)            # (1, K)
        return w * jax.lax.rsqrt(nrm2 + 1e-30)

    v = jax.lax.fori_loop(0, power_iters, power_body, v0)
    w = rmatvec(matvec(v))
    vtv = jnp.sum(v * v, axis=0, keepdims=True)                 # ~1 (0 if padded)
    sig_sq = jnp.sum(v * w, axis=0, keepdims=True) / jnp.maximum(vtv, 1e-30)
    # tau = sigma = 0.9 / ||A||_2; explicitly zero for all-zero padded columns.
    step = jnp.where(sig_sq > 1e-20,
                     0.9 * jax.lax.rsqrt(jnp.maximum(sig_sq, 1e-30)),
                     0.0)                                        # (1, K)

    # --- PDHG iterations (serially dependent; no manual unroll). -----------
    x0 = jnp.zeros((n, K), f32)
    y0 = jnp.zeros((m, K), f32)

    def body(_, carry):
        x, xbar, y = carry
        # Dual ascent + projection onto the l_inf ball of radius 0.5.
        y = jnp.clip(y + step * (matvec(xbar) - b), -0.5, 0.5)
        # Primal descent + projection onto the nonnegative orthant.
        x_new = jnp.maximum(x - step * rmatvec(y), 0.0)
        return x_new, 2.0 * x_new - x, y

    x, _, _ = jax.lax.fori_loop(0, n_iters, body, (x0, x0, y0))
    x_ref[...] = x.astype(x_ref.dtype)                           # (n, K) dense store


def cvxpylayer_forward(A, b, *, n_iters=2000, block_k=512, power_iters=10):
    """Batched forward pass of the CvxpyLayer for the example problem.

    Args:
      A: (B, m, n) parameter tensor.
      b: (B, m)    parameter tensor.
    Returns:
      Tuple with one entry per CVXPY variable: (x,) where x has shape (B, n).
    """
    B, m, n = A.shape
    assert b.shape == (B, m)
    out_dtype = A.dtype

    # Batch columns per grid step: a multiple of 128 (full lane groups), at
    # most block_k, and small enough to keep >= 2 grid steps whenever the
    # batch spans >= 2 lane groups (v7x megacore sharding of the batch axis).
    LANE = 128
    groups = pl.cdiv(B, LANE)
    groups_per_block = max(1, block_k // LANE)
    if groups >= 2:
        groups_per_block = min(groups_per_block, max(1, groups // 2))
    K = LANE * groups_per_block
    n_blocks = pl.cdiv(B, K)
    B_pad = n_blocks * K

    if B_pad != B:
        A = jnp.concatenate([A, jnp.zeros((B_pad - B, m, n), A.dtype)], axis=0)
        b = jnp.concatenate([b, jnp.zeros((B_pad - B, m), b.dtype)], axis=0)

    # Batch on the lane axis; both A layouts so both matvecs accumulate over
    # the leading (vreg-major) axis inside the kernel.
    A_nmk = jnp.transpose(A, (2, 1, 0))   # (n, m, B_pad)  -> used for A @ x
    A_mnk = jnp.transpose(A, (1, 2, 0))   # (m, n, B_pad)  -> used for A^T @ y
    b_t = jnp.transpose(b, (1, 0))        # (m, B_pad)

    kernel = partial(_pdhg_kernel, n_iters=n_iters, power_iters=power_iters)
    total_iters = n_iters + power_iters + 1
    cost = pl.CostEstimate(
        flops=int(4 * m * n * B_pad * total_iters),
        transcendentals=int(B_pad * (power_iters + 1)),
        bytes_accessed=int(2 * A.size * A.dtype.itemsize
                           + b_t.size * b_t.dtype.itemsize
                           + n * B_pad * jnp.dtype(out_dtype).itemsize),
    )

    x_t = pl.pallas_call(
        kernel,
        out_shape=jax.ShapeDtypeStruct((n, B_pad), out_dtype),
        grid_spec=pltpu.PrefetchScalarGridSpec(
            num_scalar_prefetch=0,
            grid=(n_blocks,),
            in_specs=[
                pl.BlockSpec((n, m, K), lambda i: (0, 0, i)),
                pl.BlockSpec((m, n, K), lambda i: (0, 0, i)),
                pl.BlockSpec((m, K), lambda i: (0, i)),
            ],
            out_specs=pl.BlockSpec((n, K), lambda i: (0, i)),
        ),
        compiler_params=pltpu.CompilerParams(
            dimension_semantics=("parallel",)),      # independent batch blocks
        cost_estimate=cost,
    )(A_nmk, A_mnk, b_t)

    x = jnp.transpose(x_t, (1, 0))[:B]               # (B, n)
    return (x,)


class CvxpyLayerPallas:
    """Minimal stand-in for CvxpyLayer restricted to the docstring problem:
       min 0.5*||A x - b||_1  s.t.  x >= 0,  parameters=[A, b], variables=[x]."""

    def __init__(self, m, n, n_iters=2000, block_k=512, power_iters=10):
        self.m = m
        self.n = n
        self.n_iters = n_iters
        self.block_k = block_k
        self.power_iters = power_iters

    def __call__(self, A, b):
        return cvxpylayer_forward(A, b, n_iters=self.n_iters,
                                  block_k=self.block_k,
                                  power_iters=self.power_iters)


if __name__ == "__main__":
    # Small deterministic example: batch=2, m=32 rows, n=16 variables.
    key = jax.random.PRNGKey(0)
    kA, kb = jax.random.split(key)
    B, m, n = 2, 32, 16
    A = jax.random.normal(kA, (B, m, n), dtype=jnp.float32)
    b = jax.random.normal(kb, (B, m), dtype=jnp.float32)

    layer = CvxpyLayerPallas(m, n, n_iters=2000)
    (x,) = layer(A, b)
    x = jax.block_until_ready(x)

    # Sanity checks: shape, finiteness, feasibility (x >= 0), and the solution
    # does at least as well as the feasible point x = 0.
    assert x.shape == (B, n)
    assert bool(jnp.all(jnp.isfinite(x)))
    assert bool(jnp.all(x >= -1e-5))
    obj = 0.5 * jnp.sum(jnp.abs(jnp.einsum("bmn,bn->bm", A, x) - b), axis=-1)
    obj0 = 0.5 * jnp.sum(jnp.abs(b), axis=-1)
    assert bool(jnp.all(obj <= obj0 + 1e-2))

    print("KERNEL_OK")
</pallas_src>

<mosaic_0001>
module attributes {stable_mosaic.version = 11 : i64} {
  func.func @_pdhg_kernel(%arg0: i32, %arg1: memref<16x32x512xf32, #tpu.memory_space<vmem>>, %arg2: memref<32x16x512xf32, #tpu.memory_space<vmem>>, %arg3: memref<32x512xf32, #tpu.memory_space<vmem>>, %arg4: memref<16x512xf32, #tpu.memory_space<vmem>>) attributes {dimension_semantics = [#tpu.dimension_semantics<parallel>], iteration_bounds = array<i64: 1>, scalar_prefetch = 0 : i64, scratch_operands = 0 : i64, tpu.core_type = #tpu.core_type<tc>, window_params = [{transform_indices = @transform_0, window_bounds = array<i64: 16, 32, 512>}, {transform_indices = @transform_1, window_bounds = array<i64: 32, 16, 512>}, {transform_indices = @transform_2, window_bounds = array<i64: 32, 512>}, {transform_indices = @transform_3, window_bounds = array<i64: 16, 512>}]} {
    %c0 = arith.constant 0 : index
    %c0_0 = arith.constant 0 : index
    %0 = vector.load %arg3[%c0, %c0_0] : memref<32x512xf32, #tpu.memory_space<vmem>>, vector<32x512xf32>
    %cst = arith.constant 1.000000e+00 : f32
    %1 = vector.broadcast %cst : f32 to vector<16x512xf32>
    %c0_i32 = arith.constant 0 : i32
    %c10_i32 = arith.constant 10 : i32
    %2 = arith.addi %c0_i32, %c10_i32 : i32
    %c1_i32 = arith.constant 1 : i32
    %3 = scf.for %arg5 = %c0_i32 to %2 step %c1_i32 iter_args(%arg6 = %1) -> (vector<16x512xf32>)  : i32 {
      %c0_127 = arith.constant 0 : index
      %c0_128 = arith.constant 0 : index
      %c0_129 = arith.constant 0 : index
      %313 = vector.load %arg1[%c0_127, %c0_128, %c0_129] : memref<16x32x512xf32, #tpu.memory_space<vmem>>, vector<1x32x512xf32>
      %314 = vector.shape_cast %313 : vector<1x32x512xf32> to vector<32x512xf32>
      %315 = vector.extract_strided_slice %arg6 {offsets = [0, 0], sizes = [1, 512], strides = [1, 1]} : vector<16x512xf32> to vector<1x512xf32>
      %316 = vector.broadcast %315 : vector<1x512xf32> to vector<32x512xf32>
      %317 = arith.mulf %314, %316 : vector<32x512xf32>
      %c1_130 = arith.constant 1 : index
      %c0_131 = arith.constant 0 : index
      %c0_132 = arith.constant 0 : index
      %318 = vector.load %arg1[%c1_130, %c0_131, %c0_132] : memref<16x32x512xf32, #tpu.memory_space<vmem>>, vector<1x32x512xf32>
      %319 = vector.shape_cast %318 : vector<1x32x512xf32> to vector<32x512xf32>
      %320 = vector.extract_strided_slice %arg6 {offsets = [1, 0], sizes = [1, 512], strides = [1, 1]} : vector<16x512xf32> to vector<1x512xf32>
      %321 = vector.broadcast %320 : vector<1x512xf32> to vector<32x512xf32>
      %322 = arith.mulf %319, %321 : vector<32x512xf32>
      %323 = arith.addf %317, %322 : vector<32x512xf32>
      %c2_133 = arith.constant 2 : index
      %c0_134 = arith.constant 0 : index
      %c0_135 = arith.constant 0 : index
      %324 = vector.load %arg1[%c2_133, %c0_134, %c0_135] : memref<16x32x512xf32, #tpu.memory_space<vmem>>, vector<1x32x512xf32>
      %325 = vector.shape_cast %324 : vector<1x32x512xf32> to vector<32x512xf32>
      %326 = vector.extract_strided_slice %arg6 {offsets = [2, 0], sizes = [1, 512], strides = [1, 1]} : vector<16x512xf32> to vector<1x512xf32>
      %327 = vector.broadcast %326 : vector<1x512xf32> to vector<32x512xf32>
      %328 = arith.mulf %325, %327 : vector<32x512xf32>
      %329 = arith.addf %323, %328 : vector<32x512xf32>
      %c3_136 = arith.constant 3 : index
      %c0_137 = arith.constant 0 : index
      %c0_138 = arith.constant 0 : index
      %330 = vector.load %arg1[%c3_136, %c0_137, %c0_138] : memref<16x32x512xf32, #tpu.memory_space<vmem>>, vector<1x32x512xf32>
      %331 = vector.shape_cast %330 : vector<1x32x512xf32> to vector<32x512xf32>
      %332 = vector.extract_strided_slice %arg6 {offsets = [3, 0], sizes = [1, 512], strides = [1, 1]} : vector<16x512xf32> to vector<1x512xf32>
      %333 = vector.broadcast %332 : vector<1x512xf32> to vector<32x512xf32>
      %334 = arith.mulf %331, %333 : vector<32x512xf32>
      %335 = arith.addf %329, %334 : vector<32x512xf32>
      %c4_139 = arith.constant 4 : index
      %c0_140 = arith.constant 0 : index
      %c0_141 = arith.constant 0 : index
      %336 = vector.load %arg1[%c4_139, %c0_140, %c0_141] : memref<16x32x512xf32, #tpu.memory_space<vmem>>, vector<1x32x512xf32>
      %337 = vector.shape_cast %336 : vector<1x32x512xf32> to vector<32x512xf32>
      %338 = vector.extract_strided_slice %arg6 {offsets = [4, 0], sizes = [1, 512], strides = [1, 1]} : vector<16x512xf32> to vector<1x512xf32>
      %339 = vector.broadcast %338 : vector<1x512xf32> to vector<32x512xf32>
      %340 = arith.mulf %337, %339 : vector<32x512xf32>
      %341 = arith.addf %335, %340 : vector<32x512xf32>
      %c5_142 = arith.constant 5 : index
      %c0_143 = arith.constant 0 : index
      %c0_144 = arith.constant 0 : index
      %342 = vector.load %arg1[%c5_142, %c0_143, %c0_144] : memref<16x32x512xf32, #tpu.memory_space<vmem>>, vector<1x32x512xf32>
      %343 = vector.shape_cast %342 : vector<1x32x512xf32> to vector<32x512xf32>
      %344 = vector.extract_strided_slice %arg6 {offsets = [5, 0], sizes = [1, 512], strides = [1, 1]} : vector<16x512xf32> to vector<1x512xf32>
      %345 = vector.broadcast %344 : vector<1x512xf32> to vector<32x512xf32>
      %346 = arith.mulf %343, %345 : vector<32x512xf32>
      %347 = arith.addf %341, %346 : vector<32x512xf32>
      %c6_145 = arith.constant 6 : index
      %c0_146 = arith.constant 0 : index
      %c0_147 = arith.constant 0 : index
      %348 = vector.load %arg1[%c6_145, %c0_146, %c0_147] : memref<16x32x512xf32, #tpu.memory_space<vmem>>, vector<1x32x512xf32>
      %349 = vector.shape_cast %348 : vector<1x32x512xf32> to vector<32x512xf32>
      %350 = vector.extract_strided_slice %arg6 {offsets = [6, 0], sizes = [1, 512], strides = [1, 1]} : vector<16x512xf32> to vector<1x512xf32>
      %351 = vector.broadcast %350 : vector<1x512xf32> to vector<32x512xf32>
      %352 = arith.mulf %349, %351 : vector<32x512xf32>
      %353 = arith.addf %347, %352 : vector<32x512xf32>
      %c7_148 = arith.constant 7 : index
      %c0_149 = arith.constant 0 : index
      %c0_150 = arith.constant 0 : index
      %354 = vector.load %arg1[%c7_148, %c0_149, %c0_150] : memref<16x32x512xf32, #tpu.memory_space<vmem>>, vector<1x32x512xf32>
      %355 = vector.shape_cast %354 : vector<1x32x512xf32> to vector<32x512xf32>
      %356 = vector.extract_strided_slice %arg6 {offsets = [7, 0], sizes = [1, 512], strides = [1, 1]} : vector<16x512xf32> to vector<1x512xf32>
      %357 = vector.broadcast %356 : vector<1x512xf32> to vector<32x512xf32>
      %358 = arith.mulf %355, %357 : vector<32x512xf32>
      %359 = arith.addf %353, %358 : vector<32x512xf32>
      %c8_151 = arith.constant 8 : index
      %c0_152 = arith.constant 0 : index
      %c0_153 = arith.constant 0 : index
      %360 = vector.load %arg1[%c8_151, %c0_152, %c0_153] : memref<16x32x512xf32, #tpu.memory_space<vmem>>, vector<1x32x512xf32>
      %361 = vector.shape_cast %360 : vector<1x32x512xf32> to vector<32x512xf32>
      %362 = vector.extract_strided_slice %arg6 {offsets = [8, 0], sizes = [1, 512], strides = [1, 1]} : vector<16x512xf32> to vector<1x512xf32>
      %363 = vector.broadcast %362 : vector<1x512xf32> to vector<32x512xf32>
      %364 = arith.mulf %361, %363 : vector<32x512xf32>
      %365 = arith.addf %359, %364 : vector<32x512xf32>
      %c9_154 = arith.constant 9 : index
      %c0_155 = arith.constant 0 : index
      %c0_156 = arith.constant 0 : index
      %366 = vector.load %arg1[%c9_154, %c0_155, %c0_156] : memref<16x32x512xf32, #tpu.memory_space<vmem>>, vector<1x32x512xf32>
      %367 = vector.shape_cast %366 : vector<1x32x512xf32> to vector<32x512xf32>
      %368 = vector.extract_strided_slice %arg6 {offsets = [9, 0], sizes = [1, 512], strides = [1, 1]} : vector<16x512xf32> to vector<1x512xf32>
      %369 = vector.broadcast %368 : vector<1x512xf32> to vector<32x512xf32>
      %370 = arith.mulf %367, %369 : vector<32x512xf32>
      %371 = arith.addf %365, %370 : vector<32x512xf32>
      %c10_157 = arith.constant 10 : index
      %c0_158 = arith.constant 0 : index
      %c0_159 = arith.constant 0 : index
      %372 = vector.load %arg1[%c10_157, %c0_158, %c0_159] : memref<16x32x512xf32, #tpu.memory_space<vmem>>, vector<1x32x512xf32>
      %373 = vector.shape_cast %372 : vector<1x32x512xf32> to vector<32x512xf32>
      %374 = vector.extract_strided_slice %arg6 {offsets = [10, 0], sizes = [1, 512], strides = [1, 1]} : vector<16x512xf32> to vector<1x512xf32>
      %375 = vector.broadcast %374 : vector<1x512xf32> to vector<32x512xf32>
      %376 = arith.mulf %373, %375 : vector<32x512xf32>
      %377 = arith.addf %371, %376 : vector<32x512xf32>
      %c11_160 = arith.constant 11 : index
      %c0_161 = arith.constant 0 : index
      %c0_162 = arith.constant 0 : index
      %378 = vector.load %arg1[%c11_160, %c0_161, %c0_162] : memref<16x32x512xf32, #tpu.memory_space<vmem>>, vector<1x32x512xf32>
      %379 = vector.shape_cast %378 : vector<1x32x512xf32> to vector<32x512xf32>
      %380 = vector.extract_strided_slice %arg6 {offsets = [11, 0], sizes = [1, 512], strides = [1, 1]} : vector<16x512xf32> to vector<1x512xf32>
      %381 = vector.broadcast %380 : vector<1x512xf32> to vector<32x512xf32>
      %382 = arith.mulf %379, %381 : vector<32x512xf32>
      %383 = arith.addf %377, %382 : vector<32x512xf32>
      %c12_163 = arith.constant 12 : index
      %c0_164 = arith.constant 0 : index
      %c0_165 = arith.constant 0 : index
      %384 = vector.load %arg1[%c12_163, %c0_164, %c0_165] : memref<16x32x512xf32, #tpu.memory_space<vmem>>, vector<1x32x512xf32>
      %385 = vector.shape_cast %384 : vector<1x32x512xf32> to vector<32x512xf32>
      %386 = vector.extract_strided_slice %arg6 {offsets = [12, 0], sizes = [1, 512], strides = [1, 1]} : vector<16x512xf32> to vector<1x512xf32>
      %387 = vector.broadcast %386 : vector<1x512xf32> to vector<32x512xf32>
      %388 = arith.mulf %385, %387 : vector<32x512xf32>
      %389 = arith.addf %383, %388 : vector<32x512xf32>
      %c13_166 = arith.constant 13 : index
      %c0_167 = arith.constant 0 : index
      %c0_168 = arith.constant 0 : index
      %390 = vector.load %arg1[%c13_166, %c0_167, %c0_168] : memref<16x32x512xf32, #tpu.memory_space<vmem>>, vector<1x32x512xf32>
      %391 = vector.shape_cast %390 : vector<1x32x512xf32> to vector<32x512xf32>
      %392 = vector.extract_strided_slice %arg6 {offsets = [13, 0], sizes = [1, 512], strides = [1, 1]} : vector<16x512xf32> to vector<1x512xf32>
      %393 = vector.broadcast %392 : vector<1x512xf32> to vector<32x512xf32>
      %394 = arith.mulf %391, %393 : vector<32x512xf32>
      %395 = arith.addf %389, %394 : vector<32x512xf32>
      %c14_169 = arith.constant 14 : index
      %c0_170 = arith.constant 0 : index
      %c0_171 = arith.constant 0 : index
      %396 = vector.load %arg1[%c14_169, %c0_170, %c0_171] : memref<16x32x512xf32, #tpu.memory_space<vmem>>, vector<1x32x512xf32>
      %397 = vector.shape_cast %396 : vector<1x32x512xf32> to vector<32x512xf32>
      %398 = vector.extract_strided_slice %arg6 {offsets = [14, 0], sizes = [1, 512], strides = [1, 1]} : vector<16x512xf32> to vector<1x512xf32>
      %399 = vector.broadcast %398 : vector<1x512xf32> to vector<32x512xf32>
      %400 = arith.mulf %397, %399 : vector<32x512xf32>
      %401 = arith.addf %395, %400 : vector<32x512xf32>
      %c15_172 = arith.constant 15 : index
      %c0_173 = arith.constant 0 : index
      %c0_174 = arith.constant 0 : index
      %402 = vector.load %arg1[%c15_172, %c0_173, %c0_174] : memref<16x32x512xf32, #tpu.memory_space<vmem>>, vector<1x32x512xf32>
      %403 = vector.shape_cast %402 : vector<1x32x512xf32> to vector<32x512xf32>
      %404 = vector.extract_strided_slice %arg6 {offsets = [15, 0], sizes = [1, 512], strides = [1, 1]} : vector<16x512xf32> to vector<1x512xf32>
      %405 = vector.broadcast %404 : vector<1x512xf32> to vector<32x512xf32>
      %406 = arith.mulf %403, %405 : vector<32x512xf32>
      %407 = arith.addf %401, %406 : vector<32x512xf32>
      %c0_175 = arith.constant 0 : index
      %c0_176 = arith.constant 0 : index
      %c0_177 = arith.constant 0 : index
      %408 = vector.load %arg2[%c0_175, %c0_176, %c0_177] : memref<32x16x512xf32, #tpu.memory_space<vmem>>, vector<1x16x512xf32>
      %409 = vector.shape_cast %408 : vector<1x16x512xf32> to vector<16x512xf32>
      %410 = vector.extract_strided_slice %407 {offsets = [0, 0], sizes = [1, 512], strides = [1, 1]} : vector<32x512xf32> to vector<1x512xf32>
      %411 = vector.broadcast %410 : vector<1x512xf32> to vector<16x512xf32>
      %412 = arith.mulf %409, %411 : vector<16x512xf32>
      %c1_178 = arith.constant 1 : index
      %c0_179 = arith.constant 0 : index
      %c0_180 = arith.constant 0 : index
      %413 = vector.load %arg2[%c1_178, %c0_179, %c0_180] : memref<32x16x512xf32, #tpu.memory_space<vmem>>, vector<1x16x512xf32>
      %414 = vector.shape_cast %413 : vector<1x16x512xf32> to vector<16x512xf32>
      %415 = vector.extract_strided_slice %407 {offsets = [1, 0], sizes = [1, 512], strides = [1, 1]} : vector<32x512xf32> to vector<1x512xf32>
      %416 = vector.broadcast %415 : vector<1x512xf32> to vector<16x512xf32>
      %417 = arith.mulf %414, %416 : vector<16x512xf32>
      %418 = arith.addf %412, %417 : vector<16x512xf32>
      %c2_181 = arith.constant 2 : index
      %c0_182 = arith.constant 0 : index
      %c0_183 = arith.constant 0 : index
      %419 = vector.load %arg2[%c2_181, %c0_182, %c0_183] : memref<32x16x512xf32, #tpu.memory_space<vmem>>, vector<1x16x512xf32>
      %420 = vector.shape_cast %419 : vector<1x16x512xf32> to vector<16x512xf32>
      %421 = vector.extract_strided_slice %407 {offsets = [2, 0], sizes = [1, 512], strides = [1, 1]} : vector<32x512xf32> to vector<1x512xf32>
      %422 = vector.broadcast %421 : vector<1x512xf32> to vector<16x512xf32>
      %423 = arith.mulf %420, %422 : vector<16x512xf32>
      %424 = arith.addf %418, %423 : vector<16x512xf32>
      %c3_184 = arith.constant 3 : index
      %c0_185 = arith.constant 0 : index
      %c0_186 = arith.constant 0 : index
      %425 = vector.load %arg2[%c3_184, %c0_185, %c0_186] : memref<32x16x512xf32, #tpu.memory_space<vmem>>, vector<1x16x512xf32>
      %426 = vector.shape_cast %425 : vector<1x16x512xf32> to vector<16x512xf32>
      %427 = vector.extract_strided_slice %407 {offsets = [3, 0], sizes = [1, 512], strides = [1, 1]} : vector<32x512xf32> to vector<1x512xf32>
      %428 = vector.broadcast %427 : vector<1x512xf32> to vector<16x512xf32>
      %429 = arith.mulf %426, %428 : vector<16x512xf32>
      %430 = arith.addf %424, %429 : vector<16x512xf32>
      %c4_187 = arith.constant 4 : index
      %c0_188 = arith.constant 0 : index
      %c0_189 = arith.constant 0 : index
      %431 = vector.load %arg2[%c4_187, %c0_188, %c0_189] : memref<32x16x512xf32, #tpu.memory_space<vmem>>, vector<1x16x512xf32>
      %432 = vector.shape_cast %431 : vector<1x16x512xf32> to vector<16x512xf32>
      %433 = vector.extract_strided_slice %407 {offsets = [4, 0], sizes = [1, 512], strides = [1, 1]} : vector<32x512xf32> to vector<1x512xf32>
      %434 = vector.broadcast %433 : vector<1x512xf32> to vector<16x512xf32>
      %435 = arith.mulf %432, %434 : vector<16x512xf32>
      %436 = arith.addf %430, %435 : vector<16x512xf32>
      %c5_190 = arith.constant 5 : index
      %c0_191 = arith.constant 0 : index
      %c0_192 = arith.constant 0 : index
      %437 = vector.load %arg2[%c5_190, %c0_191, %c0_192] : memref<32x16x512xf32, #tpu.memory_space<vmem>>, vector<1x16x512xf32>
      %438 = vector.shape_cast %437 : vector<1x16x512xf32> to vector<16x512xf32>
      %439 = vector.extract_strided_slice %407 {offsets = [5, 0], sizes = [1, 512], strides = [1, 1]} : vector<32x512xf32> to vector<1x512xf32>
      %440 = vector.broadcast %439 : vector<1x512xf32> to vector<16x512xf32>
      %441 = arith.mulf %438, %440 : vector<16x512xf32>
      %442 = arith.addf %436, %441 : vector<16x512xf32>
      %c6_193 = arith.constant 6 : index
      %c0_194 = arith.constant 0 : index
      %c0_195 = arith.constant 0 : index
      %443 = vector.load %arg2[%c6_193, %c0_194, %c0_195] : memref<32x16x512xf32, #tpu.memory_space<vmem>>, vector<1x16x512xf32>
      %444 = vector.shape_cast %443 : vector<1x16x512xf32> to vector<16x512xf32>
      %445 = vector.extract_strided_slice %407 {offsets = [6, 0], sizes = [1, 512], strides = [1, 1]} : vector<32x512xf32> to vector<1x512xf32>
      %446 = vector.broadcast %445 : vector<1x512xf32> to vector<16x512xf32>
      %447 = arith.mulf %444, %446 : vector<16x512xf32>
      %448 = arith.addf %442, %447 : vector<16x512xf32>
      %c7_196 = arith.constant 7 : index
      %c0_197 = arith.constant 0 : index
      %c0_198 = arith.constant 0 : index
      %449 = vector.load %arg2[%c7_196, %c0_197, %c0_198] : memref<32x16x512xf32, #tpu.memory_space<vmem>>, vector<1x16x512xf32>
      %450 = vector.shape_cast %449 : vector<1x16x512xf32> to vector<16x512xf32>
      %451 = vector.extract_strided_slice %407 {offsets = [7, 0], sizes = [1, 512], strides = [1, 1]} : vector<32x512xf32> to vector<1x512xf32>
      %452 = vector.broadcast %451 : vector<1x512xf32> to vector<16x512xf32>
      %453 = arith.mulf %450, %452 : vector<16x512xf32>
      %454 = arith.addf %448, %453 : vector<16x512xf32>
      %c8_199 = arith.constant 8 : index
      %c0_200 = arith.constant 0 : index
      %c0_201 = arith.constant 0 : index
      %455 = vector.load %arg2[%c8_199, %c0_200, %c0_201] : memref<32x16x512xf32, #tpu.memory_space<vmem>>, vector<1x16x512xf32>
      %456 = vector.shape_cast %455 : vector<1x16x512xf32> to vector<16x512xf32>
      %457 = vector.extract_strided_slice %407 {offsets = [8, 0], sizes = [1, 512], strides = [1, 1]} : vector<32x512xf32> to vector<1x512xf32>
      %458 = vector.broadcast %457 : vector<1x512xf32> to vector<16x512xf32>
      %459 = arith.mulf %456, %458 : vector<16x512xf32>
      %460 = arith.addf %454, %459 : vector<16x512xf32>
      %c9_202 = arith.constant 9 : index
      %c0_203 = arith.constant 0 : index
      %c0_204 = arith.constant 0 : index
      %461 = vector.load %arg2[%c9_202, %c0_203, %c0_204] : memref<32x16x512xf32, #tpu.memory_space<vmem>>, vector<1x16x512xf32>
      %462 = vector.shape_cast %461 : vector<1x16x512xf32> to vector<16x512xf32>
      %463 = vector.extract_strided_slice %407 {offsets = [9, 0], sizes = [1, 512], strides = [1, 1]} : vector<32x512xf32> to vector<1x512xf32>
      %464 = vector.broadcast %463 : vector<1x512xf32> to vector<16x512xf32>
      %465 = arith.mulf %462, %464 : vector<16x512xf32>
      %466 = arith.addf %460, %465 : vector<16x512xf32>
      %c10_205 = arith.constant 10 : index
      %c0_206 = arith.constant 0 : index
      %c0_207 = arith.constant 0 : index
      %467 = vector.load %arg2[%c10_205, %c0_206, %c0_207] : memref<32x16x512xf32, #tpu.memory_space<vmem>>, vector<1x16x512xf32>
      %468 = vector.shape_cast %467 : vector<1x16x512xf32> to vector<16x512xf32>
      %469 = vector.extract_strided_slice %407 {offsets = [10, 0], sizes = [1, 512], strides = [1, 1]} : vector<32x512xf32> to vector<1x512xf32>
      %470 = vector.broadcast %469 : vector<1x512xf32> to vector<16x512xf32>
      %471 = arith.mulf %468, %470 : vector<16x512xf32>
      %472 = arith.addf %466, %471 : vector<16x512xf32>
      %c11_208 = arith.constant 11 : index
      %c0_209 = arith.constant 0 : index
      %c0_210 = arith.constant 0 : index
      %473 = vector.load %arg2[%c11_208, %c0_209, %c0_210] : memref<32x16x512xf32, #tpu.memory_space<vmem>>, vector<1x16x512xf32>
      %474 = vector.shape_cast %473 : vector<1x16x512xf32> to vector<16x512xf32>
      %475 = vector.extract_strided_slice %407 {offsets = [11, 0], sizes = [1, 512], strides = [1, 1]} : vector<32x512xf32> to vector<1x512xf32>
      %476 = vector.broadcast %475 : vector<1x512xf32> to vector<16x512xf32>
      %477 = arith.mulf %474, %476 : vector<16x512xf32>
      %478 = arith.addf %472, %477 : vector<16x512xf32>
      %c12_211 = arith.constant 12 : index
      %c0_212 = arith.constant 0 : index
      %c0_213 = arith.constant 0 : index
      %479 = vector.load %arg2[%c12_211, %c0_212, %c0_213] : memref<32x16x512xf32, #tpu.memory_space<vmem>>, vector<1x16x512xf32>
      %480 = vector.shape_cast %479 : vector<1x16x512xf32> to vector<16x512xf32>
      %481 = vector.extract_strided_slice %407 {offsets = [12, 0], sizes = [1, 512], strides = [1, 1]} : vector<32x512xf32> to vector<1x512xf32>
      %482 = vector.broadcast %481 : vector<1x512xf32> to vector<16x512xf32>
      %483 = arith.mulf %480, %482 : vector<16x512xf32>
      %484 = arith.addf %478, %483 : vector<16x512xf32>
      %c13_214 = arith.constant 13 : index
      %c0_215 = arith.constant 0 : index
      %c0_216 = arith.constant 0 : index
      %485 = vector.load %arg2[%c13_214, %c0_215, %c0_216] : memref<32x16x512xf32, #tpu.memory_space<vmem>>, vector<1x16x512xf32>
      %486 = vector.shape_cast %485 : vector<1x16x512xf32> to vector<16x512xf32>
      %487 = vector.extract_strided_slice %407 {offsets = [13, 0], sizes = [1, 512], strides = [1, 1]} : vector<32x512xf32> to vector<1x512xf32>
      %488 = vector.broadcast %487 : vector<1x512xf32> to vector<16x512xf32>
      %489 = arith.mulf %486, %488 : vector<16x512xf32>
      %490 = arith.addf %484, %489 : vector<16x512xf32>
      %c14_217 = arith.constant 14 : index
      %c0_218 = arith.constant 0 : index
      %c0_219 = arith.constant 0 : index
      %491 = vector.load %arg2[%c14_217, %c0_218, %c0_219] : memref<32x16x512xf32, #tpu.memory_space<vmem>>, vector<1x16x512xf32>
      %492 = vector.shape_cast %491 : vector<1x16x512xf32> to vector<16x512xf32>
      %493 = vector.extract_strided_slice %407 {offsets = [14, 0], sizes = [1, 512], strides = [1, 1]} : vector<32x512xf32> to vector<1x512xf32>
      %494 = vector.broadcast %493 : vector<1x512xf32> to vector<16x512xf32>
      %495 = arith.mulf %492, %494 : vector<16x512xf32>
      %496 = arith.addf %490, %495 : vector<16x512xf32>
      %c15_220 = arith.constant 15 : index
      %c0_221 = arith.constant 0 : index
      %c0_222 = arith.constant 0 : index
      %497 = vector.load %arg2[%c15_220, %c0_221, %c0_222] : memref<32x16x512xf32, #tpu.memory_space<vmem>>, vector<1x16x512xf32>
      %498 = vector.shape_cast %497 : vector<1x16x512xf32> to vector<16x512xf32>
      %499 = vector.extract_strided_slice %407 {offsets = [15, 0], sizes = [1, 512], strides = [1, 1]} : vector<32x512xf32> to vector<1x512xf32>
      %500 = vector.broadcast %499 : vector<1x512xf32> to vector<16x512xf32>
      %501 = arith.mulf %498, %500 : vector<16x512xf32>
      %502 = arith.addf %496, %501 : vector<16x512xf32>
      %c16_223 = arith.constant 16 : index
      %c0_224 = arith.constant 0 : index
      %c0_225 = arith.constant 0 : index
      %503 = vector.load %arg2[%c16_223, %c0_224, %c0_225] : memref<32x16x512xf32, #tpu.memory_space<vmem>>, vector<1x16x512xf32>
      %504 = vector.shape_cast %503 : vector<1x16x512xf32> to vector<16x512xf32>
      %505 = vector.extract_strided_slice %407 {offsets = [16, 0], sizes = [1, 512], strides = [1, 1]} : vector<32x512xf32> to vector<1x512xf32>
      %506 = vector.broadcast %505 : vector<1x512xf32> to vector<16x512xf32>
      %507 = arith.mulf %504, %506 : vector<16x512xf32>
      %508 = arith.addf %502, %507 : vector<16x512xf32>
      %c17_226 = arith.constant 17 : index
      %c0_227 = arith.constant 0 : index
      %c0_228 = arith.constant 0 : index
      %509 = vector.load %arg2[%c17_226, %c0_227, %c0_228] : memref<32x16x512xf32, #tpu.memory_space<vmem>>, vector<1x16x512xf32>
      %510 = vector.shape_cast %509 : vector<1x16x512xf32> to vector<16x512xf32>
      %511 = vector.extract_strided_slice %407 {offsets = [17, 0], sizes = [1, 512], strides = [1, 1]} : vector<32x512xf32> to vector<1x512xf32>
      %512 = vector.broadcast %511 : vector<1x512xf32> to vector<16x512xf32>
      %513 = arith.mulf %510, %512 : vector<16x512xf32>
      %514 = arith.addf %508, %513 : vector<16x512xf32>
      %c18_229 = arith.constant 18 : index
      %c0_230 = arith.constant 0 : index
      %c0_231 = arith.constant 0 : index
      %515 = vector.load %arg2[%c18_229, %c0_230, %c0_231] : memref<32x16x512xf32, #tpu.memory_space<vmem>>, vector<1x16x512xf32>
      %516 = vector.shape_cast %515 : vector<1x16x512xf32> to vector<16x512xf32>
      %517 = vector.extract_strided_slice %407 {offsets = [18, 0], sizes = [1, 512], strides = [1, 1]} : vector<32x512xf32> to vector<1x512xf32>
      %518 = vector.broadcast %517 : vector<1x512xf32> to vector<16x512xf32>
      %519 = arith.mulf %516, %518 : vector<16x512xf32>
      %520 = arith.addf %514, %519 : vector<16x512xf32>
      %c19_232 = arith.constant 19 : index
      %c0_233 = arith.constant 0 : index
      %c0_234 = arith.constant 0 : index
      %521 = vector.load %arg2[%c19_232, %c0_233, %c0_234] : memref<32x16x512xf32, #tpu.memory_space<vmem>>, vector<1x16x512xf32>
      %522 = vector.shape_cast %521 : vector<1x16x512xf32> to vector<16x512xf32>
      %523 = vector.extract_strided_slice %407 {offsets = [19, 0], sizes = [1, 512], strides = [1, 1]} : vector<32x512xf32> to vector<1x512xf32>
      %524 = vector.broadcast %523 : vector<1x512xf32> to vector<16x512xf32>
      %525 = arith.mulf %522, %524 : vector<16x512xf32>
      %526 = arith.addf %520, %525 : vector<16x512xf32>
      %c20_235 = arith.constant 20 : index
      %c0_236 = arith.constant 0 : index
      %c0_237 = arith.constant 0 : index
      %527 = vector.load %arg2[%c20_235, %c0_236, %c0_237] : memref<32x16x512xf32, #tpu.memory_space<vmem>>, vector<1x16x512xf32>
      %528 = vector.shape_cast %527 : vector<1x16x512xf32> to vector<16x512xf32>
      %529 = vector.extract_strided_slice %407 {offsets = [20, 0], sizes = [1, 512], strides = [1, 1]} : vector<32x512xf32> to vector<1x512xf32>
      %530 = vector.broadcast %529 : vector<1x512xf32> to vector<16x512xf32>
      %531 = arith.mulf %528, %530 : vector<16x512xf32>
      %532 = arith.addf %526, %531 : vector<16x512xf32>
      %c21_238 = arith.constant 21 : index
      %c0_239 = arith.constant 0 : index
      %c0_240 = arith.constant 0 : index
      %533 = vector.load %arg2[%c21_238, %c0_239, %c0_240] : memref<32x16x512xf32, #tpu.memory_space<vmem>>, vector<1x16x512xf32>
      %534 = vector.shape_cast %533 : vector<1x16x512xf32> to vector<16x512xf32>
      %535 = vector.extract_strided_slice %407 {offsets = [21, 0], sizes = [1, 512], strides = [1, 1]} : vector<32x512xf32> to vector<1x512xf32>
      %536 = vector.broadcast %535 : vector<1x512xf32> to vector<16x512xf32>
      %537 = arith.mulf %534, %536 : vector<16x512xf32>
      %538 = arith.addf %532, %537 : vector<16x512xf32>
      %c22_241 = arith.constant 22 : index
      %c0_242 = arith.constant 0 : index
      %c0_243 = arith.constant 0 : index
      %539 = vector.load %arg2[%c22_241, %c0_242, %c0_243] : memref<32x16x512xf32, #tpu.memory_space<vmem>>, vector<1x16x512xf32>
      %540 = vector.shape_cast %539 : vector<1x16x512xf32> to vector<16x512xf32>
      %541 = vector.extract_strided_slice %407 {offsets = [22, 0], sizes = [1, 512], strides = [1, 1]} : vector<32x512xf32> to vector<1x512xf32>
      %542 = vector.broadcast %541 : vector<1x512xf32> to vector<16x512xf32>
      %543 = arith.mulf %540, %542 : vector<16x512xf32>
      %544 = arith.addf %538, %543 : vector<16x512xf32>
      %c23_244 = arith.constant 23 : index
      %c0_245 = arith.constant 0 : index
      %c0_246 = arith.constant 0 : index
      %545 = vector.load %arg2[%c23_244, %c0_245, %c0_246] : memref<32x16x512xf32, #tpu.memory_space<vmem>>, vector<1x16x512xf32>
      %546 = vector.shape_cast %545 : vector<1x16x512xf32> to vector<16x512xf32>
      %547 = vector.extract_strided_slice %407 {offsets = [23, 0], sizes = [1, 512], strides = [1, 1]} : vector<32x512xf32> to vector<1x512xf32>
      %548 = vector.broadcast %547 : vector<1x512xf32> to vector<16x512xf32>
      %549 = arith.mulf %546, %548 : vector<16x512xf32>
      %550 = arith.addf %544, %549 : vector<16x512xf32>
      %c24_247 = arith.constant 24 : index
      %c0_248 = arith.constant 0 : index
      %c0_249 = arith.constant 0 : index
      %551 = vector.load %arg2[%c24_247, %c0_248, %c0_249] : memref<32x16x512xf32, #tpu.memory_space<vmem>>, vector<1x16x512xf32>
      %552 = vector.shape_cast %551 : vector<1x16x512xf32> to vector<16x512xf32>
      %553 = vector.extract_strided_slice %407 {offsets = [24, 0], sizes = [1, 512], strides = [1, 1]} : vector<32x512xf32> to vector<1x512xf32>
      %554 = vector.broadcast %553 : vector<1x512xf32> to vector<16x512xf32>
      %555 = arith.mulf %552, %554 : vector<16x512xf32>
      %556 = arith.addf %550, %555 : vector<16x512xf32>
      %c25_250 = arith.constant 25 : index
      %c0_251 = arith.constant 0 : index
      %c0_252 = arith.constant 0 : index
      %557 = vector.load %arg2[%c25_250, %c0_251, %c0_252] : memref<32x16x512xf32, #tpu.memory_space<vmem>>, vector<1x16x512xf32>
      %558 = vector.shape_cast %557 : vector<1x16x512xf32> to vector<16x512xf32>
      %559 = vector.extract_strided_slice %407 {offsets = [25, 0], sizes = [1, 512], strides = [1, 1]} : vector<32x512xf32> to vector<1x512xf32>
      %560 = vector.broadcast %559 : vector<1x512xf32> to vector<16x512xf32>
      %561 = arith.mulf %558, %560 : vector<16x512xf32>
      %562 = arith.addf %556, %561 : vector<16x512xf32>
      %c26_253 = arith.constant 26 : index
      %c0_254 = arith.constant 0 : index
      %c0_255 = arith.constant 0 : index
      %563 = vector.load %arg2[%c26_253, %c0_254, %c0_255] : memref<32x16x512xf32, #tpu.memory_space<vmem>>, vector<1x16x512xf32>
      %564 = vector.shape_cast %563 : vector<1x16x512xf32> to vector<16x512xf32>
      %565 = vector.extract_strided_slice %407 {offsets = [26, 0], sizes = [1, 512], strides = [1, 1]} : vector<32x512xf32> to vector<1x512xf32>
      %566 = vector.broadcast %565 : vector<1x512xf32> to vector<16x512xf32>
      %567 = arith.mulf %564, %566 : vector<16x512xf32>
      %568 = arith.addf %562, %567 : vector<16x512xf32>
      %c27_256 = arith.constant 27 : index
      %c0_257 = arith.constant 0 : index
      %c0_258 = arith.constant 0 : index
      %569 = vector.load %arg2[%c27_256, %c0_257, %c0_258] : memref<32x16x512xf32, #tpu.memory_space<vmem>>, vector<1x16x512xf32>
      %570 = vector.shape_cast %569 : vector<1x16x512xf32> to vector<16x512xf32>
      %571 = vector.extract_strided_slice %407 {offsets = [27, 0], sizes = [1, 512], strides = [1, 1]} : vector<32x512xf32> to vector<1x512xf32>
      %572 = vector.broadcast %571 : vector<1x512xf32> to vector<16x512xf32>
      %573 = arith.mulf %570, %572 : vector<16x512xf32>
      %574 = arith.addf %568, %573 : vector<16x512xf32>
      %c28_259 = arith.constant 28 : index
      %c0_260 = arith.constant 0 : index
      %c0_261 = arith.constant 0 : index
      %575 = vector.load %arg2[%c28_259, %c0_260, %c0_261] : memref<32x16x512xf32, #tpu.memory_space<vmem>>, vector<1x16x512xf32>
      %576 = vector.shape_cast %575 : vector<1x16x512xf32> to vector<16x512xf32>
      %577 = vector.extract_strided_slice %407 {offsets = [28, 0], sizes = [1, 512], strides = [1, 1]} : vector<32x512xf32> to vector<1x512xf32>
      %578 = vector.broadcast %577 : vector<1x512xf32> to vector<16x512xf32>
      %579 = arith.mulf %576, %578 : vector<16x512xf32>
      %580 = arith.addf %574, %579 : vector<16x512xf32>
      %c29_262 = arith.constant 29 : index
      %c0_263 = arith.constant 0 : index
      %c0_264 = arith.constant 0 : index
      %581 = vector.load %arg2[%c29_262, %c0_263, %c0_264] : memref<32x16x512xf32, #tpu.memory_space<vmem>>, vector<1x16x512xf32>
      %582 = vector.shape_cast %581 : vector<1x16x512xf32> to vector<16x512xf32>
      %583 = vector.extract_strided_slice %407 {offsets = [29, 0], sizes = [1, 512], strides = [1, 1]} : vector<32x512xf32> to vector<1x512xf32>
      %584 = vector.broadcast %583 : vector<1x512xf32> to vector<16x512xf32>
      %585 = arith.mulf %582, %584 : vector<16x512xf32>
      %586 = arith.addf %580, %585 : vector<16x512xf32>
      %c30_265 = arith.constant 30 : index
      %c0_266 = arith.constant 0 : index
      %c0_267 = arith.constant 0 : index
      %587 = vector.load %arg2[%c30_265, %c0_266, %c0_267] : memref<32x16x512xf32, #tpu.memory_space<vmem>>, vector<1x16x512xf32>
      %588 = vector.shape_cast %587 : vector<1x16x512xf32> to vector<16x512xf32>
      %589 = vector.extract_strided_slice %407 {offsets = [30, 0], sizes = [1, 512], strides = [1, 1]} : vector<32x512xf32> to vector<1x512xf32>
      %590 = vector.broadcast %589 : vector<1x512xf32> to vector<16x512xf32>
      %591 = arith.mulf %588, %590 : vector<16x512xf32>
      %592 = arith.addf %586, %591 : vector<16x512xf32>
      %c31_268 = arith.constant 31 : index
      %c0_269 = arith.constant 0 : index
      %c0_270 = arith.constant 0 : index
      %593 = vector.load %arg2[%c31_268, %c0_269, %c0_270] : memref<32x16x512xf32, #tpu.memory_space<vmem>>, vector<1x16x512xf32>
      %594 = vector.shape_cast %593 : vector<1x16x512xf32> to vector<16x512xf32>
      %595 = vector.extract_strided_slice %407 {offsets = [31, 0], sizes = [1, 512], strides = [1, 1]} : vector<32x512xf32> to vector<1x512xf32>
      %596 = vector.broadcast %595 : vector<1x512xf32> to vector<16x512xf32>
      %597 = arith.mulf %594, %596 : vector<16x512xf32>
      %598 = arith.addf %592, %597 : vector<16x512xf32>
      %599 = arith.mulf %598, %598 : vector<16x512xf32>
      %cst_271 = arith.constant dense<0.000000e+00> : vector<512xf32>
      %600 = vector.multi_reduction <add>, %599, %cst_271 [0] : vector<16x512xf32> to vector<512xf32>
      %601 = vector.shape_cast %600 : vector<512xf32> to vector<1x512xf32>
      %cst_272 = arith.constant 1.000000e-30 : f32
      %602 = vector.broadcast %cst_272 : f32 to vector<1x512xf32>
      %603 = arith.addf %601, %602 : vector<1x512xf32>
      %604 = math.rsqrt %603 : vector<1x512xf32>
      %605 = vector.broadcast %604 : vector<1x512xf32> to vector<16x512xf32>
      %606 = arith.mulf %598, %605 : vector<16x512xf32>
      scf.yield %606 : vector<16x512xf32>
    }
    %c0_1 = arith.constant 0 : index
    %c0_2 = arith.constant 0 : index
    %c0_3 = arith.constant 0 : index
    %4 = vector.load %arg1[%c0_1, %c0_2, %c0_3] : memref<16x32x512xf32, #tpu.memory_space<vmem>>, vector<1x32x512xf32>
    %5 = vector.shape_cast %4 : vector<1x32x512xf32> to vector<32x512xf32>
    %6 = vector.extract_strided_slice %3 {offsets = [0, 0], sizes = [1, 512], strides = [1, 1]} : vector<16x512xf32> to vector<1x512xf32>
    %7 = vector.broadcast %6 : vector<1x512xf32> to vector<32x512xf32>
    %8 = arith.mulf %5, %7 : vector<32x512xf32>
    %c1 = arith.constant 1 : index
    %c0_4 = arith.constant 0 : index
    %c0_5 = arith.constant 0 : index
    %9 = vector.load %arg1[%c1, %c0_4, %c0_5] : memref<16x32x512xf32, #tpu.memory_space<vmem>>, vector<1x32x512xf32>
    %10 = vector.shape_cast %9 : vector<1x32x512xf32> to vector<32x512xf32>
    %11 = vector.extract_strided_slice %3 {offsets = [1, 0], sizes = [1, 512], strides = [1, 1]} : vector<16x512xf32> to vector<1x512xf32>
    %12 = vector.broadcast %11 : vector<1x512xf32> to vector<32x512xf32>
    %13 = arith.mulf %10, %12 : vector<32x512xf32>
    %14 = arith.addf %8, %13 : vector<32x512xf32>
    %c2 = arith.constant 2 : index
    %c0_6 = arith.constant 0 : index
    %c0_7 = arith.constant 0 : index
    %15 = vector.load %arg1[%c2, %c0_6, %c0_7] : memref<16x32x512xf32, #tpu.memory_space<vmem>>, vector<1x32x512xf32>
    %16 = vector.shape_cast %15 : vector<1x32x512xf32> to vector<32x512xf32>
    %17 = vector.extract_strided_slice %3 {offsets = [2, 0], sizes = [1, 512], strides = [1, 1]} : vector<16x512xf32> to vector<1x512xf32>
    %18 = vector.broadcast %17 : vector<1x512xf32> to vector<32x512xf32>
    %19 = arith.mulf %16, %18 : vector<32x512xf32>
    %20 = arith.addf %14, %19 : vector<32x512xf32>
    %c3 = arith.constant 3 : index
    %c0_8 = arith.constant 0 : index
    %c0_9 = arith.constant 0 : index
    %21 = vector.load %arg1[%c3, %c0_8, %c0_9] : memref<16x32x512xf32, #tpu.memory_space<vmem>>, vector<1x32x512xf32>
    %22 = vector.shape_cast %21 : vector<1x32x512xf32> to vector<32x512xf32>
    %23 = vector.extract_strided_slice %3 {offsets = [3, 0], sizes = [1, 512], strides = [1, 1]} : vector<16x512xf32> to vector<1x512xf32>
    %24 = vector.broadcast %23 : vector<1x512xf32> to vector<32x512xf32>
    %25 = arith.mulf %22, %24 : vector<32x512xf32>
    %26 = arith.addf %20, %25 : vector<32x512xf32>
    %c4 = arith.constant 4 : index
    %c0_10 = arith.constant 0 : index
    %c0_11 = arith.constant 0 : index
    %27 = vector.load %arg1[%c4, %c0_10, %c0_11] : memref<16x32x512xf32, #tpu.memory_space<vmem>>, vector<1x32x512xf32>
    %28 = vector.shape_cast %27 : vector<1x32x512xf32> to vector<32x512xf32>
    %29 = vector.extract_strided_slice %3 {offsets = [4, 0], sizes = [1, 512], strides = [1, 1]} : vector<16x512xf32> to vector<1x512xf32>
    %30 = vector.broadcast %29 : vector<1x512xf32> to vector<32x512xf32>
    %31 = arith.mulf %28, %30 : vector<32x512xf32>
    %32 = arith.addf %26, %31 : vector<32x512xf32>
    %c5 = arith.constant 5 : index
    %c0_12 = arith.constant 0 : index
    %c0_13 = arith.constant 0 : index
    %33 = vector.load %arg1[%c5, %c0_12, %c0_13] : memref<16x32x512xf32, #tpu.memory_space<vmem>>, vector<1x32x512xf32>
    %34 = vector.shape_cast %33 : vector<1x32x512xf32> to vector<32x512xf32>
    %35 = vector.extract_strided_slice %3 {offsets = [5, 0], sizes = [1, 512], strides = [1, 1]} : vector<16x512xf32> to vector<1x512xf32>
    %36 = vector.broadcast %35 : vector<1x512xf32> to vector<32x512xf32>
    %37 = arith.mulf %34, %36 : vector<32x512xf32>
    %38 = arith.addf %32, %37 : vector<32x512xf32>
    %c6 = arith.constant 6 : index
    %c0_14 = arith.constant 0 : index
    %c0_15 = arith.constant 0 : index
    %39 = vector.load %arg1[%c6, %c0_14, %c0_15] : memref<16x32x512xf32, #tpu.memory_space<vmem>>, vector<1x32x512xf32>
    %40 = vector.shape_cast %39 : vector<1x32x512xf32> to vector<32x512xf32>
    %41 = vector.extract_strided_slice %3 {offsets = [6, 0], sizes = [1, 512], strides = [1, 1]} : vector<16x512xf32> to vector<1x512xf32>
    %42 = vector.broadcast %41 : vector<1x512xf32> to vector<32x512xf32>
    %43 = arith.mulf %40, %42 : vector<32x512xf32>
    %44 = arith.addf %38, %43 : vector<32x512xf32>
    %c7 = arith.constant 7 : index
    %c0_16 = arith.constant 0 : index
    %c0_17 = arith.constant 0 : index
    %45 = vector.load %arg1[%c7, %c0_16, %c0_17] : memref<16x32x512xf32, #tpu.memory_space<vmem>>, vector<1x32x512xf32>
    %46 = vector.shape_cast %45 : vector<1x32x512xf32> to vector<32x512xf32>
    %47 = vector.extract_strided_slice %3 {offsets = [7, 0], sizes = [1, 512], strides = [1, 1]} : vector<16x512xf32> to vector<1x512xf32>
    %48 = vector.broadcast %47 : vector<1x512xf32> to vector<32x512xf32>
    %49 = arith.mulf %46, %48 : vector<32x512xf32>
    %50 = arith.addf %44, %49 : vector<32x512xf32>
    %c8 = arith.constant 8 : index
    %c0_18 = arith.constant 0 : index
    %c0_19 = arith.constant 0 : index
    %51 = vector.load %arg1[%c8, %c0_18, %c0_19] : memref<16x32x512xf32, #tpu.memory_space<vmem>>, vector<1x32x512xf32>
    %52 = vector.shape_cast %51 : vector<1x32x512xf32> to vector<32x512xf32>
    %53 = vector.extract_strided_slice %3 {offsets = [8, 0], sizes = [1, 512], strides = [1, 1]} : vector<16x512xf32> to vector<1x512xf32>
    %54 = vector.broadcast %53 : vector<1x512xf32> to vector<32x512xf32>
    %55 = arith.mulf %52, %54 : vector<32x512xf32>
    %56 = arith.addf %50, %55 : vector<32x512xf32>
    %c9 = arith.constant 9 : index
    %c0_20 = arith.constant 0 : index
    %c0_21 = arith.constant 0 : index
    %57 = vector.load %arg1[%c9, %c0_20, %c0_21] : memref<16x32x512xf32, #tpu.memory_space<vmem>>, vector<1x32x512xf32>
    %58 = vector.shape_cast %57 : vector<1x32x512xf32> to vector<32x512xf32>
    %59 = vector.extract_strided_slice %3 {offsets = [9, 0], sizes = [1, 512], strides = [1, 1]} : vector<16x512xf32> to vector<1x512xf32>
    %60 = vector.broadcast %59 : vector<1x512xf32> to vector<32x512xf32>
    %61 = arith.mulf %58, %60 : vector<32x512xf32>
    %62 = arith.addf %56, %61 : vector<32x512xf32>
    %c10 = arith.constant 10 : index
    %c0_22 = arith.constant 0 : index
    %c0_23 = arith.constant 0 : index
    %63 = vector.load %arg1[%c10, %c0_22, %c0_23] : memref<16x32x512xf32, #tpu.memory_space<vmem>>, vector<1x32x512xf32>
    %64 = vector.shape_cast %63 : vector<1x32x512xf32> to vector<32x512xf32>
    %65 = vector.extract_strided_slice %3 {offsets = [10, 0], sizes = [1, 512], strides = [1, 1]} : vector<16x512xf32> to vector<1x512xf32>
    %66 = vector.broadcast %65 : vector<1x512xf32> to vector<32x512xf32>
    %67 = arith.mulf %64, %66 : vector<32x512xf32>
    %68 = arith.addf %62, %67 : vector<32x512xf32>
    %c11 = arith.constant 11 : index
    %c0_24 = arith.constant 0 : index
    %c0_25 = arith.constant 0 : index
    %69 = vector.load %arg1[%c11, %c0_24, %c0_25] : memref<16x32x512xf32, #tpu.memory_space<vmem>>, vector<1x32x512xf32>
    %70 = vector.shape_cast %69 : vector<1x32x512xf32> to vector<32x512xf32>
    %71 = vector.extract_strided_slice %3 {offsets = [11, 0], sizes = [1, 512], strides = [1, 1]} : vector<16x512xf32> to vector<1x512xf32>
    %72 = vector.broadcast %71 : vector<1x512xf32> to vector<32x512xf32>
    %73 = arith.mulf %70, %72 : vector<32x512xf32>
    %74 = arith.addf %68, %73 : vector<32x512xf32>
    %c12 = arith.constant 12 : index
    %c0_26 = arith.constant 0 : index
    %c0_27 = arith.constant 0 : index
    %75 = vector.load %arg1[%c12, %c0_26, %c0_27] : memref<16x32x512xf32, #tpu.memory_space<vmem>>, vector<1x32x512xf32>
    %76 = vector.shape_cast %75 : vector<1x32x512xf32> to vector<32x512xf32>
    %77 = vector.extract_strided_slice %3 {offsets = [12, 0], sizes = [1, 512], strides = [1, 1]} : vector<16x512xf32> to vector<1x512xf32>
    %78 = vector.broadcast %77 : vector<1x512xf32> to vector<32x512xf32>
    %79 = arith.mulf %76, %78 : vector<32x512xf32>
    %80 = arith.addf %74, %79 : vector<32x512xf32>
    %c13 = arith.constant 13 : index
    %c0_28 = arith.constant 0 : index
    %c0_29 = arith.constant 0 : index
    %81 = vector.load %arg1[%c13, %c0_28, %c0_29] : memref<16x32x512xf32, #tpu.memory_space<vmem>>, vector<1x32x512xf32>
    %82 = vector.shape_cast %81 : vector<1x32x512xf32> to vector<32x512xf32>
    %83 = vector.extract_strided_slice %3 {offsets = [13, 0], sizes = [1, 512], strides = [1, 1]} : vector<16x512xf32> to vector<1x512xf32>
    %84 = vector.broadcast %83 : vector<1x512xf32> to vector<32x512xf32>
    %85 = arith.mulf %82, %84 : vector<32x512xf32>
    %86 = arith.addf %80, %85 : vector<32x512xf32>
    %c14 = arith.constant 14 : index
    %c0_30 = arith.constant 0 : index
    %c0_31 = arith.constant 0 : index
    %87 = vector.load %arg1[%c14, %c0_30, %c0_31] : memref<16x32x512xf32, #tpu.memory_space<vmem>>, vector<1x32x512xf32>
    %88 = vector.shape_cast %87 : vector<1x32x512xf32> to vector<32x512xf32>
    %89 = vector.extract_strided_slice %3 {offsets = [14, 0], sizes = [1, 512], strides = [1, 1]} : vector<16x512xf32> to vector<1x512xf32>
    %90 = vector.broadcast %89 : vector<1x512xf32> to vector<32x512xf32>
    %91 = arith.mulf %88, %90 : vector<32x512xf32>
    %92 = arith.addf %86, %91 : vector<32x512xf32>
    %c15 = arith.constant 15 : index
    %c0_32 = arith.constant 0 : index
    %c0_33 = arith.constant 0 : index
    %93 = vector.load %arg1[%c15, %c0_32, %c0_33] : memref<16x32x512xf32, #tpu.memory_space<vmem>>, vector<1x32x512xf32>
    %94 = vector.shape_cast %93 : vector<1x32x512xf32> to vector<32x512xf32>
    %95 = vector.extract_strided_slice %3 {offsets = [15, 0], sizes = [1, 512], strides = [1, 1]} : vector<16x512xf32> to vector<1x512xf32>
    %96 = vector.broadcast %95 : vector<1x512xf32> to vector<32x512xf32>
    %97 = arith.mulf %94, %96 : vector<32x512xf32>
    %98 = arith.addf %92, %97 : vector<32x512xf32>
    %c0_34 = arith.constant 0 : index
    %c0_35 = arith.constant 0 : index
    %c0_36 = arith.constant 0 : index
    %99 = vector.load %arg2[%c0_34, %c0_35, %c0_36] : memref<32x16x512xf32, #tpu.memory_space<vmem>>, vector<1x16x512xf32>
    %100 = vector.shape_cast %99 : vector<1x16x512xf32> to vector<16x512xf32>
    %101 = vector.extract_strided_slice %98 {offsets = [0, 0], sizes = [1, 512], strides = [1, 1]} : vector<32x512xf32> to vector<1x512xf32>
    %102 = vector.broadcast %101 : vector<1x512xf32> to vector<16x512xf32>
    %103 = arith.mulf %100, %102 : vector<16x512xf32>
    %c1_37 = arith.constant 1 : index
    %c0_38 = arith.constant 0 : index
    %c0_39 = arith.constant 0 : index
    %104 = vector.load %arg2[%c1_37, %c0_38, %c0_39] : memref<32x16x512xf32, #tpu.memory_space<vmem>>, vector<1x16x512xf32>
    %105 = vector.shape_cast %104 : vector<1x16x512xf32> to vector<16x512xf32>
    %106 = vector.extract_strided_slice %98 {offsets = [1, 0], sizes = [1, 512], strides = [1, 1]} : vector<32x512xf32> to vector<1x512xf32>
    %107 = vector.broadcast %106 : vector<1x512xf32> to vector<16x512xf32>
    %108 = arith.mulf %105, %107 : vector<16x512xf32>
    %109 = arith.addf %103, %108 : vector<16x512xf32>
    %c2_40 = arith.constant 2 : index
    %c0_41 = arith.constant 0 : index
    %c0_42 = arith.constant 0 : index
    %110 = vector.load %arg2[%c2_40, %c0_41, %c0_42] : memref<32x16x512xf32, #tpu.memory_space<vmem>>, vector<1x16x512xf32>
    %111 = vector.shape_cast %110 : vector<1x16x512xf32> to vector<16x512xf32>
    %112 = vector.extract_strided_slice %98 {offsets = [2, 0], sizes = [1, 512], strides = [1, 1]} : vector<32x512xf32> to vector<1x512xf32>
    %113 = vector.broadcast %112 : vector<1x512xf32> to vector<16x512xf32>
    %114 = arith.mulf %111, %113 : vector<16x512xf32>
    %115 = arith.addf %109, %114 : vector<16x512xf32>
    %c3_43 = arith.constant 3 : index
    %c0_44 = arith.constant 0 : index
    %c0_45 = arith.constant 0 : index
    %116 = vector.load %arg2[%c3_43, %c0_44, %c0_45] : memref<32x16x512xf32, #tpu.memory_space<vmem>>, vector<1x16x512xf32>
    %117 = vector.shape_cast %116 : vector<1x16x512xf32> to vector<16x512xf32>
    %118 = vector.extract_strided_slice %98 {offsets = [3, 0], sizes = [1, 512], strides = [1, 1]} : vector<32x512xf32> to vector<1x512xf32>
    %119 = vector.broadcast %118 : vector<1x512xf32> to vector<16x512xf32>
    %120 = arith.mulf %117, %119 : vector<16x512xf32>
    %121 = arith.addf %115, %120 : vector<16x512xf32>
    %c4_46 = arith.constant 4 : index
    %c0_47 = arith.constant 0 : index
    %c0_48 = arith.constant 0 : index
    %122 = vector.load %arg2[%c4_46, %c0_47, %c0_48] : memref<32x16x512xf32, #tpu.memory_space<vmem>>, vector<1x16x512xf32>
    %123 = vector.shape_cast %122 : vector<1x16x512xf32> to vector<16x512xf32>
    %124 = vector.extract_strided_slice %98 {offsets = [4, 0], sizes = [1, 512], strides = [1, 1]} : vector<32x512xf32> to vector<1x512xf32>
    %125 = vector.broadcast %124 : vector<1x512xf32> to vector<16x512xf32>
    %126 = arith.mulf %123, %125 : vector<16x512xf32>
    %127 = arith.addf %121, %126 : vector<16x512xf32>
    %c5_49 = arith.constant 5 : index
    %c0_50 = arith.constant 0 : index
    %c0_51 = arith.constant 0 : index
    %128 = vector.load %arg2[%c5_49, %c0_50, %c0_51] : memref<32x16x512xf32, #tpu.memory_space<vmem>>, vector<1x16x512xf32>
    %129 = vector.shape_cast %128 : vector<1x16x512xf32> to vector<16x512xf32>
    %130 = vector.extract_strided_slice %98 {offsets = [5, 0], sizes = [1, 512], strides = [1, 1]} : vector<32x512xf32> to vector<1x512xf32>
    %131 = vector.broadcast %130 : vector<1x512xf32> to vector<16x512xf32>
    %132 = arith.mulf %129, %131 : vector<16x512xf32>
    %133 = arith.addf %127, %132 : vector<16x512xf32>
    %c6_52 = arith.constant 6 : index
    %c0_53 = arith.constant 0 : index
    %c0_54 = arith.constant 0 : index
    %134 = vector.load %arg2[%c6_52, %c0_53, %c0_54] : memref<32x16x512xf32, #tpu.memory_space<vmem>>, vector<1x16x512xf32>
    %135 = vector.shape_cast %134 : vector<1x16x512xf32> to vector<16x512xf32>
    %136 = vector.extract_strided_slice %98 {offsets = [6, 0], sizes = [1, 512], strides = [1, 1]} : vector<32x512xf32> to vector<1x512xf32>
    %137 = vector.broadcast %136 : vector<1x512xf32> to vector<16x512xf32>
    %138 = arith.mulf %135, %137 : vector<16x512xf32>
    %139 = arith.addf %133, %138 : vector<16x512xf32>
    %c7_55 = arith.constant 7 : index
    %c0_56 = arith.constant 0 : index
    %c0_57 = arith.constant 0 : index
    %140 = vector.load %arg2[%c7_55, %c0_56, %c0_57] : memref<32x16x512xf32, #tpu.memory_space<vmem>>, vector<1x16x512xf32>
    %141 = vector.shape_cast %140 : vector<1x16x512xf32> to vector<16x512xf32>
    %142 = vector.extract_strided_slice %98 {offsets = [7, 0], sizes = [1, 512], strides = [1, 1]} : vector<32x512xf32> to vector<1x512xf32>
    %143 = vector.broadcast %142 : vector<1x512xf32> to vector<16x512xf32>
    %144 = arith.mulf %141, %143 : vector<16x512xf32>
    %145 = arith.addf %139, %144 : vector<16x512xf32>
    %c8_58 = arith.constant 8 : index
    %c0_59 = arith.constant 0 : index
    %c0_60 = arith.constant 0 : index
    %146 = vector.load %arg2[%c8_58, %c0_59, %c0_60] : memref<32x16x512xf32, #tpu.memory_space<vmem>>, vector<1x16x512xf32>
    %147 = vector.shape_cast %146 : vector<1x16x512xf32> to vector<16x512xf32>
    %148 = vector.extract_strided_slice %98 {offsets = [8, 0], sizes = [1, 512], strides = [1, 1]} : vector<32x512xf32> to vector<1x512xf32>
    %149 = vector.broadcast %148 : vector<1x512xf32> to vector<16x512xf32>
    %150 = arith.mulf %147, %149 : vector<16x512xf32>
    %151 = arith.addf %145, %150 : vector<16x512xf32>
    %c9_61 = arith.constant 9 : index
    %c0_62 = arith.constant 0 : index
    %c0_63 = arith.constant 0 : index
    %152 = vector.load %arg2[%c9_61, %c0_62, %c0_63] : memref<32x16x512xf32, #tpu.memory_space<vmem>>, vector<1x16x512xf32>
    %153 = vector.shape_cast %152 : vector<1x16x512xf32> to vector<16x512xf32>
    %154 = vector.extract_strided_slice %98 {offsets = [9, 0], sizes = [1, 512], strides = [1, 1]} : vector<32x512xf32> to vector<1x512xf32>
    %155 = vector.broadcast %154 : vector<1x512xf32> to vector<16x512xf32>
    %156 = arith.mulf %153, %155 : vector<16x512xf32>
    %157 = arith.addf %151, %156 : vector<16x512xf32>
    %c10_64 = arith.constant 10 : index
    %c0_65 = arith.constant 0 : index
    %c0_66 = arith.constant 0 : index
    %158 = vector.load %arg2[%c10_64, %c0_65, %c0_66] : memref<32x16x512xf32, #tpu.memory_space<vmem>>, vector<1x16x512xf32>
    %159 = vector.shape_cast %158 : vector<1x16x512xf32> to vector<16x512xf32>
    %160 = vector.extract_strided_slice %98 {offsets = [10, 0], sizes = [1, 512], strides = [1, 1]} : vector<32x512xf32> to vector<1x512xf32>
    %161 = vector.broadcast %160 : vector<1x512xf32> to vector<16x512xf32>
    %162 = arith.mulf %159, %161 : vector<16x512xf32>
    %163 = arith.addf %157, %162 : vector<16x512xf32>
    %c11_67 = arith.constant 11 : index
    %c0_68 = arith.constant 0 : index
    %c0_69 = arith.constant 0 : index
    %164 = vector.load %arg2[%c11_67, %c0_68, %c0_69] : memref<32x16x512xf32, #tpu.memory_space<vmem>>, vector<1x16x512xf32>
    %165 = vector.shape_cast %164 : vector<1x16x512xf32> to vector<16x512xf32>
    %166 = vector.extract_strided_slice %98 {offsets = [11, 0], sizes = [1, 512], strides = [1, 1]} : vector<32x512xf32> to vector<1x512xf32>
    %167 = vector.broadcast %166 : vector<1x512xf32> to vector<16x512xf32>
    %168 = arith.mulf %165, %167 : vector<16x512xf32>
    %169 = arith.addf %163, %168 : vector<16x512xf32>
    %c12_70 = arith.constant 12 : index
    %c0_71 = arith.constant 0 : index
    %c0_72 = arith.constant 0 : index
    %170 = vector.load %arg2[%c12_70, %c0_71, %c0_72] : memref<32x16x512xf32, #tpu.memory_space<vmem>>, vector<1x16x512xf32>
    %171 = vector.shape_cast %170 : vector<1x16x512xf32> to vector<16x512xf32>
    %172 = vector.extract_strided_slice %98 {offsets = [12, 0], sizes = [1, 512], strides = [1, 1]} : vector<32x512xf32> to vector<1x512xf32>
    %173 = vector.broadcast %172 : vector<1x512xf32> to vector<16x512xf32>
    %174 = arith.mulf %171, %173 : vector<16x512xf32>
    %175 = arith.addf %169, %174 : vector<16x512xf32>
    %c13_73 = arith.constant 13 : index
    %c0_74 = arith.constant 0 : index
    %c0_75 = arith.constant 0 : index
    %176 = vector.load %arg2[%c13_73, %c0_74, %c0_75] : memref<32x16x512xf32, #tpu.memory_space<vmem>>, vector<1x16x512xf32>
    %177 = vector.shape_cast %176 : vector<1x16x512xf32> to vector<16x512xf32>
    %178 = vector.extract_strided_slice %98 {offsets = [13, 0], sizes = [1, 512], strides = [1, 1]} : vector<32x512xf32> to vector<1x512xf32>
    %179 = vector.broadcast %178 : vector<1x512xf32> to vector<16x512xf32>
    %180 = arith.mulf %177, %179 : vector<16x512xf32>
    %181 = arith.addf %175, %180 : vector<16x512xf32>
    %c14_76 = arith.constant 14 : index
    %c0_77 = arith.constant 0 : index
    %c0_78 = arith.constant 0 : index
    %182 = vector.load %arg2[%c14_76, %c0_77, %c0_78] : memref<32x16x512xf32, #tpu.memory_space<vmem>>, vector<1x16x512xf32>
    %183 = vector.shape_cast %182 : vector<1x16x512xf32> to vector<16x512xf32>
    %184 = vector.extract_strided_slice %98 {offsets = [14, 0], sizes = [1, 512], strides = [1, 1]} : vector<32x512xf32> to vector<1x512xf32>
    %185 = vector.broadcast %184 : vector<1x512xf32> to vector<16x512xf32>
    %186 = arith.mulf %183, %185 : vector<16x512xf32>
    %187 = arith.addf %181, %186 : vector<16x512xf32>
    %c15_79 = arith.constant 15 : index
    %c0_80 = arith.constant 0 : index
    %c0_81 = arith.constant 0 : index
    %188 = vector.load %arg2[%c15_79, %c0_80, %c0_81] : memref<32x16x512xf32, #tpu.memory_space<vmem>>, vector<1x16x512xf32>
    %189 = vector.shape_cast %188 : vector<1x16x512xf32> to vector<16x512xf32>
    %190 = vector.extract_strided_slice %98 {offsets = [15, 0], sizes = [1, 512], strides = [1, 1]} : vector<32x512xf32> to vector<1x512xf32>
    %191 = vector.broadcast %190 : vector<1x512xf32> to vector<16x512xf32>
    %192 = arith.mulf %189, %191 : vector<16x512xf32>
    %193 = arith.addf %187, %192 : vector<16x512xf32>
    %c16 = arith.constant 16 : index
    %c0_82 = arith.constant 0 : index
    %c0_83 = arith.constant 0 : index
    %194 = vector.load %arg2[%c16, %c0_82, %c0_83] : memref<32x16x512xf32, #tpu.memory_space<vmem>>, vector<1x16x512xf32>
    %195 = vector.shape_cast %194 : vector<1x16x512xf32> to vector<16x512xf32>
    %196 = vector.extract_strided_slice %98 {offsets = [16, 0], sizes = [1, 512], strides = [1, 1]} : vector<32x512xf32> to vector<1x512xf32>
    %197 = vector.broadcast %196 : vector<1x512xf32> to vector<16x512xf32>
    %198 = arith.mulf %195, %197 : vector<16x512xf32>
    %199 = arith.addf %193, %198 : vector<16x512xf32>
    %c17 = arith.constant 17 : index
    %c0_84 = arith.constant 0 : index
    %c0_85 = arith.constant 0 : index
    %200 = vector.load %arg2[%c17, %c0_84, %c0_85] : memref<32x16x512xf32, #tpu.memory_space<vmem>>, vector<1x16x512xf32>
    %201 = vector.shape_cast %200 : vector<1x16x512xf32> to vector<16x512xf32>
    %202 = vector.extract_strided_slice %98 {offsets = [17, 0], sizes = [1, 512], strides = [1, 1]} : vector<32x512xf32> to vector<1x512xf32>
    %203 = vector.broadcast %202 : vector<1x512xf32> to vector<16x512xf32>
    %204 = arith.mulf %201, %203 : vector<16x512xf32>
    %205 = arith.addf %199, %204 : vector<16x512xf32>
    %c18 = arith.constant 18 : index
    %c0_86 = arith.constant 0 : index
    %c0_87 = arith.constant 0 : index
    %206 = vector.load %arg2[%c18, %c0_86, %c0_87] : memref<32x16x512xf32, #tpu.memory_space<vmem>>, vector<1x16x512xf32>
    %207 = vector.shape_cast %206 : vector<1x16x512xf32> to vector<16x512xf32>
    %208 = vector.extract_strided_slice %98 {offsets = [18, 0], sizes = [1, 512], strides = [1, 1]} : vector<32x512xf32> to vector<1x512xf32>
    %209 = vector.broadcast %208 : vector<1x512xf32> to vector<16x512xf32>
    %210 = arith.mulf %207, %209 : vector<16x512xf32>
    %211 = arith.addf %205, %210 : vector<16x512xf32>
    %c19 = arith.constant 19 : index
    %c0_88 = arith.constant 0 : index
    %c0_89 = arith.constant 0 : index
    %212 = vector.load %arg2[%c19, %c0_88, %c0_89] : memref<32x16x512xf32, #tpu.memory_space<vmem>>, vector<1x16x512xf32>
    %213 = vector.shape_cast %212 : vector<1x16x512xf32> to vector<16x512xf32>
    %214 = vector.extract_strided_slice %98 {offsets = [19, 0], sizes = [1, 512], strides = [1, 1]} : vector<32x512xf32> to vector<1x512xf32>
    %215 = vector.broadcast %214 : vector<1x512xf32> to vector<16x512xf32>
    %216 = arith.mulf %213, %215 : vector<16x512xf32>
    %217 = arith.addf %211, %216 : vector<16x512xf32>
    %c20 = arith.constant 20 : index
    %c0_90 = arith.constant 0 : index
    %c0_91 = arith.constant 0 : index
    %218 = vector.load %arg2[%c20, %c0_90, %c0_91] : memref<32x16x512xf32, #tpu.memory_space<vmem>>, vector<1x16x512xf32>
    %219 = vector.shape_cast %218 : vector<1x16x512xf32> to vector<16x512xf32>
    %220 = vector.extract_strided_slice %98 {offsets = [20, 0], sizes = [1, 512], strides = [1, 1]} : vector<32x512xf32> to vector<1x512xf32>
    %221 = vector.broadcast %220 : vector<1x512xf32> to vector<16x512xf32>
    %222 = arith.mulf %219, %221 : vector<16x512xf32>
    %223 = arith.addf %217, %222 : vector<16x512xf32>
    %c21 = arith.constant 21 : index
    %c0_92 = arith.constant 0 : index
    %c0_93 = arith.constant 0 : index
    %224 = vector.load %arg2[%c21, %c0_92, %c0_93] : memref<32x16x512xf32, #tpu.memory_space<vmem>>, vector<1x16x512xf32>
    %225 = vector.shape_cast %224 : vector<1x16x512xf32> to vector<16x512xf32>
    %226 = vector.extract_strided_slice %98 {offsets = [21, 0], sizes = [1, 512], strides = [1, 1]} : vector<32x512xf32> to vector<1x512xf32>
    %227 = vector.broadcast %226 : vector<1x512xf32> to vector<16x512xf32>
    %228 = arith.mulf %225, %227 : vector<16x512xf32>
    %229 = arith.addf %223, %228 : vector<16x512xf32>
    %c22 = arith.constant 22 : index
    %c0_94 = arith.constant 0 : index
    %c0_95 = arith.constant 0 : index
    %230 = vector.load %arg2[%c22, %c0_94, %c0_95] : memref<32x16x512xf32, #tpu.memory_space<vmem>>, vector<1x16x512xf32>
    %231 = vector.shape_cast %230 : vector<1x16x512xf32> to vector<16x512xf32>
    %232 = vector.extract_strided_slice %98 {offsets = [22, 0], sizes = [1, 512], strides = [1, 1]} : vector<32x512xf32> to vector<1x512xf32>
    %233 = vector.broadcast %232 : vector<1x512xf32> to vector<16x512xf32>
    %234 = arith.mulf %231, %233 : vector<16x512xf32>
    %235 = arith.addf %229, %234 : vector<16x512xf32>
    %c23 = arith.constant 23 : index
    %c0_96 = arith.constant 0 : index
    %c0_97 = arith.constant 0 : index
    %236 = vector.load %arg2[%c23, %c0_96, %c0_97] : memref<32x16x512xf32, #tpu.memory_space<vmem>>, vector<1x16x512xf32>
    %237 = vector.shape_cast %236 : vector<1x16x512xf32> to vector<16x512xf32>
    %238 = vector.extract_strided_slice %98 {offsets = [23, 0], sizes = [1, 512], strides = [1, 1]} : vector<32x512xf32> to vector<1x512xf32>
    %239 = vector.broadcast %238 : vector<1x512xf32> to vector<16x512xf32>
    %240 = arith.mulf %237, %239 : vector<16x512xf32>
    %241 = arith.addf %235, %240 : vector<16x512xf32>
    %c24 = arith.constant 24 : index
    %c0_98 = arith.constant 0 : index
    %c0_99 = arith.constant 0 : index
    %242 = vector.load %arg2[%c24, %c0_98, %c0_99] : memref<32x16x512xf32, #tpu.memory_space<vmem>>, vector<1x16x512xf32>
    %243 = vector.shape_cast %242 : vector<1x16x512xf32> to vector<16x512xf32>
    %244 = vector.extract_strided_slice %98 {offsets = [24, 0], sizes = [1, 512], strides = [1, 1]} : vector<32x512xf32> to vector<1x512xf32>
    %245 = vector.broadcast %244 : vector<1x512xf32> to vector<16x512xf32>
    %246 = arith.mulf %243, %245 : vector<16x512xf32>
    %247 = arith.addf %241, %246 : vector<16x512xf32>
    %c25 = arith.constant 25 : index
    %c0_100 = arith.constant 0 : index
    %c0_101 = arith.constant 0 : index
    %248 = vector.load %arg2[%c25, %c0_100, %c0_101] : memref<32x16x512xf32, #tpu.memory_space<vmem>>, vector<1x16x512xf32>
    %249 = vector.shape_cast %248 : vector<1x16x512xf32> to vector<16x512xf32>
    %250 = vector.extract_strided_slice %98 {offsets = [25, 0], sizes = [1, 512], strides = [1, 1]} : vector<32x512xf32> to vector<1x512xf32>
    %251 = vector.broadcast %250 : vector<1x512xf32> to vector<16x512xf32>
    %252 = arith.mulf %249, %251 : vector<16x512xf32>
    %253 = arith.addf %247, %252 : vector<16x512xf32>
    %c26 = arith.constant 26 : index
    %c0_102 = arith.constant 0 : index
    %c0_103 = arith.constant 0 : index
    %254 = vector.load %arg2[%c26, %c0_102, %c0_103] : memref<32x16x512xf32, #tpu.memory_space<vmem>>, vector<1x16x512xf32>
    %255 = vector.shape_cast %254 : vector<1x16x512xf32> to vector<16x512xf32>
    %256 = vector.extract_strided_slice %98 {offsets = [26, 0], sizes = [1, 512], strides = [1, 1]} : vector<32x512xf32> to vector<1x512xf32>
    %257 = vector.broadcast %256 : vector<1x512xf32> to vector<16x512xf32>
    %258 = arith.mulf %255, %257 : vector<16x512xf32>
    %259 = arith.addf %253, %258 : vector<16x512xf32>
    %c27 = arith.constant 27 : index
    %c0_104 = arith.constant 0 : index
    %c0_105 = arith.constant 0 : index
    %260 = vector.load %arg2[%c27, %c0_104, %c0_105] : memref<32x16x512xf32, #tpu.memory_space<vmem>>, vector<1x16x512xf32>
    %261 = vector.shape_cast %260 : vector<1x16x512xf32> to vector<16x512xf32>
    %262 = vector.extract_strided_slice %98 {offsets = [27, 0], sizes = [1, 512], strides = [1, 1]} : vector<32x512xf32> to vector<1x512xf32>
    %263 = vector.broadcast %262 : vector<1x512xf32> to vector<16x512xf32>
    %264 = arith.mulf %261, %263 : vector<16x512xf32>
    %265 = arith.addf %259, %264 : vector<16x512xf32>
    %c28 = arith.constant 28 : index
    %c0_106 = arith.constant 0 : index
    %c0_107 = arith.constant 0 : index
    %266 = vector.load %arg2[%c28, %c0_106, %c0_107] : memref<32x16x512xf32, #tpu.memory_space<vmem>>, vector<1x16x512xf32>
    %267 = vector.shape_cast %266 : vector<1x16x512xf32> to vector<16x512xf32>
    %268 = vector.extract_strided_slice %98 {offsets = [28, 0], sizes = [1, 512], strides = [1, 1]} : vector<32x512xf32> to vector<1x512xf32>
    %269 = vector.broadcast %268 : vector<1x512xf32> to vector<16x512xf32>
    %270 = arith.mulf %267, %269 : vector<16x512xf32>
    %271 = arith.addf %265, %270 : vector<16x512xf32>
    %c29 = arith.constant 29 : index
    %c0_108 = arith.constant 0 : index
    %c0_109 = arith.constant 0 : index
    %272 = vector.load %arg2[%c29, %c0_108, %c0_109] : memref<32x16x512xf32, #tpu.memory_space<vmem>>, vector<1x16x512xf32>
    %273 = vector.shape_cast %272 : vector<1x16x512xf32> to vector<16x512xf32>
    %274 = vector.extract_strided_slice %98 {offsets = [29, 0], sizes = [1, 512], strides = [1, 1]} : vector<32x512xf32> to vector<1x512xf32>
    %275 = vector.broadcast %274 : vector<1x512xf32> to vector<16x512xf32>
    %276 = arith.mulf %273, %275 : vector<16x512xf32>
    %277 = arith.addf %271, %276 : vector<16x512xf32>
    %c30 = arith.constant 30 : index
    %c0_110 = arith.constant 0 : index
    %c0_111 = arith.constant 0 : index
    %278 = vector.load %arg2[%c30, %c0_110, %c0_111] : memref<32x16x512xf32, #tpu.memory_space<vmem>>, vector<1x16x512xf32>
    %279 = vector.shape_cast %278 : vector<1x16x512xf32> to vector<16x512xf32>
    %280 = vector.extract_strided_slice %98 {offsets = [30, 0], sizes = [1, 512], strides = [1, 1]} : vector<32x512xf32> to vector<1x512xf32>
    %281 = vector.broadcast %280 : vector<1x512xf32> to vector<16x512xf32>
    %282 = arith.mulf %279, %281 : vector<16x512xf32>
    %283 = arith.addf %277, %282 : vector<16x512xf32>
    %c31 = arith.constant 31 : index
    %c0_112 = arith.constant 0 : index
    %c0_113 = arith.constant 0 : index
    %284 = vector.load %arg2[%c31, %c0_112, %c0_113] : memref<32x16x512xf32, #tpu.memory_space<vmem>>, vector<1x16x512xf32>
    %285 = vector.shape_cast %284 : vector<1x16x512xf32> to vector<16x512xf32>
    %286 = vector.extract_strided_slice %98 {offsets = [31, 0], sizes = [1, 512], strides = [1, 1]} : vector<32x512xf32> to vector<1x512xf32>
    %287 = vector.broadcast %286 : vector<1x512xf32> to vector<16x512xf32>
    %288 = arith.mulf %285, %287 : vector<16x512xf32>
    %289 = arith.addf %283, %288 : vector<16x512xf32>
    %290 = arith.mulf %3, %3 : vector<16x512xf32>
    %cst_114 = arith.constant dense<0.000000e+00> : vector<512xf32>
    %291 = vector.multi_reduction <add>, %290, %cst_114 [0] : vector<16x512xf32> to vector<512xf32>
    %292 = vector.shape_cast %291 : vector<512xf32> to vector<1x512xf32>
    %293 = arith.mulf %3, %289 : vector<16x512xf32>
    %cst_115 = arith.constant dense<0.000000e+00> : vector<512xf32>
    %294 = vector.multi_reduction <add>, %293, %cst_115 [0] : vector<16x512xf32> to vector<512xf32>
    %295 = vector.shape_cast %294 : vector<512xf32> to vector<1x512xf32>
    %cst_116 = arith.constant 1.000000e-30 : f32
    %296 = vector.broadcast %cst_116 : f32 to vector<1x512xf32>
    %297 = arith.maximumf %292, %296 : vector<1x512xf32>
    %298 = arith.divf %295, %297 : vector<1x512xf32>
    %cst_117 = arith.constant 9.99999968E-21 : f32
    %299 = vector.broadcast %cst_117 : f32 to vector<1x512xf32>
    %300 = arith.cmpf ogt, %298, %299 : vector<1x512xf32>
    %cst_118 = arith.constant 1.000000e-30 : f32
    %301 = vector.broadcast %cst_118 : f32 to vector<1x512xf32>
    %302 = arith.maximumf %298, %301 : vector<1x512xf32>
    %303 = math.rsqrt %302 : vector<1x512xf32>
    %cst_119 = arith.constant 0.899999976 : f32
    %304 = vector.broadcast %cst_119 : f32 to vector<1x512xf32>
    %305 = arith.mulf %304, %303 : vector<1x512xf32>
    %cst_120 = arith.constant 0.000000e+00 : f32
    %306 = vector.broadcast %cst_120 : f32 to vector<1x512xf32>
    %307 = arith.select %300, %305, %306 : vector<1x512xi1>, vector<1x512xf32>
    %cst_121 = arith.constant 0.000000e+00 : f32
    %308 = vector.broadcast %cst_121 : f32 to vector<16x512xf32>
    %cst_122 = arith.constant 0.000000e+00 : f32
    %309 = vector.broadcast %cst_122 : f32 to vector<32x512xf32>
    %c0_i32_123 = arith.constant 0 : i32
    %c2000_i32 = arith.constant 2000 : i32
    %310 = arith.addi %c0_i32_123, %c2000_i32 : i32
    %c1_i32_124 = arith.constant 1 : i32
    %311:3 = scf.for %arg5 = %c0_i32_123 to %310 step %c1_i32_124 iter_args(%arg6 = %308, %arg7 = %308, %arg8 = %309) -> (vector<16x512xf32>, vector<16x512xf32>, vector<32x512xf32>)  : i32 {
      %c0_127 = arith.constant 0 : index
      %c0_128 = arith.constant 0 : index
      %c0_129 = arith.constant 0 : index
      %313 = vector.load %arg1[%c0_127, %c0_128, %c0_129] : memref<16x32x512xf32, #tpu.memory_space<vmem>>, vector<1x32x512xf32>
      %314 = vector.shape_cast %313 : vector<1x32x512xf32> to vector<32x512xf32>
      %315 = vector.extract_strided_slice %arg7 {offsets = [0, 0], sizes = [1, 512], strides = [1, 1]} : vector<16x512xf32> to vector<1x512xf32>
      %316 = vector.broadcast %315 : vector<1x512xf32> to vector<32x512xf32>
      %317 = arith.mulf %314, %316 : vector<32x512xf32>
      %c1_130 = arith.constant 1 : index
      %c0_131 = arith.constant 0 : index
      %c0_132 = arith.constant 0 : index
      %318 = vector.load %arg1[%c1_130, %c0_131, %c0_132] : memref<16x32x512xf32, #tpu.memory_space<vmem>>, vector<1x32x512xf32>
      %319 = vector.shape_cast %318 : vector<1x32x512xf32> to vector<32x512xf32>
      %320 = vector.extract_strided_slice %arg7 {offsets = [1, 0], sizes = [1, 512], strides = [1, 1]} : vector<16x512xf32> to vector<1x512xf32>
      %321 = vector.broadcast %320 : vector<1x512xf32> to vector<32x512xf32>
      %322 = arith.mulf %319, %321 : vector<32x512xf32>
      %323 = arith.addf %317, %322 : vector<32x512xf32>
      %c2_133 = arith.constant 2 : index
      %c0_134 = arith.constant 0 : index
      %c0_135 = arith.constant 0 : index
      %324 = vector.load %arg1[%c2_133, %c0_134, %c0_135] : memref<16x32x512xf32, #tpu.memory_space<vmem>>, vector<1x32x512xf32>
      %325 = vector.shape_cast %324 : vector<1x32x512xf32> to vector<32x512xf32>
      %326 = vector.extract_strided_slice %arg7 {offsets = [2, 0], sizes = [1, 512], strides = [1, 1]} : vector<16x512xf32> to vector<1x512xf32>
      %327 = vector.broadcast %326 : vector<1x512xf32> to vector<32x512xf32>
      %328 = arith.mulf %325, %327 : vector<32x512xf32>
      %329 = arith.addf %323, %328 : vector<32x512xf32>
      %c3_136 = arith.constant 3 : index
      %c0_137 = arith.constant 0 : index
      %c0_138 = arith.constant 0 : index
      %330 = vector.load %arg1[%c3_136, %c0_137, %c0_138] : memref<16x32x512xf32, #tpu.memory_space<vmem>>, vector<1x32x512xf32>
      %331 = vector.shape_cast %330 : vector<1x32x512xf32> to vector<32x512xf32>
      %332 = vector.extract_strided_slice %arg7 {offsets = [3, 0], sizes = [1, 512], strides = [1, 1]} : vector<16x512xf32> to vector<1x512xf32>
      %333 = vector.broadcast %332 : vector<1x512xf32> to vector<32x512xf32>
      %334 = arith.mulf %331, %333 : vector<32x512xf32>
      %335 = arith.addf %329, %334 : vector<32x512xf32>
      %c4_139 = arith.constant 4 : index
      %c0_140 = arith.constant 0 : index
      %c0_141 = arith.constant 0 : index
      %336 = vector.load %arg1[%c4_139, %c0_140, %c0_141] : memref<16x32x512xf32, #tpu.memory_space<vmem>>, vector<1x32x512xf32>
      %337 = vector.shape_cast %336 : vector<1x32x512xf32> to vector<32x512xf32>
      %338 = vector.extract_strided_slice %arg7 {offsets = [4, 0], sizes = [1, 512], strides = [1, 1]} : vector<16x512xf32> to vector<1x512xf32>
      %339 = vector.broadcast %338 : vector<1x512xf32> to vector<32x512xf32>
      %340 = arith.mulf %337, %339 : vector<32x512xf32>
      %341 = arith.addf %335, %340 : vector<32x512xf32>
      %c5_142 = arith.constant 5 : index
      %c0_143 = arith.constant 0 : index
      %c0_144 = arith.constant 0 : index
      %342 = vector.load %arg1[%c5_142, %c0_143, %c0_144] : memref<16x32x512xf32, #tpu.memory_space<vmem>>, vector<1x32x512xf32>
      %343 = vector.shape_cast %342 : vector<1x32x512xf32> to vector<32x512xf32>
      %344 = vector.extract_strided_slice %arg7 {offsets = [5, 0], sizes = [1, 512], strides = [1, 1]} : vector<16x512xf32> to vector<1x512xf32>
      %345 = vector.broadcast %344 : vector<1x512xf32> to vector<32x512xf32>
      %346 = arith.mulf %343, %345 : vector<32x512xf32>
      %347 = arith.addf %341, %346 : vector<32x512xf32>
      %c6_145 = arith.constant 6 : index
      %c0_146 = arith.constant 0 : index
      %c0_147 = arith.constant 0 : index
      %348 = vector.load %arg1[%c6_145, %c0_146, %c0_147] : memref<16x32x512xf32, #tpu.memory_space<vmem>>, vector<1x32x512xf32>
      %349 = vector.shape_cast %348 : vector<1x32x512xf32> to vector<32x512xf32>
      %350 = vector.extract_strided_slice %arg7 {offsets = [6, 0], sizes = [1, 512], strides = [1, 1]} : vector<16x512xf32> to vector<1x512xf32>
      %351 = vector.broadcast %350 : vector<1x512xf32> to vector<32x512xf32>
      %352 = arith.mulf %349, %351 : vector<32x512xf32>
      %353 = arith.addf %347, %352 : vector<32x512xf32>
      %c7_148 = arith.constant 7 : index
      %c0_149 = arith.constant 0 : index
      %c0_150 = arith.constant 0 : index
      %354 = vector.load %arg1[%c7_148, %c0_149, %c0_150] : memref<16x32x512xf32, #tpu.memory_space<vmem>>, vector<1x32x512xf32>
      %355 = vector.shape_cast %354 : vector<1x32x512xf32> to vector<32x512xf32>
      %356 = vector.extract_strided_slice %arg7 {offsets = [7, 0], sizes = [1, 512], strides = [1, 1]} : vector<16x512xf32> to vector<1x512xf32>
      %357 = vector.broadcast %356 : vector<1x512xf32> to vector<32x512xf32>
      %358 = arith.mulf %355, %357 : vector<32x512xf32>
      %359 = arith.addf %353, %358 : vector<32x512xf32>
      %c8_151 = arith.constant 8 : index
      %c0_152 = arith.constant 0 : index
      %c0_153 = arith.constant 0 : index
      %360 = vector.load %arg1[%c8_151, %c0_152, %c0_153] : memref<16x32x512xf32, #tpu.memory_space<vmem>>, vector<1x32x512xf32>
      %361 = vector.shape_cast %360 : vector<1x32x512xf32> to vector<32x512xf32>
      %362 = vector.extract_strided_slice %arg7 {offsets = [8, 0], sizes = [1, 512], strides = [1, 1]} : vector<16x512xf32> to vector<1x512xf32>
      %363 = vector.broadcast %362 : vector<1x512xf32> to vector<32x512xf32>
      %364 = arith.mulf %361, %363 : vector<32x512xf32>
      %365 = arith.addf %359, %364 : vector<32x512xf32>
      %c9_154 = arith.constant 9 : index
      %c0_155 = arith.constant 0 : index
      %c0_156 = arith.constant 0 : index
      %366 = vector.load %arg1[%c9_154, %c0_155, %c0_156] : memref<16x32x512xf32, #tpu.memory_space<vmem>>, vector<1x32x512xf32>
      %367 = vector.shape_cast %366 : vector<1x32x512xf32> to vector<32x512xf32>
      %368 = vector.extract_strided_slice %arg7 {offsets = [9, 0], sizes = [1, 512], strides = [1, 1]} : vector<16x512xf32> to vector<1x512xf32>
      %369 = vector.broadcast %368 : vector<1x512xf32> to vector<32x512xf32>
      %370 = arith.mulf %367, %369 : vector<32x512xf32>
      %371 = arith.addf %365, %370 : vector<32x512xf32>
      %c10_157 = arith.constant 10 : index
      %c0_158 = arith.constant 0 : index
      %c0_159 = arith.constant 0 : index
      %372 = vector.load %arg1[%c10_157, %c0_158, %c0_159] : memref<16x32x512xf32, #tpu.memory_space<vmem>>, vector<1x32x512xf32>
      %373 = vector.shape_cast %372 : vector<1x32x512xf32> to vector<32x512xf32>
      %374 = vector.extract_strided_slice %arg7 {offsets = [10, 0], sizes = [1, 512], strides = [1, 1]} : vector<16x512xf32> to vector<1x512xf32>
      %375 = vector.broadcast %374 : vector<1x512xf32> to vector<32x512xf32>
      %376 = arith.mulf %373, %375 : vector<32x512xf32>
      %377 = arith.addf %371, %376 : vector<32x512xf32>
      %c11_160 = arith.constant 11 : index
      %c0_161 = arith.constant 0 : index
      %c0_162 = arith.constant 0 : index
      %378 = vector.load %arg1[%c11_160, %c0_161, %c0_162] : memref<16x32x512xf32, #tpu.memory_space<vmem>>, vector<1x32x512xf32>
      %379 = vector.shape_cast %378 : vector<1x32x512xf32> to vector<32x512xf32>
      %380 = vector.extract_strided_slice %arg7 {offsets = [11, 0], sizes = [1, 512], strides = [1, 1]} : vector<16x512xf32> to vector<1x512xf32>
      %381 = vector.broadcast %380 : vector<1x512xf32> to vector<32x512xf32>
      %382 = arith.mulf %379, %381 : vector<32x512xf32>
      %383 = arith.addf %377, %382 : vector<32x512xf32>
      %c12_163 = arith.constant 12 : index
      %c0_164 = arith.constant 0 : index
      %c0_165 = arith.constant 0 : index
      %384 = vector.load %arg1[%c12_163, %c0_164, %c0_165] : memref<16x32x512xf32, #tpu.memory_space<vmem>>, vector<1x32x512xf32>
      %385 = vector.shape_cast %384 : vector<1x32x512xf32> to vector<32x512xf32>
      %386 = vector.extract_strided_slice %arg7 {offsets = [12, 0], sizes = [1, 512], strides = [1, 1]} : vector<16x512xf32> to vector<1x512xf32>
      %387 = vector.broadcast %386 : vector<1x512xf32> to vector<32x512xf32>
      %388 = arith.mulf %385, %387 : vector<32x512xf32>
      %389 = arith.addf %383, %388 : vector<32x512xf32>
      %c13_166 = arith.constant 13 : index
      %c0_167 = arith.constant 0 : index
      %c0_168 = arith.constant 0 : index
      %390 = vector.load %arg1[%c13_166, %c0_167, %c0_168] : memref<16x32x512xf32, #tpu.memory_space<vmem>>, vector<1x32x512xf32>
      %391 = vector.shape_cast %390 : vector<1x32x512xf32> to vector<32x512xf32>
      %392 = vector.extract_strided_slice %arg7 {offsets = [13, 0], sizes = [1, 512], strides = [1, 1]} : vector<16x512xf32> to vector<1x512xf32>
      %393 = vector.broadcast %392 : vector<1x512xf32> to vector<32x512xf32>
      %394 = arith.mulf %391, %393 : vector<32x512xf32>
      %395 = arith.addf %389, %394 : vector<32x512xf32>
      %c14_169 = arith.constant 14 : index
      %c0_170 = arith.constant 0 : index
      %c0_171 = arith.constant 0 : index
      %396 = vector.load %arg1[%c14_169, %c0_170, %c0_171] : memref<16x32x512xf32, #tpu.memory_space<vmem>>, vector<1x32x512xf32>
      %397 = vector.shape_cast %396 : vector<1x32x512xf32> to vector<32x512xf32>
      %398 = vector.extract_strided_slice %arg7 {offsets = [14, 0], sizes = [1, 512], strides = [1, 1]} : vector<16x512xf32> to vector<1x512xf32>
      %399 = vector.broadcast %398 : vector<1x512xf32> to vector<32x512xf32>
      %400 = arith.mulf %397, %399 : vector<32x512xf32>
      %401 = arith.addf %395, %400 : vector<32x512xf32>
      %c15_172 = arith.constant 15 : index
      %c0_173 = arith.constant 0 : index
      %c0_174 = arith.constant 0 : index
      %402 = vector.load %arg1[%c15_172, %c0_173, %c0_174] : memref<16x32x512xf32, #tpu.memory_space<vmem>>, vector<1x32x512xf32>
      %403 = vector.shape_cast %402 : vector<1x32x512xf32> to vector<32x512xf32>
      %404 = vector.extract_strided_slice %arg7 {offsets = [15, 0], sizes = [1, 512], strides = [1, 1]} : vector<16x512xf32> to vector<1x512xf32>
      %405 = vector.broadcast %404 : vector<1x512xf32> to vector<32x512xf32>
      %406 = arith.mulf %403, %405 : vector<32x512xf32>
      %407 = arith.addf %401, %406 : vector<32x512xf32>
      %408 = arith.subf %407, %0 : vector<32x512xf32>
      %409 = vector.broadcast %307 : vector<1x512xf32> to vector<32x512xf32>
      %410 = arith.mulf %409, %408 : vector<32x512xf32>
      %411 = arith.addf %arg8, %410 : vector<32x512xf32>
      %cst_175 = arith.constant -5.000000e-01 : f32
      %cst_176 = arith.constant 5.000000e-01 : f32
      %412 = vector.broadcast %cst_175 : f32 to vector<32x512xf32>
      %413 = arith.maximumf %412, %411 : vector<32x512xf32>
      %414 = vector.broadcast %cst_176 : f32 to vector<32x512xf32>
      %415 = arith.minimumf %414, %413 : vector<32x512xf32>
      %c0_177 = arith.constant 0 : index
      %c0_178 = arith.constant 0 : index
      %c0_179 = arith.constant 0 : index
      %416 = vector.load %arg2[%c0_177, %c0_178, %c0_179] : memref<32x16x512xf32, #tpu.memory_space<vmem>>, vector<1x16x512xf32>
      %417 = vector.shape_cast %416 : vector<1x16x512xf32> to vector<16x512xf32>
      %418 = vector.extract_strided_slice %415 {offsets = [0, 0], sizes = [1, 512], strides = [1, 1]} : vector<32x512xf32> to vector<1x512xf32>
      %419 = vector.broadcast %418 : vector<1x512xf32> to vector<16x512xf32>
      %420 = arith.mulf %417, %419 : vector<16x512xf32>
      %c1_180 = arith.constant 1 : index
      %c0_181 = arith.constant 0 : index
      %c0_182 = arith.constant 0 : index
      %421 = vector.load %arg2[%c1_180, %c0_181, %c0_182] : memref<32x16x512xf32, #tpu.memory_space<vmem>>, vector<1x16x512xf32>
      %422 = vector.shape_cast %421 : vector<1x16x512xf32> to vector<16x512xf32>
      %423 = vector.extract_strided_slice %415 {offsets = [1, 0], sizes = [1, 512], strides = [1, 1]} : vector<32x512xf32> to vector<1x512xf32>
      %424 = vector.broadcast %423 : vector<1x512xf32> to vector<16x512xf32>
      %425 = arith.mulf %422, %424 : vector<16x512xf32>
      %426 = arith.addf %420, %425 : vector<16x512xf32>
      %c2_183 = arith.constant 2 : index
      %c0_184 = arith.constant 0 : index
      %c0_185 = arith.constant 0 : index
      %427 = vector.load %arg2[%c2_183, %c0_184, %c0_185] : memref<32x16x512xf32, #tpu.memory_space<vmem>>, vector<1x16x512xf32>
      %428 = vector.shape_cast %427 : vector<1x16x512xf32> to vector<16x512xf32>
      %429 = vector.extract_strided_slice %415 {offsets = [2, 0], sizes = [1, 512], strides = [1, 1]} : vector<32x512xf32> to vector<1x512xf32>
      %430 = vector.broadcast %429 : vector<1x512xf32> to vector<16x512xf32>
      %431 = arith.mulf %428, %430 : vector<16x512xf32>
      %432 = arith.addf %426, %431 : vector<16x512xf32>
      %c3_186 = arith.constant 3 : index
      %c0_187 = arith.constant 0 : index
      %c0_188 = arith.constant 0 : index
      %433 = vector.load %arg2[%c3_186, %c0_187, %c0_188] : memref<32x16x512xf32, #tpu.memory_space<vmem>>, vector<1x16x512xf32>
      %434 = vector.shape_cast %433 : vector<1x16x512xf32> to vector<16x512xf32>
      %435 = vector.extract_strided_slice %415 {offsets = [3, 0], sizes = [1, 512], strides = [1, 1]} : vector<32x512xf32> to vector<1x512xf32>
      %436 = vector.broadcast %435 : vector<1x512xf32> to vector<16x512xf32>
      %437 = arith.mulf %434, %436 : vector<16x512xf32>
      %438 = arith.addf %432, %437 : vector<16x512xf32>
      %c4_189 = arith.constant 4 : index
      %c0_190 = arith.constant 0 : index
      %c0_191 = arith.constant 0 : index
      %439 = vector.load %arg2[%c4_189, %c0_190, %c0_191] : memref<32x16x512xf32, #tpu.memory_space<vmem>>, vector<1x16x512xf32>
      %440 = vector.shape_cast %439 : vector<1x16x512xf32> to vector<16x512xf32>
      %441 = vector.extract_strided_slice %415 {offsets = [4, 0], sizes = [1, 512], strides = [1, 1]} : vector<32x512xf32> to vector<1x512xf32>
      %442 = vector.broadcast %441 : vector<1x512xf32> to vector<16x512xf32>
      %443 = arith.mulf %440, %442 : vector<16x512xf32>
      %444 = arith.addf %438, %443 : vector<16x512xf32>
      %c5_192 = arith.constant 5 : index
      %c0_193 = arith.constant 0 : index
      %c0_194 = arith.constant 0 : index
      %445 = vector.load %arg2[%c5_192, %c0_193, %c0_194] : memref<32x16x512xf32, #tpu.memory_space<vmem>>, vector<1x16x512xf32>
      %446 = vector.shape_cast %445 : vector<1x16x512xf32> to vector<16x512xf32>
      %447 = vector.extract_strided_slice %415 {offsets = [5, 0], sizes = [1, 512], strides = [1, 1]} : vector<32x512xf32> to vector<1x512xf32>
      %448 = vector.broadcast %447 : vector<1x512xf32> to vector<16x512xf32>
      %449 = arith.mulf %446, %448 : vector<16x512xf32>
      %450 = arith.addf %444, %449 : vector<16x512xf32>
      %c6_195 = arith.constant 6 : index
      %c0_196 = arith.constant 0 : index
      %c0_197 = arith.constant 0 : index
      %451 = vector.load %arg2[%c6_195, %c0_196, %c0_197] : memref<32x16x512xf32, #tpu.memory_space<vmem>>, vector<1x16x512xf32>
      %452 = vector.shape_cast %451 : vector<1x16x512xf32> to vector<16x512xf32>
      %453 = vector.extract_strided_slice %415 {offsets = [6, 0], sizes = [1, 512], strides = [1, 1]} : vector<32x512xf32> to vector<1x512xf32>
      %454 = vector.broadcast %453 : vector<1x512xf32> to vector<16x512xf32>
      %455 = arith.mulf %452, %454 : vector<16x512xf32>
      %456 = arith.addf %450, %455 : vector<16x512xf32>
      %c7_198 = arith.constant 7 : index
      %c0_199 = arith.constant 0 : index
      %c0_200 = arith.constant 0 : index
      %457 = vector.load %arg2[%c7_198, %c0_199, %c0_200] : memref<32x16x512xf32, #tpu.memory_space<vmem>>, vector<1x16x512xf32>
      %458 = vector.shape_cast %457 : vector<1x16x512xf32> to vector<16x512xf32>
      %459 = vector.extract_strided_slice %415 {offsets = [7, 0], sizes = [1, 512], strides = [1, 1]} : vector<32x512xf32> to vector<1x512xf32>
      %460 = vector.broadcast %459 : vector<1x512xf32> to vector<16x512xf32>
      %461 = arith.mulf %458, %460 : vector<16x512xf32>
      %462 = arith.addf %456, %461 : vector<16x512xf32>
      %c8_201 = arith.constant 8 : index
      %c0_202 = arith.constant 0 : index
      %c0_203 = arith.constant 0 : index
      %463 = vector.load %arg2[%c8_201, %c0_202, %c0_203] : memref<32x16x512xf32, #tpu.memory_space<vmem>>, vector<1x16x512xf32>
      %464 = vector.shape_cast %463 : vector<1x16x512xf32> to vector<16x512xf32>
      %465 = vector.extract_strided_slice %415 {offsets = [8, 0], sizes = [1, 512], strides = [1, 1]} : vector<32x512xf32> to vector<1x512xf32>
      %466 = vector.broadcast %465 : vector<1x512xf32> to vector<16x512xf32>
      %467 = arith.mulf %464, %466 : vector<16x512xf32>
      %468 = arith.addf %462, %467 : vector<16x512xf32>
      %c9_204 = arith.constant 9 : index
      %c0_205 = arith.constant 0 : index
      %c0_206 = arith.constant 0 : index
      %469 = vector.load %arg2[%c9_204, %c0_205, %c0_206] : memref<32x16x512xf32, #tpu.memory_space<vmem>>, vector<1x16x512xf32>
      %470 = vector.shape_cast %469 : vector<1x16x512xf32> to vector<16x512xf32>
      %471 = vector.extract_strided_slice %415 {offsets = [9, 0], sizes = [1, 512], strides = [1, 1]} : vector<32x512xf32> to vector<1x512xf32>
      %472 = vector.broadcast %471 : vector<1x512xf32> to vector<16x512xf32>
      %473 = arith.mulf %470, %472 : vector<16x512xf32>
      %474 = arith.addf %468, %473 : vector<16x512xf32>
      %c10_207 = arith.constant 10 : index
      %c0_208 = arith.constant 0 : index
      %c0_209 = arith.constant 0 : index
      %475 = vector.load %arg2[%c10_207, %c0_208, %c0_209] : memref<32x16x512xf32, #tpu.memory_space<vmem>>, vector<1x16x512xf32>
      %476 = vector.shape_cast %475 : vector<1x16x512xf32> to vector<16x512xf32>
      %477 = vector.extract_strided_slice %415 {offsets = [10, 0], sizes = [1, 512], strides = [1, 1]} : vector<32x512xf32> to vector<1x512xf32>
      %478 = vector.broadcast %477 : vector<1x512xf32> to vector<16x512xf32>
      %479 = arith.mulf %476, %478 : vector<16x512xf32>
      %480 = arith.addf %474, %479 : vector<16x512xf32>
      %c11_210 = arith.constant 11 : index
      %c0_211 = arith.constant 0 : index
      %c0_212 = arith.constant 0 : index
      %481 = vector.load %arg2[%c11_210, %c0_211, %c0_212] : memref<32x16x512xf32, #tpu.memory_space<vmem>>, vector<1x16x512xf32>
      %482 = vector.shape_cast %481 : vector<1x16x512xf32> to vector<16x512xf32>
      %483 = vector.extract_strided_slice %415 {offsets = [11, 0], sizes = [1, 512], strides = [1, 1]} : vector<32x512xf32> to vector<1x512xf32>
      %484 = vector.broadcast %483 : vector<1x512xf32> to vector<16x512xf32>
      %485 = arith.mulf %482, %484 : vector<16x512xf32>
      %486 = arith.addf %480, %485 : vector<16x512xf32>
      %c12_213 = arith.constant 12 : index
      %c0_214 = arith.constant 0 : index
      %c0_215 = arith.constant 0 : index
      %487 = vector.load %arg2[%c12_213, %c0_214, %c0_215] : memref<32x16x512xf32, #tpu.memory_space<vmem>>, vector<1x16x512xf32>
      %488 = vector.shape_cast %487 : vector<1x16x512xf32> to vector<16x512xf32>
      %489 = vector.extract_strided_slice %415 {offsets = [12, 0], sizes = [1, 512], strides = [1, 1]} : vector<32x512xf32> to vector<1x512xf32>
      %490 = vector.broadcast %489 : vector<1x512xf32> to vector<16x512xf32>
      %491 = arith.mulf %488, %490 : vector<16x512xf32>
      %492 = arith.addf %486, %491 : vector<16x512xf32>
      %c13_216 = arith.constant 13 : index
      %c0_217 = arith.constant 0 : index
      %c0_218 = arith.constant 0 : index
      %493 = vector.load %arg2[%c13_216, %c0_217, %c0_218] : memref<32x16x512xf32, #tpu.memory_space<vmem>>, vector<1x16x512xf32>
      %494 = vector.shape_cast %493 : vector<1x16x512xf32> to vector<16x512xf32>
      %495 = vector.extract_strided_slice %415 {offsets = [13, 0], sizes = [1, 512], strides = [1, 1]} : vector<32x512xf32> to vector<1x512xf32>
      %496 = vector.broadcast %495 : vector<1x512xf32> to vector<16x512xf32>
      %497 = arith.mulf %494, %496 : vector<16x512xf32>
      %498 = arith.addf %492, %497 : vector<16x512xf32>
      %c14_219 = arith.constant 14 : index
      %c0_220 = arith.constant 0 : index
      %c0_221 = arith.constant 0 : index
      %499 = vector.load %arg2[%c14_219, %c0_220, %c0_221] : memref<32x16x512xf32, #tpu.memory_space<vmem>>, vector<1x16x512xf32>
      %500 = vector.shape_cast %499 : vector<1x16x512xf32> to vector<16x512xf32>
      %501 = vector.extract_strided_slice %415 {offsets = [14, 0], sizes = [1, 512], strides = [1, 1]} : vector<32x512xf32> to vector<1x512xf32>
      %502 = vector.broadcast %501 : vector<1x512xf32> to vector<16x512xf32>
      %503 = arith.mulf %500, %502 : vector<16x512xf32>
      %504 = arith.addf %498, %503 : vector<16x512xf32>
      %c15_222 = arith.constant 15 : index
      %c0_223 = arith.constant 0 : index
      %c0_224 = arith.constant 0 : index
      %505 = vector.load %arg2[%c15_222, %c0_223, %c0_224] : memref<32x16x512xf32, #tpu.memory_space<vmem>>, vector<1x16x512xf32>
      %506 = vector.shape_cast %505 : vector<1x16x512xf32> to vector<16x512xf32>
      %507 = vector.extract_strided_slice %415 {offsets = [15, 0], sizes = [1, 512], strides = [1, 1]} : vector<32x512xf32> to vector<1x512xf32>
      %508 = vector.broadcast %507 : vector<1x512xf32> to vector<16x512xf32>
      %509 = arith.mulf %506, %508 : vector<16x512xf32>
      %510 = arith.addf %504, %509 : vector<16x512xf32>
      %c16_225 = arith.constant 16 : index
      %c0_226 = arith.constant 0 : index
      %c0_227 = arith.constant 0 : index
      %511 = vector.load %arg2[%c16_225, %c0_226, %c0_227] : memref<32x16x512xf32, #tpu.memory_space<vmem>>, vector<1x16x512xf32>
      %512 = vector.shape_cast %511 : vector<1x16x512xf32> to vector<16x512xf32>
      %513 = vector.extract_strided_slice %415 {offsets = [16, 0], sizes = [1, 512], strides = [1, 1]} : vector<32x512xf32> to vector<1x512xf32>
      %514 = vector.broadcast %513 : vector<1x512xf32> to vector<16x512xf32>
      %515 = arith.mulf %512, %514 : vector<16x512xf32>
      %516 = arith.addf %510, %515 : vector<16x512xf32>
      %c17_228 = arith.constant 17 : index
      %c0_229 = arith.constant 0 : index
      %c0_230 = arith.constant 0 : index
      %517 = vector.load %arg2[%c17_228, %c0_229, %c0_230] : memref<32x16x512xf32, #tpu.memory_space<vmem>>, vector<1x16x512xf32>
      %518 = vector.shape_cast %517 : vector<1x16x512xf32> to vector<16x512xf32>
      %519 = vector.extract_strided_slice %415 {offsets = [17, 0], sizes = [1, 512], strides = [1, 1]} : vector<32x512xf32> to vector<1x512xf32>
      %520 = vector.broadcast %519 : vector<1x512xf32> to vector<16x512xf32>
      %521 = arith.mulf %518, %520 : vector<16x512xf32>
      %522 = arith.addf %516, %521 : vector<16x512xf32>
      %c18_231 = arith.constant 18 : index
      %c0_232 = arith.constant 0 : index
      %c0_233 = arith.constant 0 : index
      %523 = vector.load %arg2[%c18_231, %c0_232, %c0_233] : memref<32x16x512xf32, #tpu.memory_space<vmem>>, vector<1x16x512xf32>
      %524 = vector.shape_cast %523 : vector<1x16x512xf32> to vector<16x512xf32>
      %525 = vector.extract_strided_slice %415 {offsets = [18, 0], sizes = [1, 512], strides = [1, 1]} : vector<32x512xf32> to vector<1x512xf32>
      %526 = vector.broadcast %525 : vector<1x512xf32> to vector<16x512xf32>
      %527 = arith.mulf %524, %526 : vector<16x512xf32>
      %528 = arith.addf %522, %527 : vector<16x512xf32>
      %c19_234 = arith.constant 19 : index
      %c0_235 = arith.constant 0 : index
      %c0_236 = arith.constant 0 : index
      %529 = vector.load %arg2[%c19_234, %c0_235, %c0_236] : memref<32x16x512xf32, #tpu.memory_space<vmem>>, vector<1x16x512xf32>
      %530 = vector.shape_cast %529 : vector<1x16x512xf32> to vector<16x512xf32>
      %531 = vector.extract_strided_slice %415 {offsets = [19, 0], sizes = [1, 512], strides = [1, 1]} : vector<32x512xf32> to vector<1x512xf32>
      %532 = vector.broadcast %531 : vector<1x512xf32> to vector<16x512xf32>
      %533 = arith.mulf %530, %532 : vector<16x512xf32>
      %534 = arith.addf %528, %533 : vector<16x512xf32>
      %c20_237 = arith.constant 20 : index
      %c0_238 = arith.constant 0 : index
      %c0_239 = arith.constant 0 : index
      %535 = vector.load %arg2[%c20_237, %c0_238, %c0_239] : memref<32x16x512xf32, #tpu.memory_space<vmem>>, vector<1x16x512xf32>
      %536 = vector.shape_cast %535 : vector<1x16x512xf32> to vector<16x512xf32>
      %537 = vector.extract_strided_slice %415 {offsets = [20, 0], sizes = [1, 512], strides = [1, 1]} : vector<32x512xf32> to vector<1x512xf32>
      %538 = vector.broadcast %537 : vector<1x512xf32> to vector<16x512xf32>
      %539 = arith.mulf %536, %538 : vector<16x512xf32>
      %540 = arith.addf %534, %539 : vector<16x512xf32>
      %c21_240 = arith.constant 21 : index
      %c0_241 = arith.constant 0 : index
      %c0_242 = arith.constant 0 : index
      %541 = vector.load %arg2[%c21_240, %c0_241, %c0_242] : memref<32x16x512xf32, #tpu.memory_space<vmem>>, vector<1x16x512xf32>
      %542 = vector.shape_cast %541 : vector<1x16x512xf32> to vector<16x512xf32>
      %543 = vector.extract_strided_slice %415 {offsets = [21, 0], sizes = [1, 512], strides = [1, 1]} : vector<32x512xf32> to vector<1x512xf32>
      %544 = vector.broadcast %543 : vector<1x512xf32> to vector<16x512xf32>
      %545 = arith.mulf %542, %544 : vector<16x512xf32>
      %546 = arith.addf %540, %545 : vector<16x512xf32>
      %c22_243 = arith.constant 22 : index
      %c0_244 = arith.constant 0 : index
      %c0_245 = arith.constant 0 : index
      %547 = vector.load %arg2[%c22_243, %c0_244, %c0_245] : memref<32x16x512xf32, #tpu.memory_space<vmem>>, vector<1x16x512xf32>
      %548 = vector.shape_cast %547 : vector<1x16x512xf32> to vector<16x512xf32>
      %549 = vector.extract_strided_slice %415 {offsets = [22, 0], sizes = [1, 512], strides = [1, 1]} : vector<32x512xf32> to vector<1x512xf32>
      %550 = vector.broadcast %549 : vector<1x512xf32> to vector<16x512xf32>
      %551 = arith.mulf %548, %550 : vector<16x512xf32>
      %552 = arith.addf %546, %551 : vector<16x512xf32>
      %c23_246 = arith.constant 23 : index
      %c0_247 = arith.constant 0 : index
      %c0_248 = arith.constant 0 : index
      %553 = vector.load %arg2[%c23_246, %c0_247, %c0_248] : memref<32x16x512xf32, #tpu.memory_space<vmem>>, vector<1x16x512xf32>
      %554 = vector.shape_cast %553 : vector<1x16x512xf32> to vector<16x512xf32>
      %555 = vector.extract_strided_slice %415 {offsets = [23, 0], sizes = [1, 512], strides = [1, 1]} : vector<32x512xf32> to vector<1x512xf32>
      %556 = vector.broadcast %555 : vector<1x512xf32> to vector<16x512xf32>
      %557 = arith.mulf %554, %556 : vector<16x512xf32>
      %558 = arith.addf %552, %557 : vector<16x512xf32>
      %c24_249 = arith.constant 24 : index
      %c0_250 = arith.constant 0 : index
      %c0_251 = arith.constant 0 : index
      %559 = vector.load %arg2[%c24_249, %c0_250, %c0_251] : memref<32x16x512xf32, #tpu.memory_space<vmem>>, vector<1x16x512xf32>
      %560 = vector.shape_cast %559 : vector<1x16x512xf32> to vector<16x512xf32>
      %561 = vector.extract_strided_slice %415 {offsets = [24, 0], sizes = [1, 512], strides = [1, 1]} : vector<32x512xf32> to vector<1x512xf32>
      %562 = vector.broadcast %561 : vector<1x512xf32> to vector<16x512xf32>
      %563 = arith.mulf %560, %562 : vector<16x512xf32>
      %564 = arith.addf %558, %563 : vector<16x512xf32>
      %c25_252 = arith.constant 25 : index
      %c0_253 = arith.constant 0 : index
      %c0_254 = arith.constant 0 : index
      %565 = vector.load %arg2[%c25_252, %c0_253, %c0_254] : memref<32x16x512xf32, #tpu.memory_space<vmem>>, vector<1x16x512xf32>
      %566 = vector.shape_cast %565 : vector<1x16x512xf32> to vector<16x512xf32>
      %567 = vector.extract_strided_slice %415 {offsets = [25, 0], sizes = [1, 512], strides = [1, 1]} : vector<32x512xf32> to vector<1x512xf32>
      %568 = vector.broadcast %567 : vector<1x512xf32> to vector<16x512xf32>
      %569 = arith.mulf %566, %568 : vector<16x512xf32>
      %570 = arith.addf %564, %569 : vector<16x512xf32>
      %c26_255 = arith.constant 26 : index
      %c0_256 = arith.constant 0 : index
      %c0_257 = arith.constant 0 : index
      %571 = vector.load %arg2[%c26_255, %c0_256, %c0_257] : memref<32x16x512xf32, #tpu.memory_space<vmem>>, vector<1x16x512xf32>
      %572 = vector.shape_cast %571 : vector<1x16x512xf32> to vector<16x512xf32>
      %573 = vector.extract_strided_slice %415 {offsets = [26, 0], sizes = [1, 512], strides = [1, 1]} : vector<32x512xf32> to vector<1x512xf32>
      %574 = vector.broadcast %573 : vector<1x512xf32> to vector<16x512xf32>
      %575 = arith.mulf %572, %574 : vector<16x512xf32>
      %576 = arith.addf %570, %575 : vector<16x512xf32>
      %c27_258 = arith.constant 27 : index
      %c0_259 = arith.constant 0 : index
      %c0_260 = arith.constant 0 : index
      %577 = vector.load %arg2[%c27_258, %c0_259, %c0_260] : memref<32x16x512xf32, #tpu.memory_space<vmem>>, vector<1x16x512xf32>
      %578 = vector.shape_cast %577 : vector<1x16x512xf32> to vector<16x512xf32>
      %579 = vector.extract_strided_slice %415 {offsets = [27, 0], sizes = [1, 512], strides = [1, 1]} : vector<32x512xf32> to vector<1x512xf32>
      %580 = vector.broadcast %579 : vector<1x512xf32> to vector<16x512xf32>
      %581 = arith.mulf %578, %580 : vector<16x512xf32>
      %582 = arith.addf %576, %581 : vector<16x512xf32>
      %c28_261 = arith.constant 28 : index
      %c0_262 = arith.constant 0 : index
      %c0_263 = arith.constant 0 : index
      %583 = vector.load %arg2[%c28_261, %c0_262, %c0_263] : memref<32x16x512xf32, #tpu.memory_space<vmem>>, vector<1x16x512xf32>
      %584 = vector.shape_cast %583 : vector<1x16x512xf32> to vector<16x512xf32>
      %585 = vector.extract_strided_slice %415 {offsets = [28, 0], sizes = [1, 512], strides = [1, 1]} : vector<32x512xf32> to vector<1x512xf32>
      %586 = vector.broadcast %585 : vector<1x512xf32> to vector<16x512xf32>
      %587 = arith.mulf %584, %586 : vector<16x512xf32>
      %588 = arith.addf %582, %587 : vector<16x512xf32>
      %c29_264 = arith.constant 29 : index
      %c0_265 = arith.constant 0 : index
      %c0_266 = arith.constant 0 : index
      %589 = vector.load %arg2[%c29_264, %c0_265, %c0_266] : memref<32x16x512xf32, #tpu.memory_space<vmem>>, vector<1x16x512xf32>
      %590 = vector.shape_cast %589 : vector<1x16x512xf32> to vector<16x512xf32>
      %591 = vector.extract_strided_slice %415 {offsets = [29, 0], sizes = [1, 512], strides = [1, 1]} : vector<32x512xf32> to vector<1x512xf32>
      %592 = vector.broadcast %591 : vector<1x512xf32> to vector<16x512xf32>
      %593 = arith.mulf %590, %592 : vector<16x512xf32>
      %594 = arith.addf %588, %593 : vector<16x512xf32>
      %c30_267 = arith.constant 30 : index
      %c0_268 = arith.constant 0 : index
      %c0_269 = arith.constant 0 : index
      %595 = vector.load %arg2[%c30_267, %c0_268, %c0_269] : memref<32x16x512xf32, #tpu.memory_space<vmem>>, vector<1x16x512xf32>
      %596 = vector.shape_cast %595 : vector<1x16x512xf32> to vector<16x512xf32>
      %597 = vector.extract_strided_slice %415 {offsets = [30, 0], sizes = [1, 512], strides = [1, 1]} : vector<32x512xf32> to vector<1x512xf32>
      %598 = vector.broadcast %597 : vector<1x512xf32> to vector<16x512xf32>
      %599 = arith.mulf %596, %598 : vector<16x512xf32>
      %600 = arith.addf %594, %599 : vector<16x512xf32>
      %c31_270 = arith.constant 31 : index
      %c0_271 = arith.constant 0 : index
      %c0_272 = arith.constant 0 : index
      %601 = vector.load %arg2[%c31_270, %c0_271, %c0_272] : memref<32x16x512xf32, #tpu.memory_space<vmem>>, vector<1x16x512xf32>
      %602 = vector.shape_cast %601 : vector<1x16x512xf32> to vector<16x512xf32>
      %603 = vector.extract_strided_slice %415 {offsets = [31, 0], sizes = [1, 512], strides = [1, 1]} : vector<32x512xf32> to vector<1x512xf32>
      %604 = vector.broadcast %603 : vector<1x512xf32> to vector<16x512xf32>
      %605 = arith.mulf %602, %604 : vector<16x512xf32>
      %606 = arith.addf %600, %605 : vector<16x512xf32>
      %607 = vector.broadcast %307 : vector<1x512xf32> to vector<16x512xf32>
      %608 = arith.mulf %607, %606 : vector<16x512xf32>
      %609 = arith.subf %arg6, %608 : vector<16x512xf32>
      %cst_273 = arith.constant 0.000000e+00 : f32
      %610 = vector.broadcast %cst_273 : f32 to vector<16x512xf32>
      %611 = arith.maximumf %609, %610 : vector<16x512xf32>
      %cst_274 = arith.constant 2.000000e+00 : f32
      %612 = vector.broadcast %cst_274 : f32 to vector<16x512xf32>
      %613 = arith.mulf %612, %611 : vector<16x512xf32>
      %614 = arith.subf %613, %arg6 : vector<16x512xf32>
      scf.yield %611, %614, %415 : vector<16x512xf32>, vector<16x512xf32>, vector<32x512xf32>
    }
    %c0_125 = arith.constant 0 : index
    %c0_126 = arith.constant 0 : index
    %312 = vector.load %arg4[%c0_125, %c0_126] : memref<16x512xf32, #tpu.memory_space<vmem>>, vector<16x512xf32>
    tpu.vector_store %arg4[%c0_125, %c0_126], %311#0 {strides = array<i32>} : memref<16x512xf32, #tpu.memory_space<vmem>>, vector<16x512xf32>,
    return
  }
  func.func @transform_0(%arg0: i32) -> (i32, i32, i32) {
    %c0_i32 = arith.constant 0 : i32
    %c0_i32_0 = arith.constant 0 : i32
    %c0_i32_1 = arith.constant 0 : i32
    return %c0_i32, %c0_i32_0, %arg0 : i32, i32, i32
  }
  func.func @transform_1(%arg0: i32) -> (i32, i32, i32) {
    %c0_i32 = arith.constant 0 : i32
    %c0_i32_0 = arith.constant 0 : i32
    %c0_i32_1 = arith.constant 0 : i32
    return %c0_i32, %c0_i32_0, %arg0 : i32, i32, i32
  }
  func.func @transform_2(%arg0: i32) -> (i32, i32) {
    %c0_i32 = arith.constant 0 : i32
    %c0_i32_0 = arith.constant 0 : i32
    return %c0_i32, %arg0 : i32, i32
  }
  func.func @transform_3(%arg0: i32) -> (i32, i32) {
    %c0_i32 = arith.constant 0 : i32
    %c0_i32_0 = arith.constant 0 : i32
    return %c0_i32, %arg0 : i32, i32
  }
}

</mosaic_0001>

<llo_original>
// kernel: tpu_custom_call.1
$region0: #{tpu_custom_call.1}
  #allocation0 [shape = 'u32[]', space=smem, size = 0x4, offset = 0x4, fixed_abs, tag = 'smem constant byte address 0x4 - core index']
  #allocation1 [shape = 'u32[144,128]{1,0:T(1,128)}', space=vmem, size = 0x12000, scoped, tag = 'internal scratch']
  %s0 = inlined_call_operand.hbm [shape: f32[16,32,512], index: 0, kind: input, shape index: {}]
  %s1 = inlined_call_operand.hbm [shape: f32[32,16,512], index: 1, kind: input, shape index: {}]
  %s2 = inlined_call_operand.hbm [shape: f32[32,512], index: 2, kind: input, shape index: {}]
  %s3 = inlined_call_operand.hbm [shape: f32[16,512], index: 3, kind: output, shape index: {}]
  %s4 = sld [smem:[#allocation0]]
  $region48: #{tpu_custom_call.1} parent=0
    _
  %s6 = ssub.s32 1, %s4
  %s7 = scalar_select 0, %s6, %s4
  $region1: #{tpu_custom_call.1} parent=0
    #allocation2 [shape = 'u8[1048576]{0}', space=vmem, size = 0x100000, scoped, tag = 'input window, operand 0, single buffered']
    #allocation3 [shape = 's32[1]{0}', space=sflag, size = 0x4, scoped, tag = 'scoped memory for tpu_custom_call.1']
    #allocation4 [shape = 's32[1]{0}', space=sflag, size = 0x4, scoped, tag = 'scoped memory for tpu_custom_call.1']
    #allocation5 [shape = 'u8[1048576]{0}', space=vmem, size = 0x100000, scoped, tag = 'input window, operand 1, single buffered']
    #allocation6 [shape = 's32[1]{0}', space=sflag, size = 0x4, scoped, tag = 'scoped memory for tpu_custom_call.1']
    #allocation7 [shape = 'u8[65536]{0}', space=vmem, size = 0x10000, scoped, tag = 'input window, operand 2, single buffered']
    #allocation8 [shape = 'u8[32768]{0}', space=vmem, size = 0x8000, scoped, tag = 'output window, operand 0, single buffered']
    %8 = vsyncpa [#allocation3], 0
    %9 = vsyncpa [#allocation6], 0
    %10 = vsyncpa [#allocation4], 0
    // Predicated region
    $region2: #{tpu_custom_call.1} parent=1 // pred_check
      _
    $region3: #{tpu_custom_call.1} parent=1 // pred_check_branch
      %12 = sbr.rel (0) target = $region5
    $region4: #{tpu_custom_call.1} parent=1 // pred_region
      %s14 = ssub.s32 32768, 32768
      %15 = vsyncadd [#allocation3], %s14
      %s16 = sshll.u32 [#allocation2], 4
      %s17 = int_to_ptr.vmem [resolvable:$true] %s16
      %22 = dma.hbm_to_vmem [thread:$0]  %s0, 32768, %s17, [#allocation3], 512, 512, 32
    $region5: #{tpu_custom_call.1} parent=1 // pred_fallthru
      _
    // Predicated region
    $region6: #{tpu_custom_call.1} parent=1 // pred_check
      _
    $region7: #{tpu_custom_call.1} parent=1 // pred_check_branch
      %24 = sbr.rel (0) target = $region9
    $region8: #{tpu_custom_call.1} parent=1 // pred_region
      %s26 = ssub.s32 32768, 32768
      %27 = vsyncadd [#allocation6], %s26
      %s28 = sshll.u32 [#allocation5], 4
      %s29 = int_to_ptr.vmem [resolvable:$true] %s28
      %34 = dma.hbm_to_vmem [thread:$0]  %s1, 32768, %s29, [#allocation6], 512, 512, 32
    $region9: #{tpu_custom_call.1} parent=1 // pred_fallthru
      _
    // Predicated region
    $region10: #{tpu_custom_call.1} parent=1 // pred_check
      _
    $region11: #{tpu_custom_call.1} parent=1 // pred_check_branch
      %36 = sbr.rel (0) target = $region13
    $region12: #{tpu_custom_call.1} parent=1 // pred_region
      %s38 = ssub.s32 2048, 2048
      %39 = vsyncadd [#allocation6], %s38
      %s40 = sshll.u32 [#allocation7], 4
      %s41 = int_to_ptr.vmem [resolvable:$true] %s40
      %46 = dma.hbm_to_vmem [thread:$0]  %s2, 2048, %s41, [#allocation6], 512, 512, 32
    $region13: #{tpu_custom_call.1} parent=1 // pred_fallthru
      _
    // Predicated region
    $region14: #{tpu_custom_call.1} parent=1 // pred_check
      _
    $region15: #{tpu_custom_call.1} parent=1 // pred_check_branch
      %48 = sbr.rel (0) target = $region17
    $region16: #{tpu_custom_call.1} parent=1 // pred_region
      %49 = dma.done [#allocation3], 32768
    $region17: #{tpu_custom_call.1} parent=1 // pred_fallthru
      _
    // Predicated region
    $region18: #{tpu_custom_call.1} parent=1 // pred_check
      _
    $region19: #{tpu_custom_call.1} parent=1 // pred_check_branch
      %51 = sbr.rel (0) target = $region21
    $region20: #{tpu_custom_call.1} parent=1 // pred_region
      %52 = dma.done [#allocation6], 32768
    $region21: #{tpu_custom_call.1} parent=1 // pred_fallthru
      _
    // Predicated region
    $region22: #{tpu_custom_call.1} parent=1 // pred_check
      _
    $region23: #{tpu_custom_call.1} parent=1 // pred_check_branch
      %54 = sbr.rel (0) target = $region25
    $region24: #{tpu_custom_call.1} parent=1 // pred_region
      %55 = dma.done [#allocation6], 2048
    $region25: #{tpu_custom_call.1} parent=1 // pred_fallthru
      _
    %v56 = vld [vmem:[#allocation7] sm:$0xff]
    %v57 = vld [vmem:[#allocation7 + $0x8] sm:$0xff]
    %v58 = vld [vmem:[#allocation7 + $0x10] sm:$0xff]
    %v59 = vld [vmem:[#allocation7 + $0x18] sm:$0xff]
    %v60 = vld [vmem:[#allocation7 + $0x20] sm:$0xff]
    %v61 = vld [vmem:[#allocation7 + $0x28] sm:$0xff]
    %v62 = vld [vmem:[#allocation7 + $0x30] sm:$0xff]
    %v63 = vld [vmem:[#allocation7 + $0x38] sm:$0xff]
    %v64 = vld [vmem:[#allocation7 + $0x40] sm:$0xff]
    %v65 = vld [vmem:[#allocation7 + $0x48] sm:$0xff]
    %v66 = vld [vmem:[#allocation7 + $0x50] sm:$0xff]
    %v67 = vld [vmem:[#allocation7 + $0x58] sm:$0xff]
    %v68 = vld [vmem:[#allocation7 + $0x60] sm:$0xff]
    %v69 = vld [vmem:[#allocation7 + $0x68] sm:$0xff]
    %v70 = vld [vmem:[#allocation7 + $0x70] sm:$0xff]
    %v71 = vld [vmem:[#allocation7 + $0x78] sm:$0xff]
    loop: start=0, step=1, limit=10
    $region26: #{tpu_custom_call.1} parent=1 // loop_pre_header
      _
    $region27: #{tpu_custom_call.1} parent=1 // loop_header
      %s73 = sphi 0, %s77
      %p74 = scmp.ge.s32.totalorder %s73, 10
      %v78 = vphi 1.0, %v2456
      %v79 = vphi 1.0, %v2457
      %v80 = vphi 1.0, %v2458
      %v81 = vphi 1.0, %v2459
      %v82 = vphi 1.0, %v2460
      %v83 = vphi 1.0, %v2461
      %v84 = vphi 1.0, %v2462
      %v85 = vphi 1.0, %v2463
    $region28: #{tpu_custom_call.1} parent=1 // loop_header_branch
      %76 = sbr.rel (%p74) target = $region32
    $region29: #{tpu_custom_call.1} parent=1 // loop_body
      %v86 = vld [vmem:[#allocation2] sm:$0xff]
      %v87 = vld [vmem:[#allocation2 + $0x8] sm:$0xff]
      %v88 = vld [vmem:[#allocation2 + $0x10] sm:$0xff]
      %v89 = vld [vmem:[#allocation2 + $0x18] sm:$0xff]
      %v90 = vld [vmem:[#allocation2 + $0x20] sm:$0xff]
      %v91 = vld [vmem:[#allocation2 + $0x28] sm:$0xff]
      %v92 = vld [vmem:[#allocation2 + $0x30] sm:$0xff]
      %v93 = vld [vmem:[#allocation2 + $0x38] sm:$0xff]
      %v94 = vld [vmem:[#allocation2 + $0x40] sm:$0xff]
      %v95 = vld [vmem:[#allocation2 + $0x48] sm:$0xff]
      %v96 = vld [vmem:[#allocation2 + $0x50] sm:$0xff]
      %v97 = vld [vmem:[#allocation2 + $0x58] sm:$0xff]
      %v98 = vld [vmem:[#allocation2 + $0x60] sm:$0xff]
      %v99 = vld [vmem:[#allocation2 + $0x68] sm:$0xff]
      %v100 = vld [vmem:[#allocation2 + $0x70] sm:$0xff]
      %v101 = vld [vmem:[#allocation2 + $0x78] sm:$0xff]
      %v102 = vlaneseq
      %v103 = vshrl.u32 %v102, 7
      %v104 = vsub.s32 0, %v103
      %v105 = vrot.slane %v78, %v104
      %v106 = vlaneseq
      %v107 = vshrl.u32 %v106, 7
      %v108 = vsub.s32 0, %v107
      %v109 = vrot.slane %v79, %v108
      %v110 = vlaneseq
      %v111 = vshrl.u32 %v110, 7
      %v112 = vsub.s32 0, %v111
      %v113 = vrot.slane %v80, %v112
      %v114 = vlaneseq
      %v115 = vshrl.u32 %v114, 7
      %v116 = vsub.s32 0, %v115
      %v117 = vrot.slane %v81, %v116
      %v118 = vmul.f32 %v86, %v105
      %v119 = vmul.f32 %v87, %v109
      %v120 = vmul.f32 %v88, %v113
      %v121 = vmul.f32 %v89, %v117
      %v122 = vmul.f32 %v90, %v105
      %v123 = vmul.f32 %v91, %v109
      %v124 = vmul.f32 %v92, %v113
      %v125 = vmul.f32 %v93, %v117
      %v126 = vmul.f32 %v94, %v105
      %v127 = vmul.f32 %v95, %v109
      %v128 = vmul.f32 %v96, %v113
      %v129 = vmul.f32 %v97, %v117
      %v130 = vmul.f32 %v98, %v105
      %v131 = vmul.f32 %v99, %v109
      %v132 = vmul.f32 %v100, %v113
      %v133 = vmul.f32 %v101, %v117
      %s134 = scalar_lea.vmem [#allocation2], 128
      %v135 = vld [vmem:[%s134] sm:$0xff]
      %v136 = vld [vmem:[%s134 + $0x8] sm:$0xff]
      %v137 = vld [vmem:[%s134 + $0x10] sm:$0xff]
      %v138 = vld [vmem:[%s134 + $0x18] sm:$0xff]
      %v139 = vld [vmem:[%s134 + $0x20] sm:$0xff]
      %v140 = vld [vmem:[%s134 + $0x28] sm:$0xff]
      %v141 = vld [vmem:[%s134 + $0x30] sm:$0xff]
      %v142 = vld [vmem:[%s134 + $0x38] sm:$0xff]
      %v143 = vld [vmem:[%s134 + $0x40] sm:$0xff]
      %v144 = vld [vmem:[%s134 + $0x48] sm:$0xff]
      %v145 = vld [vmem:[%s134 + $0x50] sm:$0xff]
      %v146 = vld [vmem:[%s134 + $0x58] sm:$0xff]
      %v147 = vld [vmem:[%s134 + $0x60] sm:$0xff]
      %v148 = vld [vmem:[%s134 + $0x68] sm:$0xff]
      %v149 = vld [vmem:[%s134 + $0x70] sm:$0xff]
      %v150 = vld [vmem:[%s134 + $0x78] sm:$0xff]
      %v151 = vlaneseq
      %v152 = vshrl.u32 %v151, 7
      %v153 = vsub.s32 1, %v152
      %v154 = vrot.slane %v78, %v153
      %v155 = vlaneseq
      %v156 = vshrl.u32 %v155, 7
      %v157 = vsub.s32 1, %v156
      %v158 = vrot.slane %v79, %v157
      %v159 = vlaneseq
      %v160 = vshrl.u32 %v159, 7
      %v161 = vsub.s32 1, %v160
      %v162 = vrot.slane %v80, %v161
      %v163 = vlaneseq
      %v164 = vshrl.u32 %v163, 7
      %v165 = vsub.s32 1, %v164
      %v166 = vrot.slane %v81, %v165
      %v167 = vmul.f32 %v135, %v154
      %v168 = vmul.f32 %v136, %v158
      %v169 = vmul.f32 %v137, %v162
      %v170 = vmul.f32 %v138, %v166
      %v171 = vmul.f32 %v139, %v154
      %v172 = vmul.f32 %v140, %v158
      %v173 = vmul.f32 %v141, %v162
      %v174 = vmul.f32 %v142, %v166
      %v175 = vmul.f32 %v143, %v154
      %v176 = vmul.f32 %v144, %v158
      %v177 = vmul.f32 %v145, %v162
      %v178 = vmul.f32 %v146, %v166
      %v179 = vmul.f32 %v147, %v154
      %v180 = vmul.f32 %v148, %v158
      %v181 = vmul.f32 %v149, %v162
      %v182 = vmul.f32 %v150, %v166
      %v183 = vadd.f32 %v118, %v167
      %v184 = vadd.f32 %v119, %v168
      %v185 = vadd.f32 %v120, %v169
      %v186 = vadd.f32 %v121, %v170
      %v187 = vadd.f32 %v122, %v171
      %v188 = vadd.f32 %v123, %v172
      %v189 = vadd.f32 %v124, %v173
      %v190 = vadd.f32 %v125, %v174
      %v191 = vadd.f32 %v126, %v175
      %v192 = vadd.f32 %v127, %v176
      %v193 = vadd.f32 %v128, %v177
      %v194 = vadd.f32 %v129, %v178
      %v195 = vadd.f32 %v130, %v179
      %v196 = vadd.f32 %v131, %v180
      %v197 = vadd.f32 %v132, %v181
      %v198 = vadd.f32 %v133, %v182
      %s199 = scalar_lea.vmem [#allocation2], 256
      %v200 = vld [vmem:[%s199] sm:$0xff]
      %v201 = vld [vmem:[%s199 + $0x8] sm:$0xff]
      %v202 = vld [vmem:[%s199 + $0x10] sm:$0xff]
      %v203 = vld [vmem:[%s199 + $0x18] sm:$0xff]
      %v204 = vld [vmem:[%s199 + $0x20] sm:$0xff]
      %v205 = vld [vmem:[%s199 + $0x28] sm:$0xff]
      %v206 = vld [vmem:[%s199 + $0x30] sm:$0xff]
      %v207 = vld [vmem:[%s199 + $0x38] sm:$0xff]
      %v208 = vld [vmem:[%s199 + $0x40] sm:$0xff]
      %v209 = vld [vmem:[%s199 + $0x48] sm:$0xff]
      %v210 = vld [vmem:[%s199 + $0x50] sm:$0xff]
      %v211 = vld [vmem:[%s199 + $0x58] sm:$0xff]
      %v212 = vld [vmem:[%s199 + $0x60] sm:$0xff]
      %v213 = vld [vmem:[%s199 + $0x68] sm:$0xff]
      %v214 = vld [vmem:[%s199 + $0x70] sm:$0xff]
      %v215 = vld [vmem:[%s199 + $0x78] sm:$0xff]
      %v216 = vlaneseq
      %v217 = vshrl.u32 %v216, 7
      %v218 = vsub.s32 2, %v217
      %v219 = vrot.slane %v78, %v218
      %v220 = vlaneseq
      %v221 = vshrl.u32 %v220, 7
      %v222 = vsub.s32 2, %v221
      %v223 = vrot.slane %v79, %v222
      %v224 = vlaneseq
      %v225 = vshrl.u32 %v224, 7
      %v226 = vsub.s32 2, %v225
      %v227 = vrot.slane %v80, %v226
      %v228 = vlaneseq
      %v229 = vshrl.u32 %v228, 7
      %v230 = vsub.s32 2, %v229
      %v231 = vrot.slane %v81, %v230
      %v232 = vmul.f32 %v200, %v219
      %v233 = vmul.f32 %v201, %v223
      %v234 = vmul.f32 %v202, %v227
      %v235 = vmul.f32 %v203, %v231
      %v236 = vmul.f32 %v204, %v219
      %v237 = vmul.f32 %v205, %v223
      %v238 = vmul.f32 %v206, %v227
      %v239 = vmul.f32 %v207, %v231
      %v240 = vmul.f32 %v208, %v219
      %v241 = vmul.f32 %v209, %v223
      %v242 = vmul.f32 %v210, %v227
      %v243 = vmul.f32 %v211, %v231
      %v244 = vmul.f32 %v212, %v219
      %v245 = vmul.f32 %v213, %v223
      %v246 = vmul.f32 %v214, %v227
      %v247 = vmul.f32 %v215, %v231
      %v248 = vadd.f32 %v183, %v232
      %v249 = vadd.f32 %v184, %v233
      %v250 = vadd.f32 %v185, %v234
      %v251 = vadd.f32 %v186, %v235
      %v252 = vadd.f32 %v187, %v236
      %v253 = vadd.f32 %v188, %v237
      %v254 = vadd.f32 %v189, %v238
      %v255 = vadd.f32 %v190, %v239
      %v256 = vadd.f32 %v191, %v240
      %v257 = vadd.f32 %v192, %v241
      %v258 = vadd.f32 %v193, %v242
      %v259 = vadd.f32 %v194, %v243
      %v260 = vadd.f32 %v195, %v244
      %v261 = vadd.f32 %v196, %v245
      %v262 = vadd.f32 %v197, %v246
      %v263 = vadd.f32 %v198, %v247
      %s264 = scalar_lea.vmem [#allocation2], 384
      %v265 = vld [vmem:[%s264] sm:$0xff]
      %v266 = vld [vmem:[%s264 + $0x8] sm:$0xff]
      %v267 = vld [vmem:[%s264 + $0x10] sm:$0xff]
      %v268 = vld [vmem:[%s264 + $0x18] sm:$0xff]
      %v269 = vld [vmem:[%s264 + $0x20] sm:$0xff]
      %v270 = vld [vmem:[%s264 + $0x28] sm:$0xff]
      %v271 = vld [vmem:[%s264 + $0x30] sm:$0xff]
      %v272 = vld [vmem:[%s264 + $0x38] sm:$0xff]
      %v273 = vld [vmem:[%s264 + $0x40] sm:$0xff]
      %v274 = vld [vmem:[%s264 + $0x48] sm:$0xff]
      %v275 = vld [vmem:[%s264 + $0x50] sm:$0xff]
      %v276 = vld [vmem:[%s264 + $0x58] sm:$0xff]
      %v277 = vld [vmem:[%s264 + $0x60] sm:$0xff]
      %v278 = vld [vmem:[%s264 + $0x68] sm:$0xff]
      %v279 = vld [vmem:[%s264 + $0x70] sm:$0xff]
      %v280 = vld [vmem:[%s264 + $0x78] sm:$0xff]
      %v281 = vlaneseq
      %v282 = vshrl.u32 %v281, 7
      %v283 = vsub.s32 3, %v282
      %v284 = vrot.slane %v78, %v283
      %v285 = vlaneseq
      %v286 = vshrl.u32 %v285, 7
      %v287 = vsub.s32 3, %v286
      %v288 = vrot.slane %v79, %v287
      %v289 = vlaneseq
      %v290 = vshrl.u32 %v289, 7
      %v291 = vsub.s32 3, %v290
      %v292 = vrot.slane %v80, %v291
      %v293 = vlaneseq
      %v294 = vshrl.u32 %v293, 7
      %v295 = vsub.s32 3, %v294
      %v296 = vrot.slane %v81, %v295
      %v297 = vmul.f32 %v265, %v284
      %v298 = vmul.f32 %v266, %v288
      %v299 = vmul.f32 %v267, %v292
      %v300 = vmul.f32 %v268, %v296
      %v301 = vmul.f32 %v269, %v284
      %v302 = vmul.f32 %v270, %v288
      %v303 = vmul.f32 %v271, %v292
      %v304 = vmul.f32 %v272, %v296
      %v305 = vmul.f32 %v273, %v284
      %v306 = vmul.f32 %v274, %v288
      %v307 = vmul.f32 %v275, %v292
      %v308 = vmul.f32 %v276, %v296
      %v309 = vmul.f32 %v277, %v284
      %v310 = vmul.f32 %v278, %v288
      %v311 = vmul.f32 %v279, %v292
      %v312 = vmul.f32 %v280, %v296
      %v313 = vadd.f32 %v248, %v297
      %v314 = vadd.f32 %v249, %v298
      %v315 = vadd.f32 %v250, %v299
      %v316 = vadd.f32 %v251, %v300
      %v317 = vadd.f32 %v252, %v301
      %v318 = vadd.f32 %v253, %v302
      %v319 = vadd.f32 %v254, %v303
      %v320 = vadd.f32 %v255, %v304
      %v321 = vadd.f32 %v256, %v305
      %v322 = vadd.f32 %v257, %v306
      %v323 = vadd.f32 %v258, %v307
      %v324 = vadd.f32 %v259, %v308
      %v325 = vadd.f32 %v260, %v309
      %v326 = vadd.f32 %v261, %v310
      %v327 = vadd.f32 %v262, %v311
      %v328 = vadd.f32 %v263, %v312
      %s329 = scalar_lea.vmem [#allocation2], 512
      %v330 = vld [vmem:[%s329] sm:$0xff]
      %v331 = vld [vmem:[%s329 + $0x8] sm:$0xff]
      %v332 = vld [vmem:[%s329 + $0x10] sm:$0xff]
      %v333 = vld [vmem:[%s329 + $0x18] sm:$0xff]
      %v334 = vld [vmem:[%s329 + $0x20] sm:$0xff]
      %v335 = vld [vmem:[%s329 + $0x28] sm:$0xff]
      %v336 = vld [vmem:[%s329 + $0x30] sm:$0xff]
      %v337 = vld [vmem:[%s329 + $0x38] sm:$0xff]
      %v338 = vld [vmem:[%s329 + $0x40] sm:$0xff]
      %v339 = vld [vmem:[%s329 + $0x48] sm:$0xff]
      %v340 = vld [vmem:[%s329 + $0x50] sm:$0xff]
      %v341 = vld [vmem:[%s329 + $0x58] sm:$0xff]
      %v342 = vld [vmem:[%s329 + $0x60] sm:$0xff]
      %v343 = vld [vmem:[%s329 + $0x68] sm:$0xff]
      %v344 = vld [vmem:[%s329 + $0x70] sm:$0xff]
      %v345 = vld [vmem:[%s329 + $0x78] sm:$0xff]
      %v346 = vlaneseq
      %v347 = vshrl.u32 %v346, 7
      %v348 = vsub.s32 4, %v347
      %v349 = vrot.slane %v78, %v348
      %v350 = vlaneseq
      %v351 = vshrl.u32 %v350, 7
      %v352 = vsub.s32 4, %v351
      %v353 = vrot.slane %v79, %v352
      %v354 = vlaneseq
      %v355 = vshrl.u32 %v354, 7
      %v356 = vsub.s32 4, %v355
      %v357 = vrot.slane %v80, %v356
      %v358 = vlaneseq
      %v359 = vshrl.u32 %v358, 7
      %v360 = vsub.s32 4, %v359
      %v361 = vrot.slane %v81, %v360
      %v362 = vmul.f32 %v330, %v349
      %v363 = vmul.f32 %v331, %v353
      %v364 = vmul.f32 %v332, %v357
      %v365 = vmul.f32 %v333, %v361
      %v366 = vmul.f32 %v334, %v349
      %v367 = vmul.f32 %v335, %v353
      %v368 = vmul.f32 %v336, %v357
      %v369 = vmul.f32 %v337, %v361
      %v370 = vmul.f32 %v338, %v349
      %v371 = vmul.f32 %v339, %v353
      %v372 = vmul.f32 %v340, %v357
      %v373 = vmul.f32 %v341, %v361
      %v374 = vmul.f32 %v342, %v349
      %v375 = vmul.f32 %v343, %v353
      %v376 = vmul.f32 %v344, %v357
      %v377 = vmul.f32 %v345, %v361
      %v378 = vadd.f32 %v313, %v362
      %v379 = vadd.f32 %v314, %v363
      %v380 = vadd.f32 %v315, %v364
      %v381 = vadd.f32 %v316, %v365
      %v382 = vadd.f32 %v317, %v366
      %v383 = vadd.f32 %v318, %v367
      %v384 = vadd.f32 %v319, %v368
      %v385 = vadd.f32 %v320, %v369
      %v386 = vadd.f32 %v321, %v370
      %v387 = vadd.f32 %v322, %v371
      %v388 = vadd.f32 %v323, %v372
      %v389 = vadd.f32 %v324, %v373
      %v390 = vadd.f32 %v325, %v374
      %v391 = vadd.f32 %v326, %v375
      %v392 = vadd.f32 %v327, %v376
      %v393 = vadd.f32 %v328, %v377
      %s394 = scalar_lea.vmem [#allocation2], 640
      %v395 = vld [vmem:[%s394] sm:$0xff]
      %v396 = vld [vmem:[%s394 + $0x8] sm:$0xff]
      %v397 = vld [vmem:[%s394 + $0x10] sm:$0xff]
      %v398 = vld [vmem:[%s394 + $0x18] sm:$0xff]
      %v399 = vld [vmem:[%s394 + $0x20] sm:$0xff]
      %v400 = vld [vmem:[%s394 + $0x28] sm:$0xff]
      %v401 = vld [vmem:[%s394 + $0x30] sm:$0xff]
      %v402 = vld [vmem:[%s394 + $0x38] sm:$0xff]
      %v403 = vld [vmem:[%s394 + $0x40] sm:$0xff]
      %v404 = vld [vmem:[%s394 + $0x48] sm:$0xff]
      %v405 = vld [vmem:[%s394 + $0x50] sm:$0xff]
      %v406 = vld [vmem:[%s394 + $0x58] sm:$0xff]
      %v407 = vld [vmem:[%s394 + $0x60] sm:$0xff]
      %v408 = vld [vmem:[%s394 + $0x68] sm:$0xff]
      %v409 = vld [vmem:[%s394 + $0x70] sm:$0xff]
      %v410 = vld [vmem:[%s394 + $0x78] sm:$0xff]
      %v411 = vlaneseq
      %v412 = vshrl.u32 %v411, 7
      %v413 = vsub.s32 5, %v412
      %v414 = vrot.slane %v78, %v413
      %v415 = vlaneseq
      %v416 = vshrl.u32 %v415, 7
      %v417 = vsub.s32 5, %v416
      %v418 = vrot.slane %v79, %v417
      %v419 = vlaneseq
      %v420 = vshrl.u32 %v419, 7
      %v421 = vsub.s32 5, %v420
      %v422 = vrot.slane %v80, %v421
      %v423 = vlaneseq
      %v424 = vshrl.u32 %v423, 7
      %v425 = vsub.s32 5, %v424
      %v426 = vrot.slane %v81, %v425
      %v427 = vmul.f32 %v395, %v414
      %v428 = vmul.f32 %v396, %v418
      %v429 = vmul.f32 %v397, %v422
      %v430 = vmul.f32 %v398, %v426
      %v431 = vmul.f32 %v399, %v414
      %v432 = vmul.f32 %v400, %v418
      %v433 = vmul.f32 %v401, %v422
      %v434 = vmul.f32 %v402, %v426
      %v435 = vmul.f32 %v403, %v414
      %v436 = vmul.f32 %v404, %v418
      %v437 = vmul.f32 %v405, %v422
      %v438 = vmul.f32 %v406, %v426
      %v439 = vmul.f32 %v407, %v414
      %v440 = vmul.f32 %v408, %v418
      %v441 = vmul.f32 %v409, %v422
      %v442 = vmul.f32 %v410, %v426
      %v443 = vadd.f32 %v378, %v427
      %v444 = vadd.f32 %v379, %v428
      %v445 = vadd.f32 %v380, %v429
      %v446 = vadd.f32 %v381, %v430
      %v447 = vadd.f32 %v382, %v431
      %v448 = vadd.f32 %v383, %v432
      %v449 = vadd.f32 %v384, %v433
      %v450 = vadd.f32 %v385, %v434
      %v451 = vadd.f32 %v386, %v435
      %v452 = vadd.f32 %v387, %v436
      %v453 = vadd.f32 %v388, %v437
      %v454 = vadd.f32 %v389, %v438
      %v455 = vadd.f32 %v390, %v439
      %v456 = vadd.f32 %v391, %v440
      %v457 = vadd.f32 %v392, %v441
      %v458 = vadd.f32 %v393, %v442
      %s459 = scalar_lea.vmem [#allocation2], 768
      %v460 = vld [vmem:[%s459] sm:$0xff]
      %v461 = vld [vmem:[%s459 + $0x8] sm:$0xff]
      %v462 = vld [vmem:[%s459 + $0x10] sm:$0xff]
      %v463 = vld [vmem:[%s459 + $0x18] sm:$0xff]
      %v464 = vld [vmem:[%s459 + $0x20] sm:$0xff]
      %v465 = vld [vmem:[%s459 + $0x28] sm:$0xff]
      %v466 = vld [vmem:[%s459 + $0x30] sm:$0xff]
      %v467 = vld [vmem:[%s459 + $0x38] sm:$0xff]
      %v468 = vld [vmem:[%s459 + $0x40] sm:$0xff]
      %v469 = vld [vmem:[%s459 + $0x48] sm:$0xff]
      %v470 = vld [vmem:[%s459 + $0x50] sm:$0xff]
      %v471 = vld [vmem:[%s459 + $0x58] sm:$0xff]
      %v472 = vld [vmem:[%s459 + $0x60] sm:$0xff]
      %v473 = vld [vmem:[%s459 + $0x68] sm:$0xff]
      %v474 = vld [vmem:[%s459 + $0x70] sm:$0xff]
      %v475 = vld [vmem:[%s459 + $0x78] sm:$0xff]
      %v476 = vlaneseq
      %v477 = vshrl.u32 %v476, 7
      %v478 = vsub.s32 6, %v477
      %v479 = vrot.slane %v78, %v478
      %v480 = vlaneseq
      %v481 = vshrl.u32 %v480, 7
      %v482 = vsub.s32 6, %v481
      %v483 = vrot.slane %v79, %v482
      %v484 = vlaneseq
      %v485 = vshrl.u32 %v484, 7
      %v486 = vsub.s32 6, %v485
      %v487 = vrot.slane %v80, %v486
      %v488 = vlaneseq
      %v489 = vshrl.u32 %v488, 7
      %v490 = vsub.s32 6, %v489
      %v491 = vrot.slane %v81, %v490
      %v492 = vmul.f32 %v460, %v479
      %v493 = vmul.f32 %v461, %v483
      %v494 = vmul.f32 %v462, %v487
      %v495 = vmul.f32 %v463, %v491
      %v496 = vmul.f32 %v464, %v479
      %v497 = vmul.f32 %v465, %v483
      %v498 = vmul.f32 %v466, %v487
      %v499 = vmul.f32 %v467, %v491
      %v500 = vmul.f32 %v468, %v479
      %v501 = vmul.f32 %v469, %v483
      %v502 = vmul.f32 %v470, %v487
      %v503 = vmul.f32 %v471, %v491
      %v504 = vmul.f32 %v472, %v479
      %v505 = vmul.f32 %v473, %v483
      %v506 = vmul.f32 %v474, %v487
      %v507 = vmul.f32 %v475, %v491
      %v508 = vadd.f32 %v443, %v492
      %v509 = vadd.f32 %v444, %v493
      %v510 = vadd.f32 %v445, %v494
      %v511 = vadd.f32 %v446, %v495
      %v512 = vadd.f32 %v447, %v496
      %v513 = vadd.f32 %v448, %v497
      %v514 = vadd.f32 %v449, %v498
      %v515 = vadd.f32 %v450, %v499
      %v516 = vadd.f32 %v451, %v500
      %v517 = vadd.f32 %v452, %v501
      %v518 = vadd.f32 %v453, %v502
      %v519 = vadd.f32 %v454, %v503
      %v520 = vadd.f32 %v455, %v504
      %v521 = vadd.f32 %v456, %v505
      %v522 = vadd.f32 %v457, %v506
      %v523 = vadd.f32 %v458, %v507
      %s524 = scalar_lea.vmem [#allocation2], 896
      %v525 = vld [vmem:[%s524] sm:$0xff]
      %v526 = vld [vmem:[%s524 + $0x8] sm:$0xff]
      %v527 = vld [vmem:[%s524 + $0x10] sm:$0xff]
      %v528 = vld [vmem:[%s524 + $0x18] sm:$0xff]
      %v529 = vld [vmem:[%s524 + $0x20] sm:$0xff]
      %v530 = vld [vmem:[%s524 + $0x28] sm:$0xff]
      %v531 = vld [vmem:[%s524 + $0x30] sm:$0xff]
      %v532 = vld [vmem:[%s524 + $0x38] sm:$0xff]
      %v533 = vld [vmem:[%s524 + $0x40] sm:$0xff]
      %v534 = vld [vmem:[%s524 + $0x48] sm:$0xff]
      %v535 = vld [vmem:[%s524 + $0x50] sm:$0xff]
      %v536 = vld [vmem:[%s524 + $0x58] sm:$0xff]
      %v537 = vld [vmem:[%s524 + $0x60] sm:$0xff]
      %v538 = vld [vmem:[%s524 + $0x68] sm:$0xff]
      %v539 = vld [vmem:[%s524 + $0x70] sm:$0xff]
      %v540 = vld [vmem:[%s524 + $0x78] sm:$0xff]
      %v541 = vlaneseq
      %v542 = vshrl.u32 %v541, 7
      %v543 = vsub.s32 7, %v542
      %v544 = vrot.slane %v78, %v543
      %v545 = vlaneseq
      %v546 = vshrl.u32 %v545, 7
      %v547 = vsub.s32 7, %v546
      %v548 = vrot.slane %v79, %v547
      %v549 = vlaneseq
      %v550 = vshrl.u32 %v549, 7
      %v551 = vsub.s32 7, %v550
      %v552 = vrot.slane %v80, %v551
      %v553 = vlaneseq
      %v554 = vshrl.u32 %v553, 7
      %v555 = vsub.s32 7, %v554
      %v556 = vrot.slane %v81, %v555
      %v557 = vmul.f32 %v525, %v544
      %v558 = vmul.f32 %v526, %v548
      %v559 = vmul.f32 %v527, %v552
      %v560 = vmul.f32 %v528, %v556
      %v561 = vmul.f32 %v529, %v544
      %v562 = vmul.f32 %v530, %v548
      %v563 = vmul.f32 %v531, %v552
      %v564 = vmul.f32 %v532, %v556
      %v565 = vmul.f32 %v533, %v544
      %v566 = vmul.f32 %v534, %v548
      %v567 = vmul.f32 %v535, %v552
      %v568 = vmul.f32 %v536, %v556
      %v569 = vmul.f32 %v537, %v544
      %v570 = vmul.f32 %v538, %v548
      %v571 = vmul.f32 %v539, %v552
      %v572 = vmul.f32 %v540, %v556
      %v573 = vadd.f32 %v508, %v557
      %v574 = vadd.f32 %v509, %v558
      %v575 = vadd.f32 %v510, %v559
      %v576 = vadd.f32 %v511, %v560
      %v577 = vadd.f32 %v512, %v561
      %v578 = vadd.f32 %v513, %v562
      %v579 = vadd.f32 %v514, %v563
      %v580 = vadd.f32 %v515, %v564
      %v581 = vadd.f32 %v516, %v565
      %v582 = vadd.f32 %v517, %v566
      %v583 = vadd.f32 %v518, %v567
      %v584 = vadd.f32 %v519, %v568
      %v585 = vadd.f32 %v520, %v569
      %v586 = vadd.f32 %v521, %v570
      %v587 = vadd.f32 %v522, %v571
      %v588 = vadd.f32 %v523, %v572
      %s589 = scalar_lea.vmem [#allocation2], 1024
      %v590 = vld [vmem:[%s589] sm:$0xff]
      %v591 = vld [vmem:[%s589 + $0x8] sm:$0xff]
      %v592 = vld [vmem:[%s589 + $0x10] sm:$0xff]
      %v593 = vld [vmem:[%s589 + $0x18] sm:$0xff]
      %v594 = vld [vmem:[%s589 + $0x20] sm:$0xff]
      %v595 = vld [vmem:[%s589 + $0x28] sm:$0xff]
      %v596 = vld [vmem:[%s589 + $0x30] sm:$0xff]
      %v597 = vld [vmem:[%s589 + $0x38] sm:$0xff]
      %v598 = vld [vmem:[%s589 + $0x40] sm:$0xff]
      %v599 = vld [vmem:[%s589 + $0x48] sm:$0xff]
      %v600 = vld [vmem:[%s589 + $0x50] sm:$0xff]
      %v601 = vld [vmem:[%s589 + $0x58] sm:$0xff]
      %v602 = vld [vmem:[%s589 + $0x60] sm:$0xff]
      %v603 = vld [vmem:[%s589 + $0x68] sm:$0xff]
      %v604 = vld [vmem:[%s589 + $0x70] sm:$0xff]
      %v605 = vld [vmem:[%s589 + $0x78] sm:$0xff]
      %v606 = vlaneseq
      %v607 = vshrl.u32 %v606, 7
      %v608 = vsub.s32 0, %v607
      %v609 = vrot.slane %v82, %v608
      %v610 = vlaneseq
      %v611 = vshrl.u32 %v610, 7
      %v612 = vsub.s32 0, %v611
      %v613 = vrot.slane %v83, %v612
      %v614 = vlaneseq
      %v615 = vshrl.u32 %v614, 7
      %v616 = vsub.s32 0, %v615
      %v617 = vrot.slane %v84, %v616
      %v618 = vlaneseq
      %v619 = vshrl.u32 %v618, 7
      %v620 = vsub.s32 0, %v619
      %v621 = vrot.slane %v85, %v620
      %v622 = vmul.f32 %v590, %v609
      %v623 = vmul.f32 %v591, %v613
      %v624 = vmul.f32 %v592, %v617
      %v625 = vmul.f32 %v593, %v621
      %v626 = vmul.f32 %v594, %v609
      %v627 = vmul.f32 %v595, %v613
      %v628 = vmul.f32 %v596, %v617
      %v629 = vmul.f32 %v597, %v621
      %v630 = vmul.f32 %v598, %v609
      %v631 = vmul.f32 %v599, %v613
      %v632 = vmul.f32 %v600, %v617
      %v633 = vmul.f32 %v601, %v621
      %v634 = vmul.f32 %v602, %v609
      %v635 = vmul.f32 %v603, %v613
      %v636 = vmul.f32 %v604, %v617
      %v637 = vmul.f32 %v605, %v621
      %v638 = vadd.f32 %v573, %v622
      %v639 = vadd.f32 %v574, %v623
      %v640 = vadd.f32 %v575, %v624
      %v641 = vadd.f32 %v576, %v625
      %v642 = vadd.f32 %v577, %v626
      %v643 = vadd.f32 %v578, %v627
      %v644 = vadd.f32 %v579, %v628
      %v645 = vadd.f32 %v580, %v629
      %v646 = vadd.f32 %v581, %v630
      %v647 = vadd.f32 %v582, %v631
      %v648 = vadd.f32 %v583, %v632
      %v649 = vadd.f32 %v584, %v633
      %v650 = vadd.f32 %v585, %v634
      %v651 = vadd.f32 %v586, %v635
      %v652 = vadd.f32 %v587, %v636
      %v653 = vadd.f32 %v588, %v637
      %s654 = scalar_lea.vmem [#allocation2], 1152
      %v655 = vld [vmem:[%s654] sm:$0xff]
      %v656 = vld [vmem:[%s654 + $0x8] sm:$0xff]
      %v657 = vld [vmem:[%s654 + $0x10] sm:$0xff]
      %v658 = vld [vmem:[%s654 + $0x18] sm:$0xff]
      %v659 = vld [vmem:[%s654 + $0x20] sm:$0xff]
      %v660 = vld [vmem:[%s654 + $0x28] sm:$0xff]
      %v661 = vld [vmem:[%s654 + $0x30] sm:$0xff]
      %v662 = vld [vmem:[%s654 + $0x38] sm:$0xff]
      %v663 = vld [vmem:[%s654 + $0x40] sm:$0xff]
      %v664 = vld [vmem:[%s654 + $0x48] sm:$0xff]
      %v665 = vld [vmem:[%s654 + $0x50] sm:$0xff]
      %v666 = vld [vmem:[%s654 + $0x58] sm:$0xff]
      %v667 = vld [vmem:[%s654 + $0x60] sm:$0xff]
      %v668 = vld [vmem:[%s654 + $0x68] sm:$0xff]
      %v669 = vld [vmem:[%s654 + $0x70] sm:$0xff]
      %v670 = vld [vmem:[%s654 + $0x78] sm:$0xff]
      %v671 = vlaneseq
      %v672 = vshrl.u32 %v671, 7
      %v673 = vsub.s32 1, %v672
      %v674 = vrot.slane %v82, %v673
      %v675 = vlaneseq
      %v676 = vshrl.u32 %v675, 7
      %v677 = vsub.s32 1, %v676
      %v678 = vrot.slane %v83, %v677
      %v679 = vlaneseq
      %v680 = vshrl.u32 %v679, 7
      %v681 = vsub.s32 1, %v680
      %v682 = vrot.slane %v84, %v681
      %v683 = vlaneseq
      %v684 = vshrl.u32 %v683, 7
      %v685 = vsub.s32 1, %v684
      %v686 = vrot.slane %v85, %v685
      %v687 = vmul.f32 %v655, %v674
      %v688 = vmul.f32 %v656, %v678
      %v689 = vmul.f32 %v657, %v682
      %v690 = vmul.f32 %v658, %v686
      %v691 = vmul.f32 %v659, %v674
      %v692 = vmul.f32 %v660, %v678
      %v693 = vmul.f32 %v661, %v682
      %v694 = vmul.f32 %v662, %v686
      %v695 = vmul.f32 %v663, %v674
      %v696 = vmul.f32 %v664, %v678
      %v697 = vmul.f32 %v665, %v682
      %v698 = vmul.f32 %v666, %v686
      %v699 = vmul.f32 %v667, %v674
      %v700 = vmul.f32 %v668, %v678
      %v701 = vmul.f32 %v669, %v682
      %v702 = vmul.f32 %v670, %v686
      %v703 = vadd.f32 %v638, %v687
      %v704 = vadd.f32 %v639, %v688
      %v705 = vadd.f32 %v640, %v689
      %v706 = vadd.f32 %v641, %v690
      %v707 = vadd.f32 %v642, %v691
      %v708 = vadd.f32 %v643, %v692
      %v709 = vadd.f32 %v644, %v693
      %v710 = vadd.f32 %v645, %v694
      %v711 = vadd.f32 %v646, %v695
      %v712 = vadd.f32 %v647, %v696
      %v713 = vadd.f32 %v648, %v697
      %v714 = vadd.f32 %v649, %v698
      %v715 = vadd.f32 %v650, %v699
      %v716 = vadd.f32 %v651, %v700
      %v717 = vadd.f32 %v652, %v701
      %v718 = vadd.f32 %v653, %v702
      %s719 = scalar_lea.vmem [#allocation2], 1280
      %v720 = vld [vmem:[%s719] sm:$0xff]
      %v721 = vld [vmem:[%s719 + $0x8] sm:$0xff]
      %v722 = vld [vmem:[%s719 + $0x10] sm:$0xff]
      %v723 = vld [vmem:[%s719 + $0x18] sm:$0xff]
      %v724 = vld [vmem:[%s719 + $0x20] sm:$0xff]
      %v725 = vld [vmem:[%s719 + $0x28] sm:$0xff]
      %v726 = vld [vmem:[%s719 + $0x30] sm:$0xff]
      %v727 = vld [vmem:[%s719 + $0x38] sm:$0xff]
      %v728 = vld [vmem:[%s719 + $0x40] sm:$0xff]
      %v729 = vld [vmem:[%s719 + $0x48] sm:$0xff]
      %v730 = vld [vmem:[%s719 + $0x50] sm:$0xff]
      %v731 = vld [vmem:[%s719 + $0x58] sm:$0xff]
      %v732 = vld [vmem:[%s719 + $0x60] sm:$0xff]
      %v733 = vld [vmem:[%s719 + $0x68] sm:$0xff]
      %v734 = vld [vmem:[%s719 + $0x70] sm:$0xff]
      %v735 = vld [vmem:[%s719 + $0x78] sm:$0xff]
      %v736 = vlaneseq
      %v737 = vshrl.u32 %v736, 7
      %v738 = vsub.s32 2, %v737
      %v739 = vrot.slane %v82, %v738
      %v740 = vlaneseq
      %v741 = vshrl.u32 %v740, 7
      %v742 = vsub.s32 2, %v741
      %v743 = vrot.slane %v83, %v742
      %v744 = vlaneseq
      %v745 = vshrl.u32 %v744, 7
      %v746 = vsub.s32 2, %v745
      %v747 = vrot.slane %v84, %v746
      %v748 = vlaneseq
      %v749 = vshrl.u32 %v748, 7
      %v750 = vsub.s32 2, %v749
      %v751 = vrot.slane %v85, %v750
      %v752 = vmul.f32 %v720, %v739
      %v753 = vmul.f32 %v721, %v743
      %v754 = vmul.f32 %v722, %v747
      %v755 = vmul.f32 %v723, %v751
      %v756 = vmul.f32 %v724, %v739
      %v757 = vmul.f32 %v725, %v743
      %v758 = vmul.f32 %v726, %v747
      %v759 = vmul.f32 %v727, %v751
      %v760 = vmul.f32 %v728, %v739
      %v761 = vmul.f32 %v729, %v743
      %v762 = vmul.f32 %v730, %v747
      %v763 = vmul.f32 %v731, %v751
      %v764 = vmul.f32 %v732, %v739
      %v765 = vmul.f32 %v733, %v743
      %v766 = vmul.f32 %v734, %v747
      %v767 = vmul.f32 %v735, %v751
      %v768 = vadd.f32 %v703, %v752
      %v769 = vadd.f32 %v704, %v753
      %v770 = vadd.f32 %v705, %v754
      %v771 = vadd.f32 %v706, %v755
      %v772 = vadd.f32 %v707, %v756
      %v773 = vadd.f32 %v708, %v757
      %v774 = vadd.f32 %v709, %v758
      %v775 = vadd.f32 %v710, %v759
      %v776 = vadd.f32 %v711, %v760
      %v777 = vadd.f32 %v712, %v761
      %v778 = vadd.f32 %v713, %v762
      %v779 = vadd.f32 %v714, %v763
      %v780 = vadd.f32 %v715, %v764
      %v781 = vadd.f32 %v716, %v765
      %v782 = vadd.f32 %v717, %v766
      %v783 = vadd.f32 %v718, %v767
      %s784 = scalar_lea.vmem [#allocation2], 1408
      %v785 = vld [vmem:[%s784] sm:$0xff]
      %v786 = vld [vmem:[%s784 + $0x8] sm:$0xff]
      %v787 = vld [vmem:[%s784 + $0x10] sm:$0xff]
      %v788 = vld [vmem:[%s784 + $0x18] sm:$0xff]
      %v789 = vld [vmem:[%s784 + $0x20] sm:$0xff]
      %v790 = vld [vmem:[%s784 + $0x28] sm:$0xff]
      %v791 = vld [vmem:[%s784 + $0x30] sm:$0xff]
      %v792 = vld [vmem:[%s784 + $0x38] sm:$0xff]
      %v793 = vld [vmem:[%s784 + $0x40] sm:$0xff]
      %v794 = vld [vmem:[%s784 + $0x48] sm:$0xff]
      %v795 = vld [vmem:[%s784 + $0x50] sm:$0xff]
      %v796 = vld [vmem:[%s784 + $0x58] sm:$0xff]
      %v797 = vld [vmem:[%s784 + $0x60] sm:$0xff]
      %v798 = vld [vmem:[%s784 + $0x68] sm:$0xff]
      %v799 = vld [vmem:[%s784 + $0x70] sm:$0xff]
      %v800 = vld [vmem:[%s784 + $0x78] sm:$0xff]
      %v801 = vlaneseq
      %v802 = vshrl.u32 %v801, 7
      %v803 = vsub.s32 3, %v802
      %v804 = vrot.slane %v82, %v803
      %v805 = vlaneseq
      %v806 = vshrl.u32 %v805, 7
      %v807 = vsub.s32 3, %v806
      %v808 = vrot.slane %v83, %v807
      %v809 = vlaneseq
      %v810 = vshrl.u32 %v809, 7
      %v811 = vsub.s32 3, %v810
      %v812 = vrot.slane %v84, %v811
      %v813 = vlaneseq
      %v814 = vshrl.u32 %v813, 7
      %v815 = vsub.s32 3, %v814
      %v816 = vrot.slane %v85, %v815
      %v817 = vmul.f32 %v785, %v804
      %v818 = vmul.f32 %v786, %v808
      %v819 = vmul.f32 %v787, %v812
      %v820 = vmul.f32 %v788, %v816
      %v821 = vmul.f32 %v789, %v804
      %v822 = vmul.f32 %v790, %v808
      %v823 = vmul.f32 %v791, %v812
      %v824 = vmul.f32 %v792, %v816
      %v825 = vmul.f32 %v793, %v804
      %v826 = vmul.f32 %v794, %v808
      %v827 = vmul.f32 %v795, %v812
      %v828 = vmul.f32 %v796, %v816
      %v829 = vmul.f32 %v797, %v804
      %v830 = vmul.f32 %v798, %v808
      %v831 = vmul.f32 %v799, %v812
      %v832 = vmul.f32 %v800, %v816
      %v833 = vadd.f32 %v768, %v817
      %v834 = vadd.f32 %v769, %v818
      %v835 = vadd.f32 %v770, %v819
      %v836 = vadd.f32 %v771, %v820
      %v837 = vadd.f32 %v772, %v821
      %v838 = vadd.f32 %v773, %v822
      %v839 = vadd.f32 %v774, %v823
      %v840 = vadd.f32 %v775, %v824
      %v841 = vadd.f32 %v776, %v825
      %v842 = vadd.f32 %v777, %v826
      %v843 = vadd.f32 %v778, %v827
      %v844 = vadd.f32 %v779, %v828
      %v845 = vadd.f32 %v780, %v829
      %v846 = vadd.f32 %v781, %v830
      %v847 = vadd.f32 %v782, %v831
      %v848 = vadd.f32 %v783, %v832
      %s849 = scalar_lea.vmem [#allocation2], 1536
      %v850 = vld [vmem:[%s849] sm:$0xff]
      %v851 = vld [vmem:[%s849 + $0x8] sm:$0xff]
      %v852 = vld [vmem:[%s849 + $0x10] sm:$0xff]
      %v853 = vld [vmem:[%s849 + $0x18] sm:$0xff]
      %v854 = vld [vmem:[%s849 + $0x20] sm:$0xff]
      %v855 = vld [vmem:[%s849 + $0x28] sm:$0xff]
      %v856 = vld [vmem:[%s849 + $0x30] sm:$0xff]
      %v857 = vld [vmem:[%s849 + $0x38] sm:$0xff]
      %v858 = vld [vmem:[%s849 + $0x40] sm:$0xff]
      %v859 = vld [vmem:[%s849 + $0x48] sm:$0xff]
      %v860 = vld [vmem:[%s849 + $0x50] sm:$0xff]
      %v861 = vld [vmem:[%s849 + $0x58] sm:$0xff]
      %v862 = vld [vmem:[%s849 + $0x60] sm:$0xff]
      %v863 = vld [vmem:[%s849 + $0x68] sm:$0xff]
      %v864 = vld [vmem:[%s849 + $0x70] sm:$0xff]
      %v865 = vld [vmem:[%s849 + $0x78] sm:$0xff]
      %v866 = vlaneseq
      %v867 = vshrl.u32 %v866, 7
      %v868 = vsub.s32 4, %v867
      %v869 = vrot.slane %v82, %v868
      %v870 = vlaneseq
      %v871 = vshrl.u32 %v870, 7
      %v872 = vsub.s32 4, %v871
      %v873 = vrot.slane %v83, %v872
      %v874 = vlaneseq
      %v875 = vshrl.u32 %v874, 7
      %v876 = vsub.s32 4, %v875
      %v877 = vrot.slane %v84, %v876
      %v878 = vlaneseq
      %v879 = vshrl.u32 %v878, 7
      %v880 = vsub.s32 4, %v879
      %v881 = vrot.slane %v85, %v880
      %v882 = vmul.f32 %v850, %v869
      %v883 = vmul.f32 %v851, %v873
      %v884 = vmul.f32 %v852, %v877
      %v885 = vmul.f32 %v853, %v881
      %v886 = vmul.f32 %v854, %v869
      %v887 = vmul.f32 %v855, %v873
      %v888 = vmul.f32 %v856, %v877
      %v889 = vmul.f32 %v857, %v881
      %v890 = vmul.f32 %v858, %v869
      %v891 = vmul.f32 %v859, %v873
      %v892 = vmul.f32 %v860, %v877
      %v893 = vmul.f32 %v861, %v881
      %v894 = vmul.f32 %v862, %v869
      %v895 = vmul.f32 %v863, %v873
      %v896 = vmul.f32 %v864, %v877
      %v897 = vmul.f32 %v865, %v881
      %v898 = vadd.f32 %v833, %v882
      %v899 = vadd.f32 %v834, %v883
      %v900 = vadd.f32 %v835, %v884
      %v901 = vadd.f32 %v836, %v885
      %v902 = vadd.f32 %v837, %v886
      %v903 = vadd.f32 %v838, %v887
      %v904 = vadd.f32 %v839, %v888
      %v905 = vadd.f32 %v840, %v889
      %v906 = vadd.f32 %v841, %v890
      %v907 = vadd.f32 %v842, %v891
      %v908 = vadd.f32 %v843, %v892
      %v909 = vadd.f32 %v844, %v893
      %v910 = vadd.f32 %v845, %v894
      %v911 = vadd.f32 %v846, %v895
      %v912 = vadd.f32 %v847, %v896
      %v913 = vadd.f32 %v848, %v897
      %s914 = scalar_lea.vmem [#allocation2], 1664
      %v915 = vld [vmem:[%s914] sm:$0xff]
      %v916 = vld [vmem:[%s914 + $0x8] sm:$0xff]
      %v917 = vld [vmem:[%s914 + $0x10] sm:$0xff]
      %v918 = vld [vmem:[%s914 + $0x18] sm:$0xff]
      %v919 = vld [vmem:[%s914 + $0x20] sm:$0xff]
      %v920 = vld [vmem:[%s914 + $0x28] sm:$0xff]
      %v921 = vld [vmem:[%s914 + $0x30] sm:$0xff]
      %v922 = vld [vmem:[%s914 + $0x38] sm:$0xff]
      %v923 = vld [vmem:[%s914 + $0x40] sm:$0xff]
      %v924 = vld [vmem:[%s914 + $0x48] sm:$0xff]
      %v925 = vld [vmem:[%s914 + $0x50] sm:$0xff]
      %v926 = vld [vmem:[%s914 + $0x58] sm:$0xff]
      %v927 = vld [vmem:[%s914 + $0x60] sm:$0xff]
      %v928 = vld [vmem:[%s914 + $0x68] sm:$0xff]
      %v929 = vld [vmem:[%s914 + $0x70] sm:$0xff]
      %v930 = vld [vmem:[%s914 + $0x78] sm:$0xff]
      %v931 = vlaneseq
      %v932 = vshrl.u32 %v931, 7
      %v933 = vsub.s32 5, %v932
      %v934 = vrot.slane %v82, %v933
      %v935 = vlaneseq
      %v936 = vshrl.u32 %v935, 7
      %v937 = vsub.s32 5, %v936
      %v938 = vrot.slane %v83, %v937
      %v939 = vlaneseq
      %v940 = vshrl.u32 %v939, 7
      %v941 = vsub.s32 5, %v940
      %v942 = vrot.slane %v84, %v941
      %v943 = vlaneseq
      %v944 = vshrl.u32 %v943, 7
      %v945 = vsub.s32 5, %v944
      %v946 = vrot.slane %v85, %v945
      %v947 = vmul.f32 %v915, %v934
      %v948 = vmul.f32 %v916, %v938
      %v949 = vmul.f32 %v917, %v942
      %v950 = vmul.f32 %v918, %v946
      %v951 = vmul.f32 %v919, %v934
      %v952 = vmul.f32 %v920, %v938
      %v953 = vmul.f32 %v921, %v942
      %v954 = vmul.f32 %v922, %v946
      %v955 = vmul.f32 %v923, %v934
      %v956 = vmul.f32 %v924, %v938
      %v957 = vmul.f32 %v925, %v942
      %v958 = vmul.f32 %v926, %v946
      %v959 = vmul.f32 %v927, %v934
      %v960 = vmul.f32 %v928, %v938
      %v961 = vmul.f32 %v929, %v942
      %v962 = vmul.f32 %v930, %v946
      %v963 = vadd.f32 %v898, %v947
      %v964 = vadd.f32 %v899, %v948
      %v965 = vadd.f32 %v900, %v949
      %v966 = vadd.f32 %v901, %v950
      %v967 = vadd.f32 %v902, %v951
      %v968 = vadd.f32 %v903, %v952
      %v969 = vadd.f32 %v904, %v953
      %v970 = vadd.f32 %v905, %v954
      %v971 = vadd.f32 %v906, %v955
      %v972 = vadd.f32 %v907, %v956
      %v973 = vadd.f32 %v908, %v957
      %v974 = vadd.f32 %v909, %v958
      %v975 = vadd.f32 %v910, %v959
      %v976 = vadd.f32 %v911, %v960
      %v977 = vadd.f32 %v912, %v961
      %v978 = vadd.f32 %v913, %v962
      %s979 = scalar_lea.vmem [#allocation2], 1792
      %v980 = vld [vmem:[%s979] sm:$0xff]
      %v981 = vld [vmem:[%s979 + $0x8] sm:$0xff]
      %v982 = vld [vmem:[%s979 + $0x10] sm:$0xff]
      %v983 = vld [vmem:[%s979 + $0x18] sm:$0xff]
      %v984 = vld [vmem:[%s979 + $0x20] sm:$0xff]
      %v985 = vld [vmem:[%s979 + $0x28] sm:$0xff]
      %v986 = vld [vmem:[%s979 + $0x30] sm:$0xff]
      %v987 = vld [vmem:[%s979 + $0x38] sm:$0xff]
      %v988 = vld [vmem:[%s979 + $0x40] sm:$0xff]
      %v989 = vld [vmem:[%s979 + $0x48] sm:$0xff]
      %v990 = vld [vmem:[%s979 + $0x50] sm:$0xff]
      %v991 = vld [vmem:[%s979 + $0x58] sm:$0xff]
      %v992 = vld [vmem:[%s979 + $0x60] sm:$0xff]
      %v993 = vld [vmem:[%s979 + $0x68] sm:$0xff]
      %v994 = vld [vmem:[%s979 + $0x70] sm:$0xff]
      %v995 = vld [vmem:[%s979 + $0x78] sm:$0xff]
      %v996 = vlaneseq
      %v997 = vshrl.u32 %v996, 7
      %v998 = vsub.s32 6, %v997
      %v999 = vrot.slane %v82, %v998
      %v1000 = vlaneseq
      %v1001 = vshrl.u32 %v1000, 7
      %v1002 = vsub.s32 6, %v1001
      %v1003 = vrot.slane %v83, %v1002
      %v1004 = vlaneseq
      %v1005 = vshrl.u32 %v1004, 7
      %v1006 = vsub.s32 6, %v1005
      %v1007 = vrot.slane %v84, %v1006
      %v1008 = vlaneseq
      %v1009 = vshrl.u32 %v1008, 7
      %v1010 = vsub.s32 6, %v1009
      %v1011 = vrot.slane %v85, %v1010
      %v1012 = vmul.f32 %v980, %v999
      %v1013 = vmul.f32 %v981, %v1003
      %v1014 = vmul.f32 %v982, %v1007
      %v1015 = vmul.f32 %v983, %v1011
      %v1016 = vmul.f32 %v984, %v999
      %v1017 = vmul.f32 %v985, %v1003
      %v1018 = vmul.f32 %v986, %v1007
      %v1019 = vmul.f32 %v987, %v1011
      %v1020 = vmul.f32 %v988, %v999
      %v1021 = vmul.f32 %v989, %v1003
      %v1022 = vmul.f32 %v990, %v1007
      %v1023 = vmul.f32 %v991, %v1011
      %v1024 = vmul.f32 %v992, %v999
      %v1025 = vmul.f32 %v993, %v1003
      %v1026 = vmul.f32 %v994, %v1007
      %v1027 = vmul.f32 %v995, %v1011
      %v1028 = vadd.f32 %v963, %v1012
      %v1029 = vadd.f32 %v964, %v1013
      %v1030 = vadd.f32 %v965, %v1014
      %v1031 = vadd.f32 %v966, %v1015
      %v1032 = vadd.f32 %v967, %v1016
      %v1033 = vadd.f32 %v968, %v1017
      %v1034 = vadd.f32 %v969, %v1018
      %v1035 = vadd.f32 %v970, %v1019
      %v1036 = vadd.f32 %v971, %v1020
      %v1037 = vadd.f32 %v972, %v1021
      %v1038 = vadd.f32 %v973, %v1022
      %v1039 = vadd.f32 %v974, %v1023
      %v1040 = vadd.f32 %v975, %v1024
      %v1041 = vadd.f32 %v976, %v1025
      %v1042 = vadd.f32 %v977, %v1026
      %v1043 = vadd.f32 %v978, %v1027
      %s1044 = scalar_lea.vmem [#allocation2], 1920
      %v1045 = vld [vmem:[%s1044] sm:$0xff]
      %v1046 = vld [vmem:[%s1044 + $0x8] sm:$0xff]
      %v1047 = vld [vmem:[%s1044 + $0x10] sm:$0xff]
      %v1048 = vld [vmem:[%s1044 + $0x18] sm:$0xff]
      %v1049 = vld [vmem:[%s1044 + $0x20] sm:$0xff]
      %v1050 = vld [vmem:[%s1044 + $0x28] sm:$0xff]
      %v1051 = vld [vmem:[%s1044 + $0x30] sm:$0xff]
      %v1052 = vld [vmem:[%s1044 + $0x38] sm:$0xff]
      %v1053 = vld [vmem:[%s1044 + $0x40] sm:$0xff]
      %v1054 = vld [vmem:[%s1044 + $0x48] sm:$0xff]
      %v1055 = vld [vmem:[%s1044 + $0x50] sm:$0xff]
      %v1056 = vld [vmem:[%s1044 + $0x58] sm:$0xff]
      %v1057 = vld [vmem:[%s1044 + $0x60] sm:$0xff]
      %v1058 = vld [vmem:[%s1044 + $0x68] sm:$0xff]
      %v1059 = vld [vmem:[%s1044 + $0x70] sm:$0xff]
      %v1060 = vld [vmem:[%s1044 + $0x78] sm:$0xff]
      %v1061 = vlaneseq
      %v1062 = vshrl.u32 %v1061, 7
      %v1063 = vsub.s32 7, %v1062
      %v1064 = vrot.slane %v82, %v1063
      %v1065 = vlaneseq
      %v1066 = vshrl.u32 %v1065, 7
      %v1067 = vsub.s32 7, %v1066
      %v1068 = vrot.slane %v83, %v1067
      %v1069 = vlaneseq
      %v1070 = vshrl.u32 %v1069, 7
      %v1071 = vsub.s32 7, %v1070
      %v1072 = vrot.slane %v84, %v1071
      %v1073 = vlaneseq
      %v1074 = vshrl.u32 %v1073, 7
      %v1075 = vsub.s32 7, %v1074
      %v1076 = vrot.slane %v85, %v1075
      %v1077 = vmul.f32 %v1045, %v1064
      %v1078 = vmul.f32 %v1046, %v1068
      %v1079 = vmul.f32 %v1047, %v1072
      %v1080 = vmul.f32 %v1048, %v1076
      %v1081 = vmul.f32 %v1049, %v1064
      %v1082 = vmul.f32 %v1050, %v1068
      %v1083 = vmul.f32 %v1051, %v1072
      %v1084 = vmul.f32 %v1052, %v1076
      %v1085 = vmul.f32 %v1053, %v1064
      %v1086 = vmul.f32 %v1054, %v1068
      %v1087 = vmul.f32 %v1055, %v1072
      %v1088 = vmul.f32 %v1056, %v1076
      %v1089 = vmul.f32 %v1057, %v1064
      %v1090 = vmul.f32 %v1058, %v1068
      %v1091 = vmul.f32 %v1059, %v1072
      %v1092 = vmul.f32 %v1060, %v1076
      %v1093 = vadd.f32 %v1028, %v1077
      %v1094 = vadd.f32 %v1029, %v1078
      %v1095 = vadd.f32 %v1030, %v1079
      %v1096 = vadd.f32 %v1031, %v1080
      %v1097 = vadd.f32 %v1032, %v1081
      %v1098 = vadd.f32 %v1033, %v1082
      %v1099 = vadd.f32 %v1034, %v1083
      %v1100 = vadd.f32 %v1035, %v1084
      %v1101 = vadd.f32 %v1036, %v1085
      %v1102 = vadd.f32 %v1037, %v1086
      %v1103 = vadd.f32 %v1038, %v1087
      %v1104 = vadd.f32 %v1039, %v1088
      %v1105 = vadd.f32 %v1040, %v1089
      %v1106 = vadd.f32 %v1041, %v1090
      %v1107 = vadd.f32 %v1042, %v1091
      %v1108 = vadd.f32 %v1043, %v1092
      %v1109 = vld [vmem:[#allocation5] sm:$0xff]
      %v1110 = vld [vmem:[#allocation5 + $0x8] sm:$0xff]
      %v1111 = vld [vmem:[#allocation5 + $0x10] sm:$0xff]
      %v1112 = vld [vmem:[#allocation5 + $0x18] sm:$0xff]
      %v1113 = vld [vmem:[#allocation5 + $0x20] sm:$0xff]
      %v1114 = vld [vmem:[#allocation5 + $0x28] sm:$0xff]
      %v1115 = vld [vmem:[#allocation5 + $0x30] sm:$0xff]
      %v1116 = vld [vmem:[#allocation5 + $0x38] sm:$0xff]
      %v1117 = vlaneseq
      %v1118 = vshrl.u32 %v1117, 7
      %v1119 = vsub.s32 0, %v1118
      %v1120 = vrot.slane %v1093, %v1119
      %v1121 = vlaneseq
      %v1122 = vshrl.u32 %v1121, 7
      %v1123 = vsub.s32 0, %v1122
      %v1124 = vrot.slane %v1094, %v1123
      %v1125 = vlaneseq
      %v1126 = vshrl.u32 %v1125, 7
      %v1127 = vsub.s32 0, %v1126
      %v1128 = vrot.slane %v1095, %v1127
      %v1129 = vlaneseq
      %v1130 = vshrl.u32 %v1129, 7
      %v1131 = vsub.s32 0, %v1130
      %v1132 = vrot.slane %v1096, %v1131
      %v1133 = vmul.f32 %v1109, %v1120
      %v1134 = vmul.f32 %v1110, %v1124
      %v1135 = vmul.f32 %v1111, %v1128
      %v1136 = vmul.f32 %v1112, %v1132
      %v1137 = vmul.f32 %v1113, %v1120
      %v1138 = vmul.f32 %v1114, %v1124
      %v1139 = vmul.f32 %v1115, %v1128
      %v1140 = vmul.f32 %v1116, %v1132
      %s1141 = scalar_lea.vmem [#allocation5], 64
      %v1142 = vld [vmem:[%s1141] sm:$0xff]
      %v1143 = vld [vmem:[%s1141 + $0x8] sm:$0xff]
      %v1144 = vld [vmem:[%s1141 + $0x10] sm:$0xff]
      %v1145 = vld [vmem:[%s1141 + $0x18] sm:$0xff]
      %v1146 = vld [vmem:[%s1141 + $0x20] sm:$0xff]
      %v1147 = vld [vmem:[%s1141 + $0x28] sm:$0xff]
      %v1148 = vld [vmem:[%s1141 + $0x30] sm:$0xff]
      %v1149 = vld [vmem:[%s1141 + $0x38] sm:$0xff]
      %v1150 = vlaneseq
      %v1151 = vshrl.u32 %v1150, 7
      %v1152 = vsub.s32 1, %v1151
      %v1153 = vrot.slane %v1093, %v1152
      %v1154 = vlaneseq
      %v1155 = vshrl.u32 %v1154, 7
      %v1156 = vsub.s32 1, %v1155
      %v1157 = vrot.slane %v1094, %v1156
      %v1158 = vlaneseq
      %v1159 = vshrl.u32 %v1158, 7
      %v1160 = vsub.s32 1, %v1159
      %v1161 = vrot.slane %v1095, %v1160
      %v1162 = vlaneseq
      %v1163 = vshrl.u32 %v1162, 7
      %v1164 = vsub.s32 1, %v1163
      %v1165 = vrot.slane %v1096, %v1164
      %v1166 = vmul.f32 %v1142, %v1153
      %v1167 = vmul.f32 %v1143, %v1157
      %v1168 = vmul.f32 %v1144, %v1161
      %v1169 = vmul.f32 %v1145, %v1165
      %v1170 = vmul.f32 %v1146, %v1153
      %v1171 = vmul.f32 %v1147, %v1157
      %v1172 = vmul.f32 %v1148, %v1161
      %v1173 = vmul.f32 %v1149, %v1165
      %v1174 = vadd.f32 %v1133, %v1166
      %v1175 = vadd.f32 %v1134, %v1167
      %v1176 = vadd.f32 %v1135, %v1168
      %v1177 = vadd.f32 %v1136, %v1169
      %v1178 = vadd.f32 %v1137, %v1170
      %v1179 = vadd.f32 %v1138, %v1171
      %v1180 = vadd.f32 %v1139, %v1172
      %v1181 = vadd.f32 %v1140, %v1173
      %s1182 = scalar_lea.vmem [#allocation5], 128
      %v1183 = vld [vmem:[%s1182] sm:$0xff]
      %v1184 = vld [vmem:[%s1182 + $0x8] sm:$0xff]
      %v1185 = vld [vmem:[%s1182 + $0x10] sm:$0xff]
      %v1186 = vld [vmem:[%s1182 + $0x18] sm:$0xff]
      %v1187 = vld [vmem:[%s1182 + $0x20] sm:$0xff]
      %v1188 = vld [vmem:[%s1182 + $0x28] sm:$0xff]
      %v1189 = vld [vmem:[%s1182 + $0x30] sm:$0xff]
      %v1190 = vld [vmem:[%s1182 + $0x38] sm:$0xff]
      %v1191 = vlaneseq
      %v1192 = vshrl.u32 %v1191, 7
      %v1193 = vsub.s32 2, %v1192
      %v1194 = vrot.slane %v1093, %v1193
      %v1195 = vlaneseq
      %v1196 = vshrl.u32 %v1195, 7
      %v1197 = vsub.s32 2, %v1196
      %v1198 = vrot.slane %v1094, %v1197
      %v1199 = vlaneseq
      %v1200 = vshrl.u32 %v1199, 7
      %v1201 = vsub.s32 2, %v1200
      %v1202 = vrot.slane %v1095, %v1201
      %v1203 = vlaneseq
      %v1204 = vshrl.u32 %v1203, 7
      %v1205 = vsub.s32 2, %v1204
      %v1206 = vrot.slane %v1096, %v1205
      %v1207 = vmul.f32 %v1183, %v1194
      %v1208 = vmul.f32 %v1184, %v1198
      %v1209 = vmul.f32 %v1185, %v1202
      %v1210 = vmul.f32 %v1186, %v1206
      %v1211 = vmul.f32 %v1187, %v1194
      %v1212 = vmul.f32 %v1188, %v1198
      %v1213 = vmul.f32 %v1189, %v1202
      %v1214 = vmul.f32 %v1190, %v1206
      %v1215 = vadd.f32 %v1174, %v1207
      %v1216 = vadd.f32 %v1175, %v1208
      %v1217 = vadd.f32 %v1176, %v1209
      %v1218 = vadd.f32 %v1177, %v1210
      %v1219 = vadd.f32 %v1178, %v1211
      %v1220 = vadd.f32 %v1179, %v1212
      %v1221 = vadd.f32 %v1180, %v1213
      %v1222 = vadd.f32 %v1181, %v1214
      %s1223 = scalar_lea.vmem [#allocation5], 192
      %v1224 = vld [vmem:[%s1223] sm:$0xff]
      %v1225 = vld [vmem:[%s1223 + $0x8] sm:$0xff]
      %v1226 = vld [vmem:[%s1223 + $0x10] sm:$0xff]
      %v1227 = vld [vmem:[%s1223 + $0x18] sm:$0xff]
      %v1228 = vld [vmem:[%s1223 + $0x20] sm:$0xff]
      %v1229 = vld [vmem:[%s1223 + $0x28] sm:$0xff]
      %v1230 = vld [vmem:[%s1223 + $0x30] sm:$0xff]
      %v1231 = vld [vmem:[%s1223 + $0x38] sm:$0xff]
      %v1232 = vlaneseq
      %v1233 = vshrl.u32 %v1232, 7
      %v1234 = vsub.s32 3, %v1233
      %v1235 = vrot.slane %v1093, %v1234
      %v1236 = vlaneseq
      %v1237 = vshrl.u32 %v1236, 7
      %v1238 = vsub.s32 3, %v1237
      %v1239 = vrot.slane %v1094, %v1238
      %v1240 = vlaneseq
      %v1241 = vshrl.u32 %v1240, 7
      %v1242 = vsub.s32 3, %v1241
      %v1243 = vrot.slane %v1095, %v1242
      %v1244 = vlaneseq
      %v1245 = vshrl.u32 %v1244, 7
      %v1246 = vsub.s32 3, %v1245
      %v1247 = vrot.slane %v1096, %v1246
      %v1248 = vmul.f32 %v1224, %v1235
      %v1249 = vmul.f32 %v1225, %v1239
      %v1250 = vmul.f32 %v1226, %v1243
      %v1251 = vmul.f32 %v1227, %v1247
      %v1252 = vmul.f32 %v1228, %v1235
      %v1253 = vmul.f32 %v1229, %v1239
      %v1254 = vmul.f32 %v1230, %v1243
      %v1255 = vmul.f32 %v1231, %v1247
      %v1256 = vadd.f32 %v1215, %v1248
      %v1257 = vadd.f32 %v1216, %v1249
      %v1258 = vadd.f32 %v1217, %v1250
      %v1259 = vadd.f32 %v1218, %v1251
      %v1260 = vadd.f32 %v1219, %v1252
      %v1261 = vadd.f32 %v1220, %v1253
      %v1262 = vadd.f32 %v1221, %v1254
      %v1263 = vadd.f32 %v1222, %v1255
      %s1264 = scalar_lea.vmem [#allocation5], 256
      %v1265 = vld [vmem:[%s1264] sm:$0xff]
      %v1266 = vld [vmem:[%s1264 + $0x8] sm:$0xff]
      %v1267 = vld [vmem:[%s1264 + $0x10] sm:$0xff]
      %v1268 = vld [vmem:[%s1264 + $0x18] sm:$0xff]
      %v1269 = vld [vmem:[%s1264 + $0x20] sm:$0xff]
      %v1270 = vld [vmem:[%s1264 + $0x28] sm:$0xff]
      %v1271 = vld [vmem:[%s1264 + $0x30] sm:$0xff]
      %v1272 = vld [vmem:[%s1264 + $0x38] sm:$0xff]
      %v1273 = vlaneseq
      %v1274 = vshrl.u32 %v1273, 7
      %v1275 = vsub.s32 4, %v1274
      %v1276 = vrot.slane %v1093, %v1275
      %v1277 = vlaneseq
      %v1278 = vshrl.u32 %v1277, 7
      %v1279 = vsub.s32 4, %v1278
      %v1280 = vrot.slane %v1094, %v1279
      %v1281 = vlaneseq
      %v1282 = vshrl.u32 %v1281, 7
      %v1283 = vsub.s32 4, %v1282
      %v1284 = vrot.slane %v1095, %v1283
      %v1285 = vlaneseq
      %v1286 = vshrl.u32 %v1285, 7
      %v1287 = vsub.s32 4, %v1286
      %v1288 = vrot.slane %v1096, %v1287
      %v1289 = vmul.f32 %v1265, %v1276
      %v1290 = vmul.f32 %v1266, %v1280
      %v1291 = vmul.f32 %v1267, %v1284
      %v1292 = vmul.f32 %v1268, %v1288
      %v1293 = vmul.f32 %v1269, %v1276
      %v1294 = vmul.f32 %v1270, %v1280
      %v1295 = vmul.f32 %v1271, %v1284
      %v1296 = vmul.f32 %v1272, %v1288
      %v1297 = vadd.f32 %v1256, %v1289
      %v1298 = vadd.f32 %v1257, %v1290
      %v1299 = vadd.f32 %v1258, %v1291
      %v1300 = vadd.f32 %v1259, %v1292
      %v1301 = vadd.f32 %v1260, %v1293
      %v1302 = vadd.f32 %v1261, %v1294
      %v1303 = vadd.f32 %v1262, %v1295
      %v1304 = vadd.f32 %v1263, %v1296
      %s1305 = scalar_lea.vmem [#allocation5], 320
      %v1306 = vld [vmem:[%s1305] sm:$0xff]
      %v1307 = vld [vmem:[%s1305 + $0x8] sm:$0xff]
      %v1308 = vld [vmem:[%s1305 + $0x10] sm:$0xff]
      %v1309 = vld [vmem:[%s1305 + $0x18] sm:$0xff]
      %v1310 = vld [vmem:[%s1305 + $0x20] sm:$0xff]
      %v1311 = vld [vmem:[%s1305 + $0x28] sm:$0xff]
      %v1312 = vld [vmem:[%s1305 + $0x30] sm:$0xff]
      %v1313 = vld [vmem:[%s1305 + $0x38] sm:$0xff]
      %v1314 = vlaneseq
      %v1315 = vshrl.u32 %v1314, 7
      %v1316 = vsub.s32 5, %v1315
      %v1317 = vrot.slane %v1093, %v1316
      %v1318 = vlaneseq
      %v1319 = vshrl.u32 %v1318, 7
      %v1320 = vsub.s32 5, %v1319
      %v1321 = vrot.slane %v1094, %v1320
      %v1322 = vlaneseq
      %v1323 = vshrl.u32 %v1322, 7
      %v1324 = vsub.s32 5, %v1323
      %v1325 = vrot.slane %v1095, %v1324
      %v1326 = vlaneseq
      %v1327 = vshrl.u32 %v1326, 7
      %v1328 = vsub.s32 5, %v1327
      %v1329 = vrot.slane %v1096, %v1328
      %v1330 = vmul.f32 %v1306, %v1317
      %v1331 = vmul.f32 %v1307, %v1321
      %v1332 = vmul.f32 %v1308, %v1325
      %v1333 = vmul.f32 %v1309, %v1329
      %v1334 = vmul.f32 %v1310, %v1317
      %v1335 = vmul.f32 %v1311, %v1321
      %v1336 = vmul.f32 %v1312, %v1325
      %v1337 = vmul.f32 %v1313, %v1329
      %v1338 = vadd.f32 %v1297, %v1330
      %v1339 = vadd.f32 %v1298, %v1331
      %v1340 = vadd.f32 %v1299, %v1332
      %v1341 = vadd.f32 %v1300, %v1333
      %v1342 = vadd.f32 %v1301, %v1334
      %v1343 = vadd.f32 %v1302, %v1335
      %v1344 = vadd.f32 %v1303, %v1336
      %v1345 = vadd.f32 %v1304, %v1337
      %s1346 = scalar_lea.vmem [#allocation5], 384
      %v1347 = vld [vmem:[%s1346] sm:$0xff]
      %v1348 = vld [vmem:[%s1346 + $0x8] sm:$0xff]
      %v1349 = vld [vmem:[%s1346 + $0x10] sm:$0xff]
      %v1350 = vld [vmem:[%s1346 + $0x18] sm:$0xff]
      %v1351 = vld [vmem:[%s1346 + $0x20] sm:$0xff]
      %v1352 = vld [vmem:[%s1346 + $0x28] sm:$0xff]
      %v1353 = vld [vmem:[%s1346 + $0x30] sm:$0xff]
      %v1354 = vld [vmem:[%s1346 + $0x38] sm:$0xff]
      %v1355 = vlaneseq
      %v1356 = vshrl.u32 %v1355, 7
      %v1357 = vsub.s32 6, %v1356
      %v1358 = vrot.slane %v1093, %v1357
      %v1359 = vlaneseq
      %v1360 = vshrl.u32 %v1359, 7
      %v1361 = vsub.s32 6, %v1360
      %v1362 = vrot.slane %v1094, %v1361
      %v1363 = vlaneseq
      %v1364 = vshrl.u32 %v1363, 7
      %v1365 = vsub.s32 6, %v1364
      %v1366 = vrot.slane %v1095, %v1365
      %v1367 = vlaneseq
      %v1368 = vshrl.u32 %v1367, 7
      %v1369 = vsub.s32 6, %v1368
      %v1370 = vrot.slane %v1096, %v1369
      %v1371 = vmul.f32 %v1347, %v1358
      %v1372 = vmul.f32 %v1348, %v1362
      %v1373 = vmul.f32 %v1349, %v1366
      %v1374 = vmul.f32 %v1350, %v1370
      %v1375 = vmul.f32 %v1351, %v1358
      %v1376 = vmul.f32 %v1352, %v1362
      %v1377 = vmul.f32 %v1353, %v1366
      %v1378 = vmul.f32 %v1354, %v1370
      %v1379 = vadd.f32 %v1338, %v1371
      %v1380 = vadd.f32 %v1339, %v1372
      %v1381 = vadd.f32 %v1340, %v1373
      %v1382 = vadd.f32 %v1341, %v1374
      %v1383 = vadd.f32 %v1342, %v1375
      %v1384 = vadd.f32 %v1343, %v1376
      %v1385 = vadd.f32 %v1344, %v1377
      %v1386 = vadd.f32 %v1345, %v1378
      %s1387 = scalar_lea.vmem [#allocation5], 448
      %v1388 = vld [vmem:[%s1387] sm:$0xff]
      %v1389 = vld [vmem:[%s1387 + $0x8] sm:$0xff]
      %v1390 = vld [vmem:[%s1387 + $0x10] sm:$0xff]
      %v1391 = vld [vmem:[%s1387 + $0x18] sm:$0xff]
      %v1392 = vld [vmem:[%s1387 + $0x20] sm:$0xff]
      %v1393 = vld [vmem:[%s1387 + $0x28] sm:$0xff]
      %v1394 = vld [vmem:[%s1387 + $0x30] sm:$0xff]
      %v1395 = vld [vmem:[%s1387 + $0x38] sm:$0xff]
      %v1396 = vlaneseq
      %v1397 = vshrl.u32 %v1396, 7
      %v1398 = vsub.s32 7, %v1397
      %v1399 = vrot.slane %v1093, %v1398
      %v1400 = vlaneseq
      %v1401 = vshrl.u32 %v1400, 7
      %v1402 = vsub.s32 7, %v1401
      %v1403 = vrot.slane %v1094, %v1402
      %v1404 = vlaneseq
      %v1405 = vshrl.u32 %v1404, 7
      %v1406 = vsub.s32 7, %v1405
      %v1407 = vrot.slane %v1095, %v1406
      %v1408 = vlaneseq
      %v1409 = vshrl.u32 %v1408, 7
      %v1410 = vsub.s32 7, %v1409
      %v1411 = vrot.slane %v1096, %v1410
      %v1412 = vmul.f32 %v1388, %v1399
      %v1413 = vmul.f32 %v1389, %v1403
      %v1414 = vmul.f32 %v1390, %v1407
      %v1415 = vmul.f32 %v1391, %v1411
      %v1416 = vmul.f32 %v1392, %v1399
      %v1417 = vmul.f32 %v1393, %v1403
      %v1418 = vmul.f32 %v1394, %v1407
      %v1419 = vmul.f32 %v1395, %v1411
      %v1420 = vadd.f32 %v1379, %v1412
      %v1421 = vadd.f32 %v1380, %v1413
      %v1422 = vadd.f32 %v1381, %v1414
      %v1423 = vadd.f32 %v1382, %v1415
      %v1424 = vadd.f32 %v1383, %v1416
      %v1425 = vadd.f32 %v1384, %v1417
      %v1426 = vadd.f32 %v1385, %v1418
      %v1427 = vadd.f32 %v1386, %v1419
      %s1428 = scalar_lea.vmem [#allocation5], 512
      %v1429 = vld [vmem:[%s1428] sm:$0xff]
      %v1430 = vld [vmem:[%s1428 + $0x8] sm:$0xff]
      %v1431 = vld [vmem:[%s1428 + $0x10] sm:$0xff]
      %v1432 = vld [vmem:[%s1428 + $0x18] sm:$0xff]
      %v1433 = vld [vmem:[%s1428 + $0x20] sm:$0xff]
      %v1434 = vld [vmem:[%s1428 + $0x28] sm:$0xff]
      %v1435 = vld [vmem:[%s1428 + $0x30] sm:$0xff]
      %v1436 = vld [vmem:[%s1428 + $0x38] sm:$0xff]
      %v1437 = vlaneseq
      %v1438 = vshrl.u32 %v1437, 7
      %v1439 = vsub.s32 0, %v1438
      %v1440 = vrot.slane %v1097, %v1439
      %v1441 = vlaneseq
      %v1442 = vshrl.u32 %v1441, 7
      %v1443 = vsub.s32 0, %v1442
      %v1444 = vrot.slane %v1098, %v1443
      %v1445 = vlaneseq
      %v1446 = vshrl.u32 %v1445, 7
      %v1447 = vsub.s32 0, %v1446
      %v1448 = vrot.slane %v1099, %v1447
      %v1449 = vlaneseq
      %v1450 = vshrl.u32 %v1449, 7
      %v1451 = vsub.s32 0, %v1450
      %v1452 = vrot.slane %v1100, %v1451
      %v1453 = vmul.f32 %v1429, %v1440
      %v1454 = vmul.f32 %v1430, %v1444
      %v1455 = vmul.f32 %v1431, %v1448
      %v1456 = vmul.f32 %v1432, %v1452
      %v1457 = vmul.f32 %v1433, %v1440
      %v1458 = vmul.f32 %v1434, %v1444
      %v1459 = vmul.f32 %v1435, %v1448
      %v1460 = vmul.f32 %v1436, %v1452
      %v1461 = vadd.f32 %v1420, %v1453
      %v1462 = vadd.f32 %v1421, %v1454
      %v1463 = vadd.f32 %v1422, %v1455
      %v1464 = vadd.f32 %v1423, %v1456
      %v1465 = vadd.f32 %v1424, %v1457
      %v1466 = vadd.f32 %v1425, %v1458
      %v1467 = vadd.f32 %v1426, %v1459
      %v1468 = vadd.f32 %v1427, %v1460
      %s1469 = scalar_lea.vmem [#allocation5], 576
      %v1470 = vld [vmem:[%s1469] sm:$0xff]
      %v1471 = vld [vmem:[%s1469 + $0x8] sm:$0xff]
      %v1472 = vld [vmem:[%s1469 + $0x10] sm:$0xff]
      %v1473 = vld [vmem:[%s1469 + $0x18] sm:$0xff]
      %v1474 = vld [vmem:[%s1469 + $0x20] sm:$0xff]
      %v1475 = vld [vmem:[%s1469 + $0x28] sm:$0xff]
      %v1476 = vld [vmem:[%s1469 + $0x30] sm:$0xff]
      %v1477 = vld [vmem:[%s1469 + $0x38] sm:$0xff]
      %v1478 = vlaneseq
      %v1479 = vshrl.u32 %v1478, 7
      %v1480 = vsub.s32 1, %v1479
      %v1481 = vrot.slane %v1097, %v1480
      %v1482 = vlaneseq
      %v1483 = vshrl.u32 %v1482, 7
      %v1484 = vsub.s32 1, %v1483
      %v1485 = vrot.slane %v1098, %v1484
      %v1486 = vlaneseq
      %v1487 = vshrl.u32 %v1486, 7
      %v1488 = vsub.s32 1, %v1487
      %v1489 = vrot.slane %v1099, %v1488
      %v1490 = vlaneseq
      %v1491 = vshrl.u32 %v1490, 7
      %v1492 = vsub.s32 1, %v1491
      %v1493 = vrot.slane %v1100, %v1492
      %v1494 = vmul.f32 %v1470, %v1481
      %v1495 = vmul.f32 %v1471, %v1485
      %v1496 = vmul.f32 %v1472, %v1489
      %v1497 = vmul.f32 %v1473, %v1493
      %v1498 = vmul.f32 %v1474, %v1481
      %v1499 = vmul.f32 %v1475, %v1485
      %v1500 = vmul.f32 %v1476, %v1489
      %v1501 = vmul.f32 %v1477, %v1493
      %v1502 = vadd.f32 %v1461, %v1494
      %v1503 = vadd.f32 %v1462, %v1495
      %v1504 = vadd.f32 %v1463, %v1496
      %v1505 = vadd.f32 %v1464, %v1497
      %v1506 = vadd.f32 %v1465, %v1498
      %v1507 = vadd.f32 %v1466, %v1499
      %v1508 = vadd.f32 %v1467, %v1500
      %v1509 = vadd.f32 %v1468, %v1501
      %s1510 = scalar_lea.vmem [#allocation5], 640
      %v1511 = vld [vmem:[%s1510] sm:$0xff]
      %v1512 = vld [vmem:[%s1510 + $0x8] sm:$0xff]
      %v1513 = vld [vmem:[%s1510 + $0x10] sm:$0xff]
      %v1514 = vld [vmem:[%s1510 + $0x18] sm:$0xff]
      %v1515 = vld [vmem:[%s1510 + $0x20] sm:$0xff]
      %v1516 = vld [vmem:[%s1510 + $0x28] sm:$0xff]
      %v1517 = vld [vmem:[%s1510 + $0x30] sm:$0xff]
      %v1518 = vld [vmem:[%s1510 + $0x38] sm:$0xff]
      %v1519 = vlaneseq
      %v1520 = vshrl.u32 %v1519, 7
      %v1521 = vsub.s32 2, %v1520
      %v1522 = vrot.slane %v1097, %v1521
      %v1523 = vlaneseq
      %v1524 = vshrl.u32 %v1523, 7
      %v1525 = vsub.s32 2, %v1524
      %v1526 = vrot.slane %v1098, %v1525
      %v1527 = vlaneseq
      %v1528 = vshrl.u32 %v1527, 7
      %v1529 = vsub.s32 2, %v1528
      %v1530 = vrot.slane %v1099, %v1529
      %v1531 = vlaneseq
      %v1532 = vshrl.u32 %v1531, 7
      %v1533 = vsub.s32 2, %v1532
      %v1534 = vrot.slane %v1100, %v1533
      %v1535 = vmul.f32 %v1511, %v1522
      %v1536 = vmul.f32 %v1512, %v1526
      %v1537 = vmul.f32 %v1513, %v1530
      %v1538 = vmul.f32 %v1514, %v1534
      %v1539 = vmul.f32 %v1515, %v1522
      %v1540 = vmul.f32 %v1516, %v1526
      %v1541 = vmul.f32 %v1517, %v1530
      %v1542 = vmul.f32 %v1518, %v1534
      %v1543 = vadd.f32 %v1502, %v1535
      %v1544 = vadd.f32 %v1503, %v1536
      %v1545 = vadd.f32 %v1504, %v1537
      %v1546 = vadd.f32 %v1505, %v1538
      %v1547 = vadd.f32 %v1506, %v1539
      %v1548 = vadd.f32 %v1507, %v1540
      %v1549 = vadd.f32 %v1508, %v1541
      %v1550 = vadd.f32 %v1509, %v1542
      %s1551 = scalar_lea.vmem [#allocation5], 704
      %v1552 = vld [vmem:[%s1551] sm:$0xff]
      %v1553 = vld [vmem:[%s1551 + $0x8] sm:$0xff]
      %v1554 = vld [vmem:[%s1551 + $0x10] sm:$0xff]
      %v1555 = vld [vmem:[%s1551 + $0x18] sm:$0xff]
      %v1556 = vld [vmem:[%s1551 + $0x20] sm:$0xff]
      %v1557 = vld [vmem:[%s1551 + $0x28] sm:$0xff]
      %v1558 = vld [vmem:[%s1551 + $0x30] sm:$0xff]
      %v1559 = vld [vmem:[%s1551 + $0x38] sm:$0xff]
      %v1560 = vlaneseq
      %v1561 = vshrl.u32 %v1560, 7
      %v1562 = vsub.s32 3, %v1561
      %v1563 = vrot.slane %v1097, %v1562
      %v1564 = vlaneseq
      %v1565 = vshrl.u32 %v1564, 7
      %v1566 = vsub.s32 3, %v1565
      %v1567 = vrot.slane %v1098, %v1566
      %v1568 = vlaneseq
      %v1569 = vshrl.u32 %v1568, 7
      %v1570 = vsub.s32 3, %v1569
      %v1571 = vrot.slane %v1099, %v1570
      %v1572 = vlaneseq
      %v1573 = vshrl.u32 %v1572, 7
      %v1574 = vsub.s32 3, %v1573
      %v1575 = vrot.slane %v1100, %v1574
      %v1576 = vmul.f32 %v1552, %v1563
      %v1577 = vmul.f32 %v1553, %v1567
      %v1578 = vmul.f32 %v1554, %v1571
      %v1579 = vmul.f32 %v1555, %v1575
      %v1580 = vmul.f32 %v1556, %v1563
      %v1581 = vmul.f32 %v1557, %v1567
      %v1582 = vmul.f32 %v1558, %v1571
      %v1583 = vmul.f32 %v1559, %v1575
      %v1584 = vadd.f32 %v1543, %v1576
      %v1585 = vadd.f32 %v1544, %v1577
      %v1586 = vadd.f32 %v1545, %v1578
      %v1587 = vadd.f32 %v1546, %v1579
      %v1588 = vadd.f32 %v1547, %v1580
      %v1589 = vadd.f32 %v1548, %v1581
      %v1590 = vadd.f32 %v1549, %v1582
      %v1591 = vadd.f32 %v1550, %v1583
      %s1592 = scalar_lea.vmem [#allocation5], 768
      %v1593 = vld [vmem:[%s1592] sm:$0xff]
      %v1594 = vld [vmem:[%s1592 + $0x8] sm:$0xff]
      %v1595 = vld [vmem:[%s1592 + $0x10] sm:$0xff]
      %v1596 = vld [vmem:[%s1592 + $0x18] sm:$0xff]
      %v1597 = vld [vmem:[%s1592 + $0x20] sm:$0xff]
      %v1598 = vld [vmem:[%s1592 + $0x28] sm:$0xff]
      %v1599 = vld [vmem:[%s1592 + $0x30] sm:$0xff]
      %v1600 = vld [vmem:[%s1592 + $0x38] sm:$0xff]
      %v1601 = vlaneseq
      %v1602 = vshrl.u32 %v1601, 7
      %v1603 = vsub.s32 4, %v1602
      %v1604 = vrot.slane %v1097, %v1603
      %v1605 = vlaneseq
      %v1606 = vshrl.u32 %v1605, 7
      %v1607 = vsub.s32 4, %v1606
      %v1608 = vrot.slane %v1098, %v1607
      %v1609 = vlaneseq
      %v1610 = vshrl.u32 %v1609, 7
      %v1611 = vsub.s32 4, %v1610
      %v1612 = vrot.slane %v1099, %v1611
      %v1613 = vlaneseq
      %v1614 = vshrl.u32 %v1613, 7
      %v1615 = vsub.s32 4, %v1614
      %v1616 = vrot.slane %v1100, %v1615
      %v1617 = vmul.f32 %v1593, %v1604
      %v1618 = vmul.f32 %v1594, %v1608
      %v1619 = vmul.f32 %v1595, %v1612
      %v1620 = vmul.f32 %v1596, %v1616
      %v1621 = vmul.f32 %v1597, %v1604
      %v1622 = vmul.f32 %v1598, %v1608
      %v1623 = vmul.f32 %v1599, %v1612
      %v1624 = vmul.f32 %v1600, %v1616
      %v1625 = vadd.f32 %v1584, %v1617
      %v1626 = vadd.f32 %v1585, %v1618
      %v1627 = vadd.f32 %v1586, %v1619
      %v1628 = vadd.f32 %v1587, %v1620
      %v1629 = vadd.f32 %v1588, %v1621
      %v1630 = vadd.f32 %v1589, %v1622
      %v1631 = vadd.f32 %v1590, %v1623
      %v1632 = vadd.f32 %v1591, %v1624
      %s1633 = scalar_lea.vmem [#allocation5], 832
      %v1634 = vld [vmem:[%s1633] sm:$0xff]
      %v1635 = vld [vmem:[%s1633 + $0x8] sm:$0xff]
      %v1636 = vld [vmem:[%s1633 + $0x10] sm:$0xff]
      %v1637 = vld [vmem:[%s1633 + $0x18] sm:$0xff]
      %v1638 = vld [vmem:[%s1633 + $0x20] sm:$0xff]
      %v1639 = vld [vmem:[%s1633 + $0x28] sm:$0xff]
      %v1640 = vld [vmem:[%s1633 + $0x30] sm:$0xff]
      %v1641 = vld [vmem:[%s1633 + $0x38] sm:$0xff]
      %v1642 = vlaneseq
      %v1643 = vshrl.u32 %v1642, 7
      %v1644 = vsub.s32 5, %v1643
      %v1645 = vrot.slane %v1097, %v1644
      %v1646 = vlaneseq
      %v1647 = vshrl.u32 %v1646, 7
      %v1648 = vsub.s32 5, %v1647
      %v1649 = vrot.slane %v1098, %v1648
      %v1650 = vlaneseq
      %v1651 = vshrl.u32 %v1650, 7
      %v1652 = vsub.s32 5, %v1651
      %v1653 = vrot.slane %v1099, %v1652
      %v1654 = vlaneseq
      %v1655 = vshrl.u32 %v1654, 7
      %v1656 = vsub.s32 5, %v1655
      %v1657 = vrot.slane %v1100, %v1656
      %v1658 = vmul.f32 %v1634, %v1645
      %v1659 = vmul.f32 %v1635, %v1649
      %v1660 = vmul.f32 %v1636, %v1653
      %v1661 = vmul.f32 %v1637, %v1657
      %v1662 = vmul.f32 %v1638, %v1645
      %v1663 = vmul.f32 %v1639, %v1649
      %v1664 = vmul.f32 %v1640, %v1653
      %v1665 = vmul.f32 %v1641, %v1657
      %v1666 = vadd.f32 %v1625, %v1658
      %v1667 = vadd.f32 %v1626, %v1659
      %v1668 = vadd.f32 %v1627, %v1660
      %v1669 = vadd.f32 %v1628, %v1661
      %v1670 = vadd.f32 %v1629, %v1662
      %v1671 = vadd.f32 %v1630, %v1663
      %v1672 = vadd.f32 %v1631, %v1664
      %v1673 = vadd.f32 %v1632, %v1665
      %s1674 = scalar_lea.vmem [#allocation5], 896
      %v1675 = vld [vmem:[%s1674] sm:$0xff]
      %v1676 = vld [vmem:[%s1674 + $0x8] sm:$0xff]
      %v1677 = vld [vmem:[%s1674 + $0x10] sm:$0xff]
      %v1678 = vld [vmem:[%s1674 + $0x18] sm:$0xff]
      %v1679 = vld [vmem:[%s1674 + $0x20] sm:$0xff]
      %v1680 = vld [vmem:[%s1674 + $0x28] sm:$0xff]
      %v1681 = vld [vmem:[%s1674 + $0x30] sm:$0xff]
      %v1682 = vld [vmem:[%s1674 + $0x38] sm:$0xff]
      %v1683 = vlaneseq
      %v1684 = vshrl.u32 %v1683, 7
      %v1685 = vsub.s32 6, %v1684
      %v1686 = vrot.slane %v1097, %v1685
      %v1687 = vlaneseq
      %v1688 = vshrl.u32 %v1687, 7
      %v1689 = vsub.s32 6, %v1688
      %v1690 = vrot.slane %v1098, %v1689
      %v1691 = vlaneseq
      %v1692 = vshrl.u32 %v1691, 7
      %v1693 = vsub.s32 6, %v1692
      %v1694 = vrot.slane %v1099, %v1693
      %v1695 = vlaneseq
      %v1696 = vshrl.u32 %v1695, 7
      %v1697 = vsub.s32 6, %v1696
      %v1698 = vrot.slane %v1100, %v1697
      %v1699 = vmul.f32 %v1675, %v1686
      %v1700 = vmul.f32 %v1676, %v1690
      %v1701 = vmul.f32 %v1677, %v1694
      %v1702 = vmul.f32 %v1678, %v1698
      %v1703 = vmul.f32 %v1679, %v1686
      %v1704 = vmul.f32 %v1680, %v1690
      %v1705 = vmul.f32 %v1681, %v1694
      %v1706 = vmul.f32 %v1682, %v1698
      %v1707 = vadd.f32 %v1666, %v1699
      %v1708 = vadd.f32 %v1667, %v1700
      %v1709 = vadd.f32 %v1668, %v1701
      %v1710 = vadd.f32 %v1669, %v1702
      %v1711 = vadd.f32 %v1670, %v1703
      %v1712 = vadd.f32 %v1671, %v1704
      %v1713 = vadd.f32 %v1672, %v1705
      %v1714 = vadd.f32 %v1673, %v1706
      %s1715 = scalar_lea.vmem [#allocation5], 960
      %v1716 = vld [vmem:[%s1715] sm:$0xff]
      %v1717 = vld [vmem:[%s1715 + $0x8] sm:$0xff]
      %v1718 = vld [vmem:[%s1715 + $0x10] sm:$0xff]
      %v1719 = vld [vmem:[%s1715 + $0x18] sm:$0xff]
      %v1720 = vld [vmem:[%s1715 + $0x20] sm:$0xff]
      %v1721 = vld [vmem:[%s1715 + $0x28] sm:$0xff]
      %v1722 = vld [vmem:[%s1715 + $0x30] sm:$0xff]
      %v1723 = vld [vmem:[%s1715 + $0x38] sm:$0xff]
      %v1724 = vlaneseq
      %v1725 = vshrl.u32 %v1724, 7
      %v1726 = vsub.s32 7, %v1725
      %v1727 = vrot.slane %v1097, %v1726
      %v1728 = vlaneseq
      %v1729 = vshrl.u32 %v1728, 7
      %v1730 = vsub.s32 7, %v1729
      %v1731 = vrot.slane %v1098, %v1730
      %v1732 = vlaneseq
      %v1733 = vshrl.u32 %v1732, 7
      %v1734 = vsub.s32 7, %v1733
      %v1735 = vrot.slane %v1099, %v1734
      %v1736 = vlaneseq
      %v1737 = vshrl.u32 %v1736, 7
      %v1738 = vsub.s32 7, %v1737
      %v1739 = vrot.slane %v1100, %v1738
      %v1740 = vmul.f32 %v1716, %v1727
      %v1741 = vmul.f32 %v1717, %v1731
      %v1742 = vmul.f32 %v1718, %v1735
      %v1743 = vmul.f32 %v1719, %v1739
      %v1744 = vmul.f32 %v1720, %v1727
      %v1745 = vmul.f32 %v1721, %v1731
      %v1746 = vmul.f32 %v1722, %v1735
      %v1747 = vmul.f32 %v1723, %v1739
      %v1748 = vadd.f32 %v1707, %v1740
      %v1749 = vadd.f32 %v1708, %v1741
      %v1750 = vadd.f32 %v1709, %v1742
      %v1751 = vadd.f32 %v1710, %v1743
      %v1752 = vadd.f32 %v1711, %v1744
      %v1753 = vadd.f32 %v1712, %v1745
      %v1754 = vadd.f32 %v1713, %v1746
      %v1755 = vadd.f32 %v1714, %v1747
      %s1756 = scalar_lea.vmem [#allocation5], 1024
      %v1757 = vld [vmem:[%s1756] sm:$0xff]
      %v1758 = vld [vmem:[%s1756 + $0x8] sm:$0xff]
      %v1759 = vld [vmem:[%s1756 + $0x10] sm:$0xff]
      %v1760 = vld [vmem:[%s1756 + $0x18] sm:$0xff]
      %v1761 = vld [vmem:[%s1756 + $0x20] sm:$0xff]
      %v1762 = vld [vmem:[%s1756 + $0x28] sm:$0xff]
      %v1763 = vld [vmem:[%s1756 + $0x30] sm:$0xff]
      %v1764 = vld [vmem:[%s1756 + $0x38] sm:$0xff]
      %v1765 = vlaneseq
      %v1766 = vshrl.u32 %v1765, 7
      %v1767 = vsub.s32 0, %v1766
      %v1768 = vrot.slane %v1101, %v1767
      %v1769 = vlaneseq
      %v1770 = vshrl.u32 %v1769, 7
      %v1771 = vsub.s32 0, %v1770
      %v1772 = vrot.slane %v1102, %v1771
      %v1773 = vlaneseq
      %v1774 = vshrl.u32 %v1773, 7
      %v1775 = vsub.s32 0, %v1774
      %v1776 = vrot.slane %v1103, %v1775
      %v1777 = vlaneseq
      %v1778 = vshrl.u32 %v1777, 7
      %v1779 = vsub.s32 0, %v1778
      %v1780 = vrot.slane %v1104, %v1779
      %v1781 = vmul.f32 %v1757, %v1768
      %v1782 = vmul.f32 %v1758, %v1772
      %v1783 = vmul.f32 %v1759, %v1776
      %v1784 = vmul.f32 %v1760, %v1780
      %v1785 = vmul.f32 %v1761, %v1768
      %v1786 = vmul.f32 %v1762, %v1772
      %v1787 = vmul.f32 %v1763, %v1776
      %v1788 = vmul.f32 %v1764, %v1780
      %v1789 = vadd.f32 %v1748, %v1781
      %v1790 = vadd.f32 %v1749, %v1782
      %v1791 = vadd.f32 %v1750, %v1783
      %v1792 = vadd.f32 %v1751, %v1784
      %v1793 = vadd.f32 %v1752, %v1785
      %v1794 = vadd.f32 %v1753, %v1786
      %v1795 = vadd.f32 %v1754, %v1787
      %v1796 = vadd.f32 %v1755, %v1788
      %s1797 = scalar_lea.vmem [#allocation5], 1088
      %v1798 = vld [vmem:[%s1797] sm:$0xff]
      %v1799 = vld [vmem:[%s1797 + $0x8] sm:$0xff]
      %v1800 = vld [vmem:[%s1797 + $0x10] sm:$0xff]
      %v1801 = vld [vmem:[%s1797 + $0x18] sm:$0xff]
      %v1802 = vld [vmem:[%s1797 + $0x20] sm:$0xff]
      %v1803 = vld [vmem:[%s1797 + $0x28] sm:$0xff]
      %v1804 = vld [vmem:[%s1797 + $0x30] sm:$0xff]
      %v1805 = vld [vmem:[%s1797 + $0x38] sm:$0xff]
      %v1806 = vlaneseq
      %v1807 = vshrl.u32 %v1806, 7
      %v1808 = vsub.s32 1, %v1807
      %v1809 = vrot.slane %v1101, %v1808
      %v1810 = vlaneseq
      %v1811 = vshrl.u32 %v1810, 7
      %v1812 = vsub.s32 1, %v1811
      %v1813 = vrot.slane %v1102, %v1812
      %v1814 = vlaneseq
      %v1815 = vshrl.u32 %v1814, 7
      %v1816 = vsub.s32 1, %v1815
      %v1817 = vrot.slane %v1103, %v1816
      %v1818 = vlaneseq
      %v1819 = vshrl.u32 %v1818, 7
      %v1820 = vsub.s32 1, %v1819
      %v1821 = vrot.slane %v1104, %v1820
      %v1822 = vmul.f32 %v1798, %v1809
      %v1823 = vmul.f32 %v1799, %v1813
      %v1824 = vmul.f32 %v1800, %v1817
      %v1825 = vmul.f32 %v1801, %v1821
      %v1826 = vmul.f32 %v1802, %v1809
      %v1827 = vmul.f32 %v1803, %v1813
      %v1828 = vmul.f32 %v1804, %v1817
      %v1829 = vmul.f32 %v1805, %v1821
      %v1830 = vadd.f32 %v1789, %v1822
      %v1831 = vadd.f32 %v1790, %v1823
      %v1832 = vadd.f32 %v1791, %v1824
      %v1833 = vadd.f32 %v1792, %v1825
      %v1834 = vadd.f32 %v1793, %v1826
      %v1835 = vadd.f32 %v1794, %v1827
      %v1836 = vadd.f32 %v1795, %v1828
      %v1837 = vadd.f32 %v1796, %v1829
      %s1838 = scalar_lea.vmem [#allocation5], 1152
      %v1839 = vld [vmem:[%s1838] sm:$0xff]
      %v1840 = vld [vmem:[%s1838 + $0x8] sm:$0xff]
      %v1841 = vld [vmem:[%s1838 + $0x10] sm:$0xff]
      %v1842 = vld [vmem:[%s1838 + $0x18] sm:$0xff]
      %v1843 = vld [vmem:[%s1838 + $0x20] sm:$0xff]
      %v1844 = vld [vmem:[%s1838 + $0x28] sm:$0xff]
      %v1845 = vld [vmem:[%s1838 + $0x30] sm:$0xff]
      %v1846 = vld [vmem:[%s1838 + $0x38] sm:$0xff]
      %v1847 = vlaneseq
      %v1848 = vshrl.u32 %v1847, 7
      %v1849 = vsub.s32 2, %v1848
      %v1850 = vrot.slane %v1101, %v1849
      %v1851 = vlaneseq
      %v1852 = vshrl.u32 %v1851, 7
      %v1853 = vsub.s32 2, %v1852
      %v1854 = vrot.slane %v1102, %v1853
      %v1855 = vlaneseq
      %v1856 = vshrl.u32 %v1855, 7
      %v1857 = vsub.s32 2, %v1856
      %v1858 = vrot.slane %v1103, %v1857
      %v1859 = vlaneseq
      %v1860 = vshrl.u32 %v1859, 7
      %v1861 = vsub.s32 2, %v1860
      %v1862 = vrot.slane %v1104, %v1861
      %v1863 = vmul.f32 %v1839, %v1850
      %v1864 = vmul.f32 %v1840, %v1854
      %v1865 = vmul.f32 %v1841, %v1858
      %v1866 = vmul.f32 %v1842, %v1862
      %v1867 = vmul.f32 %v1843, %v1850
      %v1868 = vmul.f32 %v1844, %v1854
      %v1869 = vmul.f32 %v1845, %v1858
      %v1870 = vmul.f32 %v1846, %v1862
      %v1871 = vadd.f32 %v1830, %v1863
      %v1872 = vadd.f32 %v1831, %v1864
      %v1873 = vadd.f32 %v1832, %v1865
      %v1874 = vadd.f32 %v1833, %v1866
      %v1875 = vadd.f32 %v1834, %v1867
      %v1876 = vadd.f32 %v1835, %v1868
      %v1877 = vadd.f32 %v1836, %v1869
      %v1878 = vadd.f32 %v1837, %v1870
      %s1879 = scalar_lea.vmem [#allocation5], 1216
      %v1880 = vld [vmem:[%s1879] sm:$0xff]
      %v1881 = vld [vmem:[%s1879 + $0x8] sm:$0xff]
      %v1882 = vld [vmem:[%s1879 + $0x10] sm:$0xff]
      %v1883 = vld [vmem:[%s1879 + $0x18] sm:$0xff]
      %v1884 = vld [vmem:[%s1879 + $0x20] sm:$0xff]
      %v1885 = vld [vmem:[%s1879 + $0x28] sm:$0xff]
      %v1886 = vld [vmem:[%s1879 + $0x30] sm:$0xff]
      %v1887 = vld [vmem:[%s1879 + $0x38] sm:$0xff]
      %v1888 = vlaneseq
      %v1889 = vshrl.u32 %v1888, 7
      %v1890 = vsub.s32 3, %v1889
      %v1891 = vrot.slane %v1101, %v1890
      %v1892 = vlaneseq
      %v1893 = vshrl.u32 %v1892, 7
      %v1894 = vsub.s32 3, %v1893
      %v1895 = vrot.slane %v1102, %v1894
      %v1896 = vlaneseq
      %v1897 = vshrl.u32 %v1896, 7
      %v1898 = vsub.s32 3, %v1897
      %v1899 = vrot.slane %v1103, %v1898
      %v1900 = vlaneseq
      %v1901 = vshrl.u32 %v1900, 7
      %v1902 = vsub.s32 3, %v1901
      %v1903 = vrot.slane %v1104, %v1902
      %v1904 = vmul.f32 %v1880, %v1891
      %v1905 = vmul.f32 %v1881, %v1895
      %v1906 = vmul.f32 %v1882, %v1899
      %v1907 = vmul.f32 %v1883, %v1903
      %v1908 = vmul.f32 %v1884, %v1891
      %v1909 = vmul.f32 %v1885, %v1895
      %v1910 = vmul.f32 %v1886, %v1899
      %v1911 = vmul.f32 %v1887, %v1903
      %v1912 = vadd.f32 %v1871, %v1904
      %v1913 = vadd.f32 %v1872, %v1905
      %v1914 = vadd.f32 %v1873, %v1906
      %v1915 = vadd.f32 %v1874, %v1907
      %v1916 = vadd.f32 %v1875, %v1908
      %v1917 = vadd.f32 %v1876, %v1909
      %v1918 = vadd.f32 %v1877, %v1910
      %v1919 = vadd.f32 %v1878, %v1911
      %s1920 = scalar_lea.vmem [#allocation5], 1280
      %v1921 = vld [vmem:[%s1920] sm:$0xff]
      %v1922 = vld [vmem:[%s1920 + $0x8] sm:$0xff]
      %v1923 = vld [vmem:[%s1920 + $0x10] sm:$0xff]
      %v1924 = vld [vmem:[%s1920 + $0x18] sm:$0xff]
      %v1925 = vld [vmem:[%s1920 + $0x20] sm:$0xff]
      %v1926 = vld [vmem:[%s1920 + $0x28] sm:$0xff]
      %v1927 = vld [vmem:[%s1920 + $0x30] sm:$0xff]
      %v1928 = vld [vmem:[%s1920 + $0x38] sm:$0xff]
      %v1929 = vlaneseq
      %v1930 = vshrl.u32 %v1929, 7
      %v1931 = vsub.s32 4, %v1930
      %v1932 = vrot.slane %v1101, %v1931
      %v1933 = vlaneseq
      %v1934 = vshrl.u32 %v1933, 7
      %v1935 = vsub.s32 4, %v1934
      %v1936 = vrot.slane %v1102, %v1935
      %v1937 = vlaneseq
      %v1938 = vshrl.u32 %v1937, 7
      %v1939 = vsub.s32 4, %v1938
      %v1940 = vrot.slane %v1103, %v1939
      %v1941 = vlaneseq
      %v1942 = vshrl.u32 %v1941, 7
      %v1943 = vsub.s32 4, %v1942
      %v1944 = vrot.slane %v1104, %v1943
      %v1945 = vmul.f32 %v1921, %v1932
      %v1946 = vmul.f32 %v1922, %v1936
      %v1947 = vmul.f32 %v1923, %v1940
      %v1948 = vmul.f32 %v1924, %v1944
      %v1949 = vmul.f32 %v1925, %v1932
      %v1950 = vmul.f32 %v1926, %v1936
      %v1951 = vmul.f32 %v1927, %v1940
      %v1952 = vmul.f32 %v1928, %v1944
      %v1953 = vadd.f32 %v1912, %v1945
      %v1954 = vadd.f32 %v1913, %v1946
      %v1955 = vadd.f32 %v1914, %v1947
      %v1956 = vadd.f32 %v1915, %v1948
      %v1957 = vadd.f32 %v1916, %v1949
      %v1958 = vadd.f32 %v1917, %v1950
      %v1959 = vadd.f32 %v1918, %v1951
      %v1960 = vadd.f32 %v1919, %v1952
      %s1961 = scalar_lea.vmem [#allocation5], 1344
      %v1962 = vld [vmem:[%s1961] sm:$0xff]
      %v1963 = vld [vmem:[%s1961 + $0x8] sm:$0xff]
      %v1964 = vld [vmem:[%s1961 + $0x10] sm:$0xff]
      %v1965 = vld [vmem:[%s1961 + $0x18] sm:$0xff]
      %v1966 = vld [vmem:[%s1961 + $0x20] sm:$0xff]
      %v1967 = vld [vmem:[%s1961 + $0x28] sm:$0xff]
      %v1968 = vld [vmem:[%s1961 + $0x30] sm:$0xff]
      %v1969 = vld [vmem:[%s1961 + $0x38] sm:$0xff]
      %v1970 = vlaneseq
      %v1971 = vshrl.u32 %v1970, 7
      %v1972 = vsub.s32 5, %v1971
      %v1973 = vrot.slane %v1101, %v1972
      %v1974 = vlaneseq
      %v1975 = vshrl.u32 %v1974, 7
      %v1976 = vsub.s32 5, %v1975
      %v1977 = vrot.slane %v1102, %v1976
      %v1978 = vlaneseq
      %v1979 = vshrl.u32 %v1978, 7
      %v1980 = vsub.s32 5, %v1979
      %v1981 = vrot.slane %v1103, %v1980
      %v1982 = vlaneseq
      %v1983 = vshrl.u32 %v1982, 7
      %v1984 = vsub.s32 5, %v1983
      %v1985 = vrot.slane %v1104, %v1984
      %v1986 = vmul.f32 %v1962, %v1973
      %v1987 = vmul.f32 %v1963, %v1977
      %v1988 = vmul.f32 %v1964, %v1981
      %v1989 = vmul.f32 %v1965, %v1985
      %v1990 = vmul.f32 %v1966, %v1973
      %v1991 = vmul.f32 %v1967, %v1977
      %v1992 = vmul.f32 %v1968, %v1981
      %v1993 = vmul.f32 %v1969, %v1985
      %v1994 = vadd.f32 %v1953, %v1986
      %v1995 = vadd.f32 %v1954, %v1987
      %v1996 = vadd.f32 %v1955, %v1988
      %v1997 = vadd.f32 %v1956, %v1989
      %v1998 = vadd.f32 %v1957, %v1990
      %v1999 = vadd.f32 %v1958, %v1991
      %v2000 = vadd.f32 %v1959, %v1992
      %v2001 = vadd.f32 %v1960, %v1993
      %s2002 = scalar_lea.vmem [#allocation5], 1408
      %v2003 = vld [vmem:[%s2002] sm:$0xff]
      %v2004 = vld [vmem:[%s2002 + $0x8] sm:$0xff]
      %v2005 = vld [vmem:[%s2002 + $0x10] sm:$0xff]
      %v2006 = vld [vmem:[%s2002 + $0x18] sm:$0xff]
      %v2007 = vld [vmem:[%s2002 + $0x20] sm:$0xff]
      %v2008 = vld [vmem:[%s2002 + $0x28] sm:$0xff]
      %v2009 = vld [vmem:[%s2002 + $0x30] sm:$0xff]
      %v2010 = vld [vmem:[%s2002 + $0x38] sm:$0xff]
      %v2011 = vlaneseq
      %v2012 = vshrl.u32 %v2011, 7
      %v2013 = vsub.s32 6, %v2012
      %v2014 = vrot.slane %v1101, %v2013
      %v2015 = vlaneseq
      %v2016 = vshrl.u32 %v2015, 7
      %v2017 = vsub.s32 6, %v2016
      %v2018 = vrot.slane %v1102, %v2017
      %v2019 = vlaneseq
      %v2020 = vshrl.u32 %v2019, 7
      %v2021 = vsub.s32 6, %v2020
      %v2022 = vrot.slane %v1103, %v2021
      %v2023 = vlaneseq
      %v2024 = vshrl.u32 %v2023, 7
      %v2025 = vsub.s32 6, %v2024
      %v2026 = vrot.slane %v1104, %v2025
      %v2027 = vmul.f32 %v2003, %v2014
      %v2028 = vmul.f32 %v2004, %v2018
      %v2029 = vmul.f32 %v2005, %v2022
      %v2030 = vmul.f32 %v2006, %v2026
      %v2031 = vmul.f32 %v2007, %v2014
      %v2032 = vmul.f32 %v2008, %v2018
      %v2033 = vmul.f32 %v2009, %v2022
      %v2034 = vmul.f32 %v2010, %v2026
      %v2035 = vadd.f32 %v1994, %v2027
      %v2036 = vadd.f32 %v1995, %v2028
      %v2037 = vadd.f32 %v1996, %v2029
      %v2038 = vadd.f32 %v1997, %v2030
      %v2039 = vadd.f32 %v1998, %v2031
      %v2040 = vadd.f32 %v1999, %v2032
      %v2041 = vadd.f32 %v2000, %v2033
      %v2042 = vadd.f32 %v2001, %v2034
      %s2043 = scalar_lea.vmem [#allocation5], 1472
      %v2044 = vld [vmem:[%s2043] sm:$0xff]
      %v2045 = vld [vmem:[%s2043 + $0x8] sm:$0xff]
      %v2046 = vld [vmem:[%s2043 + $0x10] sm:$0xff]
      %v2047 = vld [vmem:[%s2043 + $0x18] sm:$0xff]
      %v2048 = vld [vmem:[%s2043 + $0x20] sm:$0xff]
      %v2049 = vld [vmem:[%s2043 + $0x28] sm:$0xff]
      %v2050 = vld [vmem:[%s2043 + $0x30] sm:$0xff]
      %v2051 = vld [vmem:[%s2043 + $0x38] sm:$0xff]
      %v2052 = vlaneseq
      %v2053 = vshrl.u32 %v2052, 7
      %v2054 = vsub.s32 7, %v2053
      %v2055 = vrot.slane %v1101, %v2054
      %v2056 = vlaneseq
      %v2057 = vshrl.u32 %v2056, 7
      %v2058 = vsub.s32 7, %v2057
      %v2059 = vrot.slane %v1102, %v2058
      %v2060 = vlaneseq
      %v2061 = vshrl.u32 %v2060, 7
      %v2062 = vsub.s32 7, %v2061
      %v2063 = vrot.slane %v1103, %v2062
      %v2064 = vlaneseq
      %v2065 = vshrl.u32 %v2064, 7
      %v2066 = vsub.s32 7, %v2065
      %v2067 = vrot.slane %v1104, %v2066
      %v2068 = vmul.f32 %v2044, %v2055
      %v2069 = vmul.f32 %v2045, %v2059
      %v2070 = vmul.f32 %v2046, %v2063
      %v2071 = vmul.f32 %v2047, %v2067
      %v2072 = vmul.f32 %v2048, %v2055
      %v2073 = vmul.f32 %v2049, %v2059
      %v2074 = vmul.f32 %v2050, %v2063
      %v2075 = vmul.f32 %v2051, %v2067
      %v2076 = vadd.f32 %v2035, %v2068
      %v2077 = vadd.f32 %v2036, %v2069
      %v2078 = vadd.f32 %v2037, %v2070
      %v2079 = vadd.f32 %v2038, %v2071
      %v2080 = vadd.f32 %v2039, %v2072
      %v2081 = vadd.f32 %v2040, %v2073
      %v2082 = vadd.f32 %v2041, %v2074
      %v2083 = vadd.f32 %v2042, %v2075
      %s2084 = scalar_lea.vmem [#allocation5], 1536
      %v2085 = vld [vmem:[%s2084] sm:$0xff]
      %v2086 = vld [vmem:[%s2084 + $0x8] sm:$0xff]
      %v2087 = vld [vmem:[%s2084 + $0x10] sm:$0xff]
      %v2088 = vld [vmem:[%s2084 + $0x18] sm:$0xff]
      %v2089 = vld [vmem:[%s2084 + $0x20] sm:$0xff]
      %v2090 = vld [vmem:[%s2084 + $0x28] sm:$0xff]
      %v2091 = vld [vmem:[%s2084 + $0x30] sm:$0xff]
      %v2092 = vld [vmem:[%s2084 + $0x38] sm:$0xff]
      %v2093 = vlaneseq
      %v2094 = vshrl.u32 %v2093, 7
      %v2095 = vsub.s32 0, %v2094
      %v2096 = vrot.slane %v1105, %v2095
      %v2097 = vlaneseq
      %v2098 = vshrl.u32 %v2097, 7
      %v2099 = vsub.s32 0, %v2098
      %v2100 = vrot.slane %v1106, %v2099
      %v2101 = vlaneseq
      %v2102 = vshrl.u32 %v2101, 7
      %v2103 = vsub.s32 0, %v2102
      %v2104 = vrot.slane %v1107, %v2103
      %v2105 = vlaneseq
      %v2106 = vshrl.u32 %v2105, 7
      %v2107 = vsub.s32 0, %v2106
      %v2108 = vrot.slane %v1108, %v2107
      %v2109 = vmul.f32 %v2085, %v2096
      %v2110 = vmul.f32 %v2086, %v2100
      %v2111 = vmul.f32 %v2087, %v2104
      %v2112 = vmul.f32 %v2088, %v2108
      %v2113 = vmul.f32 %v2089, %v2096
      %v2114 = vmul.f32 %v2090, %v2100
      %v2115 = vmul.f32 %v2091, %v2104
      %v2116 = vmul.f32 %v2092, %v2108
      %v2117 = vadd.f32 %v2076, %v2109
      %v2118 = vadd.f32 %v2077, %v2110
      %v2119 = vadd.f32 %v2078, %v2111
      %v2120 = vadd.f32 %v2079, %v2112
      %v2121 = vadd.f32 %v2080, %v2113
      %v2122 = vadd.f32 %v2081, %v2114
      %v2123 = vadd.f32 %v2082, %v2115
      %v2124 = vadd.f32 %v2083, %v2116
      %s2125 = scalar_lea.vmem [#allocation5], 1600
      %v2126 = vld [vmem:[%s2125] sm:$0xff]
      %v2127 = vld [vmem:[%s2125 + $0x8] sm:$0xff]
      %v2128 = vld [vmem:[%s2125 + $0x10] sm:$0xff]
      %v2129 = vld [vmem:[%s2125 + $0x18] sm:$0xff]
      %v2130 = vld [vmem:[%s2125 + $0x20] sm:$0xff]
      %v2131 = vld [vmem:[%s2125 + $0x28] sm:$0xff]
      %v2132 = vld [vmem:[%s2125 + $0x30] sm:$0xff]
      %v2133 = vld [vmem:[%s2125 + $0x38] sm:$0xff]
      %v2134 = vlaneseq
      %v2135 = vshrl.u32 %v2134, 7
      %v2136 = vsub.s32 1, %v2135
      %v2137 = vrot.slane %v1105, %v2136
      %v2138 = vlaneseq
      %v2139 = vshrl.u32 %v2138, 7
      %v2140 = vsub.s32 1, %v2139
      %v2141 = vrot.slane %v1106, %v2140
      %v2142 = vlaneseq
      %v2143 = vshrl.u32 %v2142, 7
      %v2144 = vsub.s32 1, %v2143
      %v2145 = vrot.slane %v1107, %v2144
      %v2146 = vlaneseq
      %v2147 = vshrl.u32 %v2146, 7
      %v2148 = vsub.s32 1, %v2147
      %v2149 = vrot.slane %v1108, %v2148
      %v2150 = vmul.f32 %v2126, %v2137
      %v2151 = vmul.f32 %v2127, %v2141
      %v2152 = vmul.f32 %v2128, %v2145
      %v2153 = vmul.f32 %v2129, %v2149
      %v2154 = vmul.f32 %v2130, %v2137
      %v2155 = vmul.f32 %v2131, %v2141
      %v2156 = vmul.f32 %v2132, %v2145
      %v2157 = vmul.f32 %v2133, %v2149
      %v2158 = vadd.f32 %v2117, %v2150
      %v2159 = vadd.f32 %v2118, %v2151
      %v2160 = vadd.f32 %v2119, %v2152
      %v2161 = vadd.f32 %v2120, %v2153
      %v2162 = vadd.f32 %v2121, %v2154
      %v2163 = vadd.f32 %v2122, %v2155
      %v2164 = vadd.f32 %v2123, %v2156
      %v2165 = vadd.f32 %v2124, %v2157
      %s2166 = scalar_lea.vmem [#allocation5], 1664
      %v2167 = vld [vmem:[%s2166] sm:$0xff]
      %v2168 = vld [vmem:[%s2166 + $0x8] sm:$0xff]
      %v2169 = vld [vmem:[%s2166 + $0x10] sm:$0xff]
      %v2170 = vld [vmem:[%s2166 + $0x18] sm:$0xff]
      %v2171 = vld [vmem:[%s2166 + $0x20] sm:$0xff]
      %v2172 = vld [vmem:[%s2166 + $0x28] sm:$0xff]
      %v2173 = vld [vmem:[%s2166 + $0x30] sm:$0xff]
      %v2174 = vld [vmem:[%s2166 + $0x38] sm:$0xff]
      %v2175 = vlaneseq
      %v2176 = vshrl.u32 %v2175, 7
      %v2177 = vsub.s32 2, %v2176
      %v2178 = vrot.slane %v1105, %v2177
      %v2179 = vlaneseq
      %v2180 = vshrl.u32 %v2179, 7
      %v2181 = vsub.s32 2, %v2180
      %v2182 = vrot.slane %v1106, %v2181
      %v2183 = vlaneseq
      %v2184 = vshrl.u32 %v2183, 7
      %v2185 = vsub.s32 2, %v2184
      %v2186 = vrot.slane %v1107, %v2185
      %v2187 = vlaneseq
      %v2188 = vshrl.u32 %v2187, 7
      %v2189 = vsub.s32 2, %v2188
      %v2190 = vrot.slane %v1108, %v2189
      %v2191 = vmul.f32 %v2167, %v2178
      %v2192 = vmul.f32 %v2168, %v2182
      %v2193 = vmul.f32 %v2169, %v2186
      %v2194 = vmul.f32 %v2170, %v2190
      %v2195 = vmul.f32 %v2171, %v2178
      %v2196 = vmul.f32 %v2172, %v2182
      %v2197 = vmul.f32 %v2173, %v2186
      %v2198 = vmul.f32 %v2174, %v2190
      %v2199 = vadd.f32 %v2158, %v2191
      %v2200 = vadd.f32 %v2159, %v2192
      %v2201 = vadd.f32 %v2160, %v2193
      %v2202 = vadd.f32 %v2161, %v2194
      %v2203 = vadd.f32 %v2162, %v2195
      %v2204 = vadd.f32 %v2163, %v2196
      %v2205 = vadd.f32 %v2164, %v2197
      %v2206 = vadd.f32 %v2165, %v2198
      %s2207 = scalar_lea.vmem [#allocation5], 1728
      %v2208 = vld [vmem:[%s2207] sm:$0xff]
      %v2209 = vld [vmem:[%s2207 + $0x8] sm:$0xff]
      %v2210 = vld [vmem:[%s2207 + $0x10] sm:$0xff]
      %v2211 = vld [vmem:[%s2207 + $0x18] sm:$0xff]
      %v2212 = vld [vmem:[%s2207 + $0x20] sm:$0xff]
      %v2213 = vld [vmem:[%s2207 + $0x28] sm:$0xff]
      %v2214 = vld [vmem:[%s2207 + $0x30] sm:$0xff]
      %v2215 = vld [vmem:[%s2207 + $0x38] sm:$0xff]
      %v2216 = vlaneseq
      %v2217 = vshrl.u32 %v2216, 7
      %v2218 = vsub.s32 3, %v2217
      %v2219 = vrot.slane %v1105, %v2218
      %v2220 = vlaneseq
      %v2221 = vshrl.u32 %v2220, 7
      %v2222 = vsub.s32 3, %v2221
      %v2223 = vrot.slane %v1106, %v2222
      %v2224 = vlaneseq
      %v2225 = vshrl.u32 %v2224, 7
      %v2226 = vsub.s32 3, %v2225
      %v2227 = vrot.slane %v1107, %v2226
      %v2228 = vlaneseq
      %v2229 = vshrl.u32 %v2228, 7
      %v2230 = vsub.s32 3, %v2229
      %v2231 = vrot.slane %v1108, %v2230
      %v2232 = vmul.f32 %v2208, %v2219
      %v2233 = vmul.f32 %v2209, %v2223
      %v2234 = vmul.f32 %v2210, %v2227
      %v2235 = vmul.f32 %v2211, %v2231
      %v2236 = vmul.f32 %v2212, %v2219
      %v2237 = vmul.f32 %v2213, %v2223
      %v2238 = vmul.f32 %v2214, %v2227
      %v2239 = vmul.f32 %v2215, %v2231
      %v2240 = vadd.f32 %v2199, %v2232
      %v2241 = vadd.f32 %v2200, %v2233
      %v2242 = vadd.f32 %v2201, %v2234
      %v2243 = vadd.f32 %v2202, %v2235
      %v2244 = vadd.f32 %v2203, %v2236
      %v2245 = vadd.f32 %v2204, %v2237
      %v2246 = vadd.f32 %v2205, %v2238
      %v2247 = vadd.f32 %v2206, %v2239
      %s2248 = scalar_lea.vmem [#allocation5], 1792
      %v2249 = vld [vmem:[%s2248] sm:$0xff]
      %v2250 = vld [vmem:[%s2248 + $0x8] sm:$0xff]
      %v2251 = vld [vmem:[%s2248 + $0x10] sm:$0xff]
      %v2252 = vld [vmem:[%s2248 + $0x18] sm:$0xff]
      %v2253 = vld [vmem:[%s2248 + $0x20] sm:$0xff]
      %v2254 = vld [vmem:[%s2248 + $0x28] sm:$0xff]
      %v2255 = vld [vmem:[%s2248 + $0x30] sm:$0xff]
      %v2256 = vld [vmem:[%s2248 + $0x38] sm:$0xff]
      %v2257 = vlaneseq
      %v2258 = vshrl.u32 %v2257, 7
      %v2259 = vsub.s32 4, %v2258
      %v2260 = vrot.slane %v1105, %v2259
      %v2261 = vlaneseq
      %v2262 = vshrl.u32 %v2261, 7
      %v2263 = vsub.s32 4, %v2262
      %v2264 = vrot.slane %v1106, %v2263
      %v2265 = vlaneseq
      %v2266 = vshrl.u32 %v2265, 7
      %v2267 = vsub.s32 4, %v2266
      %v2268 = vrot.slane %v1107, %v2267
      %v2269 = vlaneseq
      %v2270 = vshrl.u32 %v2269, 7
      %v2271 = vsub.s32 4, %v2270
      %v2272 = vrot.slane %v1108, %v2271
      %v2273 = vmul.f32 %v2249, %v2260
      %v2274 = vmul.f32 %v2250, %v2264
      %v2275 = vmul.f32 %v2251, %v2268
      %v2276 = vmul.f32 %v2252, %v2272
      %v2277 = vmul.f32 %v2253, %v2260
      %v2278 = vmul.f32 %v2254, %v2264
      %v2279 = vmul.f32 %v2255, %v2268
      %v2280 = vmul.f32 %v2256, %v2272
      %v2281 = vadd.f32 %v2240, %v2273
      %v2282 = vadd.f32 %v2241, %v2274
      %v2283 = vadd.f32 %v2242, %v2275
      %v2284 = vadd.f32 %v2243, %v2276
      %v2285 = vadd.f32 %v2244, %v2277
      %v2286 = vadd.f32 %v2245, %v2278
      %v2287 = vadd.f32 %v2246, %v2279
      %v2288 = vadd.f32 %v2247, %v2280
      %s2289 = scalar_lea.vmem [#allocation5], 1856
      %v2290 = vld [vmem:[%s2289] sm:$0xff]
      %v2291 = vld [vmem:[%s2289 + $0x8] sm:$0xff]
      %v2292 = vld [vmem:[%s2289 + $0x10] sm:$0xff]
      %v2293 = vld [vmem:[%s2289 + $0x18] sm:$0xff]
      %v2294 = vld [vmem:[%s2289 + $0x20] sm:$0xff]
      %v2295 = vld [vmem:[%s2289 + $0x28] sm:$0xff]
      %v2296 = vld [vmem:[%s2289 + $0x30] sm:$0xff]
      %v2297 = vld [vmem:[%s2289 + $0x38] sm:$0xff]
      %v2298 = vlaneseq
      %v2299 = vshrl.u32 %v2298, 7
      %v2300 = vsub.s32 5, %v2299
      %v2301 = vrot.slane %v1105, %v2300
      %v2302 = vlaneseq
      %v2303 = vshrl.u32 %v2302, 7
      %v2304 = vsub.s32 5, %v2303
      %v2305 = vrot.slane %v1106, %v2304
      %v2306 = vlaneseq
      %v2307 = vshrl.u32 %v2306, 7
      %v2308 = vsub.s32 5, %v2307
      %v2309 = vrot.slane %v1107, %v2308
      %v2310 = vlaneseq
      %v2311 = vshrl.u32 %v2310, 7
      %v2312 = vsub.s32 5, %v2311
      %v2313 = vrot.slane %v1108, %v2312
      %v2314 = vmul.f32 %v2290, %v2301
      %v2315 = vmul.f32 %v2291, %v2305
      %v2316 = vmul.f32 %v2292, %v2309
      %v2317 = vmul.f32 %v2293, %v2313
      %v2318 = vmul.f32 %v2294, %v2301
      %v2319 = vmul.f32 %v2295, %v2305
      %v2320 = vmul.f32 %v2296, %v2309
      %v2321 = vmul.f32 %v2297, %v2313
      %v2322 = vadd.f32 %v2281, %v2314
      %v2323 = vadd.f32 %v2282, %v2315
      %v2324 = vadd.f32 %v2283, %v2316
      %v2325 = vadd.f32 %v2284, %v2317
      %v2326 = vadd.f32 %v2285, %v2318
      %v2327 = vadd.f32 %v2286, %v2319
      %v2328 = vadd.f32 %v2287, %v2320
      %v2329 = vadd.f32 %v2288, %v2321
      %s2330 = scalar_lea.vmem [#allocation5], 1920
      %v2331 = vld [vmem:[%s2330] sm:$0xff]
      %v2332 = vld [vmem:[%s2330 + $0x8] sm:$0xff]
      %v2333 = vld [vmem:[%s2330 + $0x10] sm:$0xff]
      %v2334 = vld [vmem:[%s2330 + $0x18] sm:$0xff]
      %v2335 = vld [vmem:[%s2330 + $0x20] sm:$0xff]
      %v2336 = vld [vmem:[%s2330 + $0x28] sm:$0xff]
      %v2337 = vld [vmem:[%s2330 + $0x30] sm:$0xff]
      %v2338 = vld [vmem:[%s2330 + $0x38] sm:$0xff]
      %v2339 = vlaneseq
      %v2340 = vshrl.u32 %v2339, 7
      %v2341 = vsub.s32 6, %v2340
      %v2342 = vrot.slane %v1105, %v2341
      %v2343 = vlaneseq
      %v2344 = vshrl.u32 %v2343, 7
      %v2345 = vsub.s32 6, %v2344
      %v2346 = vrot.slane %v1106, %v2345
      %v2347 = vlaneseq
      %v2348 = vshrl.u32 %v2347, 7
      %v2349 = vsub.s32 6, %v2348
      %v2350 = vrot.slane %v1107, %v2349
      %v2351 = vlaneseq
      %v2352 = vshrl.u32 %v2351, 7
      %v2353 = vsub.s32 6, %v2352
      %v2354 = vrot.slane %v1108, %v2353
      %v2355 = vmul.f32 %v2331, %v2342
      %v2356 = vmul.f32 %v2332, %v2346
      %v2357 = vmul.f32 %v2333, %v2350
      %v2358 = vmul.f32 %v2334, %v2354
      %v2359 = vmul.f32 %v2335, %v2342
      %v2360 = vmul.f32 %v2336, %v2346
      %v2361 = vmul.f32 %v2337, %v2350
      %v2362 = vmul.f32 %v2338, %v2354
      %v2363 = vadd.f32 %v2322, %v2355
      %v2364 = vadd.f32 %v2323, %v2356
      %v2365 = vadd.f32 %v2324, %v2357
      %v2366 = vadd.f32 %v2325, %v2358
      %v2367 = vadd.f32 %v2326, %v2359
      %v2368 = vadd.f32 %v2327, %v2360
      %v2369 = vadd.f32 %v2328, %v2361
      %v2370 = vadd.f32 %v2329, %v2362
      %s2371 = scalar_lea.vmem [#allocation5], 1984
      %v2372 = vld [vmem:[%s2371] sm:$0xff]
      %v2373 = vld [vmem:[%s2371 + $0x8] sm:$0xff]
      %v2374 = vld [vmem:[%s2371 + $0x10] sm:$0xff]
      %v2375 = vld [vmem:[%s2371 + $0x18] sm:$0xff]
      %v2376 = vld [vmem:[%s2371 + $0x20] sm:$0xff]
      %v2377 = vld [vmem:[%s2371 + $0x28] sm:$0xff]
      %v2378 = vld [vmem:[%s2371 + $0x30] sm:$0xff]
      %v2379 = vld [vmem:[%s2371 + $0x38] sm:$0xff]
      %v2380 = vlaneseq
      %v2381 = vshrl.u32 %v2380, 7
      %v2382 = vsub.s32 7, %v2381
      %v2383 = vrot.slane %v1105, %v2382
      %v2384 = vlaneseq
      %v2385 = vshrl.u32 %v2384, 7
      %v2386 = vsub.s32 7, %v2385
      %v2387 = vrot.slane %v1106, %v2386
      %v2388 = vlaneseq
      %v2389 = vshrl.u32 %v2388, 7
      %v2390 = vsub.s32 7, %v2389
      %v2391 = vrot.slane %v1107, %v2390
      %v2392 = vlaneseq
      %v2393 = vshrl.u32 %v2392, 7
      %v2394 = vsub.s32 7, %v2393
      %v2395 = vrot.slane %v1108, %v2394
      %v2396 = vmul.f32 %v2372, %v2383
      %v2397 = vmul.f32 %v2373, %v2387
      %v2398 = vmul.f32 %v2374, %v2391
      %v2399 = vmul.f32 %v2375, %v2395
      %v2400 = vmul.f32 %v2376, %v2383
      %v2401 = vmul.f32 %v2377, %v2387
      %v2402 = vmul.f32 %v2378, %v2391
      %v2403 = vmul.f32 %v2379, %v2395
      %v2404 = vadd.f32 %v2363, %v2396
      %v2405 = vadd.f32 %v2364, %v2397
      %v2406 = vadd.f32 %v2365, %v2398
      %v2407 = vadd.f32 %v2366, %v2399
      %v2408 = vadd.f32 %v2367, %v2400
      %v2409 = vadd.f32 %v2368, %v2401
      %v2410 = vadd.f32 %v2369, %v2402
      %v2411 = vadd.f32 %v2370, %v2403
      %v2412 = vmul.f32 %v2404, %v2404
      %v2413 = vmul.f32 %v2405, %v2405
      %v2414 = vmul.f32 %v2406, %v2406
      %v2415 = vmul.f32 %v2407, %v2407
      %v2416 = vmul.f32 %v2408, %v2408
      %v2417 = vmul.f32 %v2409, %v2409
      %v2418 = vmul.f32 %v2410, %v2410
      %v2419 = vmul.f32 %v2411, %v2411
      %v2420 = vadd.f32 %v2412, %v2416
      %v2421 = vrot.slane %v2420, 4
      %v2422 = vadd.f32 %v2420, %v2421
      %v2423 = vrot.slane %v2422, 2
      %v2424 = vadd.f32 %v2422, %v2423
      %v2425 = vrot.slane %v2424, 1
      %v2426 = vadd.f32 %v2424, %v2425
      %v2427 = vadd.f32 %v2413, %v2417
      %v2428 = vrot.slane %v2427, 4
      %v2429 = vadd.f32 %v2427, %v2428
      %v2430 = vrot.slane %v2429, 2
      %v2431 = vadd.f32 %v2429, %v2430
      %v2432 = vrot.slane %v2431, 1
      %v2433 = vadd.f32 %v2431, %v2432
      %v2434 = vadd.f32 %v2414, %v2418
      %v2435 = vrot.slane %v2434, 4
      %v2436 = vadd.f32 %v2434, %v2435
      %v2437 = vrot.slane %v2436, 2
      %v2438 = vadd.f32 %v2436, %v2437
      %v2439 = vrot.slane %v2438, 1
      %v2440 = vadd.f32 %v2438, %v2439
      %v2441 = vadd.f32 %v2415, %v2419
      %v2442 = vrot.slane %v2441, 4
      %v2443 = vadd.f32 %v2441, %v2442
      %v2444 = vrot.slane %v2443, 2
      %v2445 = vadd.f32 %v2443, %v2444
      %v2446 = vrot.slane %v2445, 1
      %v2447 = vadd.f32 %v2445, %v2446
      %v2448 = vadd.f32 %v2426, 1e-30
      %v2449 = vadd.f32 %v2433, 1e-30
      %v2450 = vadd.f32 %v2440, 1e-30
      %v2451 = vadd.f32 %v2447, 1e-30
      %v2452 = vrsqrt.pop %v2448
      %v2453 = vrsqrt.pop %v2449
      %v2454 = vrsqrt.pop %v2450
      %v2455 = vrsqrt.pop %v2451
      %v2456 = vmul.f32 %v2404, %v2452
      %v2457 = vmul.f32 %v2405, %v2453
      %v2458 = vmul.f32 %v2406, %v2454
      %v2459 = vmul.f32 %v2407, %v2455
      %v2460 = vmul.f32 %v2408, %v2452
      %v2461 = vmul.f32 %v2409, %v2453
      %v2462 = vmul.f32 %v2410, %v2454
      %v2463 = vmul.f32 %v2411, %v2455
    $region30: #{tpu_custom_call.1} parent=1 // loop_footer
      %s77 = sadd.s32 1, %s73
    $region31: #{tpu_custom_call.1} parent=1 // loop_footer_branch
      %72 = sbr.rel target = $region27
    $region32: #{tpu_custom_call.1} parent=1 // loop_exit
      _
    %v2464 = vld [vmem:[#allocation2] sm:$0xff]
    %v2465 = vld [vmem:[#allocation2 + $0x8] sm:$0xff]
    %v2466 = vld [vmem:[#allocation2 + $0x10] sm:$0xff]
    %v2467 = vld [vmem:[#allocation2 + $0x18] sm:$0xff]
    %v2468 = vld [vmem:[#allocation2 + $0x20] sm:$0xff]
    %v2469 = vld [vmem:[#allocation2 + $0x28] sm:$0xff]
    %v2470 = vld [vmem:[#allocation2 + $0x30] sm:$0xff]
    %v2471 = vld [vmem:[#allocation2 + $0x38] sm:$0xff]
    %v2472 = vld [vmem:[#allocation2 + $0x40] sm:$0xff]
    %v2473 = vld [vmem:[#allocation2 + $0x48] sm:$0xff]
    %v2474 = vld [vmem:[#allocation2 + $0x50] sm:$0xff]
    %v2475 = vld [vmem:[#allocation2 + $0x58] sm:$0xff]
    %v2476 = vld [vmem:[#allocation2 + $0x60] sm:$0xff]
    %v2477 = vld [vmem:[#allocation2 + $0x68] sm:$0xff]
    %v2478 = vld [vmem:[#allocation2 + $0x70] sm:$0xff]
    %v2479 = vld [vmem:[#allocation2 + $0x78] sm:$0xff]
    %v2480 = vlaneseq
    %v2481 = vshrl.u32 %v2480, 7
    %v2482 = vsub.s32 0, %v2481
    %v2483 = vrot.slane %v78, %v2482
    %v2484 = vlaneseq
    %v2485 = vshrl.u32 %v2484, 7
    %v2486 = vsub.s32 0, %v2485
    %v2487 = vrot.slane %v79, %v2486
    %v2488 = vlaneseq
    %v2489 = vshrl.u32 %v2488, 7
    %v2490 = vsub.s32 0, %v2489
    %v2491 = vrot.slane %v80, %v2490
    %v2492 = vlaneseq
    %v2493 = vshrl.u32 %v2492, 7
    %v2494 = vsub.s32 0, %v2493
    %v2495 = vrot.slane %v81, %v2494
    %v2496 = vmul.f32 %v2464, %v2483
    %v2497 = vmul.f32 %v2465, %v2487
    %v2498 = vmul.f32 %v2466, %v2491
    %v2499 = vmul.f32 %v2467, %v2495
    %v2500 = vmul.f32 %v2468, %v2483
    %v2501 = vmul.f32 %v2469, %v2487
    %v2502 = vmul.f32 %v2470, %v2491
    %v2503 = vmul.f32 %v2471, %v2495
    %v2504 = vmul.f32 %v2472, %v2483
    %v2505 = vmul.f32 %v2473, %v2487
    %v2506 = vmul.f32 %v2474, %v2491
    %v2507 = vmul.f32 %v2475, %v2495
    %v2508 = vmul.f32 %v2476, %v2483
    %v2509 = vmul.f32 %v2477, %v2487
    %v2510 = vmul.f32 %v2478, %v2491
    %v2511 = vmul.f32 %v2479, %v2495
    %s2512 = scalar_lea.vmem [#allocation2], 128
    %v2513 = vld [vmem:[%s2512] sm:$0xff]
    %v2514 = vld [vmem:[%s2512 + $0x8] sm:$0xff]
    %v2515 = vld [vmem:[%s2512 + $0x10] sm:$0xff]
    %v2516 = vld [vmem:[%s2512 + $0x18] sm:$0xff]
    %v2517 = vld [vmem:[%s2512 + $0x20] sm:$0xff]
    %v2518 = vld [vmem:[%s2512 + $0x28] sm:$0xff]
    %v2519 = vld [vmem:[%s2512 + $0x30] sm:$0xff]
    %v2520 = vld [vmem:[%s2512 + $0x38] sm:$0xff]
    %v2521 = vld [vmem:[%s2512 + $0x40] sm:$0xff]
    %v2522 = vld [vmem:[%s2512 + $0x48] sm:$0xff]
    %v2523 = vld [vmem:[%s2512 + $0x50] sm:$0xff]
    %v2524 = vld [vmem:[%s2512 + $0x58] sm:$0xff]
    %v2525 = vld [vmem:[%s2512 + $0x60] sm:$0xff]
    %v2526 = vld [vmem:[%s2512 + $0x68] sm:$0xff]
    %v2527 = vld [vmem:[%s2512 + $0x70] sm:$0xff]
    %v2528 = vld [vmem:[%s2512 + $0x78] sm:$0xff]
    %v2529 = vlaneseq
    %v2530 = vshrl.u32 %v2529, 7
    %v2531 = vsub.s32 1, %v2530
    %v2532 = vrot.slane %v78, %v2531
    %v2533 = vlaneseq
    %v2534 = vshrl.u32 %v2533, 7
    %v2535 = vsub.s32 1, %v2534
    %v2536 = vrot.slane %v79, %v2535
    %v2537 = vlaneseq
    %v2538 = vshrl.u32 %v2537, 7
    %v2539 = vsub.s32 1, %v2538
    %v2540 = vrot.slane %v80, %v2539
    %v2541 = vlaneseq
    %v2542 = vshrl.u32 %v2541, 7
    %v2543 = vsub.s32 1, %v2542
    %v2544 = vrot.slane %v81, %v2543
    %v2545 = vmul.f32 %v2513, %v2532
    %v2546 = vmul.f32 %v2514, %v2536
    %v2547 = vmul.f32 %v2515, %v2540
    %v2548 = vmul.f32 %v2516, %v2544
    %v2549 = vmul.f32 %v2517, %v2532
    %v2550 = vmul.f32 %v2518, %v2536
    %v2551 = vmul.f32 %v2519, %v2540
    %v2552 = vmul.f32 %v2520, %v2544
    %v2553 = vmul.f32 %v2521, %v2532
    %v2554 = vmul.f32 %v2522, %v2536
    %v2555 = vmul.f32 %v2523, %v2540
    %v2556 = vmul.f32 %v2524, %v2544
    %v2557 = vmul.f32 %v2525, %v2532
    %v2558 = vmul.f32 %v2526, %v2536
    %v2559 = vmul.f32 %v2527, %v2540
    %v2560 = vmul.f32 %v2528, %v2544
    %v2561 = vadd.f32 %v2496, %v2545
    %v2562 = vadd.f32 %v2497, %v2546
    %v2563 = vadd.f32 %v2498, %v2547
    %v2564 = vadd.f32 %v2499, %v2548
    %v2565 = vadd.f32 %v2500, %v2549
    %v2566 = vadd.f32 %v2501, %v2550
    %v2567 = vadd.f32 %v2502, %v2551
    %v2568 = vadd.f32 %v2503, %v2552
    %v2569 = vadd.f32 %v2504, %v2553
    %v2570 = vadd.f32 %v2505, %v2554
    %v2571 = vadd.f32 %v2506, %v2555
    %v2572 = vadd.f32 %v2507, %v2556
    %v2573 = vadd.f32 %v2508, %v2557
    %v2574 = vadd.f32 %v2509, %v2558
    %v2575 = vadd.f32 %v2510, %v2559
    %v2576 = vadd.f32 %v2511, %v2560
    %s2577 = scalar_lea.vmem [#allocation2], 256
    %v2578 = vld [vmem:[%s2577] sm:$0xff]
    %v2579 = vld [vmem:[%s2577 + $0x8] sm:$0xff]
    %v2580 = vld [vmem:[%s2577 + $0x10] sm:$0xff]
    %v2581 = vld [vmem:[%s2577 + $0x18] sm:$0xff]
    %v2582 = vld [vmem:[%s2577 + $0x20] sm:$0xff]
    %v2583 = vld [vmem:[%s2577 + $0x28] sm:$0xff]
    %v2584 = vld [vmem:[%s2577 + $0x30] sm:$0xff]
    %v2585 = vld [vmem:[%s2577 + $0x38] sm:$0xff]
    %v2586 = vld [vmem:[%s2577 + $0x40] sm:$0xff]
    %v2587 = vld [vmem:[%s2577 + $0x48] sm:$0xff]
    %v2588 = vld [vmem:[%s2577 + $0x50] sm:$0xff]
    %v2589 = vld [vmem:[%s2577 + $0x58] sm:$0xff]
    %v2590 = vld [vmem:[%s2577 + $0x60] sm:$0xff]
    %v2591 = vld [vmem:[%s2577 + $0x68] sm:$0xff]
    %v2592 = vld [vmem:[%s2577 + $0x70] sm:$0xff]
    %v2593 = vld [vmem:[%s2577 + $0x78] sm:$0xff]
    %v2594 = vlaneseq
    %v2595 = vshrl.u32 %v2594, 7
    %v2596 = vsub.s32 2, %v2595
    %v2597 = vrot.slane %v78, %v2596
    %v2598 = vlaneseq
    %v2599 = vshrl.u32 %v2598, 7
    %v2600 = vsub.s32 2, %v2599
    %v2601 = vrot.slane %v79, %v2600
    %v2602 = vlaneseq
    %v2603 = vshrl.u32 %v2602, 7
    %v2604 = vsub.s32 2, %v2603
    %v2605 = vrot.slane %v80, %v2604
    %v2606 = vlaneseq
    %v2607 = vshrl.u32 %v2606, 7
    %v2608 = vsub.s32 2, %v2607
    %v2609 = vrot.slane %v81, %v2608
    %v2610 = vmul.f32 %v2578, %v2597
    %v2611 = vmul.f32 %v2579, %v2601
    %v2612 = vmul.f32 %v2580, %v2605
    %v2613 = vmul.f32 %v2581, %v2609
    %v2614 = vmul.f32 %v2582, %v2597
    %v2615 = vmul.f32 %v2583, %v2601
    %v2616 = vmul.f32 %v2584, %v2605
    %v2617 = vmul.f32 %v2585, %v2609
    %v2618 = vmul.f32 %v2586, %v2597
    %v2619 = vmul.f32 %v2587, %v2601
    %v2620 = vmul.f32 %v2588, %v2605
    %v2621 = vmul.f32 %v2589, %v2609
    %v2622 = vmul.f32 %v2590, %v2597
    %v2623 = vmul.f32 %v2591, %v2601
    %v2624 = vmul.f32 %v2592, %v2605
    %v2625 = vmul.f32 %v2593, %v2609
    %v2626 = vadd.f32 %v2561, %v2610
    %v2627 = vadd.f32 %v2562, %v2611
    %v2628 = vadd.f32 %v2563, %v2612
    %v2629 = vadd.f32 %v2564, %v2613
    %v2630 = vadd.f32 %v2565, %v2614
    %v2631 = vadd.f32 %v2566, %v2615
    %v2632 = vadd.f32 %v2567, %v2616
    %v2633 = vadd.f32 %v2568, %v2617
    %v2634 = vadd.f32 %v2569, %v2618
    %v2635 = vadd.f32 %v2570, %v2619
    %v2636 = vadd.f32 %v2571, %v2620
    %v2637 = vadd.f32 %v2572, %v2621
    %v2638 = vadd.f32 %v2573, %v2622
    %v2639 = vadd.f32 %v2574, %v2623
    %v2640 = vadd.f32 %v2575, %v2624
    %v2641 = vadd.f32 %v2576, %v2625
    %s2642 = scalar_lea.vmem [#allocation2], 384
    %v2643 = vld [vmem:[%s2642] sm:$0xff]
    %v2644 = vld [vmem:[%s2642 + $0x8] sm:$0xff]
    %v2645 = vld [vmem:[%s2642 + $0x10] sm:$0xff]
    %v2646 = vld [vmem:[%s2642 + $0x18] sm:$0xff]
    %v2647 = vld [vmem:[%s2642 + $0x20] sm:$0xff]
    %v2648 = vld [vmem:[%s2642 + $0x28] sm:$0xff]
    %v2649 = vld [vmem:[%s2642 + $0x30] sm:$0xff]
    %v2650 = vld [vmem:[%s2642 + $0x38] sm:$0xff]
    %v2651 = vld [vmem:[%s2642 + $0x40] sm:$0xff]
    %v2652 = vld [vmem:[%s2642 + $0x48] sm:$0xff]
    %v2653 = vld [vmem:[%s2642 + $0x50] sm:$0xff]
    %v2654 = vld [vmem:[%s2642 + $0x58] sm:$0xff]
    %v2655 = vld [vmem:[%s2642 + $0x60] sm:$0xff]
    %v2656 = vld [vmem:[%s2642 + $0x68] sm:$0xff]
    %v2657 = vld [vmem:[%s2642 + $0x70] sm:$0xff]
    %v2658 = vld [vmem:[%s2642 + $0x78] sm:$0xff]
    %v2659 = vlaneseq
    %v2660 = vshrl.u32 %v2659, 7
    %v2661 = vsub.s32 3, %v2660
    %v2662 = vrot.slane %v78, %v2661
    %v2663 = vlaneseq
    %v2664 = vshrl.u32 %v2663, 7
    %v2665 = vsub.s32 3, %v2664
    %v2666 = vrot.slane %v79, %v2665
    %v2667 = vlaneseq
    %v2668 = vshrl.u32 %v2667, 7
    %v2669 = vsub.s32 3, %v2668
    %v2670 = vrot.slane %v80, %v2669
    %v2671 = vlaneseq
    %v2672 = vshrl.u32 %v2671, 7
    %v2673 = vsub.s32 3, %v2672
    %v2674 = vrot.slane %v81, %v2673
    %v2675 = vmul.f32 %v2643, %v2662
    %v2676 = vmul.f32 %v2644, %v2666
    %v2677 = vmul.f32 %v2645, %v2670
    %v2678 = vmul.f32 %v2646, %v2674
    %v2679 = vmul.f32 %v2647, %v2662
    %v2680 = vmul.f32 %v2648, %v2666
    %v2681 = vmul.f32 %v2649, %v2670
    %v2682 = vmul.f32 %v2650, %v2674
    %v2683 = vmul.f32 %v2651, %v2662
    %v2684 = vmul.f32 %v2652, %v2666
    %v2685 = vmul.f32 %v2653, %v2670
    %v2686 = vmul.f32 %v2654, %v2674
    %v2687 = vmul.f32 %v2655, %v2662
    %v2688 = vmul.f32 %v2656, %v2666
    %v2689 = vmul.f32 %v2657, %v2670
    %v2690 = vmul.f32 %v2658, %v2674
    %v2691 = vadd.f32 %v2626, %v2675
    %v2692 = vadd.f32 %v2627, %v2676
    %v2693 = vadd.f32 %v2628, %v2677
    %v2694 = vadd.f32 %v2629, %v2678
    %v2695 = vadd.f32 %v2630, %v2679
    %v2696 = vadd.f32 %v2631, %v2680
    %v2697 = vadd.f32 %v2632, %v2681
    %v2698 = vadd.f32 %v2633, %v2682
    %v2699 = vadd.f32 %v2634, %v2683
    %v2700 = vadd.f32 %v2635, %v2684
    %v2701 = vadd.f32 %v2636, %v2685
    %v2702 = vadd.f32 %v2637, %v2686
    %v2703 = vadd.f32 %v2638, %v2687
    %v2704 = vadd.f32 %v2639, %v2688
    %v2705 = vadd.f32 %v2640, %v2689
    %v2706 = vadd.f32 %v2641, %v2690
    %s2707 = scalar_lea.vmem [#allocation2], 512
    %v2708 = vld [vmem:[%s2707] sm:$0xff]
    %v2709 = vld [vmem:[%s2707 + $0x8] sm:$0xff]
    %v2710 = vld [vmem:[%s2707 + $0x10] sm:$0xff]
    %v2711 = vld [vmem:[%s2707 + $0x18] sm:$0xff]
    %v2712 = vld [vmem:[%s2707 + $0x20] sm:$0xff]
    %v2713 = vld [vmem:[%s2707 + $0x28] sm:$0xff]
    %v2714 = vld [vmem:[%s2707 + $0x30] sm:$0xff]
    %v2715 = vld [vmem:[%s2707 + $0x38] sm:$0xff]
    %v2716 = vld [vmem:[%s2707 + $0x40] sm:$0xff]
    %v2717 = vld [vmem:[%s2707 + $0x48] sm:$0xff]
    %v2718 = vld [vmem:[%s2707 + $0x50] sm:$0xff]
    %v2719 = vld [vmem:[%s2707 + $0x58] sm:$0xff]
    %v2720 = vld [vmem:[%s2707 + $0x60] sm:$0xff]
    %v2721 = vld [vmem:[%s2707 + $0x68] sm:$0xff]
    %v2722 = vld [vmem:[%s2707 + $0x70] sm:$0xff]
    %v2723 = vld [vmem:[%s2707 + $0x78] sm:$0xff]
    %v2724 = vlaneseq
    %v2725 = vshrl.u32 %v2724, 7
    %v2726 = vsub.s32 4, %v2725
    %v2727 = vrot.slane %v78, %v2726
    %v2728 = vlaneseq
    %v2729 = vshrl.u32 %v2728, 7
    %v2730 = vsub.s32 4, %v2729
    %v2731 = vrot.slane %v79, %v2730
    %v2732 = vlaneseq
    %v2733 = vshrl.u32 %v2732, 7
    %v2734 = vsub.s32 4, %v2733
    %v2735 = vrot.slane %v80, %v2734
    %v2736 = vlaneseq
    %v2737 = vshrl.u32 %v2736, 7
    %v2738 = vsub.s32 4, %v2737
    %v2739 = vrot.slane %v81, %v2738
    %v2740 = vmul.f32 %v2708, %v2727
    %v2741 = vmul.f32 %v2709, %v2731
    %v2742 = vmul.f32 %v2710, %v2735
    %v2743 = vmul.f32 %v2711, %v2739
    %v2744 = vmul.f32 %v2712, %v2727
    %v2745 = vmul.f32 %v2713, %v2731
    %v2746 = vmul.f32 %v2714, %v2735
    %v2747 = vmul.f32 %v2715, %v2739
    %v2748 = vmul.f32 %v2716, %v2727
    %v2749 = vmul.f32 %v2717, %v2731
    %v2750 = vmul.f32 %v2718, %v2735
    %v2751 = vmul.f32 %v2719, %v2739
    %v2752 = vmul.f32 %v2720, %v2727
    %v2753 = vmul.f32 %v2721, %v2731
    %v2754 = vmul.f32 %v2722, %v2735
    %v2755 = vmul.f32 %v2723, %v2739
    %v2756 = vadd.f32 %v2691, %v2740
    %v2757 = vadd.f32 %v2692, %v2741
    %v2758 = vadd.f32 %v2693, %v2742
    %v2759 = vadd.f32 %v2694, %v2743
    %v2760 = vadd.f32 %v2695, %v2744
    %v2761 = vadd.f32 %v2696, %v2745
    %v2762 = vadd.f32 %v2697, %v2746
    %v2763 = vadd.f32 %v2698, %v2747
    %v2764 = vadd.f32 %v2699, %v2748
    %v2765 = vadd.f32 %v2700, %v2749
    %v2766 = vadd.f32 %v2701, %v2750
    %v2767 = vadd.f32 %v2702, %v2751
    %v2768 = vadd.f32 %v2703, %v2752
    %v2769 = vadd.f32 %v2704, %v2753
    %v2770 = vadd.f32 %v2705, %v2754
    %v2771 = vadd.f32 %v2706, %v2755
    %s2772 = scalar_lea.vmem [#allocation2], 640
    %v2773 = vld [vmem:[%s2772] sm:$0xff]
    %v2774 = vld [vmem:[%s2772 + $0x8] sm:$0xff]
    %v2775 = vld [vmem:[%s2772 + $0x10] sm:$0xff]
    %v2776 = vld [vmem:[%s2772 + $0x18] sm:$0xff]
    %v2777 = vld [vmem:[%s2772 + $0x20] sm:$0xff]
    %v2778 = vld [vmem:[%s2772 + $0x28] sm:$0xff]
    %v2779 = vld [vmem:[%s2772 + $0x30] sm:$0xff]
    %v2780 = vld [vmem:[%s2772 + $0x38] sm:$0xff]
    %v2781 = vld [vmem:[%s2772 + $0x40] sm:$0xff]
    %v2782 = vld [vmem:[%s2772 + $0x48] sm:$0xff]
    %v2783 = vld [vmem:[%s2772 + $0x50] sm:$0xff]
    %v2784 = vld [vmem:[%s2772 + $0x58] sm:$0xff]
    %v2785 = vld [vmem:[%s2772 + $0x60] sm:$0xff]
    %v2786 = vld [vmem:[%s2772 + $0x68] sm:$0xff]
    %v2787 = vld [vmem:[%s2772 + $0x70] sm:$0xff]
    %v2788 = vld [vmem:[%s2772 + $0x78] sm:$0xff]
    %v2789 = vlaneseq
    %v2790 = vshrl.u32 %v2789, 7
    %v2791 = vsub.s32 5, %v2790
    %v2792 = vrot.slane %v78, %v2791
    %v2793 = vlaneseq
    %v2794 = vshrl.u32 %v2793, 7
    %v2795 = vsub.s32 5, %v2794
    %v2796 = vrot.slane %v79, %v2795
    %v2797 = vlaneseq
    %v2798 = vshrl.u32 %v2797, 7
    %v2799 = vsub.s32 5, %v2798
    %v2800 = vrot.slane %v80, %v2799
    %v2801 = vlaneseq
    %v2802 = vshrl.u32 %v2801, 7
    %v2803 = vsub.s32 5, %v2802
    %v2804 = vrot.slane %v81, %v2803
    %v2805 = vmul.f32 %v2773, %v2792
    %v2806 = vmul.f32 %v2774, %v2796
    %v2807 = vmul.f32 %v2775, %v2800
    %v2808 = vmul.f32 %v2776, %v2804
    %v2809 = vmul.f32 %v2777, %v2792
    %v2810 = vmul.f32 %v2778, %v2796
    %v2811 = vmul.f32 %v2779, %v2800
    %v2812 = vmul.f32 %v2780, %v2804
    %v2813 = vmul.f32 %v2781, %v2792
    %v2814 = vmul.f32 %v2782, %v2796
    %v2815 = vmul.f32 %v2783, %v2800
    %v2816 = vmul.f32 %v2784, %v2804
    %v2817 = vmul.f32 %v2785, %v2792
    %v2818 = vmul.f32 %v2786, %v2796
    %v2819 = vmul.f32 %v2787, %v2800
    %v2820 = vmul.f32 %v2788, %v2804
    %v2821 = vadd.f32 %v2756, %v2805
    %v2822 = vadd.f32 %v2757, %v2806
    %v2823 = vadd.f32 %v2758, %v2807
    %v2824 = vadd.f32 %v2759, %v2808
    %v2825 = vadd.f32 %v2760, %v2809
    %v2826 = vadd.f32 %v2761, %v2810
    %v2827 = vadd.f32 %v2762, %v2811
    %v2828 = vadd.f32 %v2763, %v2812
    %v2829 = vadd.f32 %v2764, %v2813
    %v2830 = vadd.f32 %v2765, %v2814
    %v2831 = vadd.f32 %v2766, %v2815
    %v2832 = vadd.f32 %v2767, %v2816
    %v2833 = vadd.f32 %v2768, %v2817
    %v2834 = vadd.f32 %v2769, %v2818
    %v2835 = vadd.f32 %v2770, %v2819
    %v2836 = vadd.f32 %v2771, %v2820
    %s2837 = scalar_lea.vmem [#allocation2], 768
    %v2838 = vld [vmem:[%s2837] sm:$0xff]
    %v2839 = vld [vmem:[%s2837 + $0x8] sm:$0xff]
    %v2840 = vld [vmem:[%s2837 + $0x10] sm:$0xff]
    %v2841 = vld [vmem:[%s2837 + $0x18] sm:$0xff]
    %v2842 = vld [vmem:[%s2837 + $0x20] sm:$0xff]
    %v2843 = vld [vmem:[%s2837 + $0x28] sm:$0xff]
    %v2844 = vld [vmem:[%s2837 + $0x30] sm:$0xff]
    %v2845 = vld [vmem:[%s2837 + $0x38] sm:$0xff]
    %v2846 = vld [vmem:[%s2837 + $0x40] sm:$0xff]
    %v2847 = vld [vmem:[%s2837 + $0x48] sm:$0xff]
    %v2848 = vld [vmem:[%s2837 + $0x50] sm:$0xff]
    %v2849 = vld [vmem:[%s2837 + $0x58] sm:$0xff]
    %v2850 = vld [vmem:[%s2837 + $0x60] sm:$0xff]
    %v2851 = vld [vmem:[%s2837 + $0x68] sm:$0xff]
    %v2852 = vld [vmem:[%s2837 + $0x70] sm:$0xff]
    %v2853 = vld [vmem:[%s2837 + $0x78] sm:$0xff]
    %v2854 = vlaneseq
    %v2855 = vshrl.u32 %v2854, 7
    %v2856 = vsub.s32 6, %v2855
    %v2857 = vrot.slane %v78, %v2856
    %v2858 = vlaneseq
    %v2859 = vshrl.u32 %v2858, 7
    %v2860 = vsub.s32 6, %v2859
    %v2861 = vrot.slane %v79, %v2860
    %v2862 = vlaneseq
    %v2863 = vshrl.u32 %v2862, 7
    %v2864 = vsub.s32 6, %v2863
    %v2865 = vrot.slane %v80, %v2864
    %v2866 = vlaneseq
    %v2867 = vshrl.u32 %v2866, 7
    %v2868 = vsub.s32 6, %v2867
    %v2869 = vrot.slane %v81, %v2868
    %v2870 = vmul.f32 %v2838, %v2857
    %v2871 = vmul.f32 %v2839, %v2861
    %v2872 = vmul.f32 %v2840, %v2865
    %v2873 = vmul.f32 %v2841, %v2869
    %v2874 = vmul.f32 %v2842, %v2857
    %v2875 = vmul.f32 %v2843, %v2861
    %v2876 = vmul.f32 %v2844, %v2865
    %v2877 = vmul.f32 %v2845, %v2869
    %v2878 = vmul.f32 %v2846, %v2857
    %v2879 = vmul.f32 %v2847, %v2861
    %v2880 = vmul.f32 %v2848, %v2865
    %v2881 = vmul.f32 %v2849, %v2869
    %v2882 = vmul.f32 %v2850, %v2857
    %v2883 = vmul.f32 %v2851, %v2861
    %v2884 = vmul.f32 %v2852, %v2865
    %v2885 = vmul.f32 %v2853, %v2869
    %v2886 = vadd.f32 %v2821, %v2870
    %v2887 = vadd.f32 %v2822, %v2871
    %v2888 = vadd.f32 %v2823, %v2872
    %v2889 = vadd.f32 %v2824, %v2873
    %v2890 = vadd.f32 %v2825, %v2874
    %v2891 = vadd.f32 %v2826, %v2875
    %v2892 = vadd.f32 %v2827, %v2876
    %v2893 = vadd.f32 %v2828, %v2877
    %v2894 = vadd.f32 %v2829, %v2878
    %v2895 = vadd.f32 %v2830, %v2879
    %v2896 = vadd.f32 %v2831, %v2880
    %v2897 = vadd.f32 %v2832, %v2881
    %v2898 = vadd.f32 %v2833, %v2882
    %v2899 = vadd.f32 %v2834, %v2883
    %v2900 = vadd.f32 %v2835, %v2884
    %v2901 = vadd.f32 %v2836, %v2885
    %s2902 = scalar_lea.vmem [#allocation2], 896
    %v2903 = vld [vmem:[%s2902] sm:$0xff]
    %v2904 = vld [vmem:[%s2902 + $0x8] sm:$0xff]
    %v2905 = vld [vmem:[%s2902 + $0x10] sm:$0xff]
    %v2906 = vld [vmem:[%s2902 + $0x18] sm:$0xff]
    %v2907 = vld [vmem:[%s2902 + $0x20] sm:$0xff]
    %v2908 = vld [vmem:[%s2902 + $0x28] sm:$0xff]
    %v2909 = vld [vmem:[%s2902 + $0x30] sm:$0xff]
    %v2910 = vld [vmem:[%s2902 + $0x38] sm:$0xff]
    %v2911 = vld [vmem:[%s2902 + $0x40] sm:$0xff]
    %v2912 = vld [vmem:[%s2902 + $0x48] sm:$0xff]
    %v2913 = vld [vmem:[%s2902 + $0x50] sm:$0xff]
    %v2914 = vld [vmem:[%s2902 + $0x58] sm:$0xff]
    %v2915 = vld [vmem:[%s2902 + $0x60] sm:$0xff]
    %v2916 = vld [vmem:[%s2902 + $0x68] sm:$0xff]
    %v2917 = vld [vmem:[%s2902 + $0x70] sm:$0xff]
    %v2918 = vld [vmem:[%s2902 + $0x78] sm:$0xff]
    %v2919 = vlaneseq
    %v2920 = vshrl.u32 %v2919, 7
    %v2921 = vsub.s32 7, %v2920
    %v2922 = vrot.slane %v78, %v2921
    %v2923 = vlaneseq
    %v2924 = vshrl.u32 %v2923, 7
    %v2925 = vsub.s32 7, %v2924
    %v2926 = vrot.slane %v79, %v2925
    %v2927 = vlaneseq
    %v2928 = vshrl.u32 %v2927, 7
    %v2929 = vsub.s32 7, %v2928
    %v2930 = vrot.slane %v80, %v2929
    %v2931 = vlaneseq
    %v2932 = vshrl.u32 %v2931, 7
    %v2933 = vsub.s32 7, %v2932
    %v2934 = vrot.slane %v81, %v2933
    %v2935 = vmul.f32 %v2903, %v2922
    %v2936 = vmul.f32 %v2904, %v2926
    %v2937 = vmul.f32 %v2905, %v2930
    %v2938 = vmul.f32 %v2906, %v2934
    %v2939 = vmul.f32 %v2907, %v2922
    %v2940 = vmul.f32 %v2908, %v2926
    %v2941 = vmul.f32 %v2909, %v2930
    %v2942 = vmul.f32 %v2910, %v2934
    %v2943 = vmul.f32 %v2911, %v2922
    %v2944 = vmul.f32 %v2912, %v2926
    %v2945 = vmul.f32 %v2913, %v2930
    %v2946 = vmul.f32 %v2914, %v2934
    %v2947 = vmul.f32 %v2915, %v2922
    %v2948 = vmul.f32 %v2916, %v2926
    %v2949 = vmul.f32 %v2917, %v2930
    %v2950 = vmul.f32 %v2918, %v2934
    %v2951 = vadd.f32 %v2886, %v2935
    %v2952 = vadd.f32 %v2887, %v2936
    %v2953 = vadd.f32 %v2888, %v2937
    %v2954 = vadd.f32 %v2889, %v2938
    %v2955 = vadd.f32 %v2890, %v2939
    %v2956 = vadd.f32 %v2891, %v2940
    %v2957 = vadd.f32 %v2892, %v2941
    %v2958 = vadd.f32 %v2893, %v2942
    %v2959 = vadd.f32 %v2894, %v2943
    %v2960 = vadd.f32 %v2895, %v2944
    %v2961 = vadd.f32 %v2896, %v2945
    %v2962 = vadd.f32 %v2897, %v2946
    %v2963 = vadd.f32 %v2898, %v2947
    %v2964 = vadd.f32 %v2899, %v2948
    %v2965 = vadd.f32 %v2900, %v2949
    %v2966 = vadd.f32 %v2901, %v2950
    %s2967 = scalar_lea.vmem [#allocation2], 1024
    %v2968 = vld [vmem:[%s2967] sm:$0xff]
    %v2969 = vld [vmem:[%s2967 + $0x8] sm:$0xff]
    %v2970 = vld [vmem:[%s2967 + $0x10] sm:$0xff]
    %v2971 = vld [vmem:[%s2967 + $0x18] sm:$0xff]
    %v2972 = vld [vmem:[%s2967 + $0x20] sm:$0xff]
    %v2973 = vld [vmem:[%s2967 + $0x28] sm:$0xff]
    %v2974 = vld [vmem:[%s2967 + $0x30] sm:$0xff]
    %v2975 = vld [vmem:[%s2967 + $0x38] sm:$0xff]
    %v2976 = vld [vmem:[%s2967 + $0x40] sm:$0xff]
    %v2977 = vld [vmem:[%s2967 + $0x48] sm:$0xff]
    %v2978 = vld [vmem:[%s2967 + $0x50] sm:$0xff]
    %v2979 = vld [vmem:[%s2967 + $0x58] sm:$0xff]
    %v2980 = vld [vmem:[%s2967 + $0x60] sm:$0xff]
    %v2981 = vld [vmem:[%s2967 + $0x68] sm:$0xff]
    %v2982 = vld [vmem:[%s2967 + $0x70] sm:$0xff]
    %v2983 = vld [vmem:[%s2967 + $0x78] sm:$0xff]
    %v2984 = vlaneseq
    %v2985 = vshrl.u32 %v2984, 7
    %v2986 = vsub.s32 0, %v2985
    %v2987 = vrot.slane %v82, %v2986
    %v2988 = vlaneseq
    %v2989 = vshrl.u32 %v2988, 7
    %v2990 = vsub.s32 0, %v2989
    %v2991 = vrot.slane %v83, %v2990
    %v2992 = vlaneseq
    %v2993 = vshrl.u32 %v2992, 7
    %v2994 = vsub.s32 0, %v2993
    %v2995 = vrot.slane %v84, %v2994
    %v2996 = vlaneseq
    %v2997 = vshrl.u32 %v2996, 7
    %v2998 = vsub.s32 0, %v2997
    %v2999 = vrot.slane %v85, %v2998
    %v3000 = vmul.f32 %v2968, %v2987
    %v3001 = vmul.f32 %v2969, %v2991
    %v3002 = vmul.f32 %v2970, %v2995
    %v3003 = vmul.f32 %v2971, %v2999
    %v3004 = vmul.f32 %v2972, %v2987
    %v3005 = vmul.f32 %v2973, %v2991
    %v3006 = vmul.f32 %v2974, %v2995
    %v3007 = vmul.f32 %v2975, %v2999
    %v3008 = vmul.f32 %v2976, %v2987
    %v3009 = vmul.f32 %v2977, %v2991
    %v3010 = vmul.f32 %v2978, %v2995
    %v3011 = vmul.f32 %v2979, %v2999
    %v3012 = vmul.f32 %v2980, %v2987
    %v3013 = vmul.f32 %v2981, %v2991
    %v3014 = vmul.f32 %v2982, %v2995
    %v3015 = vmul.f32 %v2983, %v2999
    %v3016 = vadd.f32 %v2951, %v3000
    %v3017 = vadd.f32 %v2952, %v3001
    %v3018 = vadd.f32 %v2953, %v3002
    %v3019 = vadd.f32 %v2954, %v3003
    %v3020 = vadd.f32 %v2955, %v3004
    %v3021 = vadd.f32 %v2956, %v3005
    %v3022 = vadd.f32 %v2957, %v3006
    %v3023 = vadd.f32 %v2958, %v3007
    %v3024 = vadd.f32 %v2959, %v3008
    %v3025 = vadd.f32 %v2960, %v3009
    %v3026 = vadd.f32 %v2961, %v3010
    %v3027 = vadd.f32 %v2962, %v3011
    %v3028 = vadd.f32 %v2963, %v3012
    %v3029 = vadd.f32 %v2964, %v3013
    %v3030 = vadd.f32 %v2965, %v3014
    %v3031 = vadd.f32 %v2966, %v3015
    %s3032 = scalar_lea.vmem [#allocation2], 1152
    %v3033 = vld [vmem:[%s3032] sm:$0xff]
    %v3034 = vld [vmem:[%s3032 + $0x8] sm:$0xff]
    %v3035 = vld [vmem:[%s3032 + $0x10] sm:$0xff]
    %v3036 = vld [vmem:[%s3032 + $0x18] sm:$0xff]
    %v3037 = vld [vmem:[%s3032 + $0x20] sm:$0xff]
    %v3038 = vld [vmem:[%s3032 + $0x28] sm:$0xff]
    %v3039 = vld [vmem:[%s3032 + $0x30] sm:$0xff]
    %v3040 = vld [vmem:[%s3032 + $0x38] sm:$0xff]
    %v3041 = vld [vmem:[%s3032 + $0x40] sm:$0xff]
    %v3042 = vld [vmem:[%s3032 + $0x48] sm:$0xff]
    %v3043 = vld [vmem:[%s3032 + $0x50] sm:$0xff]
    %v3044 = vld [vmem:[%s3032 + $0x58] sm:$0xff]
    %v3045 = vld [vmem:[%s3032 + $0x60] sm:$0xff]
    %v3046 = vld [vmem:[%s3032 + $0x68] sm:$0xff]
    %v3047 = vld [vmem:[%s3032 + $0x70] sm:$0xff]
    %v3048 = vld [vmem:[%s3032 + $0x78] sm:$0xff]
    %v3049 = vlaneseq
    %v3050 = vshrl.u32 %v3049, 7
    %v3051 = vsub.s32 1, %v3050
    %v3052 = vrot.slane %v82, %v3051
    %v3053 = vlaneseq
    %v3054 = vshrl.u32 %v3053, 7
    %v3055 = vsub.s32 1, %v3054
    %v3056 = vrot.slane %v83, %v3055
    %v3057 = vlaneseq
    %v3058 = vshrl.u32 %v3057, 7
    %v3059 = vsub.s32 1, %v3058
    %v3060 = vrot.slane %v84, %v3059
    %v3061 = vlaneseq
    %v3062 = vshrl.u32 %v3061, 7
    %v3063 = vsub.s32 1, %v3062
    %v3064 = vrot.slane %v85, %v3063
    %v3065 = vmul.f32 %v3033, %v3052
    %v3066 = vmul.f32 %v3034, %v3056
    %v3067 = vmul.f32 %v3035, %v3060
    %v3068 = vmul.f32 %v3036, %v3064
    %v3069 = vmul.f32 %v3037, %v3052
    %v3070 = vmul.f32 %v3038, %v3056
    %v3071 = vmul.f32 %v3039, %v3060
    %v3072 = vmul.f32 %v3040, %v3064
    %v3073 = vmul.f32 %v3041, %v3052
    %v3074 = vmul.f32 %v3042, %v3056
    %v3075 = vmul.f32 %v3043, %v3060
    %v3076 = vmul.f32 %v3044, %v3064
    %v3077 = vmul.f32 %v3045, %v3052
    %v3078 = vmul.f32 %v3046, %v3056
    %v3079 = vmul.f32 %v3047, %v3060
    %v3080 = vmul.f32 %v3048, %v3064
    %v3081 = vadd.f32 %v3016, %v3065
    %v3082 = vadd.f32 %v3017, %v3066
    %v3083 = vadd.f32 %v3018, %v3067
    %v3084 = vadd.f32 %v3019, %v3068
    %v3085 = vadd.f32 %v3020, %v3069
    %v3086 = vadd.f32 %v3021, %v3070
    %v3087 = vadd.f32 %v3022, %v3071
    %v3088 = vadd.f32 %v3023, %v3072
    %v3089 = vadd.f32 %v3024, %v3073
    %v3090 = vadd.f32 %v3025, %v3074
    %v3091 = vadd.f32 %v3026, %v3075
    %v3092 = vadd.f32 %v3027, %v3076
    %v3093 = vadd.f32 %v3028, %v3077
    %v3094 = vadd.f32 %v3029, %v3078
    %v3095 = vadd.f32 %v3030, %v3079
    %v3096 = vadd.f32 %v3031, %v3080
    %s3097 = scalar_lea.vmem [#allocation2], 1280
    %v3098 = vld [vmem:[%s3097] sm:$0xff]
    %v3099 = vld [vmem:[%s3097 + $0x8] sm:$0xff]
    %v3100 = vld [vmem:[%s3097 + $0x10] sm:$0xff]
    %v3101 = vld [vmem:[%s3097 + $0x18] sm:$0xff]
    %v3102 = vld [vmem:[%s3097 + $0x20] sm:$0xff]
    %v3103 = vld [vmem:[%s3097 + $0x28] sm:$0xff]
    %v3104 = vld [vmem:[%s3097 + $0x30] sm:$0xff]
    %v3105 = vld [vmem:[%s3097 + $0x38] sm:$0xff]
    %v3106 = vld [vmem:[%s3097 + $0x40] sm:$0xff]
    %v3107 = vld [vmem:[%s3097 + $0x48] sm:$0xff]
    %v3108 = vld [vmem:[%s3097 + $0x50] sm:$0xff]
    %v3109 = vld [vmem:[%s3097 + $0x58] sm:$0xff]
    %v3110 = vld [vmem:[%s3097 + $0x60] sm:$0xff]
    %v3111 = vld [vmem:[%s3097 + $0x68] sm:$0xff]
    %v3112 = vld [vmem:[%s3097 + $0x70] sm:$0xff]
    %v3113 = vld [vmem:[%s3097 + $0x78] sm:$0xff]
    %v3114 = vlaneseq
    %v3115 = vshrl.u32 %v3114, 7
    %v3116 = vsub.s32 2, %v3115
    %v3117 = vrot.slane %v82, %v3116
    %v3118 = vlaneseq
    %v3119 = vshrl.u32 %v3118, 7
    %v3120 = vsub.s32 2, %v3119
    %v3121 = vrot.slane %v83, %v3120
    %v3122 = vlaneseq
    %v3123 = vshrl.u32 %v3122, 7
    %v3124 = vsub.s32 2, %v3123
    %v3125 = vrot.slane %v84, %v3124
    %v3126 = vlaneseq
    %v3127 = vshrl.u32 %v3126, 7
    %v3128 = vsub.s32 2, %v3127
    %v3129 = vrot.slane %v85, %v3128
    %v3130 = vmul.f32 %v3098, %v3117
    %v3131 = vmul.f32 %v3099, %v3121
    %v3132 = vmul.f32 %v3100, %v3125
    %v3133 = vmul.f32 %v3101, %v3129
    %v3134 = vmul.f32 %v3102, %v3117
    %v3135 = vmul.f32 %v3103, %v3121
    %v3136 = vmul.f32 %v3104, %v3125
    %v3137 = vmul.f32 %v3105, %v3129
    %v3138 = vmul.f32 %v3106, %v3117
    %v3139 = vmul.f32 %v3107, %v3121
    %v3140 = vmul.f32 %v3108, %v3125
    %v3141 = vmul.f32 %v3109, %v3129
    %v3142 = vmul.f32 %v3110, %v3117
    %v3143 = vmul.f32 %v3111, %v3121
    %v3144 = vmul.f32 %v3112, %v3125
    %v3145 = vmul.f32 %v3113, %v3129
    %v3146 = vadd.f32 %v3081, %v3130
    %v3147 = vadd.f32 %v3082, %v3131
    %v3148 = vadd.f32 %v3083, %v3132
    %v3149 = vadd.f32 %v3084, %v3133
    %v3150 = vadd.f32 %v3085, %v3134
    %v3151 = vadd.f32 %v3086, %v3135
    %v3152 = vadd.f32 %v3087, %v3136
    %v3153 = vadd.f32 %v3088, %v3137
    %v3154 = vadd.f32 %v3089, %v3138
    %v3155 = vadd.f32 %v3090, %v3139
    %v3156 = vadd.f32 %v3091, %v3140
    %v3157 = vadd.f32 %v3092, %v3141
    %v3158 = vadd.f32 %v3093, %v3142
    %v3159 = vadd.f32 %v3094, %v3143
    %v3160 = vadd.f32 %v3095, %v3144
    %v3161 = vadd.f32 %v3096, %v3145
    %s3162 = scalar_lea.vmem [#allocation2], 1408
    %v3163 = vld [vmem:[%s3162] sm:$0xff]
    %v3164 = vld [vmem:[%s3162 + $0x8] sm:$0xff]
    %v3165 = vld [vmem:[%s3162 + $0x10] sm:$0xff]
    %v3166 = vld [vmem:[%s3162 + $0x18] sm:$0xff]
    %v3167 = vld [vmem:[%s3162 + $0x20] sm:$0xff]
    %v3168 = vld [vmem:[%s3162 + $0x28] sm:$0xff]
    %v3169 = vld [vmem:[%s3162 + $0x30] sm:$0xff]
    %v3170 = vld [vmem:[%s3162 + $0x38] sm:$0xff]
    %v3171 = vld [vmem:[%s3162 + $0x40] sm:$0xff]
    %v3172 = vld [vmem:[%s3162 + $0x48] sm:$0xff]
    %v3173 = vld [vmem:[%s3162 + $0x50] sm:$0xff]
    %v3174 = vld [vmem:[%s3162 + $0x58] sm:$0xff]
    %v3175 = vld [vmem:[%s3162 + $0x60] sm:$0xff]
    %v3176 = vld [vmem:[%s3162 + $0x68] sm:$0xff]
    %v3177 = vld [vmem:[%s3162 + $0x70] sm:$0xff]
    %v3178 = vld [vmem:[%s3162 + $0x78] sm:$0xff]
    %v3179 = vlaneseq
    %v3180 = vshrl.u32 %v3179, 7
    %v3181 = vsub.s32 3, %v3180
    %v3182 = vrot.slane %v82, %v3181
    %v3183 = vlaneseq
    %v3184 = vshrl.u32 %v3183, 7
    %v3185 = vsub.s32 3, %v3184
    %v3186 = vrot.slane %v83, %v3185
    %v3187 = vlaneseq
    %v3188 = vshrl.u32 %v3187, 7
    %v3189 = vsub.s32 3, %v3188
    %v3190 = vrot.slane %v84, %v3189
    %v3191 = vlaneseq
    %v3192 = vshrl.u32 %v3191, 7
    %v3193 = vsub.s32 3, %v3192
    %v3194 = vrot.slane %v85, %v3193
    %v3195 = vmul.f32 %v3163, %v3182
    %v3196 = vmul.f32 %v3164, %v3186
    %v3197 = vmul.f32 %v3165, %v3190
    %v3198 = vmul.f32 %v3166, %v3194
    %v3199 = vmul.f32 %v3167, %v3182
    %v3200 = vmul.f32 %v3168, %v3186
    %v3201 = vmul.f32 %v3169, %v3190
    %v3202 = vmul.f32 %v3170, %v3194
    %v3203 = vmul.f32 %v3171, %v3182
    %v3204 = vmul.f32 %v3172, %v3186
    %v3205 = vmul.f32 %v3173, %v3190
    %v3206 = vmul.f32 %v3174, %v3194
    %v3207 = vmul.f32 %v3175, %v3182
    %v3208 = vmul.f32 %v3176, %v3186
    %v3209 = vmul.f32 %v3177, %v3190
    %v3210 = vmul.f32 %v3178, %v3194
    %v3211 = vadd.f32 %v3146, %v3195
    %v3212 = vadd.f32 %v3147, %v3196
    %v3213 = vadd.f32 %v3148, %v3197
    %v3214 = vadd.f32 %v3149, %v3198
    %v3215 = vadd.f32 %v3150, %v3199
    %v3216 = vadd.f32 %v3151, %v3200
    %v3217 = vadd.f32 %v3152, %v3201
    %v3218 = vadd.f32 %v3153, %v3202
    %v3219 = vadd.f32 %v3154, %v3203
    %v3220 = vadd.f32 %v3155, %v3204
    %v3221 = vadd.f32 %v3156, %v3205
    %v3222 = vadd.f32 %v3157, %v3206
    %v3223 = vadd.f32 %v3158, %v3207
    %v3224 = vadd.f32 %v3159, %v3208
    %v3225 = vadd.f32 %v3160, %v3209
    %v3226 = vadd.f32 %v3161, %v3210
    %s3227 = scalar_lea.vmem [#allocation2], 1536
    %v3228 = vld [vmem:[%s3227] sm:$0xff]
    %v3229 = vld [vmem:[%s3227 + $0x8] sm:$0xff]
    %v3230 = vld [vmem:[%s3227 + $0x10] sm:$0xff]
    %v3231 = vld [vmem:[%s3227 + $0x18] sm:$0xff]
    %v3232 = vld [vmem:[%s3227 + $0x20] sm:$0xff]
    %v3233 = vld [vmem:[%s3227 + $0x28] sm:$0xff]
    %v3234 = vld [vmem:[%s3227 + $0x30] sm:$0xff]
    %v3235 = vld [vmem:[%s3227 + $0x38] sm:$0xff]
    %v3236 = vld [vmem:[%s3227 + $0x40] sm:$0xff]
    %v3237 = vld [vmem:[%s3227 + $0x48] sm:$0xff]
    %v3238 = vld [vmem:[%s3227 + $0x50] sm:$0xff]
    %v3239 = vld [vmem:[%s3227 + $0x58] sm:$0xff]
    %v3240 = vld [vmem:[%s3227 + $0x60] sm:$0xff]
    %v3241 = vld [vmem:[%s3227 + $0x68] sm:$0xff]
    %v3242 = vld [vmem:[%s3227 + $0x70] sm:$0xff]
    %v3243 = vld [vmem:[%s3227 + $0x78] sm:$0xff]
    %v3244 = vlaneseq
    %v3245 = vshrl.u32 %v3244, 7
    %v3246 = vsub.s32 4, %v3245
    %v3247 = vrot.slane %v82, %v3246
    %v3248 = vlaneseq
    %v3249 = vshrl.u32 %v3248, 7
    %v3250 = vsub.s32 4, %v3249
    %v3251 = vrot.slane %v83, %v3250
    %v3252 = vlaneseq
    %v3253 = vshrl.u32 %v3252, 7
    %v3254 = vsub.s32 4, %v3253
    %v3255 = vrot.slane %v84, %v3254
    %v3256 = vlaneseq
    %v3257 = vshrl.u32 %v3256, 7
    %v3258 = vsub.s32 4, %v3257
    %v3259 = vrot.slane %v85, %v3258
    %v3260 = vmul.f32 %v3228, %v3247
    %v3261 = vmul.f32 %v3229, %v3251
    %v3262 = vmul.f32 %v3230, %v3255
    %v3263 = vmul.f32 %v3231, %v3259
    %v3264 = vmul.f32 %v3232, %v3247
    %v3265 = vmul.f32 %v3233, %v3251
    %v3266 = vmul.f32 %v3234, %v3255
    %v3267 = vmul.f32 %v3235, %v3259
    %v3268 = vmul.f32 %v3236, %v3247
    %v3269 = vmul.f32 %v3237, %v3251
    %v3270 = vmul.f32 %v3238, %v3255
    %v3271 = vmul.f32 %v3239, %v3259
    %v3272 = vmul.f32 %v3240, %v3247
    %v3273 = vmul.f32 %v3241, %v3251
    %v3274 = vmul.f32 %v3242, %v3255
    %v3275 = vmul.f32 %v3243, %v3259
    %v3276 = vadd.f32 %v3211, %v3260
    %v3277 = vadd.f32 %v3212, %v3261
    %v3278 = vadd.f32 %v3213, %v3262
    %v3279 = vadd.f32 %v3214, %v3263
    %v3280 = vadd.f32 %v3215, %v3264
    %v3281 = vadd.f32 %v3216, %v3265
    %v3282 = vadd.f32 %v3217, %v3266
    %v3283 = vadd.f32 %v3218, %v3267
    %v3284 = vadd.f32 %v3219, %v3268
    %v3285 = vadd.f32 %v3220, %v3269
    %v3286 = vadd.f32 %v3221, %v3270
    %v3287 = vadd.f32 %v3222, %v3271
    %v3288 = vadd.f32 %v3223, %v3272
    %v3289 = vadd.f32 %v3224, %v3273
    %v3290 = vadd.f32 %v3225, %v3274
    %v3291 = vadd.f32 %v3226, %v3275
    %s3292 = scalar_lea.vmem [#allocation2], 1664
    %v3293 = vld [vmem:[%s3292] sm:$0xff]
    %v3294 = vld [vmem:[%s3292 + $0x8] sm:$0xff]
    %v3295 = vld [vmem:[%s3292 + $0x10] sm:$0xff]
    %v3296 = vld [vmem:[%s3292 + $0x18] sm:$0xff]
    %v3297 = vld [vmem:[%s3292 + $0x20] sm:$0xff]
    %v3298 = vld [vmem:[%s3292 + $0x28] sm:$0xff]
    %v3299 = vld [vmem:[%s3292 + $0x30] sm:$0xff]
    %v3300 = vld [vmem:[%s3292 + $0x38] sm:$0xff]
    %v3301 = vld [vmem:[%s3292 + $0x40] sm:$0xff]
    %v3302 = vld [vmem:[%s3292 + $0x48] sm:$0xff]
    %v3303 = vld [vmem:[%s3292 + $0x50] sm:$0xff]
    %v3304 = vld [vmem:[%s3292 + $0x58] sm:$0xff]
    %v3305 = vld [vmem:[%s3292 + $0x60] sm:$0xff]
    %v3306 = vld [vmem:[%s3292 + $0x68] sm:$0xff]
    %v3307 = vld [vmem:[%s3292 + $0x70] sm:$0xff]
    %v3308 = vld [vmem:[%s3292 + $0x78] sm:$0xff]
    %v3309 = vlaneseq
    %v3310 = vshrl.u32 %v3309, 7
    %v3311 = vsub.s32 5, %v3310
    %v3312 = vrot.slane %v82, %v3311
    %v3313 = vlaneseq
    %v3314 = vshrl.u32 %v3313, 7
    %v3315 = vsub.s32 5, %v3314
    %v3316 = vrot.slane %v83, %v3315
    %v3317 = vlaneseq
    %v3318 = vshrl.u32 %v3317, 7
    %v3319 = vsub.s32 5, %v3318
    %v3320 = vrot.slane %v84, %v3319
    %v3321 = vlaneseq
    %v3322 = vshrl.u32 %v3321, 7
    %v3323 = vsub.s32 5, %v3322
    %v3324 = vrot.slane %v85, %v3323
    %v3325 = vmul.f32 %v3293, %v3312
    %v3326 = vmul.f32 %v3294, %v3316
    %v3327 = vmul.f32 %v3295, %v3320
    %v3328 = vmul.f32 %v3296, %v3324
    %v3329 = vmul.f32 %v3297, %v3312
    %v3330 = vmul.f32 %v3298, %v3316
    %v3331 = vmul.f32 %v3299, %v3320
    %v3332 = vmul.f32 %v3300, %v3324
    %v3333 = vmul.f32 %v3301, %v3312
    %v3334 = vmul.f32 %v3302, %v3316
    %v3335 = vmul.f32 %v3303, %v3320
    %v3336 = vmul.f32 %v3304, %v3324
    %v3337 = vmul.f32 %v3305, %v3312
    %v3338 = vmul.f32 %v3306, %v3316
    %v3339 = vmul.f32 %v3307, %v3320
    %v3340 = vmul.f32 %v3308, %v3324
    %v3341 = vadd.f32 %v3276, %v3325
    %v3342 = vadd.f32 %v3277, %v3326
    %v3343 = vadd.f32 %v3278, %v3327
    %v3344 = vadd.f32 %v3279, %v3328
    %v3345 = vadd.f32 %v3280, %v3329
    %v3346 = vadd.f32 %v3281, %v3330
    %v3347 = vadd.f32 %v3282, %v3331
    %v3348 = vadd.f32 %v3283, %v3332
    %v3349 = vadd.f32 %v3284, %v3333
    %v3350 = vadd.f32 %v3285, %v3334
    %v3351 = vadd.f32 %v3286, %v3335
    %v3352 = vadd.f32 %v3287, %v3336
    %v3353 = vadd.f32 %v3288, %v3337
    %v3354 = vadd.f32 %v3289, %v3338
    %v3355 = vadd.f32 %v3290, %v3339
    %v3356 = vadd.f32 %v3291, %v3340
    %s3357 = scalar_lea.vmem [#allocation2], 1792
    %v3358 = vld [vmem:[%s3357] sm:$0xff]
    %v3359 = vld [vmem:[%s3357 + $0x8] sm:$0xff]
    %v3360 = vld [vmem:[%s3357 + $0x10] sm:$0xff]
    %v3361 = vld [vmem:[%s3357 + $0x18] sm:$0xff]
    %v3362 = vld [vmem:[%s3357 + $0x20] sm:$0xff]
    %v3363 = vld [vmem:[%s3357 + $0x28] sm:$0xff]
    %v3364 = vld [vmem:[%s3357 + $0x30] sm:$0xff]
    %v3365 = vld [vmem:[%s3357 + $0x38] sm:$0xff]
    %v3366 = vld [vmem:[%s3357 + $0x40] sm:$0xff]
    %v3367 = vld [vmem:[%s3357 + $0x48] sm:$0xff]
    %v3368 = vld [vmem:[%s3357 + $0x50] sm:$0xff]
    %v3369 = vld [vmem:[%s3357 + $0x58] sm:$0xff]
    %v3370 = vld [vmem:[%s3357 + $0x60] sm:$0xff]
    %v3371 = vld [vmem:[%s3357 + $0x68] sm:$0xff]
    %v3372 = vld [vmem:[%s3357 + $0x70] sm:$0xff]
    %v3373 = vld [vmem:[%s3357 + $0x78] sm:$0xff]
    %v3374 = vlaneseq
    %v3375 = vshrl.u32 %v3374, 7
    %v3376 = vsub.s32 6, %v3375
    %v3377 = vrot.slane %v82, %v3376
    %v3378 = vlaneseq
    %v3379 = vshrl.u32 %v3378, 7
    %v3380 = vsub.s32 6, %v3379
    %v3381 = vrot.slane %v83, %v3380
    %v3382 = vlaneseq
    %v3383 = vshrl.u32 %v3382, 7
    %v3384 = vsub.s32 6, %v3383
    %v3385 = vrot.slane %v84, %v3384
    %v3386 = vlaneseq
    %v3387 = vshrl.u32 %v3386, 7
    %v3388 = vsub.s32 6, %v3387
    %v3389 = vrot.slane %v85, %v3388
    %v3390 = vmul.f32 %v3358, %v3377
    %v3391 = vmul.f32 %v3359, %v3381
    %v3392 = vmul.f32 %v3360, %v3385
    %v3393 = vmul.f32 %v3361, %v3389
    %v3394 = vmul.f32 %v3362, %v3377
    %v3395 = vmul.f32 %v3363, %v3381
    %v3396 = vmul.f32 %v3364, %v3385
    %v3397 = vmul.f32 %v3365, %v3389
    %v3398 = vmul.f32 %v3366, %v3377
    %v3399 = vmul.f32 %v3367, %v3381
    %v3400 = vmul.f32 %v3368, %v3385
    %v3401 = vmul.f32 %v3369, %v3389
    %v3402 = vmul.f32 %v3370, %v3377
    %v3403 = vmul.f32 %v3371, %v3381
    %v3404 = vmul.f32 %v3372, %v3385
    %v3405 = vmul.f32 %v3373, %v3389
    %v3406 = vadd.f32 %v3341, %v3390
    %v3407 = vadd.f32 %v3342, %v3391
    %v3408 = vadd.f32 %v3343, %v3392
    %v3409 = vadd.f32 %v3344, %v3393
    %v3410 = vadd.f32 %v3345, %v3394
    %v3411 = vadd.f32 %v3346, %v3395
    %v3412 = vadd.f32 %v3347, %v3396
    %v3413 = vadd.f32 %v3348, %v3397
    %v3414 = vadd.f32 %v3349, %v3398
    %v3415 = vadd.f32 %v3350, %v3399
    %v3416 = vadd.f32 %v3351, %v3400
    %v3417 = vadd.f32 %v3352, %v3401
    %v3418 = vadd.f32 %v3353, %v3402
    %v3419 = vadd.f32 %v3354, %v3403
    %v3420 = vadd.f32 %v3355, %v3404
    %v3421 = vadd.f32 %v3356, %v3405
    %s3422 = scalar_lea.vmem [#allocation2], 1920
    %v3423 = vld [vmem:[%s3422] sm:$0xff]
    %v3424 = vld [vmem:[%s3422 + $0x8] sm:$0xff]
    %v3425 = vld [vmem:[%s3422 + $0x10] sm:$0xff]
    %v3426 = vld [vmem:[%s3422 + $0x18] sm:$0xff]
    %v3427 = vld [vmem:[%s3422 + $0x20] sm:$0xff]
    %v3428 = vld [vmem:[%s3422 + $0x28] sm:$0xff]
    %v3429 = vld [vmem:[%s3422 + $0x30] sm:$0xff]
    %v3430 = vld [vmem:[%s3422 + $0x38] sm:$0xff]
    %v3431 = vld [vmem:[%s3422 + $0x40] sm:$0xff]
    %v3432 = vld [vmem:[%s3422 + $0x48] sm:$0xff]
    %v3433 = vld [vmem:[%s3422 + $0x50] sm:$0xff]
    %v3434 = vld [vmem:[%s3422 + $0x58] sm:$0xff]
    %v3435 = vld [vmem:[%s3422 + $0x60] sm:$0xff]
    %v3436 = vld [vmem:[%s3422 + $0x68] sm:$0xff]
    %v3437 = vld [vmem:[%s3422 + $0x70] sm:$0xff]
    %v3438 = vld [vmem:[%s3422 + $0x78] sm:$0xff]
    %v3439 = vlaneseq
    %v3440 = vshrl.u32 %v3439, 7
    %v3441 = vsub.s32 7, %v3440
    %v3442 = vrot.slane %v82, %v3441
    %v3443 = vlaneseq
    %v3444 = vshrl.u32 %v3443, 7
    %v3445 = vsub.s32 7, %v3444
    %v3446 = vrot.slane %v83, %v3445
    %v3447 = vlaneseq
    %v3448 = vshrl.u32 %v3447, 7
    %v3449 = vsub.s32 7, %v3448
    %v3450 = vrot.slane %v84, %v3449
    %v3451 = vlaneseq
    %v3452 = vshrl.u32 %v3451, 7
    %v3453 = vsub.s32 7, %v3452
    %v3454 = vrot.slane %v85, %v3453
    %v3455 = vmul.f32 %v3423, %v3442
    %v3456 = vmul.f32 %v3424, %v3446
    %v3457 = vmul.f32 %v3425, %v3450
    %v3458 = vmul.f32 %v3426, %v3454
    %v3459 = vmul.f32 %v3427, %v3442
    %v3460 = vmul.f32 %v3428, %v3446
    %v3461 = vmul.f32 %v3429, %v3450
    %v3462 = vmul.f32 %v3430, %v3454
    %v3463 = vmul.f32 %v3431, %v3442
    %v3464 = vmul.f32 %v3432, %v3446
    %v3465 = vmul.f32 %v3433, %v3450
    %v3466 = vmul.f32 %v3434, %v3454
    %v3467 = vmul.f32 %v3435, %v3442
    %v3468 = vmul.f32 %v3436, %v3446
    %v3469 = vmul.f32 %v3437, %v3450
    %v3470 = vmul.f32 %v3438, %v3454
    %v3471 = vadd.f32 %v3406, %v3455
    %v3472 = vadd.f32 %v3407, %v3456
    %v3473 = vadd.f32 %v3408, %v3457
    %v3474 = vadd.f32 %v3409, %v3458
    %v3475 = vadd.f32 %v3410, %v3459
    %v3476 = vadd.f32 %v3411, %v3460
    %v3477 = vadd.f32 %v3412, %v3461
    %v3478 = vadd.f32 %v3413, %v3462
    %v3479 = vadd.f32 %v3414, %v3463
    %v3480 = vadd.f32 %v3415, %v3464
    %v3481 = vadd.f32 %v3416, %v3465
    %v3482 = vadd.f32 %v3417, %v3466
    %v3483 = vadd.f32 %v3418, %v3467
    %v3484 = vadd.f32 %v3419, %v3468
    %v3485 = vadd.f32 %v3420, %v3469
    %v3486 = vadd.f32 %v3421, %v3470
    %v3487 = vld [vmem:[#allocation5] sm:$0xff]
    %v3488 = vld [vmem:[#allocation5 + $0x8] sm:$0xff]
    %v3489 = vld [vmem:[#allocation5 + $0x10] sm:$0xff]
    %v3490 = vld [vmem:[#allocation5 + $0x18] sm:$0xff]
    %v3491 = vld [vmem:[#allocation5 + $0x20] sm:$0xff]
    %v3492 = vld [vmem:[#allocation5 + $0x28] sm:$0xff]
    %v3493 = vld [vmem:[#allocation5 + $0x30] sm:$0xff]
    %v3494 = vld [vmem:[#allocation5 + $0x38] sm:$0xff]
    %v3495 = vlaneseq
    %v3496 = vshrl.u32 %v3495, 7
    %v3497 = vsub.s32 0, %v3496
    %v3498 = vrot.slane %v3471, %v3497
    %v3499 = vlaneseq
    %v3500 = vshrl.u32 %v3499, 7
    %v3501 = vsub.s32 0, %v3500
    %v3502 = vrot.slane %v3472, %v3501
    %v3503 = vlaneseq
    %v3504 = vshrl.u32 %v3503, 7
    %v3505 = vsub.s32 0, %v3504
    %v3506 = vrot.slane %v3473, %v3505
    %v3507 = vlaneseq
    %v3508 = vshrl.u32 %v3507, 7
    %v3509 = vsub.s32 0, %v3508
    %v3510 = vrot.slane %v3474, %v3509
    %v3511 = vmul.f32 %v3487, %v3498
    %v3512 = vmul.f32 %v3488, %v3502
    %v3513 = vmul.f32 %v3489, %v3506
    %v3514 = vmul.f32 %v3490, %v3510
    %v3515 = vmul.f32 %v3491, %v3498
    %v3516 = vmul.f32 %v3492, %v3502
    %v3517 = vmul.f32 %v3493, %v3506
    %v3518 = vmul.f32 %v3494, %v3510
    %s3519 = scalar_lea.vmem [#allocation5], 64
    %v3520 = vld [vmem:[%s3519] sm:$0xff]
    %v3521 = vld [vmem:[%s3519 + $0x8] sm:$0xff]
    %v3522 = vld [vmem:[%s3519 + $0x10] sm:$0xff]
    %v3523 = vld [vmem:[%s3519 + $0x18] sm:$0xff]
    %v3524 = vld [vmem:[%s3519 + $0x20] sm:$0xff]
    %v3525 = vld [vmem:[%s3519 + $0x28] sm:$0xff]
    %v3526 = vld [vmem:[%s3519 + $0x30] sm:$0xff]
    %v3527 = vld [vmem:[%s3519 + $0x38] sm:$0xff]
    %v3528 = vlaneseq
    %v3529 = vshrl.u32 %v3528, 7
    %v3530 = vsub.s32 1, %v3529
    %v3531 = vrot.slane %v3471, %v3530
    %v3532 = vlaneseq
    %v3533 = vshrl.u32 %v3532, 7
    %v3534 = vsub.s32 1, %v3533
    %v3535 = vrot.slane %v3472, %v3534
    %v3536 = vlaneseq
    %v3537 = vshrl.u32 %v3536, 7
    %v3538 = vsub.s32 1, %v3537
    %v3539 = vrot.slane %v3473, %v3538
    %v3540 = vlaneseq
    %v3541 = vshrl.u32 %v3540, 7
    %v3542 = vsub.s32 1, %v3541
    %v3543 = vrot.slane %v3474, %v3542
    %v3544 = vmul.f32 %v3520, %v3531
    %v3545 = vmul.f32 %v3521, %v3535
    %v3546 = vmul.f32 %v3522, %v3539
    %v3547 = vmul.f32 %v3523, %v3543
    %v3548 = vmul.f32 %v3524, %v3531
    %v3549 = vmul.f32 %v3525, %v3535
    %v3550 = vmul.f32 %v3526, %v3539
    %v3551 = vmul.f32 %v3527, %v3543
    %v3552 = vadd.f32 %v3511, %v3544
    %v3553 = vadd.f32 %v3512, %v3545
    %v3554 = vadd.f32 %v3513, %v3546
    %v3555 = vadd.f32 %v3514, %v3547
    %v3556 = vadd.f32 %v3515, %v3548
    %v3557 = vadd.f32 %v3516, %v3549
    %v3558 = vadd.f32 %v3517, %v3550
    %v3559 = vadd.f32 %v3518, %v3551
    %s3560 = scalar_lea.vmem [#allocation5], 128
    %v3561 = vld [vmem:[%s3560] sm:$0xff]
    %v3562 = vld [vmem:[%s3560 + $0x8] sm:$0xff]
    %v3563 = vld [vmem:[%s3560 + $0x10] sm:$0xff]
    %v3564 = vld [vmem:[%s3560 + $0x18] sm:$0xff]
    %v3565 = vld [vmem:[%s3560 + $0x20] sm:$0xff]
    %v3566 = vld [vmem:[%s3560 + $0x28] sm:$0xff]
    %v3567 = vld [vmem:[%s3560 + $0x30] sm:$0xff]
    %v3568 = vld [vmem:[%s3560 + $0x38] sm:$0xff]
    %v3569 = vlaneseq
    %v3570 = vshrl.u32 %v3569, 7
    %v3571 = vsub.s32 2, %v3570
    %v3572 = vrot.slane %v3471, %v3571
    %v3573 = vlaneseq
    %v3574 = vshrl.u32 %v3573, 7
    %v3575 = vsub.s32 2, %v3574
    %v3576 = vrot.slane %v3472, %v3575
    %v3577 = vlaneseq
    %v3578 = vshrl.u32 %v3577, 7
    %v3579 = vsub.s32 2, %v3578
    %v3580 = vrot.slane %v3473, %v3579
    %v3581 = vlaneseq
    %v3582 = vshrl.u32 %v3581, 7
    %v3583 = vsub.s32 2, %v3582
    %v3584 = vrot.slane %v3474, %v3583
    %v3585 = vmul.f32 %v3561, %v3572
    %v3586 = vmul.f32 %v3562, %v3576
    %v3587 = vmul.f32 %v3563, %v3580
    %v3588 = vmul.f32 %v3564, %v3584
    %v3589 = vmul.f32 %v3565, %v3572
    %v3590 = vmul.f32 %v3566, %v3576
    %v3591 = vmul.f32 %v3567, %v3580
    %v3592 = vmul.f32 %v3568, %v3584
    %v3593 = vadd.f32 %v3552, %v3585
    %v3594 = vadd.f32 %v3553, %v3586
    %v3595 = vadd.f32 %v3554, %v3587
    %v3596 = vadd.f32 %v3555, %v3588
    %v3597 = vadd.f32 %v3556, %v3589
    %v3598 = vadd.f32 %v3557, %v3590
    %v3599 = vadd.f32 %v3558, %v3591
    %v3600 = vadd.f32 %v3559, %v3592
    %s3601 = scalar_lea.vmem [#allocation5], 192
    %v3602 = vld [vmem:[%s3601] sm:$0xff]
    %v3603 = vld [vmem:[%s3601 + $0x8] sm:$0xff]
    %v3604 = vld [vmem:[%s3601 + $0x10] sm:$0xff]
    %v3605 = vld [vmem:[%s3601 + $0x18] sm:$0xff]
    %v3606 = vld [vmem:[%s3601 + $0x20] sm:$0xff]
    %v3607 = vld [vmem:[%s3601 + $0x28] sm:$0xff]
    %v3608 = vld [vmem:[%s3601 + $0x30] sm:$0xff]
    %v3609 = vld [vmem:[%s3601 + $0x38] sm:$0xff]
    %v3610 = vlaneseq
    %v3611 = vshrl.u32 %v3610, 7
    %v3612 = vsub.s32 3, %v3611
    %v3613 = vrot.slane %v3471, %v3612
    %v3614 = vlaneseq
    %v3615 = vshrl.u32 %v3614, 7
    %v3616 = vsub.s32 3, %v3615
    %v3617 = vrot.slane %v3472, %v3616
    %v3618 = vlaneseq
    %v3619 = vshrl.u32 %v3618, 7
    %v3620 = vsub.s32 3, %v3619
    %v3621 = vrot.slane %v3473, %v3620
    %v3622 = vlaneseq
    %v3623 = vshrl.u32 %v3622, 7
    %v3624 = vsub.s32 3, %v3623
    %v3625 = vrot.slane %v3474, %v3624
    %v3626 = vmul.f32 %v3602, %v3613
    %v3627 = vmul.f32 %v3603, %v3617
    %v3628 = vmul.f32 %v3604, %v3621
    %v3629 = vmul.f32 %v3605, %v3625
    %v3630 = vmul.f32 %v3606, %v3613
    %v3631 = vmul.f32 %v3607, %v3617
    %v3632 = vmul.f32 %v3608, %v3621
    %v3633 = vmul.f32 %v3609, %v3625
    %v3634 = vadd.f32 %v3593, %v3626
    %v3635 = vadd.f32 %v3594, %v3627
    %v3636 = vadd.f32 %v3595, %v3628
    %v3637 = vadd.f32 %v3596, %v3629
    %v3638 = vadd.f32 %v3597, %v3630
    %v3639 = vadd.f32 %v3598, %v3631
    %v3640 = vadd.f32 %v3599, %v3632
    %v3641 = vadd.f32 %v3600, %v3633
    %s3642 = scalar_lea.vmem [#allocation5], 256
    %v3643 = vld [vmem:[%s3642] sm:$0xff]
    %v3644 = vld [vmem:[%s3642 + $0x8] sm:$0xff]
    %v3645 = vld [vmem:[%s3642 + $0x10] sm:$0xff]
    %v3646 = vld [vmem:[%s3642 + $0x18] sm:$0xff]
    %v3647 = vld [vmem:[%s3642 + $0x20] sm:$0xff]
    %v3648 = vld [vmem:[%s3642 + $0x28] sm:$0xff]
    %v3649 = vld [vmem:[%s3642 + $0x30] sm:$0xff]
    %v3650 = vld [vmem:[%s3642 + $0x38] sm:$0xff]
    %v3651 = vlaneseq
    %v3652 = vshrl.u32 %v3651, 7
    %v3653 = vsub.s32 4, %v3652
    %v3654 = vrot.slane %v3471, %v3653
    %v3655 = vlaneseq
    %v3656 = vshrl.u32 %v3655, 7
    %v3657 = vsub.s32 4, %v3656
    %v3658 = vrot.slane %v3472, %v3657
    %v3659 = vlaneseq
    %v3660 = vshrl.u32 %v3659, 7
    %v3661 = vsub.s32 4, %v3660
    %v3662 = vrot.slane %v3473, %v3661
    %v3663 = vlaneseq
    %v3664 = vshrl.u32 %v3663, 7
    %v3665 = vsub.s32 4, %v3664
    %v3666 = vrot.slane %v3474, %v3665
    %v3667 = vmul.f32 %v3643, %v3654
    %v3668 = vmul.f32 %v3644, %v3658
    %v3669 = vmul.f32 %v3645, %v3662
    %v3670 = vmul.f32 %v3646, %v3666
    %v3671 = vmul.f32 %v3647, %v3654
    %v3672 = vmul.f32 %v3648, %v3658
    %v3673 = vmul.f32 %v3649, %v3662
    %v3674 = vmul.f32 %v3650, %v3666
    %v3675 = vadd.f32 %v3634, %v3667
    %v3676 = vadd.f32 %v3635, %v3668
    %v3677 = vadd.f32 %v3636, %v3669
    %v3678 = vadd.f32 %v3637, %v3670
    %v3679 = vadd.f32 %v3638, %v3671
    %v3680 = vadd.f32 %v3639, %v3672
    %v3681 = vadd.f32 %v3640, %v3673
    %v3682 = vadd.f32 %v3641, %v3674
    %s3683 = scalar_lea.vmem [#allocation5], 320
    %v3684 = vld [vmem:[%s3683] sm:$0xff]
    %v3685 = vld [vmem:[%s3683 + $0x8] sm:$0xff]
    %v3686 = vld [vmem:[%s3683 + $0x10] sm:$0xff]
    %v3687 = vld [vmem:[%s3683 + $0x18] sm:$0xff]
    %v3688 = vld [vmem:[%s3683 + $0x20] sm:$0xff]
    %v3689 = vld [vmem:[%s3683 + $0x28] sm:$0xff]
    %v3690 = vld [vmem:[%s3683 + $0x30] sm:$0xff]
    %v3691 = vld [vmem:[%s3683 + $0x38] sm:$0xff]
    %v3692 = vlaneseq
    %v3693 = vshrl.u32 %v3692, 7
    %v3694 = vsub.s32 5, %v3693
    %v3695 = vrot.slane %v3471, %v3694
    %v3696 = vlaneseq
    %v3697 = vshrl.u32 %v3696, 7
    %v3698 = vsub.s32 5, %v3697
    %v3699 = vrot.slane %v3472, %v3698
    %v3700 = vlaneseq
    %v3701 = vshrl.u32 %v3700, 7
    %v3702 = vsub.s32 5, %v3701
    %v3703 = vrot.slane %v3473, %v3702
    %v3704 = vlaneseq
    %v3705 = vshrl.u32 %v3704, 7
    %v3706 = vsub.s32 5, %v3705
    %v3707 = vrot.slane %v3474, %v3706
    %v3708 = vmul.f32 %v3684, %v3695
    %v3709 = vmul.f32 %v3685, %v3699
    %v3710 = vmul.f32 %v3686, %v3703
    %v3711 = vmul.f32 %v3687, %v3707
    %v3712 = vmul.f32 %v3688, %v3695
    %v3713 = vmul.f32 %v3689, %v3699
    %v3714 = vmul.f32 %v3690, %v3703
    %v3715 = vmul.f32 %v3691, %v3707
    %v3716 = vadd.f32 %v3675, %v3708
    %v3717 = vadd.f32 %v3676, %v3709
    %v3718 = vadd.f32 %v3677, %v3710
    %v3719 = vadd.f32 %v3678, %v3711
    %v3720 = vadd.f32 %v3679, %v3712
    %v3721 = vadd.f32 %v3680, %v3713
    %v3722 = vadd.f32 %v3681, %v3714
    %v3723 = vadd.f32 %v3682, %v3715
    %s3724 = scalar_lea.vmem [#allocation5], 384
    %v3725 = vld [vmem:[%s3724] sm:$0xff]
    %v3726 = vld [vmem:[%s3724 + $0x8] sm:$0xff]
    %v3727 = vld [vmem:[%s3724 + $0x10] sm:$0xff]
    %v3728 = vld [vmem:[%s3724 + $0x18] sm:$0xff]
    %v3729 = vld [vmem:[%s3724 + $0x20] sm:$0xff]
    %v3730 = vld [vmem:[%s3724 + $0x28] sm:$0xff]
    %v3731 = vld [vmem:[%s3724 + $0x30] sm:$0xff]
    %v3732 = vld [vmem:[%s3724 + $0x38] sm:$0xff]
    %v3733 = vlaneseq
    %v3734 = vshrl.u32 %v3733, 7
    %v3735 = vsub.s32 6, %v3734
    %v3736 = vrot.slane %v3471, %v3735
    %v3737 = vlaneseq
    %v3738 = vshrl.u32 %v3737, 7
    %v3739 = vsub.s32 6, %v3738
    %v3740 = vrot.slane %v3472, %v3739
    %v3741 = vlaneseq
    %v3742 = vshrl.u32 %v3741, 7
    %v3743 = vsub.s32 6, %v3742
    %v3744 = vrot.slane %v3473, %v3743
    %v3745 = vlaneseq
    %v3746 = vshrl.u32 %v3745, 7
    %v3747 = vsub.s32 6, %v3746
    %v3748 = vrot.slane %v3474, %v3747
    %v3749 = vmul.f32 %v3725, %v3736
    %v3750 = vmul.f32 %v3726, %v3740
    %v3751 = vmul.f32 %v3727, %v3744
    %v3752 = vmul.f32 %v3728, %v3748
    %v3753 = vmul.f32 %v3729, %v3736
    %v3754 = vmul.f32 %v3730, %v3740
    %v3755 = vmul.f32 %v3731, %v3744
    %v3756 = vmul.f32 %v3732, %v3748
    %v3757 = vadd.f32 %v3716, %v3749
    %v3758 = vadd.f32 %v3717, %v3750
    %v3759 = vadd.f32 %v3718, %v3751
    %v3760 = vadd.f32 %v3719, %v3752
    %v3761 = vadd.f32 %v3720, %v3753
    %v3762 = vadd.f32 %v3721, %v3754
    %v3763 = vadd.f32 %v3722, %v3755
    %v3764 = vadd.f32 %v3723, %v3756
    %s3765 = scalar_lea.vmem [#allocation5], 448
    %v3766 = vld [vmem:[%s3765] sm:$0xff]
    %v3767 = vld [vmem:[%s3765 + $0x8] sm:$0xff]
    %v3768 = vld [vmem:[%s3765 + $0x10] sm:$0xff]
    %v3769 = vld [vmem:[%s3765 + $0x18] sm:$0xff]
    %v3770 = vld [vmem:[%s3765 + $0x20] sm:$0xff]
    %v3771 = vld [vmem:[%s3765 + $0x28] sm:$0xff]
    %v3772 = vld [vmem:[%s3765 + $0x30] sm:$0xff]
    %v3773 = vld [vmem:[%s3765 + $0x38] sm:$0xff]
    %v3774 = vlaneseq
    %v3775 = vshrl.u32 %v3774, 7
    %v3776 = vsub.s32 7, %v3775
    %v3777 = vrot.slane %v3471, %v3776
    %v3778 = vlaneseq
    %v3779 = vshrl.u32 %v3778, 7
    %v3780 = vsub.s32 7, %v3779
    %v3781 = vrot.slane %v3472, %v3780
    %v3782 = vlaneseq
    %v3783 = vshrl.u32 %v3782, 7
    %v3784 = vsub.s32 7, %v3783
    %v3785 = vrot.slane %v3473, %v3784
    %v3786 = vlaneseq
    %v3787 = vshrl.u32 %v3786, 7
    %v3788 = vsub.s32 7, %v3787
    %v3789 = vrot.slane %v3474, %v3788
    %v3790 = vmul.f32 %v3766, %v3777
    %v3791 = vmul.f32 %v3767, %v3781
    %v3792 = vmul.f32 %v3768, %v3785
    %v3793 = vmul.f32 %v3769, %v3789
    %v3794 = vmul.f32 %v3770, %v3777
    %v3795 = vmul.f32 %v3771, %v3781
    %v3796 = vmul.f32 %v3772, %v3785
    %v3797 = vmul.f32 %v3773, %v3789
    %v3798 = vadd.f32 %v3757, %v3790
    %v3799 = vadd.f32 %v3758, %v3791
    %v3800 = vadd.f32 %v3759, %v3792
    %v3801 = vadd.f32 %v3760, %v3793
    %v3802 = vadd.f32 %v3761, %v3794
    %v3803 = vadd.f32 %v3762, %v3795
    %v3804 = vadd.f32 %v3763, %v3796
    %v3805 = vadd.f32 %v3764, %v3797
    %s3806 = scalar_lea.vmem [#allocation5], 512
    %v3807 = vld [vmem:[%s3806] sm:$0xff]
    %v3808 = vld [vmem:[%s3806 + $0x8] sm:$0xff]
    %v3809 = vld [vmem:[%s3806 + $0x10] sm:$0xff]
    %v3810 = vld [vmem:[%s3806 + $0x18] sm:$0xff]
    %v3811 = vld [vmem:[%s3806 + $0x20] sm:$0xff]
    %v3812 = vld [vmem:[%s3806 + $0x28] sm:$0xff]
    %v3813 = vld [vmem:[%s3806 + $0x30] sm:$0xff]
    %v3814 = vld [vmem:[%s3806 + $0x38] sm:$0xff]
    %v3815 = vlaneseq
    %v3816 = vshrl.u32 %v3815, 7
    %v3817 = vsub.s32 0, %v3816
    %v3818 = vrot.slane %v3475, %v3817
    %v3819 = vlaneseq
    %v3820 = vshrl.u32 %v3819, 7
    %v3821 = vsub.s32 0, %v3820
    %v3822 = vrot.slane %v3476, %v3821
    %v3823 = vlaneseq
    %v3824 = vshrl.u32 %v3823, 7
    %v3825 = vsub.s32 0, %v3824
    %v3826 = vrot.slane %v3477, %v3825
    %v3827 = vlaneseq
    %v3828 = vshrl.u32 %v3827, 7
    %v3829 = vsub.s32 0, %v3828
    %v3830 = vrot.slane %v3478, %v3829
    %v3831 = vmul.f32 %v3807, %v3818
    %v3832 = vmul.f32 %v3808, %v3822
    %v3833 = vmul.f32 %v3809, %v3826
    %v3834 = vmul.f32 %v3810, %v3830
    %v3835 = vmul.f32 %v3811, %v3818
    %v3836 = vmul.f32 %v3812, %v3822
    %v3837 = vmul.f32 %v3813, %v3826
    %v3838 = vmul.f32 %v3814, %v3830
    %v3839 = vadd.f32 %v3798, %v3831
    %v3840 = vadd.f32 %v3799, %v3832
    %v3841 = vadd.f32 %v3800, %v3833
    %v3842 = vadd.f32 %v3801, %v3834
    %v3843 = vadd.f32 %v3802, %v3835
    %v3844 = vadd.f32 %v3803, %v3836
    %v3845 = vadd.f32 %v3804, %v3837
    %v3846 = vadd.f32 %v3805, %v3838
    %s3847 = scalar_lea.vmem [#allocation5], 576
    %v3848 = vld [vmem:[%s3847] sm:$0xff]
    %v3849 = vld [vmem:[%s3847 + $0x8] sm:$0xff]
    %v3850 = vld [vmem:[%s3847 + $0x10] sm:$0xff]
    %v3851 = vld [vmem:[%s3847 + $0x18] sm:$0xff]
    %v3852 = vld [vmem:[%s3847 + $0x20] sm:$0xff]
    %v3853 = vld [vmem:[%s3847 + $0x28] sm:$0xff]
    %v3854 = vld [vmem:[%s3847 + $0x30] sm:$0xff]
    %v3855 = vld [vmem:[%s3847 + $0x38] sm:$0xff]
    %v3856 = vlaneseq
    %v3857 = vshrl.u32 %v3856, 7
    %v3858 = vsub.s32 1, %v3857
    %v3859 = vrot.slane %v3475, %v3858
    %v3860 = vlaneseq
    %v3861 = vshrl.u32 %v3860, 7
    %v3862 = vsub.s32 1, %v3861
    %v3863 = vrot.slane %v3476, %v3862
    %v3864 = vlaneseq
    %v3865 = vshrl.u32 %v3864, 7
    %v3866 = vsub.s32 1, %v3865
    %v3867 = vrot.slane %v3477, %v3866
    %v3868 = vlaneseq
    %v3869 = vshrl.u32 %v3868, 7
    %v3870 = vsub.s32 1, %v3869
    %v3871 = vrot.slane %v3478, %v3870
    %v3872 = vmul.f32 %v3848, %v3859
    %v3873 = vmul.f32 %v3849, %v3863
    %v3874 = vmul.f32 %v3850, %v3867
    %v3875 = vmul.f32 %v3851, %v3871
    %v3876 = vmul.f32 %v3852, %v3859
    %v3877 = vmul.f32 %v3853, %v3863
    %v3878 = vmul.f32 %v3854, %v3867
    %v3879 = vmul.f32 %v3855, %v3871
    %v3880 = vadd.f32 %v3839, %v3872
    %v3881 = vadd.f32 %v3840, %v3873
    %v3882 = vadd.f32 %v3841, %v3874
    %v3883 = vadd.f32 %v3842, %v3875
    %v3884 = vadd.f32 %v3843, %v3876
    %v3885 = vadd.f32 %v3844, %v3877
    %v3886 = vadd.f32 %v3845, %v3878
    %v3887 = vadd.f32 %v3846, %v3879
    %s3888 = scalar_lea.vmem [#allocation5], 640
    %v3889 = vld [vmem:[%s3888] sm:$0xff]
    %v3890 = vld [vmem:[%s3888 + $0x8] sm:$0xff]
    %v3891 = vld [vmem:[%s3888 + $0x10] sm:$0xff]
    %v3892 = vld [vmem:[%s3888 + $0x18] sm:$0xff]
    %v3893 = vld [vmem:[%s3888 + $0x20] sm:$0xff]
    %v3894 = vld [vmem:[%s3888 + $0x28] sm:$0xff]
    %v3895 = vld [vmem:[%s3888 + $0x30] sm:$0xff]
    %v3896 = vld [vmem:[%s3888 + $0x38] sm:$0xff]
    %v3897 = vlaneseq
    %v3898 = vshrl.u32 %v3897, 7
    %v3899 = vsub.s32 2, %v3898
    %v3900 = vrot.slane %v3475, %v3899
    %v3901 = vlaneseq
    %v3902 = vshrl.u32 %v3901, 7
    %v3903 = vsub.s32 2, %v3902
    %v3904 = vrot.slane %v3476, %v3903
    %v3905 = vlaneseq
    %v3906 = vshrl.u32 %v3905, 7
    %v3907 = vsub.s32 2, %v3906
    %v3908 = vrot.slane %v3477, %v3907
    %v3909 = vlaneseq
    %v3910 = vshrl.u32 %v3909, 7
    %v3911 = vsub.s32 2, %v3910
    %v3912 = vrot.slane %v3478, %v3911
    %v3913 = vmul.f32 %v3889, %v3900
    %v3914 = vmul.f32 %v3890, %v3904
    %v3915 = vmul.f32 %v3891, %v3908
    %v3916 = vmul.f32 %v3892, %v3912
    %v3917 = vmul.f32 %v3893, %v3900
    %v3918 = vmul.f32 %v3894, %v3904
    %v3919 = vmul.f32 %v3895, %v3908
    %v3920 = vmul.f32 %v3896, %v3912
    %v3921 = vadd.f32 %v3880, %v3913
    %v3922 = vadd.f32 %v3881, %v3914
    %v3923 = vadd.f32 %v3882, %v3915
    %v3924 = vadd.f32 %v3883, %v3916
    %v3925 = vadd.f32 %v3884, %v3917
    %v3926 = vadd.f32 %v3885, %v3918
    %v3927 = vadd.f32 %v3886, %v3919
    %v3928 = vadd.f32 %v3887, %v3920
    %s3929 = scalar_lea.vmem [#allocation5], 704
    %v3930 = vld [vmem:[%s3929] sm:$0xff]
    %v3931 = vld [vmem:[%s3929 + $0x8] sm:$0xff]
    %v3932 = vld [vmem:[%s3929 + $0x10] sm:$0xff]
    %v3933 = vld [vmem:[%s3929 + $0x18] sm:$0xff]
    %v3934 = vld [vmem:[%s3929 + $0x20] sm:$0xff]
    %v3935 = vld [vmem:[%s3929 + $0x28] sm:$0xff]
    %v3936 = vld [vmem:[%s3929 + $0x30] sm:$0xff]
    %v3937 = vld [vmem:[%s3929 + $0x38] sm:$0xff]
    %v3938 = vlaneseq
    %v3939 = vshrl.u32 %v3938, 7
    %v3940 = vsub.s32 3, %v3939
    %v3941 = vrot.slane %v3475, %v3940
    %v3942 = vlaneseq
    %v3943 = vshrl.u32 %v3942, 7
    %v3944 = vsub.s32 3, %v3943
    %v3945 = vrot.slane %v3476, %v3944
    %v3946 = vlaneseq
    %v3947 = vshrl.u32 %v3946, 7
    %v3948 = vsub.s32 3, %v3947
    %v3949 = vrot.slane %v3477, %v3948
    %v3950 = vlaneseq
    %v3951 = vshrl.u32 %v3950, 7
    %v3952 = vsub.s32 3, %v3951
    %v3953 = vrot.slane %v3478, %v3952
    %v3954 = vmul.f32 %v3930, %v3941
    %v3955 = vmul.f32 %v3931, %v3945
    %v3956 = vmul.f32 %v3932, %v3949
    %v3957 = vmul.f32 %v3933, %v3953
    %v3958 = vmul.f32 %v3934, %v3941
    %v3959 = vmul.f32 %v3935, %v3945
    %v3960 = vmul.f32 %v3936, %v3949
    %v3961 = vmul.f32 %v3937, %v3953
    %v3962 = vadd.f32 %v3921, %v3954
    %v3963 = vadd.f32 %v3922, %v3955
    %v3964 = vadd.f32 %v3923, %v3956
    %v3965 = vadd.f32 %v3924, %v3957
    %v3966 = vadd.f32 %v3925, %v3958
    %v3967 = vadd.f32 %v3926, %v3959
    %v3968 = vadd.f32 %v3927, %v3960
    %v3969 = vadd.f32 %v3928, %v3961
    %s3970 = scalar_lea.vmem [#allocation5], 768
    %v3971 = vld [vmem:[%s3970] sm:$0xff]
    %v3972 = vld [vmem:[%s3970 + $0x8] sm:$0xff]
    %v3973 = vld [vmem:[%s3970 + $0x10] sm:$0xff]
    %v3974 = vld [vmem:[%s3970 + $0x18] sm:$0xff]
    %v3975 = vld [vmem:[%s3970 + $0x20] sm:$0xff]
    %v3976 = vld [vmem:[%s3970 + $0x28] sm:$0xff]
    %v3977 = vld [vmem:[%s3970 + $0x30] sm:$0xff]
    %v3978 = vld [vmem:[%s3970 + $0x38] sm:$0xff]
    %v3979 = vlaneseq
    %v3980 = vshrl.u32 %v3979, 7
    %v3981 = vsub.s32 4, %v3980
    %v3982 = vrot.slane %v3475, %v3981
    %v3983 = vlaneseq
    %v3984 = vshrl.u32 %v3983, 7
    %v3985 = vsub.s32 4, %v3984
    %v3986 = vrot.slane %v3476, %v3985
    %v3987 = vlaneseq
    %v3988 = vshrl.u32 %v3987, 7
    %v3989 = vsub.s32 4, %v3988
    %v3990 = vrot.slane %v3477, %v3989
    %v3991 = vlaneseq
    %v3992 = vshrl.u32 %v3991, 7
    %v3993 = vsub.s32 4, %v3992
    %v3994 = vrot.slane %v3478, %v3993
    %v3995 = vmul.f32 %v3971, %v3982
    %v3996 = vmul.f32 %v3972, %v3986
    %v3997 = vmul.f32 %v3973, %v3990
    %v3998 = vmul.f32 %v3974, %v3994
    %v3999 = vmul.f32 %v3975, %v3982
    %v4000 = vmul.f32 %v3976, %v3986
    %v4001 = vmul.f32 %v3977, %v3990
    %v4002 = vmul.f32 %v3978, %v3994
    %v4003 = vadd.f32 %v3962, %v3995
    %v4004 = vadd.f32 %v3963, %v3996
    %v4005 = vadd.f32 %v3964, %v3997
    %v4006 = vadd.f32 %v3965, %v3998
    %v4007 = vadd.f32 %v3966, %v3999
    %v4008 = vadd.f32 %v3967, %v4000
    %v4009 = vadd.f32 %v3968, %v4001
    %v4010 = vadd.f32 %v3969, %v4002
    %s4011 = scalar_lea.vmem [#allocation5], 832
    %v4012 = vld [vmem:[%s4011] sm:$0xff]
    %v4013 = vld [vmem:[%s4011 + $0x8] sm:$0xff]
    %v4014 = vld [vmem:[%s4011 + $0x10] sm:$0xff]
    %v4015 = vld [vmem:[%s4011 + $0x18] sm:$0xff]
    %v4016 = vld [vmem:[%s4011 + $0x20] sm:$0xff]
    %v4017 = vld [vmem:[%s4011 + $0x28] sm:$0xff]
    %v4018 = vld [vmem:[%s4011 + $0x30] sm:$0xff]
    %v4019 = vld [vmem:[%s4011 + $0x38] sm:$0xff]
    %v4020 = vlaneseq
    %v4021 = vshrl.u32 %v4020, 7
    %v4022 = vsub.s32 5, %v4021
    %v4023 = vrot.slane %v3475, %v4022
    %v4024 = vlaneseq
    %v4025 = vshrl.u32 %v4024, 7
    %v4026 = vsub.s32 5, %v4025
    %v4027 = vrot.slane %v3476, %v4026
    %v4028 = vlaneseq
    %v4029 = vshrl.u32 %v4028, 7
    %v4030 = vsub.s32 5, %v4029
    %v4031 = vrot.slane %v3477, %v4030
    %v4032 = vlaneseq
    %v4033 = vshrl.u32 %v4032, 7
    %v4034 = vsub.s32 5, %v4033
    %v4035 = vrot.slane %v3478, %v4034
    %v4036 = vmul.f32 %v4012, %v4023
    %v4037 = vmul.f32 %v4013, %v4027
    %v4038 = vmul.f32 %v4014, %v4031
    %v4039 = vmul.f32 %v4015, %v4035
    %v4040 = vmul.f32 %v4016, %v4023
    %v4041 = vmul.f32 %v4017, %v4027
    %v4042 = vmul.f32 %v4018, %v4031
    %v4043 = vmul.f32 %v4019, %v4035
    %v4044 = vadd.f32 %v4003, %v4036
    %v4045 = vadd.f32 %v4004, %v4037
    %v4046 = vadd.f32 %v4005, %v4038
    %v4047 = vadd.f32 %v4006, %v4039
    %v4048 = vadd.f32 %v4007, %v4040
    %v4049 = vadd.f32 %v4008, %v4041
    %v4050 = vadd.f32 %v4009, %v4042
    %v4051 = vadd.f32 %v4010, %v4043
    %s4052 = scalar_lea.vmem [#allocation5], 896
    %v4053 = vld [vmem:[%s4052] sm:$0xff]
    %v4054 = vld [vmem:[%s4052 + $0x8] sm:$0xff]
    %v4055 = vld [vmem:[%s4052 + $0x10] sm:$0xff]
    %v4056 = vld [vmem:[%s4052 + $0x18] sm:$0xff]
    %v4057 = vld [vmem:[%s4052 + $0x20] sm:$0xff]
    %v4058 = vld [vmem:[%s4052 + $0x28] sm:$0xff]
    %v4059 = vld [vmem:[%s4052 + $0x30] sm:$0xff]
    %v4060 = vld [vmem:[%s4052 + $0x38] sm:$0xff]
    %v4061 = vlaneseq
    %v4062 = vshrl.u32 %v4061, 7
    %v4063 = vsub.s32 6, %v4062
    %v4064 = vrot.slane %v3475, %v4063
    %v4065 = vlaneseq
    %v4066 = vshrl.u32 %v4065, 7
    %v4067 = vsub.s32 6, %v4066
    %v4068 = vrot.slane %v3476, %v4067
    %v4069 = vlaneseq
    %v4070 = vshrl.u32 %v4069, 7
    %v4071 = vsub.s32 6, %v4070
    %v4072 = vrot.slane %v3477, %v4071
    %v4073 = vlaneseq
    %v4074 = vshrl.u32 %v4073, 7
    %v4075 = vsub.s32 6, %v4074
    %v4076 = vrot.slane %v3478, %v4075
    %v4077 = vmul.f32 %v4053, %v4064
    %v4078 = vmul.f32 %v4054, %v4068
    %v4079 = vmul.f32 %v4055, %v4072
    %v4080 = vmul.f32 %v4056, %v4076
    %v4081 = vmul.f32 %v4057, %v4064
    %v4082 = vmul.f32 %v4058, %v4068
    %v4083 = vmul.f32 %v4059, %v4072
    %v4084 = vmul.f32 %v4060, %v4076
    %v4085 = vadd.f32 %v4044, %v4077
    %v4086 = vadd.f32 %v4045, %v4078
    %v4087 = vadd.f32 %v4046, %v4079
    %v4088 = vadd.f32 %v4047, %v4080
    %v4089 = vadd.f32 %v4048, %v4081
    %v4090 = vadd.f32 %v4049, %v4082
    %v4091 = vadd.f32 %v4050, %v4083
    %v4092 = vadd.f32 %v4051, %v4084
    %s4093 = scalar_lea.vmem [#allocation5], 960
    %v4094 = vld [vmem:[%s4093] sm:$0xff]
    %v4095 = vld [vmem:[%s4093 + $0x8] sm:$0xff]
    %v4096 = vld [vmem:[%s4093 + $0x10] sm:$0xff]
    %v4097 = vld [vmem:[%s4093 + $0x18] sm:$0xff]
    %v4098 = vld [vmem:[%s4093 + $0x20] sm:$0xff]
    %v4099 = vld [vmem:[%s4093 + $0x28] sm:$0xff]
    %v4100 = vld [vmem:[%s4093 + $0x30] sm:$0xff]
    %v4101 = vld [vmem:[%s4093 + $0x38] sm:$0xff]
    %v4102 = vlaneseq
    %v4103 = vshrl.u32 %v4102, 7
    %v4104 = vsub.s32 7, %v4103
    %v4105 = vrot.slane %v3475, %v4104
    %v4106 = vlaneseq
    %v4107 = vshrl.u32 %v4106, 7
    %v4108 = vsub.s32 7, %v4107
    %v4109 = vrot.slane %v3476, %v4108
    %v4110 = vlaneseq
    %v4111 = vshrl.u32 %v4110, 7
    %v4112 = vsub.s32 7, %v4111
    %v4113 = vrot.slane %v3477, %v4112
    %v4114 = vlaneseq
    %v4115 = vshrl.u32 %v4114, 7
    %v4116 = vsub.s32 7, %v4115
    %v4117 = vrot.slane %v3478, %v4116
    %v4118 = vmul.f32 %v4094, %v4105
    %v4119 = vmul.f32 %v4095, %v4109
    %v4120 = vmul.f32 %v4096, %v4113
    %v4121 = vmul.f32 %v4097, %v4117
    %v4122 = vmul.f32 %v4098, %v4105
    %v4123 = vmul.f32 %v4099, %v4109
    %v4124 = vmul.f32 %v4100, %v4113
    %v4125 = vmul.f32 %v4101, %v4117
    %v4126 = vadd.f32 %v4085, %v4118
    %v4127 = vadd.f32 %v4086, %v4119
    %v4128 = vadd.f32 %v4087, %v4120
    %v4129 = vadd.f32 %v4088, %v4121
    %v4130 = vadd.f32 %v4089, %v4122
    %v4131 = vadd.f32 %v4090, %v4123
    %v4132 = vadd.f32 %v4091, %v4124
    %v4133 = vadd.f32 %v4092, %v4125
    %s4134 = scalar_lea.vmem [#allocation5], 1024
    %v4135 = vld [vmem:[%s4134] sm:$0xff]
    %v4136 = vld [vmem:[%s4134 + $0x8] sm:$0xff]
    %v4137 = vld [vmem:[%s4134 + $0x10] sm:$0xff]
    %v4138 = vld [vmem:[%s4134 + $0x18] sm:$0xff]
    %v4139 = vld [vmem:[%s4134 + $0x20] sm:$0xff]
    %v4140 = vld [vmem:[%s4134 + $0x28] sm:$0xff]
    %v4141 = vld [vmem:[%s4134 + $0x30] sm:$0xff]
    %v4142 = vld [vmem:[%s4134 + $0x38] sm:$0xff]
    %v4143 = vlaneseq
    %v4144 = vshrl.u32 %v4143, 7
    %v4145 = vsub.s32 0, %v4144
    %v4146 = vrot.slane %v3479, %v4145
    %v4147 = vlaneseq
    %v4148 = vshrl.u32 %v4147, 7
    %v4149 = vsub.s32 0, %v4148
    %v4150 = vrot.slane %v3480, %v4149
    %v4151 = vlaneseq
    %v4152 = vshrl.u32 %v4151, 7
    %v4153 = vsub.s32 0, %v4152
    %v4154 = vrot.slane %v3481, %v4153
    %v4155 = vlaneseq
    %v4156 = vshrl.u32 %v4155, 7
    %v4157 = vsub.s32 0, %v4156
    %v4158 = vrot.slane %v3482, %v4157
    %v4159 = vmul.f32 %v4135, %v4146
    %v4160 = vmul.f32 %v4136, %v4150
    %v4161 = vmul.f32 %v4137, %v4154
    %v4162 = vmul.f32 %v4138, %v4158
    %v4163 = vmul.f32 %v4139, %v4146
    %v4164 = vmul.f32 %v4140, %v4150
    %v4165 = vmul.f32 %v4141, %v4154
    %v4166 = vmul.f32 %v4142, %v4158
    %v4167 = vadd.f32 %v4126, %v4159
    %v4168 = vadd.f32 %v4127, %v4160
    %v4169 = vadd.f32 %v4128, %v4161
    %v4170 = vadd.f32 %v4129, %v4162
    %v4171 = vadd.f32 %v4130, %v4163
    %v4172 = vadd.f32 %v4131, %v4164
    %v4173 = vadd.f32 %v4132, %v4165
    %v4174 = vadd.f32 %v4133, %v4166
    %s4175 = scalar_lea.vmem [#allocation5], 1088
    %v4176 = vld [vmem:[%s4175] sm:$0xff]
    %v4177 = vld [vmem:[%s4175 + $0x8] sm:$0xff]
    %v4178 = vld [vmem:[%s4175 + $0x10] sm:$0xff]
    %v4179 = vld [vmem:[%s4175 + $0x18] sm:$0xff]
    %v4180 = vld [vmem:[%s4175 + $0x20] sm:$0xff]
    %v4181 = vld [vmem:[%s4175 + $0x28] sm:$0xff]
    %v4182 = vld [vmem:[%s4175 + $0x30] sm:$0xff]
    %v4183 = vld [vmem:[%s4175 + $0x38] sm:$0xff]
    %v4184 = vlaneseq
    %v4185 = vshrl.u32 %v4184, 7
    %v4186 = vsub.s32 1, %v4185
    %v4187 = vrot.slane %v3479, %v4186
    %v4188 = vlaneseq
    %v4189 = vshrl.u32 %v4188, 7
    %v4190 = vsub.s32 1, %v4189
    %v4191 = vrot.slane %v3480, %v4190
    %v4192 = vlaneseq
    %v4193 = vshrl.u32 %v4192, 7
    %v4194 = vsub.s32 1, %v4193
    %v4195 = vrot.slane %v3481, %v4194
    %v4196 = vlaneseq
    %v4197 = vshrl.u32 %v4196, 7
    %v4198 = vsub.s32 1, %v4197
    %v4199 = vrot.slane %v3482, %v4198
    %v4200 = vmul.f32 %v4176, %v4187
    %v4201 = vmul.f32 %v4177, %v4191
    %v4202 = vmul.f32 %v4178, %v4195
    %v4203 = vmul.f32 %v4179, %v4199
    %v4204 = vmul.f32 %v4180, %v4187
    %v4205 = vmul.f32 %v4181, %v4191
    %v4206 = vmul.f32 %v4182, %v4195
    %v4207 = vmul.f32 %v4183, %v4199
    %v4208 = vadd.f32 %v4167, %v4200
    %v4209 = vadd.f32 %v4168, %v4201
    %v4210 = vadd.f32 %v4169, %v4202
    %v4211 = vadd.f32 %v4170, %v4203
    %v4212 = vadd.f32 %v4171, %v4204
    %v4213 = vadd.f32 %v4172, %v4205
    %v4214 = vadd.f32 %v4173, %v4206
    %v4215 = vadd.f32 %v4174, %v4207
    %s4216 = scalar_lea.vmem [#allocation5], 1152
    %v4217 = vld [vmem:[%s4216] sm:$0xff]
    %v4218 = vld [vmem:[%s4216 + $0x8] sm:$0xff]
    %v4219 = vld [vmem:[%s4216 + $0x10] sm:$0xff]
    %v4220 = vld [vmem:[%s4216 + $0x18] sm:$0xff]
    %v4221 = vld [vmem:[%s4216 + $0x20] sm:$0xff]
    %v4222 = vld [vmem:[%s4216 + $0x28] sm:$0xff]
    %v4223 = vld [vmem:[%s4216 + $0x30] sm:$0xff]
    %v4224 = vld [vmem:[%s4216 + $0x38] sm:$0xff]
    %v4225 = vlaneseq
    %v4226 = vshrl.u32 %v4225, 7
    %v4227 = vsub.s32 2, %v4226
    %v4228 = vrot.slane %v3479, %v4227
    %v4229 = vlaneseq
    %v4230 = vshrl.u32 %v4229, 7
    %v4231 = vsub.s32 2, %v4230
    %v4232 = vrot.slane %v3480, %v4231
    %v4233 = vlaneseq
    %v4234 = vshrl.u32 %v4233, 7
    %v4235 = vsub.s32 2, %v4234
    %v4236 = vrot.slane %v3481, %v4235
    %v4237 = vlaneseq
    %v4238 = vshrl.u32 %v4237, 7
    %v4239 = vsub.s32 2, %v4238
    %v4240 = vrot.slane %v3482, %v4239
    %v4241 = vmul.f32 %v4217, %v4228
    %v4242 = vmul.f32 %v4218, %v4232
    %v4243 = vmul.f32 %v4219, %v4236
    %v4244 = vmul.f32 %v4220, %v4240
    %v4245 = vmul.f32 %v4221, %v4228
    %v4246 = vmul.f32 %v4222, %v4232
    %v4247 = vmul.f32 %v4223, %v4236
    %v4248 = vmul.f32 %v4224, %v4240
    %v4249 = vadd.f32 %v4208, %v4241
    %v4250 = vadd.f32 %v4209, %v4242
    %v4251 = vadd.f32 %v4210, %v4243
    %v4252 = vadd.f32 %v4211, %v4244
    %v4253 = vadd.f32 %v4212, %v4245
    %v4254 = vadd.f32 %v4213, %v4246
    %v4255 = vadd.f32 %v4214, %v4247
    %v4256 = vadd.f32 %v4215, %v4248
    %s4257 = scalar_lea.vmem [#allocation5], 1216
    %v4258 = vld [vmem:[%s4257] sm:$0xff]
    %v4259 = vld [vmem:[%s4257 + $0x8] sm:$0xff]
    %v4260 = vld [vmem:[%s4257 + $0x10] sm:$0xff]
    %v4261 = vld [vmem:[%s4257 + $0x18] sm:$0xff]
    %v4262 = vld [vmem:[%s4257 + $0x20] sm:$0xff]
    %v4263 = vld [vmem:[%s4257 + $0x28] sm:$0xff]
    %v4264 = vld [vmem:[%s4257 + $0x30] sm:$0xff]
    %v4265 = vld [vmem:[%s4257 + $0x38] sm:$0xff]
    %v4266 = vlaneseq
    %v4267 = vshrl.u32 %v4266, 7
    %v4268 = vsub.s32 3, %v4267
    %v4269 = vrot.slane %v3479, %v4268
    %v4270 = vlaneseq
    %v4271 = vshrl.u32 %v4270, 7
    %v4272 = vsub.s32 3, %v4271
    %v4273 = vrot.slane %v3480, %v4272
    %v4274 = vlaneseq
    %v4275 = vshrl.u32 %v4274, 7
    %v4276 = vsub.s32 3, %v4275
    %v4277 = vrot.slane %v3481, %v4276
    %v4278 = vlaneseq
    %v4279 = vshrl.u32 %v4278, 7
    %v4280 = vsub.s32 3, %v4279
    %v4281 = vrot.slane %v3482, %v4280
    %v4282 = vmul.f32 %v4258, %v4269
    %v4283 = vmul.f32 %v4259, %v4273
    %v4284 = vmul.f32 %v4260, %v4277
    %v4285 = vmul.f32 %v4261, %v4281
    %v4286 = vmul.f32 %v4262, %v4269
    %v4287 = vmul.f32 %v4263, %v4273
    %v4288 = vmul.f32 %v4264, %v4277
    %v4289 = vmul.f32 %v4265, %v4281
    %v4290 = vadd.f32 %v4249, %v4282
    %v4291 = vadd.f32 %v4250, %v4283
    %v4292 = vadd.f32 %v4251, %v4284
    %v4293 = vadd.f32 %v4252, %v4285
    %v4294 = vadd.f32 %v4253, %v4286
    %v4295 = vadd.f32 %v4254, %v4287
    %v4296 = vadd.f32 %v4255, %v4288
    %v4297 = vadd.f32 %v4256, %v4289
    %s4298 = scalar_lea.vmem [#allocation5], 1280
    %v4299 = vld [vmem:[%s4298] sm:$0xff]
    %v4300 = vld [vmem:[%s4298 + $0x8] sm:$0xff]
    %v4301 = vld [vmem:[%s4298 + $0x10] sm:$0xff]
    %v4302 = vld [vmem:[%s4298 + $0x18] sm:$0xff]
    %v4303 = vld [vmem:[%s4298 + $0x20] sm:$0xff]
    %v4304 = vld [vmem:[%s4298 + $0x28] sm:$0xff]
    %v4305 = vld [vmem:[%s4298 + $0x30] sm:$0xff]
    %v4306 = vld [vmem:[%s4298 + $0x38] sm:$0xff]
    %v4307 = vlaneseq
    %v4308 = vshrl.u32 %v4307, 7
    %v4309 = vsub.s32 4, %v4308
    %v4310 = vrot.slane %v3479, %v4309
    %v4311 = vlaneseq
    %v4312 = vshrl.u32 %v4311, 7
    %v4313 = vsub.s32 4, %v4312
    %v4314 = vrot.slane %v3480, %v4313
    %v4315 = vlaneseq
    %v4316 = vshrl.u32 %v4315, 7
    %v4317 = vsub.s32 4, %v4316
    %v4318 = vrot.slane %v3481, %v4317
    %v4319 = vlaneseq
    %v4320 = vshrl.u32 %v4319, 7
    %v4321 = vsub.s32 4, %v4320
    %v4322 = vrot.slane %v3482, %v4321
    %v4323 = vmul.f32 %v4299, %v4310
    %v4324 = vmul.f32 %v4300, %v4314
    %v4325 = vmul.f32 %v4301, %v4318
    %v4326 = vmul.f32 %v4302, %v4322
    %v4327 = vmul.f32 %v4303, %v4310
    %v4328 = vmul.f32 %v4304, %v4314
    %v4329 = vmul.f32 %v4305, %v4318
    %v4330 = vmul.f32 %v4306, %v4322
    %v4331 = vadd.f32 %v4290, %v4323
    %v4332 = vadd.f32 %v4291, %v4324
    %v4333 = vadd.f32 %v4292, %v4325
    %v4334 = vadd.f32 %v4293, %v4326
    %v4335 = vadd.f32 %v4294, %v4327
    %v4336 = vadd.f32 %v4295, %v4328
    %v4337 = vadd.f32 %v4296, %v4329
    %v4338 = vadd.f32 %v4297, %v4330
    %s4339 = scalar_lea.vmem [#allocation5], 1344
    %v4340 = vld [vmem:[%s4339] sm:$0xff]
    %v4341 = vld [vmem:[%s4339 + $0x8] sm:$0xff]
    %v4342 = vld [vmem:[%s4339 + $0x10] sm:$0xff]
    %v4343 = vld [vmem:[%s4339 + $0x18] sm:$0xff]
    %v4344 = vld [vmem:[%s4339 + $0x20] sm:$0xff]
    %v4345 = vld [vmem:[%s4339 + $0x28] sm:$0xff]
    %v4346 = vld [vmem:[%s4339 + $0x30] sm:$0xff]
    %v4347 = vld [vmem:[%s4339 + $0x38] sm:$0xff]
    %v4348 = vlaneseq
    %v4349 = vshrl.u32 %v4348, 7
    %v4350 = vsub.s32 5, %v4349
    %v4351 = vrot.slane %v3479, %v4350
    %v4352 = vlaneseq
    %v4353 = vshrl.u32 %v4352, 7
    %v4354 = vsub.s32 5, %v4353
    %v4355 = vrot.slane %v3480, %v4354
    %v4356 = vlaneseq
    %v4357 = vshrl.u32 %v4356, 7
    %v4358 = vsub.s32 5, %v4357
    %v4359 = vrot.slane %v3481, %v4358
    %v4360 = vlaneseq
    %v4361 = vshrl.u32 %v4360, 7
    %v4362 = vsub.s32 5, %v4361
    %v4363 = vrot.slane %v3482, %v4362
    %v4364 = vmul.f32 %v4340, %v4351
    %v4365 = vmul.f32 %v4341, %v4355
    %v4366 = vmul.f32 %v4342, %v4359
    %v4367 = vmul.f32 %v4343, %v4363
    %v4368 = vmul.f32 %v4344, %v4351
    %v4369 = vmul.f32 %v4345, %v4355
    %v4370 = vmul.f32 %v4346, %v4359
    %v4371 = vmul.f32 %v4347, %v4363
    %v4372 = vadd.f32 %v4331, %v4364
    %v4373 = vadd.f32 %v4332, %v4365
    %v4374 = vadd.f32 %v4333, %v4366
    %v4375 = vadd.f32 %v4334, %v4367
    %v4376 = vadd.f32 %v4335, %v4368
    %v4377 = vadd.f32 %v4336, %v4369
    %v4378 = vadd.f32 %v4337, %v4370
    %v4379 = vadd.f32 %v4338, %v4371
    %s4380 = scalar_lea.vmem [#allocation5], 1408
    %v4381 = vld [vmem:[%s4380] sm:$0xff]
    %v4382 = vld [vmem:[%s4380 + $0x8] sm:$0xff]
    %v4383 = vld [vmem:[%s4380 + $0x10] sm:$0xff]
    %v4384 = vld [vmem:[%s4380 + $0x18] sm:$0xff]
    %v4385 = vld [vmem:[%s4380 + $0x20] sm:$0xff]
    %v4386 = vld [vmem:[%s4380 + $0x28] sm:$0xff]
    %v4387 = vld [vmem:[%s4380 + $0x30] sm:$0xff]
    %v4388 = vld [vmem:[%s4380 + $0x38] sm:$0xff]
    %v4389 = vlaneseq
    %v4390 = vshrl.u32 %v4389, 7
    %v4391 = vsub.s32 6, %v4390
    %v4392 = vrot.slane %v3479, %v4391
    %v4393 = vlaneseq
    %v4394 = vshrl.u32 %v4393, 7
    %v4395 = vsub.s32 6, %v4394
    %v4396 = vrot.slane %v3480, %v4395
    %v4397 = vlaneseq
    %v4398 = vshrl.u32 %v4397, 7
    %v4399 = vsub.s32 6, %v4398
    %v4400 = vrot.slane %v3481, %v4399
    %v4401 = vlaneseq
    %v4402 = vshrl.u32 %v4401, 7
    %v4403 = vsub.s32 6, %v4402
    %v4404 = vrot.slane %v3482, %v4403
    %v4405 = vmul.f32 %v4381, %v4392
    %v4406 = vmul.f32 %v4382, %v4396
    %v4407 = vmul.f32 %v4383, %v4400
    %v4408 = vmul.f32 %v4384, %v4404
    %v4409 = vmul.f32 %v4385, %v4392
    %v4410 = vmul.f32 %v4386, %v4396
    %v4411 = vmul.f32 %v4387, %v4400
    %v4412 = vmul.f32 %v4388, %v4404
    %v4413 = vadd.f32 %v4372, %v4405
    %v4414 = vadd.f32 %v4373, %v4406
    %v4415 = vadd.f32 %v4374, %v4407
    %v4416 = vadd.f32 %v4375, %v4408
    %v4417 = vadd.f32 %v4376, %v4409
    %v4418 = vadd.f32 %v4377, %v4410
    %v4419 = vadd.f32 %v4378, %v4411
    %v4420 = vadd.f32 %v4379, %v4412
    %s4421 = scalar_lea.vmem [#allocation5], 1472
    %v4422 = vld [vmem:[%s4421] sm:$0xff]
    %v4423 = vld [vmem:[%s4421 + $0x8] sm:$0xff]
    %v4424 = vld [vmem:[%s4421 + $0x10] sm:$0xff]
    %v4425 = vld [vmem:[%s4421 + $0x18] sm:$0xff]
    %v4426 = vld [vmem:[%s4421 + $0x20] sm:$0xff]
    %v4427 = vld [vmem:[%s4421 + $0x28] sm:$0xff]
    %v4428 = vld [vmem:[%s4421 + $0x30] sm:$0xff]
    %v4429 = vld [vmem:[%s4421 + $0x38] sm:$0xff]
    %v4430 = vlaneseq
    %v4431 = vshrl.u32 %v4430, 7
    %v4432 = vsub.s32 7, %v4431
    %v4433 = vrot.slane %v3479, %v4432
    %v4434 = vlaneseq
    %v4435 = vshrl.u32 %v4434, 7
    %v4436 = vsub.s32 7, %v4435
    %v4437 = vrot.slane %v3480, %v4436
    %v4438 = vlaneseq
    %v4439 = vshrl.u32 %v4438, 7
    %v4440 = vsub.s32 7, %v4439
    %v4441 = vrot.slane %v3481, %v4440
    %v4442 = vlaneseq
    %v4443 = vshrl.u32 %v4442, 7
    %v4444 = vsub.s32 7, %v4443
    %v4445 = vrot.slane %v3482, %v4444
    %v4446 = vmul.f32 %v4422, %v4433
    %v4447 = vmul.f32 %v4423, %v4437
    %v4448 = vmul.f32 %v4424, %v4441
    %v4449 = vmul.f32 %v4425, %v4445
    %v4450 = vmul.f32 %v4426, %v4433
    %v4451 = vmul.f32 %v4427, %v4437
    %v4452 = vmul.f32 %v4428, %v4441
    %v4453 = vmul.f32 %v4429, %v4445
    %v4454 = vadd.f32 %v4413, %v4446
    %v4455 = vadd.f32 %v4414, %v4447
    %v4456 = vadd.f32 %v4415, %v4448
    %v4457 = vadd.f32 %v4416, %v4449
    %v4458 = vadd.f32 %v4417, %v4450
    %v4459 = vadd.f32 %v4418, %v4451
    %v4460 = vadd.f32 %v4419, %v4452
    %v4461 = vadd.f32 %v4420, %v4453
    %s4462 = scalar_lea.vmem [#allocation5], 1536
    %v4463 = vld [vmem:[%s4462] sm:$0xff]
    %v4464 = vld [vmem:[%s4462 + $0x8] sm:$0xff]
    %v4465 = vld [vmem:[%s4462 + $0x10] sm:$0xff]
    %v4466 = vld [vmem:[%s4462 + $0x18] sm:$0xff]
    %v4467 = vld [vmem:[%s4462 + $0x20] sm:$0xff]
    %v4468 = vld [vmem:[%s4462 + $0x28] sm:$0xff]
    %v4469 = vld [vmem:[%s4462 + $0x30] sm:$0xff]
    %v4470 = vld [vmem:[%s4462 + $0x38] sm:$0xff]
    %v4471 = vlaneseq
    %v4472 = vshrl.u32 %v4471, 7
    %v4473 = vsub.s32 0, %v4472
    %v4474 = vrot.slane %v3483, %v4473
    %v4475 = vlaneseq
    %v4476 = vshrl.u32 %v4475, 7
    %v4477 = vsub.s32 0, %v4476
    %v4478 = vrot.slane %v3484, %v4477
    %v4479 = vlaneseq
    %v4480 = vshrl.u32 %v4479, 7
    %v4481 = vsub.s32 0, %v4480
    %v4482 = vrot.slane %v3485, %v4481
    %v4483 = vlaneseq
    %v4484 = vshrl.u32 %v4483, 7
    %v4485 = vsub.s32 0, %v4484
    %v4486 = vrot.slane %v3486, %v4485
    %v4487 = vmul.f32 %v4463, %v4474
    %v4488 = vmul.f32 %v4464, %v4478
    %v4489 = vmul.f32 %v4465, %v4482
    %v4490 = vmul.f32 %v4466, %v4486
    %v4491 = vmul.f32 %v4467, %v4474
    %v4492 = vmul.f32 %v4468, %v4478
    %v4493 = vmul.f32 %v4469, %v4482
    %v4494 = vmul.f32 %v4470, %v4486
    %v4495 = vadd.f32 %v4454, %v4487
    %v4496 = vadd.f32 %v4455, %v4488
    %v4497 = vadd.f32 %v4456, %v4489
    %v4498 = vadd.f32 %v4457, %v4490
    %v4499 = vadd.f32 %v4458, %v4491
    %v4500 = vadd.f32 %v4459, %v4492
    %v4501 = vadd.f32 %v4460, %v4493
    %v4502 = vadd.f32 %v4461, %v4494
    %s4503 = scalar_lea.vmem [#allocation5], 1600
    %v4504 = vld [vmem:[%s4503] sm:$0xff]
    %v4505 = vld [vmem:[%s4503 + $0x8] sm:$0xff]
    %v4506 = vld [vmem:[%s4503 + $0x10] sm:$0xff]
    %v4507 = vld [vmem:[%s4503 + $0x18] sm:$0xff]
    %v4508 = vld [vmem:[%s4503 + $0x20] sm:$0xff]
    %v4509 = vld [vmem:[%s4503 + $0x28] sm:$0xff]
    %v4510 = vld [vmem:[%s4503 + $0x30] sm:$0xff]
    %v4511 = vld [vmem:[%s4503 + $0x38] sm:$0xff]
    %v4512 = vlaneseq
    %v4513 = vshrl.u32 %v4512, 7
    %v4514 = vsub.s32 1, %v4513
    %v4515 = vrot.slane %v3483, %v4514
    %v4516 = vlaneseq
    %v4517 = vshrl.u32 %v4516, 7
    %v4518 = vsub.s32 1, %v4517
    %v4519 = vrot.slane %v3484, %v4518
    %v4520 = vlaneseq
    %v4521 = vshrl.u32 %v4520, 7
    %v4522 = vsub.s32 1, %v4521
    %v4523 = vrot.slane %v3485, %v4522
    %v4524 = vlaneseq
    %v4525 = vshrl.u32 %v4524, 7
    %v4526 = vsub.s32 1, %v4525
    %v4527 = vrot.slane %v3486, %v4526
    %v4528 = vmul.f32 %v4504, %v4515
    %v4529 = vmul.f32 %v4505, %v4519
    %v4530 = vmul.f32 %v4506, %v4523
    %v4531 = vmul.f32 %v4507, %v4527
    %v4532 = vmul.f32 %v4508, %v4515
    %v4533 = vmul.f32 %v4509, %v4519
    %v4534 = vmul.f32 %v4510, %v4523
    %v4535 = vmul.f32 %v4511, %v4527
    %v4536 = vadd.f32 %v4495, %v4528
    %v4537 = vadd.f32 %v4496, %v4529
    %v4538 = vadd.f32 %v4497, %v4530
    %v4539 = vadd.f32 %v4498, %v4531
    %v4540 = vadd.f32 %v4499, %v4532
    %v4541 = vadd.f32 %v4500, %v4533
    %v4542 = vadd.f32 %v4501, %v4534
    %v4543 = vadd.f32 %v4502, %v4535
    %s4544 = scalar_lea.vmem [#allocation5], 1664
    %v4545 = vld [vmem:[%s4544] sm:$0xff]
    %v4546 = vld [vmem:[%s4544 + $0x8] sm:$0xff]
    %v4547 = vld [vmem:[%s4544 + $0x10] sm:$0xff]
    %v4548 = vld [vmem:[%s4544 + $0x18] sm:$0xff]
    %v4549 = vld [vmem:[%s4544 + $0x20] sm:$0xff]
    %v4550 = vld [vmem:[%s4544 + $0x28] sm:$0xff]
    %v4551 = vld [vmem:[%s4544 + $0x30] sm:$0xff]
    %v4552 = vld [vmem:[%s4544 + $0x38] sm:$0xff]
    %v4553 = vlaneseq
    %v4554 = vshrl.u32 %v4553, 7
    %v4555 = vsub.s32 2, %v4554
    %v4556 = vrot.slane %v3483, %v4555
    %v4557 = vlaneseq
    %v4558 = vshrl.u32 %v4557, 7
    %v4559 = vsub.s32 2, %v4558
    %v4560 = vrot.slane %v3484, %v4559
    %v4561 = vlaneseq
    %v4562 = vshrl.u32 %v4561, 7
    %v4563 = vsub.s32 2, %v4562
    %v4564 = vrot.slane %v3485, %v4563
    %v4565 = vlaneseq
    %v4566 = vshrl.u32 %v4565, 7
    %v4567 = vsub.s32 2, %v4566
    %v4568 = vrot.slane %v3486, %v4567
    %v4569 = vmul.f32 %v4545, %v4556
    %v4570 = vmul.f32 %v4546, %v4560
    %v4571 = vmul.f32 %v4547, %v4564
    %v4572 = vmul.f32 %v4548, %v4568
    %v4573 = vmul.f32 %v4549, %v4556
    %v4574 = vmul.f32 %v4550, %v4560
    %v4575 = vmul.f32 %v4551, %v4564
    %v4576 = vmul.f32 %v4552, %v4568
    %v4577 = vadd.f32 %v4536, %v4569
    %v4578 = vadd.f32 %v4537, %v4570
    %v4579 = vadd.f32 %v4538, %v4571
    %v4580 = vadd.f32 %v4539, %v4572
    %v4581 = vadd.f32 %v4540, %v4573
    %v4582 = vadd.f32 %v4541, %v4574
    %v4583 = vadd.f32 %v4542, %v4575
    %v4584 = vadd.f32 %v4543, %v4576
    %s4585 = scalar_lea.vmem [#allocation5], 1728
    %v4586 = vld [vmem:[%s4585] sm:$0xff]
    %v4587 = vld [vmem:[%s4585 + $0x8] sm:$0xff]
    %v4588 = vld [vmem:[%s4585 + $0x10] sm:$0xff]
    %v4589 = vld [vmem:[%s4585 + $0x18] sm:$0xff]
    %v4590 = vld [vmem:[%s4585 + $0x20] sm:$0xff]
    %v4591 = vld [vmem:[%s4585 + $0x28] sm:$0xff]
    %v4592 = vld [vmem:[%s4585 + $0x30] sm:$0xff]
    %v4593 = vld [vmem:[%s4585 + $0x38] sm:$0xff]
    %v4594 = vlaneseq
    %v4595 = vshrl.u32 %v4594, 7
    %v4596 = vsub.s32 3, %v4595
    %v4597 = vrot.slane %v3483, %v4596
    %v4598 = vlaneseq
    %v4599 = vshrl.u32 %v4598, 7
    %v4600 = vsub.s32 3, %v4599
    %v4601 = vrot.slane %v3484, %v4600
    %v4602 = vlaneseq
    %v4603 = vshrl.u32 %v4602, 7
    %v4604 = vsub.s32 3, %v4603
    %v4605 = vrot.slane %v3485, %v4604
    %v4606 = vlaneseq
    %v4607 = vshrl.u32 %v4606, 7
    %v4608 = vsub.s32 3, %v4607
    %v4609 = vrot.slane %v3486, %v4608
    %v4610 = vmul.f32 %v4586, %v4597
    %v4611 = vmul.f32 %v4587, %v4601
    %v4612 = vmul.f32 %v4588, %v4605
    %v4613 = vmul.f32 %v4589, %v4609
    %v4614 = vmul.f32 %v4590, %v4597
    %v4615 = vmul.f32 %v4591, %v4601
    %v4616 = vmul.f32 %v4592, %v4605
    %v4617 = vmul.f32 %v4593, %v4609
    %v4618 = vadd.f32 %v4577, %v4610
    %v4619 = vadd.f32 %v4578, %v4611
    %v4620 = vadd.f32 %v4579, %v4612
    %v4621 = vadd.f32 %v4580, %v4613
    %v4622 = vadd.f32 %v4581, %v4614
    %v4623 = vadd.f32 %v4582, %v4615
    %v4624 = vadd.f32 %v4583, %v4616
    %v4625 = vadd.f32 %v4584, %v4617
    %s4626 = scalar_lea.vmem [#allocation5], 1792
    %v4627 = vld [vmem:[%s4626] sm:$0xff]
    %v4628 = vld [vmem:[%s4626 + $0x8] sm:$0xff]
    %v4629 = vld [vmem:[%s4626 + $0x10] sm:$0xff]
    %v4630 = vld [vmem:[%s4626 + $0x18] sm:$0xff]
    %v4631 = vld [vmem:[%s4626 + $0x20] sm:$0xff]
    %v4632 = vld [vmem:[%s4626 + $0x28] sm:$0xff]
    %v4633 = vld [vmem:[%s4626 + $0x30] sm:$0xff]
    %v4634 = vld [vmem:[%s4626 + $0x38] sm:$0xff]
    %v4635 = vlaneseq
    %v4636 = vshrl.u32 %v4635, 7
    %v4637 = vsub.s32 4, %v4636
    %v4638 = vrot.slane %v3483, %v4637
    %v4639 = vlaneseq
    %v4640 = vshrl.u32 %v4639, 7
    %v4641 = vsub.s32 4, %v4640
    %v4642 = vrot.slane %v3484, %v4641
    %v4643 = vlaneseq
    %v4644 = vshrl.u32 %v4643, 7
    %v4645 = vsub.s32 4, %v4644
    %v4646 = vrot.slane %v3485, %v4645
    %v4647 = vlaneseq
    %v4648 = vshrl.u32 %v4647, 7
    %v4649 = vsub.s32 4, %v4648
    %v4650 = vrot.slane %v3486, %v4649
    %v4651 = vmul.f32 %v4627, %v4638
    %v4652 = vmul.f32 %v4628, %v4642
    %v4653 = vmul.f32 %v4629, %v4646
    %v4654 = vmul.f32 %v4630, %v4650
    %v4655 = vmul.f32 %v4631, %v4638
    %v4656 = vmul.f32 %v4632, %v4642
    %v4657 = vmul.f32 %v4633, %v4646
    %v4658 = vmul.f32 %v4634, %v4650
    %v4659 = vadd.f32 %v4618, %v4651
    %v4660 = vadd.f32 %v4619, %v4652
    %v4661 = vadd.f32 %v4620, %v4653
    %v4662 = vadd.f32 %v4621, %v4654
    %v4663 = vadd.f32 %v4622, %v4655
    %v4664 = vadd.f32 %v4623, %v4656
    %v4665 = vadd.f32 %v4624, %v4657
    %v4666 = vadd.f32 %v4625, %v4658
    %s4667 = scalar_lea.vmem [#allocation5], 1856
    %v4668 = vld [vmem:[%s4667] sm:$0xff]
    %v4669 = vld [vmem:[%s4667 + $0x8] sm:$0xff]
    %v4670 = vld [vmem:[%s4667 + $0x10] sm:$0xff]
    %v4671 = vld [vmem:[%s4667 + $0x18] sm:$0xff]
    %v4672 = vld [vmem:[%s4667 + $0x20] sm:$0xff]
    %v4673 = vld [vmem:[%s4667 + $0x28] sm:$0xff]
    %v4674 = vld [vmem:[%s4667 + $0x30] sm:$0xff]
    %v4675 = vld [vmem:[%s4667 + $0x38] sm:$0xff]
    %v4676 = vlaneseq
    %v4677 = vshrl.u32 %v4676, 7
    %v4678 = vsub.s32 5, %v4677
    %v4679 = vrot.slane %v3483, %v4678
    %v4680 = vlaneseq
    %v4681 = vshrl.u32 %v4680, 7
    %v4682 = vsub.s32 5, %v4681
    %v4683 = vrot.slane %v3484, %v4682
    %v4684 = vlaneseq
    %v4685 = vshrl.u32 %v4684, 7
    %v4686 = vsub.s32 5, %v4685
    %v4687 = vrot.slane %v3485, %v4686
    %v4688 = vlaneseq
    %v4689 = vshrl.u32 %v4688, 7
    %v4690 = vsub.s32 5, %v4689
    %v4691 = vrot.slane %v3486, %v4690
    %v4692 = vmul.f32 %v4668, %v4679
    %v4693 = vmul.f32 %v4669, %v4683
    %v4694 = vmul.f32 %v4670, %v4687
    %v4695 = vmul.f32 %v4671, %v4691
    %v4696 = vmul.f32 %v4672, %v4679
    %v4697 = vmul.f32 %v4673, %v4683
    %v4698 = vmul.f32 %v4674, %v4687
    %v4699 = vmul.f32 %v4675, %v4691
    %v4700 = vadd.f32 %v4659, %v4692
    %v4701 = vadd.f32 %v4660, %v4693
    %v4702 = vadd.f32 %v4661, %v4694
    %v4703 = vadd.f32 %v4662, %v4695
    %v4704 = vadd.f32 %v4663, %v4696
    %v4705 = vadd.f32 %v4664, %v4697
    %v4706 = vadd.f32 %v4665, %v4698
    %v4707 = vadd.f32 %v4666, %v4699
    %s4708 = scalar_lea.vmem [#allocation5], 1920
    %v4709 = vld [vmem:[%s4708] sm:$0xff]
    %v4710 = vld [vmem:[%s4708 + $0x8] sm:$0xff]
    %v4711 = vld [vmem:[%s4708 + $0x10] sm:$0xff]
    %v4712 = vld [vmem:[%s4708 + $0x18] sm:$0xff]
    %v4713 = vld [vmem:[%s4708 + $0x20] sm:$0xff]
    %v4714 = vld [vmem:[%s4708 + $0x28] sm:$0xff]
    %v4715 = vld [vmem:[%s4708 + $0x30] sm:$0xff]
    %v4716 = vld [vmem:[%s4708 + $0x38] sm:$0xff]
    %v4717 = vlaneseq
    %v4718 = vshrl.u32 %v4717, 7
    %v4719 = vsub.s32 6, %v4718
    %v4720 = vrot.slane %v3483, %v4719
    %v4721 = vlaneseq
    %v4722 = vshrl.u32 %v4721, 7
    %v4723 = vsub.s32 6, %v4722
    %v4724 = vrot.slane %v3484, %v4723
    %v4725 = vlaneseq
    %v4726 = vshrl.u32 %v4725, 7
    %v4727 = vsub.s32 6, %v4726
    %v4728 = vrot.slane %v3485, %v4727
    %v4729 = vlaneseq
    %v4730 = vshrl.u32 %v4729, 7
    %v4731 = vsub.s32 6, %v4730
    %v4732 = vrot.slane %v3486, %v4731
    %v4733 = vmul.f32 %v4709, %v4720
    %v4734 = vmul.f32 %v4710, %v4724
    %v4735 = vmul.f32 %v4711, %v4728
    %v4736 = vmul.f32 %v4712, %v4732
    %v4737 = vmul.f32 %v4713, %v4720
    %v4738 = vmul.f32 %v4714, %v4724
    %v4739 = vmul.f32 %v4715, %v4728
    %v4740 = vmul.f32 %v4716, %v4732
    %v4741 = vadd.f32 %v4700, %v4733
    %v4742 = vadd.f32 %v4701, %v4734
    %v4743 = vadd.f32 %v4702, %v4735
    %v4744 = vadd.f32 %v4703, %v4736
    %v4745 = vadd.f32 %v4704, %v4737
    %v4746 = vadd.f32 %v4705, %v4738
    %v4747 = vadd.f32 %v4706, %v4739
    %v4748 = vadd.f32 %v4707, %v4740
    %s4749 = scalar_lea.vmem [#allocation5], 1984
    %v4750 = vld [vmem:[%s4749] sm:$0xff]
    %v4751 = vld [vmem:[%s4749 + $0x8] sm:$0xff]
    %v4752 = vld [vmem:[%s4749 + $0x10] sm:$0xff]
    %v4753 = vld [vmem:[%s4749 + $0x18] sm:$0xff]
    %v4754 = vld [vmem:[%s4749 + $0x20] sm:$0xff]
    %v4755 = vld [vmem:[%s4749 + $0x28] sm:$0xff]
    %v4756 = vld [vmem:[%s4749 + $0x30] sm:$0xff]
    %v4757 = vld [vmem:[%s4749 + $0x38] sm:$0xff]
    %v4758 = vlaneseq
    %v4759 = vshrl.u32 %v4758, 7
    %v4760 = vsub.s32 7, %v4759
    %v4761 = vrot.slane %v3483, %v4760
    %v4762 = vlaneseq
    %v4763 = vshrl.u32 %v4762, 7
    %v4764 = vsub.s32 7, %v4763
    %v4765 = vrot.slane %v3484, %v4764
    %v4766 = vlaneseq
    %v4767 = vshrl.u32 %v4766, 7
    %v4768 = vsub.s32 7, %v4767
    %v4769 = vrot.slane %v3485, %v4768
    %v4770 = vlaneseq
    %v4771 = vshrl.u32 %v4770, 7
    %v4772 = vsub.s32 7, %v4771
    %v4773 = vrot.slane %v3486, %v4772
    %v4774 = vmul.f32 %v4750, %v4761
    %v4775 = vmul.f32 %v4751, %v4765
    %v4776 = vmul.f32 %v4752, %v4769
    %v4777 = vmul.f32 %v4753, %v4773
    %v4778 = vmul.f32 %v4754, %v4761
    %v4779 = vmul.f32 %v4755, %v4765
    %v4780 = vmul.f32 %v4756, %v4769
    %v4781 = vmul.f32 %v4757, %v4773
    %v4782 = vadd.f32 %v4741, %v4774
    %v4783 = vadd.f32 %v4742, %v4775
    %v4784 = vadd.f32 %v4743, %v4776
    %v4785 = vadd.f32 %v4744, %v4777
    %v4786 = vadd.f32 %v4745, %v4778
    %v4787 = vadd.f32 %v4746, %v4779
    %v4788 = vadd.f32 %v4747, %v4780
    %v4789 = vadd.f32 %v4748, %v4781
    %v4790 = vmul.f32 %v78, %v78
    %v4791 = vmul.f32 %v79, %v79
    %v4792 = vmul.f32 %v80, %v80
    %v4793 = vmul.f32 %v81, %v81
    %v4794 = vmul.f32 %v82, %v82
    %v4795 = vmul.f32 %v83, %v83
    %v4796 = vmul.f32 %v84, %v84
    %v4797 = vmul.f32 %v85, %v85
    %v4798 = vadd.f32 %v4790, %v4794
    %v4799 = vrot.slane %v4798, 4
    %v4800 = vadd.f32 %v4798, %v4799
    %v4801 = vrot.slane %v4800, 2
    %v4802 = vadd.f32 %v4800, %v4801
    %v4803 = vrot.slane %v4802, 1
    %v4804 = vadd.f32 %v4802, %v4803
    %v4805 = vadd.f32 %v4791, %v4795
    %v4806 = vrot.slane %v4805, 4
    %v4807 = vadd.f32 %v4805, %v4806
    %v4808 = vrot.slane %v4807, 2
    %v4809 = vadd.f32 %v4807, %v4808
    %v4810 = vrot.slane %v4809, 1
    %v4811 = vadd.f32 %v4809, %v4810
    %v4812 = vadd.f32 %v4792, %v4796
    %v4813 = vrot.slane %v4812, 4
    %v4814 = vadd.f32 %v4812, %v4813
    %v4815 = vrot.slane %v4814, 2
    %v4816 = vadd.f32 %v4814, %v4815
    %v4817 = vrot.slane %v4816, 1
    %v4818 = vadd.f32 %v4816, %v4817
    %v4819 = vadd.f32 %v4793, %v4797
    %v4820 = vrot.slane %v4819, 4
    %v4821 = vadd.f32 %v4819, %v4820
    %v4822 = vrot.slane %v4821, 2
    %v4823 = vadd.f32 %v4821, %v4822
    %v4824 = vrot.slane %v4823, 1
    %v4825 = vadd.f32 %v4823, %v4824
    %v4826 = vmul.f32 %v78, %v4782
    %v4827 = vmul.f32 %v79, %v4783
    %v4828 = vmul.f32 %v80, %v4784
    %v4829 = vmul.f32 %v81, %v4785
    %v4830 = vmul.f32 %v82, %v4786
    %v4831 = vmul.f32 %v83, %v4787
    %v4832 = vmul.f32 %v84, %v4788
    %v4833 = vmul.f32 %v85, %v4789
    %v4834 = vadd.f32 %v4826, %v4830
    %v4835 = vrot.slane %v4834, 4
    %v4836 = vadd.f32 %v4834, %v4835
    %v4837 = vrot.slane %v4836, 2
    %v4838 = vadd.f32 %v4836, %v4837
    %v4839 = vrot.slane %v4838, 1
    %v4840 = vadd.f32 %v4838, %v4839
    %v4841 = vadd.f32 %v4827, %v4831
    %v4842 = vrot.slane %v4841, 4
    %v4843 = vadd.f32 %v4841, %v4842
    %v4844 = vrot.slane %v4843, 2
    %v4845 = vadd.f32 %v4843, %v4844
    %v4846 = vrot.slane %v4845, 1
    %v4847 = vadd.f32 %v4845, %v4846
    %v4848 = vadd.f32 %v4828, %v4832
    %v4849 = vrot.slane %v4848, 4
    %v4850 = vadd.f32 %v4848, %v4849
    %v4851 = vrot.slane %v4850, 2
    %v4852 = vadd.f32 %v4850, %v4851
    %v4853 = vrot.slane %v4852, 1
    %v4854 = vadd.f32 %v4852, %v4853
    %v4855 = vadd.f32 %v4829, %v4833
    %v4856 = vrot.slane %v4855, 4
    %v4857 = vadd.f32 %v4855, %v4856
    %v4858 = vrot.slane %v4857, 2
    %v4859 = vadd.f32 %v4857, %v4858
    %v4860 = vrot.slane %v4859, 1
    %v4861 = vadd.f32 %v4859, %v4860
    %v4862 = vmax.f32 %v4804, 1e-30
    %v4863 = vmax.f32 %v4811, 1e-30
    %v4864 = vmax.f32 %v4818, 1e-30
    %v4865 = vmax.f32 %v4825, 1e-30
    %v4866 = vrcp.pop %v4862
    %v4867 = vmul.f32 %v4840, %v4866
    %v4868 = vrcp.pop %v4863
    %v4869 = vmul.f32 %v4847, %v4868
    %v4870 = vrcp.pop %v4864
    %v4871 = vmul.f32 %v4854, %v4870
    %v4872 = vrcp.pop %v4865
    %v4873 = vmul.f32 %v4861, %v4872
    %vm4874 = vcmp.gt.f32.partialorder %v4867, 1e-20
    %vm4875 = vcmp.gt.f32.partialorder %v4869, 1e-20
    %vm4876 = vcmp.gt.f32.partialorder %v4871, 1e-20
    %vm4877 = vcmp.gt.f32.partialorder %v4873, 1e-20
    %v4878 = vmax.f32 %v4867, 1e-30
    %v4879 = vmax.f32 %v4869, 1e-30
    %v4880 = vmax.f32 %v4871, 1e-30
    %v4881 = vmax.f32 %v4873, 1e-30
    %v4882 = vrsqrt.pop %v4878
    %v4883 = vrsqrt.pop %v4879
    %v4884 = vrsqrt.pop %v4880
    %v4885 = vrsqrt.pop %v4881
    %v4886 = vmul.f32 %v4882, 0.9
    %v4887 = vmul.f32 %v4883, 0.9
    %v4888 = vmul.f32 %v4884, 0.9
    %v4889 = vmul.f32 %v4885, 0.9
    %v4890 = vsel %vm4874, %v4886, 0.0
    %v4891 = vsel %vm4875, %v4887, 0.0
    %v4892 = vsel %vm4876, %v4888, 0.0
    %v4893 = vsel %vm4877, %v4889, 0.0
    loop: start=0, step=1, limit=2000
    $region33: #{tpu_custom_call.1} parent=1 // loop_pre_header
      _
    $region34: #{tpu_custom_call.1} parent=1 // loop_header
      %s4895 = sphi 0, %s4899
      %p4896 = scmp.ge.s32.totalorder %s4895, 2000
      %v4900 = vphi 0.0, %v7308
      %v4901 = vphi 0.0, %v7309
      %v4902 = vphi 0.0, %v7310
      %v4903 = vphi 0.0, %v7311
      %v4904 = vphi 0.0, %v7312
      %v4905 = vphi 0.0, %v7313
      %v4906 = vphi 0.0, %v7314
      %v4907 = vphi 0.0, %v7315
      %v4908 = vphi 0.0, %v7324
      %v4909 = vphi 0.0, %v7325
      %v4910 = vphi 0.0, %v7326
      %v4911 = vphi 0.0, %v7327
      %v4912 = vphi 0.0, %v7328
      %v4913 = vphi 0.0, %v7329
      %v4914 = vphi 0.0, %v7330
      %v4915 = vphi 0.0, %v7331
      %v4916 = vphi 0.0, %v6004
      %v4917 = vphi 0.0, %v6005
      %v4918 = vphi 0.0, %v6006
      %v4919 = vphi 0.0, %v6007
      %v4920 = vphi 0.0, %v6008
      %v4921 = vphi 0.0, %v6009
      %v4922 = vphi 0.0, %v6010
      %v4923 = vphi 0.0, %v6011
      %v4924 = vphi 0.0, %v6012
      %v4925 = vphi 0.0, %v6013
      %v4926 = vphi 0.0, %v6014
      %v4927 = vphi 0.0, %v6015
      %v4928 = vphi 0.0, %v6016
      %v4929 = vphi 0.0, %v6017
      %v4930 = vphi 0.0, %v6018
      %v4931 = vphi 0.0, %v6019
    $region35: #{tpu_custom_call.1} parent=1 // loop_header_branch
      %4898 = sbr.rel (%p4896) target = $region39
    $region36: #{tpu_custom_call.1} parent=1 // loop_body
      %v4932 = vld [vmem:[#allocation2] sm:$0xff]
      %v4933 = vld [vmem:[#allocation2 + $0x8] sm:$0xff]
      %v4934 = vld [vmem:[#allocation2 + $0x10] sm:$0xff]
      %v4935 = vld [vmem:[#allocation2 + $0x18] sm:$0xff]
      %v4936 = vld [vmem:[#allocation2 + $0x20] sm:$0xff]
      %v4937 = vld [vmem:[#allocation2 + $0x28] sm:$0xff]
      %v4938 = vld [vmem:[#allocation2 + $0x30] sm:$0xff]
      %v4939 = vld [vmem:[#allocation2 + $0x38] sm:$0xff]
      %v4940 = vld [vmem:[#allocation2 + $0x40] sm:$0xff]
      %v4941 = vld [vmem:[#allocation2 + $0x48] sm:$0xff]
      %v4942 = vld [vmem:[#allocation2 + $0x50] sm:$0xff]
      %v4943 = vld [vmem:[#allocation2 + $0x58] sm:$0xff]
      %v4944 = vld [vmem:[#allocation2 + $0x60] sm:$0xff]
      %v4945 = vld [vmem:[#allocation2 + $0x68] sm:$0xff]
      %v4946 = vld [vmem:[#allocation2 + $0x70] sm:$0xff]
      %v4947 = vld [vmem:[#allocation2 + $0x78] sm:$0xff]
      %v4948 = vlaneseq
      %v4949 = vshrl.u32 %v4948, 7
      %v4950 = vsub.s32 0, %v4949
      %v4951 = vrot.slane %v4908, %v4950
      %v4952 = vlaneseq
      %v4953 = vshrl.u32 %v4952, 7
      %v4954 = vsub.s32 0, %v4953
      %v4955 = vrot.slane %v4909, %v4954
      %v4956 = vlaneseq
      %v4957 = vshrl.u32 %v4956, 7
      %v4958 = vsub.s32 0, %v4957
      %v4959 = vrot.slane %v4910, %v4958
      %v4960 = vlaneseq
      %v4961 = vshrl.u32 %v4960, 7
      %v4962 = vsub.s32 0, %v4961
      %v4963 = vrot.slane %v4911, %v4962
      %v4964 = vmul.f32 %v4932, %v4951
      %v4965 = vmul.f32 %v4933, %v4955
      %v4966 = vmul.f32 %v4934, %v4959
      %v4967 = vmul.f32 %v4935, %v4963
      %v4968 = vmul.f32 %v4936, %v4951
      %v4969 = vmul.f32 %v4937, %v4955
      %v4970 = vmul.f32 %v4938, %v4959
      %v4971 = vmul.f32 %v4939, %v4963
      %v4972 = vmul.f32 %v4940, %v4951
      %v4973 = vmul.f32 %v4941, %v4955
      %v4974 = vmul.f32 %v4942, %v4959
      %v4975 = vmul.f32 %v4943, %v4963
      %v4976 = vmul.f32 %v4944, %v4951
      %v4977 = vmul.f32 %v4945, %v4955
      %v4978 = vmul.f32 %v4946, %v4959
      %v4979 = vmul.f32 %v4947, %v4963
      %v4980 = vld [vmem:[%s2512] sm:$0xff]
      %v4981 = vld [vmem:[%s2512 + $0x8] sm:$0xff]
      %v4982 = vld [vmem:[%s2512 + $0x10] sm:$0xff]
      %v4983 = vld [vmem:[%s2512 + $0x18] sm:$0xff]
      %v4984 = vld [vmem:[%s2512 + $0x20] sm:$0xff]
      %v4985 = vld [vmem:[%s2512 + $0x28] sm:$0xff]
      %v4986 = vld [vmem:[%s2512 + $0x30] sm:$0xff]
      %v4987 = vld [vmem:[%s2512 + $0x38] sm:$0xff]
      %v4988 = vld [vmem:[%s2512 + $0x40] sm:$0xff]
      %v4989 = vld [vmem:[%s2512 + $0x48] sm:$0xff]
      %v4990 = vld [vmem:[%s2512 + $0x50] sm:$0xff]
      %v4991 = vld [vmem:[%s2512 + $0x58] sm:$0xff]
      %v4992 = vld [vmem:[%s2512 + $0x60] sm:$0xff]
      %v4993 = vld [vmem:[%s2512 + $0x68] sm:$0xff]
      %v4994 = vld [vmem:[%s2512 + $0x70] sm:$0xff]
      %v4995 = vld [vmem:[%s2512 + $0x78] sm:$0xff]
      %v4996 = vlaneseq
      %v4997 = vshrl.u32 %v4996, 7
      %v4998 = vsub.s32 1, %v4997
      %v4999 = vrot.slane %v4908, %v4998
      %v5000 = vlaneseq
      %v5001 = vshrl.u32 %v5000, 7
      %v5002 = vsub.s32 1, %v5001
      %v5003 = vrot.slane %v4909, %v5002
      %v5004 = vlaneseq
      %v5005 = vshrl.u32 %v5004, 7
      %v5006 = vsub.s32 1, %v5005
      %v5007 = vrot.slane %v4910, %v5006
      %v5008 = vlaneseq
      %v5009 = vshrl.u32 %v5008, 7
      %v5010 = vsub.s32 1, %v5009
      %v5011 = vrot.slane %v4911, %v5010
      %v5012 = vmul.f32 %v4980, %v4999
      %v5013 = vmul.f32 %v4981, %v5003
      %v5014 = vmul.f32 %v4982, %v5007
      %v5015 = vmul.f32 %v4983, %v5011
      %v5016 = vmul.f32 %v4984, %v4999
      %v5017 = vmul.f32 %v4985, %v5003
      %v5018 = vmul.f32 %v4986, %v5007
      %v5019 = vmul.f32 %v4987, %v5011
      %v5020 = vmul.f32 %v4988, %v4999
      %v5021 = vmul.f32 %v4989, %v5003
      %v5022 = vmul.f32 %v4990, %v5007
      %v5023 = vmul.f32 %v4991, %v5011
      %v5024 = vmul.f32 %v4992, %v4999
      %v5025 = vmul.f32 %v4993, %v5003
      %v5026 = vmul.f32 %v4994, %v5007
      %v5027 = vmul.f32 %v4995, %v5011
      %v5028 = vadd.f32 %v4964, %v5012
      %v5029 = vadd.f32 %v4965, %v5013
      %v5030 = vadd.f32 %v4966, %v5014
      %v5031 = vadd.f32 %v4967, %v5015
      %v5032 = vadd.f32 %v4968, %v5016
      %v5033 = vadd.f32 %v4969, %v5017
      %v5034 = vadd.f32 %v4970, %v5018
      %v5035 = vadd.f32 %v4971, %v5019
      %v5036 = vadd.f32 %v4972, %v5020
      %v5037 = vadd.f32 %v4973, %v5021
      %v5038 = vadd.f32 %v4974, %v5022
      %v5039 = vadd.f32 %v4975, %v5023
      %v5040 = vadd.f32 %v4976, %v5024
      %v5041 = vadd.f32 %v4977, %v5025
      %v5042 = vadd.f32 %v4978, %v5026
      %v5043 = vadd.f32 %v4979, %v5027
      %v5044 = vld [vmem:[%s2577] sm:$0xff]
      %v5045 = vld [vmem:[%s2577 + $0x8] sm:$0xff]
      %v5046 = vld [vmem:[%s2577 + $0x10] sm:$0xff]
      %v5047 = vld [vmem:[%s2577 + $0x18] sm:$0xff]
      %v5048 = vld [vmem:[%s2577 + $0x20] sm:$0xff]
      %v5049 = vld [vmem:[%s2577 + $0x28] sm:$0xff]
      %v5050 = vld [vmem:[%s2577 + $0x30] sm:$0xff]
      %v5051 = vld [vmem:[%s2577 + $0x38] sm:$0xff]
      %v5052 = vld [vmem:[%s2577 + $0x40] sm:$0xff]
      %v5053 = vld [vmem:[%s2577 + $0x48] sm:$0xff]
      %v5054 = vld [vmem:[%s2577 + $0x50] sm:$0xff]
      %v5055 = vld [vmem:[%s2577 + $0x58] sm:$0xff]
      %v5056 = vld [vmem:[%s2577 + $0x60] sm:$0xff]
      %v5057 = vld [vmem:[%s2577 + $0x68] sm:$0xff]
      %v5058 = vld [vmem:[%s2577 + $0x70] sm:$0xff]
      %v5059 = vld [vmem:[%s2577 + $0x78] sm:$0xff]
      %v5060 = vlaneseq
      %v5061 = vshrl.u32 %v5060, 7
      %v5062 = vsub.s32 2, %v5061
      %v5063 = vrot.slane %v4908, %v5062
      %v5064 = vlaneseq
      %v5065 = vshrl.u32 %v5064, 7
      %v5066 = vsub.s32 2, %v5065
      %v5067 = vrot.slane %v4909, %v5066
      %v5068 = vlaneseq
      %v5069 = vshrl.u32 %v5068, 7
      %v5070 = vsub.s32 2, %v5069
      %v5071 = vrot.slane %v4910, %v5070
      %v5072 = vlaneseq
      %v5073 = vshrl.u32 %v5072, 7
      %v5074 = vsub.s32 2, %v5073
      %v5075 = vrot.slane %v4911, %v5074
      %v5076 = vmul.f32 %v5044, %v5063
      %v5077 = vmul.f32 %v5045, %v5067
      %v5078 = vmul.f32 %v5046, %v5071
      %v5079 = vmul.f32 %v5047, %v5075
      %v5080 = vmul.f32 %v5048, %v5063
      %v5081 = vmul.f32 %v5049, %v5067
      %v5082 = vmul.f32 %v5050, %v5071
      %v5083 = vmul.f32 %v5051, %v5075
      %v5084 = vmul.f32 %v5052, %v5063
      %v5085 = vmul.f32 %v5053, %v5067
      %v5086 = vmul.f32 %v5054, %v5071
      %v5087 = vmul.f32 %v5055, %v5075
      %v5088 = vmul.f32 %v5056, %v5063
      %v5089 = vmul.f32 %v5057, %v5067
      %v5090 = vmul.f32 %v5058, %v5071
      %v5091 = vmul.f32 %v5059, %v5075
      %v5092 = vadd.f32 %v5028, %v5076
      %v5093 = vadd.f32 %v5029, %v5077
      %v5094 = vadd.f32 %v5030, %v5078
      %v5095 = vadd.f32 %v5031, %v5079
      %v5096 = vadd.f32 %v5032, %v5080
      %v5097 = vadd.f32 %v5033, %v5081
      %v5098 = vadd.f32 %v5034, %v5082
      %v5099 = vadd.f32 %v5035, %v5083
      %v5100 = vadd.f32 %v5036, %v5084
      %v5101 = vadd.f32 %v5037, %v5085
      %v5102 = vadd.f32 %v5038, %v5086
      %v5103 = vadd.f32 %v5039, %v5087
      %v5104 = vadd.f32 %v5040, %v5088
      %v5105 = vadd.f32 %v5041, %v5089
      %v5106 = vadd.f32 %v5042, %v5090
      %v5107 = vadd.f32 %v5043, %v5091
      %v5108 = vld [vmem:[%s2642] sm:$0xff]
      %v5109 = vld [vmem:[%s2642 + $0x8] sm:$0xff]
      %v5110 = vld [vmem:[%s2642 + $0x10] sm:$0xff]
      %v5111 = vld [vmem:[%s2642 + $0x18] sm:$0xff]
      %v5112 = vld [vmem:[%s2642 + $0x20] sm:$0xff]
      %v5113 = vld [vmem:[%s2642 + $0x28] sm:$0xff]
      %v5114 = vld [vmem:[%s2642 + $0x30] sm:$0xff]
      %v5115 = vld [vmem:[%s2642 + $0x38] sm:$0xff]
      %v5116 = vld [vmem:[%s2642 + $0x40] sm:$0xff]
      %v5117 = vld [vmem:[%s2642 + $0x48] sm:$0xff]
      %v5118 = vld [vmem:[%s2642 + $0x50] sm:$0xff]
      %v5119 = vld [vmem:[%s2642 + $0x58] sm:$0xff]
      %v5120 = vld [vmem:[%s2642 + $0x60] sm:$0xff]
      %v5121 = vld [vmem:[%s2642 + $0x68] sm:$0xff]
      %v5122 = vld [vmem:[%s2642 + $0x70] sm:$0xff]
      %v5123 = vld [vmem:[%s2642 + $0x78] sm:$0xff]
      %v5124 = vlaneseq
      %v5125 = vshrl.u32 %v5124, 7
      %v5126 = vsub.s32 3, %v5125
      %v5127 = vrot.slane %v4908, %v5126
      %v5128 = vlaneseq
      %v5129 = vshrl.u32 %v5128, 7
      %v5130 = vsub.s32 3, %v5129
      %v5131 = vrot.slane %v4909, %v5130
      %v5132 = vlaneseq
      %v5133 = vshrl.u32 %v5132, 7
      %v5134 = vsub.s32 3, %v5133
      %v5135 = vrot.slane %v4910, %v5134
      %v5136 = vlaneseq
      %v5137 = vshrl.u32 %v5136, 7
      %v5138 = vsub.s32 3, %v5137
      %v5139 = vrot.slane %v4911, %v5138
      %v5140 = vmul.f32 %v5108, %v5127
      %v5141 = vmul.f32 %v5109, %v5131
      %v5142 = vmul.f32 %v5110, %v5135
      %v5143 = vmul.f32 %v5111, %v5139
      %v5144 = vmul.f32 %v5112, %v5127
      %v5145 = vmul.f32 %v5113, %v5131
      %v5146 = vmul.f32 %v5114, %v5135
      %v5147 = vmul.f32 %v5115, %v5139
      %v5148 = vmul.f32 %v5116, %v5127
      %v5149 = vmul.f32 %v5117, %v5131
      %v5150 = vmul.f32 %v5118, %v5135
      %v5151 = vmul.f32 %v5119, %v5139
      %v5152 = vmul.f32 %v5120, %v5127
      %v5153 = vmul.f32 %v5121, %v5131
      %v5154 = vmul.f32 %v5122, %v5135
      %v5155 = vmul.f32 %v5123, %v5139
      %v5156 = vadd.f32 %v5092, %v5140
      %v5157 = vadd.f32 %v5093, %v5141
      %v5158 = vadd.f32 %v5094, %v5142
      %v5159 = vadd.f32 %v5095, %v5143
      %v5160 = vadd.f32 %v5096, %v5144
      %v5161 = vadd.f32 %v5097, %v5145
      %v5162 = vadd.f32 %v5098, %v5146
      %v5163 = vadd.f32 %v5099, %v5147
      %v5164 = vadd.f32 %v5100, %v5148
      %v5165 = vadd.f32 %v5101, %v5149
      %v5166 = vadd.f32 %v5102, %v5150
      %v5167 = vadd.f32 %v5103, %v5151
      %v5168 = vadd.f32 %v5104, %v5152
      %v5169 = vadd.f32 %v5105, %v5153
      %v5170 = vadd.f32 %v5106, %v5154
      %v5171 = vadd.f32 %v5107, %v5155
      %v5172 = vld [vmem:[%s2707] sm:$0xff]
      %v5173 = vld [vmem:[%s2707 + $0x8] sm:$0xff]
      %v5174 = vld [vmem:[%s2707 + $0x10] sm:$0xff]
      %v5175 = vld [vmem:[%s2707 + $0x18] sm:$0xff]
      %v5176 = vld [vmem:[%s2707 + $0x20] sm:$0xff]
      %v5177 = vld [vmem:[%s2707 + $0x28] sm:$0xff]
      %v5178 = vld [vmem:[%s2707 + $0x30] sm:$0xff]
      %v5179 = vld [vmem:[%s2707 + $0x38] sm:$0xff]
      %v5180 = vld [vmem:[%s2707 + $0x40] sm:$0xff]
      %v5181 = vld [vmem:[%s2707 + $0x48] sm:$0xff]
      %v5182 = vld [vmem:[%s2707 + $0x50] sm:$0xff]
      %v5183 = vld [vmem:[%s2707 + $0x58] sm:$0xff]
      %v5184 = vld [vmem:[%s2707 + $0x60] sm:$0xff]
      %v5185 = vld [vmem:[%s2707 + $0x68] sm:$0xff]
      %v5186 = vld [vmem:[%s2707 + $0x70] sm:$0xff]
      %v5187 = vld [vmem:[%s2707 + $0x78] sm:$0xff]
      %v5188 = vlaneseq
      %v5189 = vshrl.u32 %v5188, 7
      %v5190 = vsub.s32 4, %v5189
      %v5191 = vrot.slane %v4908, %v5190
      %v5192 = vlaneseq
      %v5193 = vshrl.u32 %v5192, 7
      %v5194 = vsub.s32 4, %v5193
      %v5195 = vrot.slane %v4909, %v5194
      %v5196 = vlaneseq
      %v5197 = vshrl.u32 %v5196, 7
      %v5198 = vsub.s32 4, %v5197
      %v5199 = vrot.slane %v4910, %v5198
      %v5200 = vlaneseq
      %v5201 = vshrl.u32 %v5200, 7
      %v5202 = vsub.s32 4, %v5201
      %v5203 = vrot.slane %v4911, %v5202
      %v5204 = vmul.f32 %v5172, %v5191
      %v5205 = vmul.f32 %v5173, %v5195
      %v5206 = vmul.f32 %v5174, %v5199
      %v5207 = vmul.f32 %v5175, %v5203
      %v5208 = vmul.f32 %v5176, %v5191
      %v5209 = vmul.f32 %v5177, %v5195
      %v5210 = vmul.f32 %v5178, %v5199
      %v5211 = vmul.f32 %v5179, %v5203
      %v5212 = vmul.f32 %v5180, %v5191
      %v5213 = vmul.f32 %v5181, %v5195
      %v5214 = vmul.f32 %v5182, %v5199
      %v5215 = vmul.f32 %v5183, %v5203
      %v5216 = vmul.f32 %v5184, %v5191
      %v5217 = vmul.f32 %v5185, %v5195
      %v5218 = vmul.f32 %v5186, %v5199
      %v5219 = vmul.f32 %v5187, %v5203
      %v5220 = vadd.f32 %v5156, %v5204
      %v5221 = vadd.f32 %v5157, %v5205
      %v5222 = vadd.f32 %v5158, %v5206
      %v5223 = vadd.f32 %v5159, %v5207
      %v5224 = vadd.f32 %v5160, %v5208
      %v5225 = vadd.f32 %v5161, %v5209
      %v5226 = vadd.f32 %v5162, %v5210
      %v5227 = vadd.f32 %v5163, %v5211
      %v5228 = vadd.f32 %v5164, %v5212
      %v5229 = vadd.f32 %v5165, %v5213
      %v5230 = vadd.f32 %v5166, %v5214
      %v5231 = vadd.f32 %v5167, %v5215
      %v5232 = vadd.f32 %v5168, %v5216
      %v5233 = vadd.f32 %v5169, %v5217
      %v5234 = vadd.f32 %v5170, %v5218
      %v5235 = vadd.f32 %v5171, %v5219
      %v5236 = vld [vmem:[%s2772] sm:$0xff]
      %v5237 = vld [vmem:[%s2772 + $0x8] sm:$0xff]
      %v5238 = vld [vmem:[%s2772 + $0x10] sm:$0xff]
      %v5239 = vld [vmem:[%s2772 + $0x18] sm:$0xff]
      %v5240 = vld [vmem:[%s2772 + $0x20] sm:$0xff]
      %v5241 = vld [vmem:[%s2772 + $0x28] sm:$0xff]
      %v5242 = vld [vmem:[%s2772 + $0x30] sm:$0xff]
      %v5243 = vld [vmem:[%s2772 + $0x38] sm:$0xff]
      %v5244 = vld [vmem:[%s2772 + $0x40] sm:$0xff]
      %v5245 = vld [vmem:[%s2772 + $0x48] sm:$0xff]
      %v5246 = vld [vmem:[%s2772 + $0x50] sm:$0xff]
      %v5247 = vld [vmem:[%s2772 + $0x58] sm:$0xff]
      %v5248 = vld [vmem:[%s2772 + $0x60] sm:$0xff]
      %v5249 = vld [vmem:[%s2772 + $0x68] sm:$0xff]
      %v5250 = vld [vmem:[%s2772 + $0x70] sm:$0xff]
      %v5251 = vld [vmem:[%s2772 + $0x78] sm:$0xff]
      %v5252 = vlaneseq
      %v5253 = vshrl.u32 %v5252, 7
      %v5254 = vsub.s32 5, %v5253
      %v5255 = vrot.slane %v4908, %v5254
      %v5256 = vlaneseq
      %v5257 = vshrl.u32 %v5256, 7
      %v5258 = vsub.s32 5, %v5257
      %v5259 = vrot.slane %v4909, %v5258
      %v5260 = vlaneseq
      %v5261 = vshrl.u32 %v5260, 7
      %v5262 = vsub.s32 5, %v5261
      %v5263 = vrot.slane %v4910, %v5262
      %v5264 = vlaneseq
      %v5265 = vshrl.u32 %v5264, 7
      %v5266 = vsub.s32 5, %v5265
      %v5267 = vrot.slane %v4911, %v5266
      %v5268 = vmul.f32 %v5236, %v5255
      %v5269 = vmul.f32 %v5237, %v5259
      %v5270 = vmul.f32 %v5238, %v5263
      %v5271 = vmul.f32 %v5239, %v5267
      %v5272 = vmul.f32 %v5240, %v5255
      %v5273 = vmul.f32 %v5241, %v5259
      %v5274 = vmul.f32 %v5242, %v5263
      %v5275 = vmul.f32 %v5243, %v5267
      %v5276 = vmul.f32 %v5244, %v5255
      %v5277 = vmul.f32 %v5245, %v5259
      %v5278 = vmul.f32 %v5246, %v5263
      %v5279 = vmul.f32 %v5247, %v5267
      %v5280 = vmul.f32 %v5248, %v5255
      %v5281 = vmul.f32 %v5249, %v5259
      %v5282 = vmul.f32 %v5250, %v5263
      %v5283 = vmul.f32 %v5251, %v5267
      %v5284 = vadd.f32 %v5220, %v5268
      %v5285 = vadd.f32 %v5221, %v5269
      %v5286 = vadd.f32 %v5222, %v5270
      %v5287 = vadd.f32 %v5223, %v5271
      %v5288 = vadd.f32 %v5224, %v5272
      %v5289 = vadd.f32 %v5225, %v5273
      %v5290 = vadd.f32 %v5226, %v5274
      %v5291 = vadd.f32 %v5227, %v5275
      %v5292 = vadd.f32 %v5228, %v5276
      %v5293 = vadd.f32 %v5229, %v5277
      %v5294 = vadd.f32 %v5230, %v5278
      %v5295 = vadd.f32 %v5231, %v5279
      %v5296 = vadd.f32 %v5232, %v5280
      %v5297 = vadd.f32 %v5233, %v5281
      %v5298 = vadd.f32 %v5234, %v5282
      %v5299 = vadd.f32 %v5235, %v5283
      %v5300 = vld [vmem:[%s2837] sm:$0xff]
      %v5301 = vld [vmem:[%s2837 + $0x8] sm:$0xff]
      %v5302 = vld [vmem:[%s2837 + $0x10] sm:$0xff]
      %v5303 = vld [vmem:[%s2837 + $0x18] sm:$0xff]
      %v5304 = vld [vmem:[%s2837 + $0x20] sm:$0xff]
      %v5305 = vld [vmem:[%s2837 + $0x28] sm:$0xff]
      %v5306 = vld [vmem:[%s2837 + $0x30] sm:$0xff]
      %v5307 = vld [vmem:[%s2837 + $0x38] sm:$0xff]
      %v5308 = vld [vmem:[%s2837 + $0x40] sm:$0xff]
      %v5309 = vld [vmem:[%s2837 + $0x48] sm:$0xff]
      %v5310 = vld [vmem:[%s2837 + $0x50] sm:$0xff]
      %v5311 = vld [vmem:[%s2837 + $0x58] sm:$0xff]
      %v5312 = vld [vmem:[%s2837 + $0x60] sm:$0xff]
      %v5313 = vld [vmem:[%s2837 + $0x68] sm:$0xff]
      %v5314 = vld [vmem:[%s2837 + $0x70] sm:$0xff]
      %v5315 = vld [vmem:[%s2837 + $0x78] sm:$0xff]
      %v5316 = vlaneseq
      %v5317 = vshrl.u32 %v5316, 7
      %v5318 = vsub.s32 6, %v5317
      %v5319 = vrot.slane %v4908, %v5318
      %v5320 = vlaneseq
      %v5321 = vshrl.u32 %v5320, 7
      %v5322 = vsub.s32 6, %v5321
      %v5323 = vrot.slane %v4909, %v5322
      %v5324 = vlaneseq
      %v5325 = vshrl.u32 %v5324, 7
      %v5326 = vsub.s32 6, %v5325
      %v5327 = vrot.slane %v4910, %v5326
      %v5328 = vlaneseq
      %v5329 = vshrl.u32 %v5328, 7
      %v5330 = vsub.s32 6, %v5329
      %v5331 = vrot.slane %v4911, %v5330
      %v5332 = vmul.f32 %v5300, %v5319
      %v5333 = vmul.f32 %v5301, %v5323
      %v5334 = vmul.f32 %v5302, %v5327
      %v5335 = vmul.f32 %v5303, %v5331
      %v5336 = vmul.f32 %v5304, %v5319
      %v5337 = vmul.f32 %v5305, %v5323
      %v5338 = vmul.f32 %v5306, %v5327
      %v5339 = vmul.f32 %v5307, %v5331
      %v5340 = vmul.f32 %v5308, %v5319
      %v5341 = vmul.f32 %v5309, %v5323
      %v5342 = vmul.f32 %v5310, %v5327
      %v5343 = vmul.f32 %v5311, %v5331
      %v5344 = vmul.f32 %v5312, %v5319
      %v5345 = vmul.f32 %v5313, %v5323
      %v5346 = vmul.f32 %v5314, %v5327
      %v5347 = vmul.f32 %v5315, %v5331
      %v5348 = vadd.f32 %v5284, %v5332
      %v5349 = vadd.f32 %v5285, %v5333
      %v5350 = vadd.f32 %v5286, %v5334
      %v5351 = vadd.f32 %v5287, %v5335
      %v5352 = vadd.f32 %v5288, %v5336
      %v5353 = vadd.f32 %v5289, %v5337
      %v5354 = vadd.f32 %v5290, %v5338
      %v5355 = vadd.f32 %v5291, %v5339
      %v5356 = vadd.f32 %v5292, %v5340
      %v5357 = vadd.f32 %v5293, %v5341
      %v5358 = vadd.f32 %v5294, %v5342
      %v5359 = vadd.f32 %v5295, %v5343
      %v5360 = vadd.f32 %v5296, %v5344
      %v5361 = vadd.f32 %v5297, %v5345
      %v5362 = vadd.f32 %v5298, %v5346
      %v5363 = vadd.f32 %v5299, %v5347
      %v5364 = vld [vmem:[%s2902] sm:$0xff]
      %v5365 = vld [vmem:[%s2902 + $0x8] sm:$0xff]
      %v5366 = vld [vmem:[%s2902 + $0x10] sm:$0xff]
      %v5367 = vld [vmem:[%s2902 + $0x18] sm:$0xff]
      %v5368 = vld [vmem:[%s2902 + $0x20] sm:$0xff]
      %v5369 = vld [vmem:[%s2902 + $0x28] sm:$0xff]
      %v5370 = vld [vmem:[%s2902 + $0x30] sm:$0xff]
      %v5371 = vld [vmem:[%s2902 + $0x38] sm:$0xff]
      %v5372 = vld [vmem:[%s2902 + $0x40] sm:$0xff]
      %v5373 = vld [vmem:[%s2902 + $0x48] sm:$0xff]
      %v5374 = vld [vmem:[%s2902 + $0x50] sm:$0xff]
      %v5375 = vld [vmem:[%s2902 + $0x58] sm:$0xff]
      %v5376 = vld [vmem:[%s2902 + $0x60] sm:$0xff]
      %v5377 = vld [vmem:[%s2902 + $0x68] sm:$0xff]
      %v5378 = vld [vmem:[%s2902 + $0x70] sm:$0xff]
      %v5379 = vld [vmem:[%s2902 + $0x78] sm:$0xff]
      %v5380 = vlaneseq
      %v5381 = vshrl.u32 %v5380, 7
      %v5382 = vsub.s32 7, %v5381
      %v5383 = vrot.slane %v4908, %v5382
      %v5384 = vlaneseq
      %v5385 = vshrl.u32 %v5384, 7
      %v5386 = vsub.s32 7, %v5385
      %v5387 = vrot.slane %v4909, %v5386
      %v5388 = vlaneseq
      %v5389 = vshrl.u32 %v5388, 7
      %v5390 = vsub.s32 7, %v5389
      %v5391 = vrot.slane %v4910, %v5390
      %v5392 = vlaneseq
      %v5393 = vshrl.u32 %v5392, 7
      %v5394 = vsub.s32 7, %v5393
      %v5395 = vrot.slane %v4911, %v5394
      %v5396 = vmul.f32 %v5364, %v5383
      %v5397 = vmul.f32 %v5365, %v5387
      %v5398 = vmul.f32 %v5366, %v5391
      %v5399 = vmul.f32 %v5367, %v5395
      %v5400 = vmul.f32 %v5368, %v5383
      %v5401 = vmul.f32 %v5369, %v5387
      %v5402 = vmul.f32 %v5370, %v5391
      %v5403 = vmul.f32 %v5371, %v5395
      %v5404 = vmul.f32 %v5372, %v5383
      %v5405 = vmul.f32 %v5373, %v5387
      %v5406 = vmul.f32 %v5374, %v5391
      %v5407 = vmul.f32 %v5375, %v5395
      %v5408 = vmul.f32 %v5376, %v5383
      %v5409 = vmul.f32 %v5377, %v5387
      %v5410 = vmul.f32 %v5378, %v5391
      %v5411 = vmul.f32 %v5379, %v5395
      %v5412 = vadd.f32 %v5348, %v5396
      %v5413 = vadd.f32 %v5349, %v5397
      %v5414 = vadd.f32 %v5350, %v5398
      %v5415 = vadd.f32 %v5351, %v5399
      %v5416 = vadd.f32 %v5352, %v5400
      %v5417 = vadd.f32 %v5353, %v5401
      %v5418 = vadd.f32 %v5354, %v5402
      %v5419 = vadd.f32 %v5355, %v5403
      %v5420 = vadd.f32 %v5356, %v5404
      %v5421 = vadd.f32 %v5357, %v5405
      %v5422 = vadd.f32 %v5358, %v5406
      %v5423 = vadd.f32 %v5359, %v5407
      %v5424 = vadd.f32 %v5360, %v5408
      %v5425 = vadd.f32 %v5361, %v5409
      %v5426 = vadd.f32 %v5362, %v5410
      %v5427 = vadd.f32 %v5363, %v5411
      %v5428 = vld [vmem:[%s2967] sm:$0xff]
      %v5429 = vld [vmem:[%s2967 + $0x8] sm:$0xff]
      %v5430 = vld [vmem:[%s2967 + $0x10] sm:$0xff]
      %v5431 = vld [vmem:[%s2967 + $0x18] sm:$0xff]
      %v5432 = vld [vmem:[%s2967 + $0x20] sm:$0xff]
      %v5433 = vld [vmem:[%s2967 + $0x28] sm:$0xff]
      %v5434 = vld [vmem:[%s2967 + $0x30] sm:$0xff]
      %v5435 = vld [vmem:[%s2967 + $0x38] sm:$0xff]
      %v5436 = vld [vmem:[%s2967 + $0x40] sm:$0xff]
      %v5437 = vld [vmem:[%s2967 + $0x48] sm:$0xff]
      %v5438 = vld [vmem:[%s2967 + $0x50] sm:$0xff]
      %v5439 = vld [vmem:[%s2967 + $0x58] sm:$0xff]
      %v5440 = vld [vmem:[%s2967 + $0x60] sm:$0xff]
      %v5441 = vld [vmem:[%s2967 + $0x68] sm:$0xff]
      %v5442 = vld [vmem:[%s2967 + $0x70] sm:$0xff]
      %v5443 = vld [vmem:[%s2967 + $0x78] sm:$0xff]
      %v5444 = vlaneseq
      %v5445 = vshrl.u32 %v5444, 7
      %v5446 = vsub.s32 0, %v5445
      %v5447 = vrot.slane %v4912, %v5446
      %v5448 = vlaneseq
      %v5449 = vshrl.u32 %v5448, 7
      %v5450 = vsub.s32 0, %v5449
      %v5451 = vrot.slane %v4913, %v5450
      %v5452 = vlaneseq
      %v5453 = vshrl.u32 %v5452, 7
      %v5454 = vsub.s32 0, %v5453
      %v5455 = vrot.slane %v4914, %v5454
      %v5456 = vlaneseq
      %v5457 = vshrl.u32 %v5456, 7
      %v5458 = vsub.s32 0, %v5457
      %v5459 = vrot.slane %v4915, %v5458
      %v5460 = vmul.f32 %v5428, %v5447
      %v5461 = vmul.f32 %v5429, %v5451
      %v5462 = vmul.f32 %v5430, %v5455
      %v5463 = vmul.f32 %v5431, %v5459
      %v5464 = vmul.f32 %v5432, %v5447
      %v5465 = vmul.f32 %v5433, %v5451
      %v5466 = vmul.f32 %v5434, %v5455
      %v5467 = vmul.f32 %v5435, %v5459
      %v5468 = vmul.f32 %v5436, %v5447
      %v5469 = vmul.f32 %v5437, %v5451
      %v5470 = vmul.f32 %v5438, %v5455
      %v5471 = vmul.f32 %v5439, %v5459
      %v5472 = vmul.f32 %v5440, %v5447
      %v5473 = vmul.f32 %v5441, %v5451
      %v5474 = vmul.f32 %v5442, %v5455
      %v5475 = vmul.f32 %v5443, %v5459
      %v5476 = vadd.f32 %v5412, %v5460
      %v5477 = vadd.f32 %v5413, %v5461
      %v5478 = vadd.f32 %v5414, %v5462
      %v5479 = vadd.f32 %v5415, %v5463
      %v5480 = vadd.f32 %v5416, %v5464
      %v5481 = vadd.f32 %v5417, %v5465
      %v5482 = vadd.f32 %v5418, %v5466
      %v5483 = vadd.f32 %v5419, %v5467
      %v5484 = vadd.f32 %v5420, %v5468
      %v5485 = vadd.f32 %v5421, %v5469
      %v5486 = vadd.f32 %v5422, %v5470
      %v5487 = vadd.f32 %v5423, %v5471
      %v5488 = vadd.f32 %v5424, %v5472
      %v5489 = vadd.f32 %v5425, %v5473
      %v5490 = vadd.f32 %v5426, %v5474
      %v5491 = vadd.f32 %v5427, %v5475
      %v5492 = vld [vmem:[%s3032] sm:$0xff]
      %v5493 = vld [vmem:[%s3032 + $0x8] sm:$0xff]
      %v5494 = vld [vmem:[%s3032 + $0x10] sm:$0xff]
      %v5495 = vld [vmem:[%s3032 + $0x18] sm:$0xff]
      %v5496 = vld [vmem:[%s3032 + $0x20] sm:$0xff]
      %v5497 = vld [vmem:[%s3032 + $0x28] sm:$0xff]
      %v5498 = vld [vmem:[%s3032 + $0x30] sm:$0xff]
      %v5499 = vld [vmem:[%s3032 + $0x38] sm:$0xff]
      %v5500 = vld [vmem:[%s3032 + $0x40] sm:$0xff]
      %v5501 = vld [vmem:[%s3032 + $0x48] sm:$0xff]
      %v5502 = vld [vmem:[%s3032 + $0x50] sm:$0xff]
      %v5503 = vld [vmem:[%s3032 + $0x58] sm:$0xff]
      %v5504 = vld [vmem:[%s3032 + $0x60] sm:$0xff]
      %v5505 = vld [vmem:[%s3032 + $0x68] sm:$0xff]
      %v5506 = vld [vmem:[%s3032 + $0x70] sm:$0xff]
      %v5507 = vld [vmem:[%s3032 + $0x78] sm:$0xff]
      %v5508 = vlaneseq
      %v5509 = vshrl.u32 %v5508, 7
      %v5510 = vsub.s32 1, %v5509
      %v5511 = vrot.slane %v4912, %v5510
      %v5512 = vlaneseq
      %v5513 = vshrl.u32 %v5512, 7
      %v5514 = vsub.s32 1, %v5513
      %v5515 = vrot.slane %v4913, %v5514
      %v5516 = vlaneseq
      %v5517 = vshrl.u32 %v5516, 7
      %v5518 = vsub.s32 1, %v5517
      %v5519 = vrot.slane %v4914, %v5518
      %v5520 = vlaneseq
      %v5521 = vshrl.u32 %v5520, 7
      %v5522 = vsub.s32 1, %v5521
      %v5523 = vrot.slane %v4915, %v5522
      %v5524 = vmul.f32 %v5492, %v5511
      %v5525 = vmul.f32 %v5493, %v5515
      %v5526 = vmul.f32 %v5494, %v5519
      %v5527 = vmul.f32 %v5495, %v5523
      %v5528 = vmul.f32 %v5496, %v5511
      %v5529 = vmul.f32 %v5497, %v5515
      %v5530 = vmul.f32 %v5498, %v5519
      %v5531 = vmul.f32 %v5499, %v5523
      %v5532 = vmul.f32 %v5500, %v5511
      %v5533 = vmul.f32 %v5501, %v5515
      %v5534 = vmul.f32 %v5502, %v5519
      %v5535 = vmul.f32 %v5503, %v5523
      %v5536 = vmul.f32 %v5504, %v5511
      %v5537 = vmul.f32 %v5505, %v5515
      %v5538 = vmul.f32 %v5506, %v5519
      %v5539 = vmul.f32 %v5507, %v5523
      %v5540 = vadd.f32 %v5476, %v5524
      %v5541 = vadd.f32 %v5477, %v5525
      %v5542 = vadd.f32 %v5478, %v5526
      %v5543 = vadd.f32 %v5479, %v5527
      %v5544 = vadd.f32 %v5480, %v5528
      %v5545 = vadd.f32 %v5481, %v5529
      %v5546 = vadd.f32 %v5482, %v5530
      %v5547 = vadd.f32 %v5483, %v5531
      %v5548 = vadd.f32 %v5484, %v5532
      %v5549 = vadd.f32 %v5485, %v5533
      %v5550 = vadd.f32 %v5486, %v5534
      %v5551 = vadd.f32 %v5487, %v5535
      %v5552 = vadd.f32 %v5488, %v5536
      %v5553 = vadd.f32 %v5489, %v5537
      %v5554 = vadd.f32 %v5490, %v5538
      %v5555 = vadd.f32 %v5491, %v5539
      %v5556 = vld [vmem:[%s3097] sm:$0xff]
      %v5557 = vld [vmem:[%s3097 + $0x8] sm:$0xff]
      %v5558 = vld [vmem:[%s3097 + $0x10] sm:$0xff]
      %v5559 = vld [vmem:[%s3097 + $0x18] sm:$0xff]
      %v5560 = vld [vmem:[%s3097 + $0x20] sm:$0xff]
      %v5561 = vld [vmem:[%s3097 + $0x28] sm:$0xff]
      %v5562 = vld [vmem:[%s3097 + $0x30] sm:$0xff]
      %v5563 = vld [vmem:[%s3097 + $0x38] sm:$0xff]
      %v5564 = vld [vmem:[%s3097 + $0x40] sm:$0xff]
      %v5565 = vld [vmem:[%s3097 + $0x48] sm:$0xff]
      %v5566 = vld [vmem:[%s3097 + $0x50] sm:$0xff]
      %v5567 = vld [vmem:[%s3097 + $0x58] sm:$0xff]
      %v5568 = vld [vmem:[%s3097 + $0x60] sm:$0xff]
      %v5569 = vld [vmem:[%s3097 + $0x68] sm:$0xff]
      %v5570 = vld [vmem:[%s3097 + $0x70] sm:$0xff]
      %v5571 = vld [vmem:[%s3097 + $0x78] sm:$0xff]
      %v5572 = vlaneseq
      %v5573 = vshrl.u32 %v5572, 7
      %v5574 = vsub.s32 2, %v5573
      %v5575 = vrot.slane %v4912, %v5574
      %v5576 = vlaneseq
      %v5577 = vshrl.u32 %v5576, 7
      %v5578 = vsub.s32 2, %v5577
      %v5579 = vrot.slane %v4913, %v5578
      %v5580 = vlaneseq
      %v5581 = vshrl.u32 %v5580, 7
      %v5582 = vsub.s32 2, %v5581
      %v5583 = vrot.slane %v4914, %v5582
      %v5584 = vlaneseq
      %v5585 = vshrl.u32 %v5584, 7
      %v5586 = vsub.s32 2, %v5585
      %v5587 = vrot.slane %v4915, %v5586
      %v5588 = vmul.f32 %v5556, %v5575
      %v5589 = vmul.f32 %v5557, %v5579
      %v5590 = vmul.f32 %v5558, %v5583
      %v5591 = vmul.f32 %v5559, %v5587
      %v5592 = vmul.f32 %v5560, %v5575
      %v5593 = vmul.f32 %v5561, %v5579
      %v5594 = vmul.f32 %v5562, %v5583
      %v5595 = vmul.f32 %v5563, %v5587
      %v5596 = vmul.f32 %v5564, %v5575
      %v5597 = vmul.f32 %v5565, %v5579
      %v5598 = vmul.f32 %v5566, %v5583
      %v5599 = vmul.f32 %v5567, %v5587
      %v5600 = vmul.f32 %v5568, %v5575
      %v5601 = vmul.f32 %v5569, %v5579
      %v5602 = vmul.f32 %v5570, %v5583
      %v5603 = vmul.f32 %v5571, %v5587
      %v5604 = vadd.f32 %v5540, %v5588
      %v5605 = vadd.f32 %v5541, %v5589
      %v5606 = vadd.f32 %v5542, %v5590
      %v5607 = vadd.f32 %v5543, %v5591
      %v5608 = vadd.f32 %v5544, %v5592
      %v5609 = vadd.f32 %v5545, %v5593
      %v5610 = vadd.f32 %v5546, %v5594
      %v5611 = vadd.f32 %v5547, %v5595
      %v5612 = vadd.f32 %v5548, %v5596
      %v5613 = vadd.f32 %v5549, %v5597
      %v5614 = vadd.f32 %v5550, %v5598
      %v5615 = vadd.f32 %v5551, %v5599
      %v5616 = vadd.f32 %v5552, %v5600
      %v5617 = vadd.f32 %v5553, %v5601
      %v5618 = vadd.f32 %v5554, %v5602
      %v5619 = vadd.f32 %v5555, %v5603
      %v5620 = vld [vmem:[%s3162] sm:$0xff]
      %v5621 = vld [vmem:[%s3162 + $0x8] sm:$0xff]
      %v5622 = vld [vmem:[%s3162 + $0x10] sm:$0xff]
      %v5623 = vld [vmem:[%s3162 + $0x18] sm:$0xff]
      %v5624 = vld [vmem:[%s3162 + $0x20] sm:$0xff]
      %v5625 = vld [vmem:[%s3162 + $0x28] sm:$0xff]
      %v5626 = vld [vmem:[%s3162 + $0x30] sm:$0xff]
      %v5627 = vld [vmem:[%s3162 + $0x38] sm:$0xff]
      %v5628 = vld [vmem:[%s3162 + $0x40] sm:$0xff]
      %v5629 = vld [vmem:[%s3162 + $0x48] sm:$0xff]
      %v5630 = vld [vmem:[%s3162 + $0x50] sm:$0xff]
      %v5631 = vld [vmem:[%s3162 + $0x58] sm:$0xff]
      %v5632 = vld [vmem:[%s3162 + $0x60] sm:$0xff]
      %v5633 = vld [vmem:[%s3162 + $0x68] sm:$0xff]
      %v5634 = vld [vmem:[%s3162 + $0x70] sm:$0xff]
      %v5635 = vld [vmem:[%s3162 + $0x78] sm:$0xff]
      %v5636 = vlaneseq
      %v5637 = vshrl.u32 %v5636, 7
      %v5638 = vsub.s32 3, %v5637
      %v5639 = vrot.slane %v4912, %v5638
      %v5640 = vlaneseq
      %v5641 = vshrl.u32 %v5640, 7
      %v5642 = vsub.s32 3, %v5641
      %v5643 = vrot.slane %v4913, %v5642
      %v5644 = vlaneseq
      %v5645 = vshrl.u32 %v5644, 7
      %v5646 = vsub.s32 3, %v5645
      %v5647 = vrot.slane %v4914, %v5646
      %v5648 = vlaneseq
      %v5649 = vshrl.u32 %v5648, 7
      %v5650 = vsub.s32 3, %v5649
      %v5651 = vrot.slane %v4915, %v5650
      %v5652 = vmul.f32 %v5620, %v5639
      %v5653 = vmul.f32 %v5621, %v5643
      %v5654 = vmul.f32 %v5622, %v5647
      %v5655 = vmul.f32 %v5623, %v5651
      %v5656 = vmul.f32 %v5624, %v5639
      %v5657 = vmul.f32 %v5625, %v5643
      %v5658 = vmul.f32 %v5626, %v5647
      %v5659 = vmul.f32 %v5627, %v5651
      %v5660 = vmul.f32 %v5628, %v5639
      %v5661 = vmul.f32 %v5629, %v5643
      %v5662 = vmul.f32 %v5630, %v5647
      %v5663 = vmul.f32 %v5631, %v5651
      %v5664 = vmul.f32 %v5632, %v5639
      %v5665 = vmul.f32 %v5633, %v5643
      %v5666 = vmul.f32 %v5634, %v5647
      %v5667 = vmul.f32 %v5635, %v5651
      %v5668 = vadd.f32 %v5604, %v5652
      %v5669 = vadd.f32 %v5605, %v5653
      %v5670 = vadd.f32 %v5606, %v5654
      %v5671 = vadd.f32 %v5607, %v5655
      %v5672 = vadd.f32 %v5608, %v5656
      %v5673 = vadd.f32 %v5609, %v5657
      %v5674 = vadd.f32 %v5610, %v5658
      %v5675 = vadd.f32 %v5611, %v5659
      %v5676 = vadd.f32 %v5612, %v5660
      %v5677 = vadd.f32 %v5613, %v5661
      %v5678 = vadd.f32 %v5614, %v5662
      %v5679 = vadd.f32 %v5615, %v5663
      %v5680 = vadd.f32 %v5616, %v5664
      %v5681 = vadd.f32 %v5617, %v5665
      %v5682 = vadd.f32 %v5618, %v5666
      %v5683 = vadd.f32 %v5619, %v5667
      %v5684 = vld [vmem:[%s3227] sm:$0xff]
      %v5685 = vld [vmem:[%s3227 + $0x8] sm:$0xff]
      %v5686 = vld [vmem:[%s3227 + $0x10] sm:$0xff]
      %v5687 = vld [vmem:[%s3227 + $0x18] sm:$0xff]
      %v5688 = vld [vmem:[%s3227 + $0x20] sm:$0xff]
      %v5689 = vld [vmem:[%s3227 + $0x28] sm:$0xff]
      %v5690 = vld [vmem:[%s3227 + $0x30] sm:$0xff]
      %v5691 = vld [vmem:[%s3227 + $0x38] sm:$0xff]
      %v5692 = vld [vmem:[%s3227 + $0x40] sm:$0xff]
      %v5693 = vld [vmem:[%s3227 + $0x48] sm:$0xff]
      %v5694 = vld [vmem:[%s3227 + $0x50] sm:$0xff]
      %v5695 = vld [vmem:[%s3227 + $0x58] sm:$0xff]
      %v5696 = vld [vmem:[%s3227 + $0x60] sm:$0xff]
      %v5697 = vld [vmem:[%s3227 + $0x68] sm:$0xff]
      %v5698 = vld [vmem:[%s3227 + $0x70] sm:$0xff]
      %v5699 = vld [vmem:[%s3227 + $0x78] sm:$0xff]
      %v5700 = vlaneseq
      %v5701 = vshrl.u32 %v5700, 7
      %v5702 = vsub.s32 4, %v5701
      %v5703 = vrot.slane %v4912, %v5702
      %v5704 = vlaneseq
      %v5705 = vshrl.u32 %v5704, 7
      %v5706 = vsub.s32 4, %v5705
      %v5707 = vrot.slane %v4913, %v5706
      %v5708 = vlaneseq
      %v5709 = vshrl.u32 %v5708, 7
      %v5710 = vsub.s32 4, %v5709
      %v5711 = vrot.slane %v4914, %v5710
      %v5712 = vlaneseq
      %v5713 = vshrl.u32 %v5712, 7
      %v5714 = vsub.s32 4, %v5713
      %v5715 = vrot.slane %v4915, %v5714
      %v5716 = vmul.f32 %v5684, %v5703
      %v5717 = vmul.f32 %v5685, %v5707
      %v5718 = vmul.f32 %v5686, %v5711
      %v5719 = vmul.f32 %v5687, %v5715
      %v5720 = vmul.f32 %v5688, %v5703
      %v5721 = vmul.f32 %v5689, %v5707
      %v5722 = vmul.f32 %v5690, %v5711
      %v5723 = vmul.f32 %v5691, %v5715
      %v5724 = vmul.f32 %v5692, %v5703
      %v5725 = vmul.f32 %v5693, %v5707
      %v5726 = vmul.f32 %v5694, %v5711
      %v5727 = vmul.f32 %v5695, %v5715
      %v5728 = vmul.f32 %v5696, %v5703
      %v5729 = vmul.f32 %v5697, %v5707
      %v5730 = vmul.f32 %v5698, %v5711
      %v5731 = vmul.f32 %v5699, %v5715
      %v5732 = vadd.f32 %v5668, %v5716
      %v5733 = vadd.f32 %v5669, %v5717
      %v5734 = vadd.f32 %v5670, %v5718
      %v5735 = vadd.f32 %v5671, %v5719
      %v5736 = vadd.f32 %v5672, %v5720
      %v5737 = vadd.f32 %v5673, %v5721
      %v5738 = vadd.f32 %v5674, %v5722
      %v5739 = vadd.f32 %v5675, %v5723
      %v5740 = vadd.f32 %v5676, %v5724
      %v5741 = vadd.f32 %v5677, %v5725
      %v5742 = vadd.f32 %v5678, %v5726
      %v5743 = vadd.f32 %v5679, %v5727
      %v5744 = vadd.f32 %v5680, %v5728
      %v5745 = vadd.f32 %v5681, %v5729
      %v5746 = vadd.f32 %v5682, %v5730
      %v5747 = vadd.f32 %v5683, %v5731
      %v5748 = vld [vmem:[%s3292] sm:$0xff]
      %v5749 = vld [vmem:[%s3292 + $0x8] sm:$0xff]
      %v5750 = vld [vmem:[%s3292 + $0x10] sm:$0xff]
      %v5751 = vld [vmem:[%s3292 + $0x18] sm:$0xff]
      %v5752 = vld [vmem:[%s3292 + $0x20] sm:$0xff]
      %v5753 = vld [vmem:[%s3292 + $0x28] sm:$0xff]
      %v5754 = vld [vmem:[%s3292 + $0x30] sm:$0xff]
      %v5755 = vld [vmem:[%s3292 + $0x38] sm:$0xff]
      %v5756 = vld [vmem:[%s3292 + $0x40] sm:$0xff]
      %v5757 = vld [vmem:[%s3292 + $0x48] sm:$0xff]
      %v5758 = vld [vmem:[%s3292 + $0x50] sm:$0xff]
      %v5759 = vld [vmem:[%s3292 + $0x58] sm:$0xff]
      %v5760 = vld [vmem:[%s3292 + $0x60] sm:$0xff]
      %v5761 = vld [vmem:[%s3292 + $0x68] sm:$0xff]
      %v5762 = vld [vmem:[%s3292 + $0x70] sm:$0xff]
      %v5763 = vld [vmem:[%s3292 + $0x78] sm:$0xff]
      %v5764 = vlaneseq
      %v5765 = vshrl.u32 %v5764, 7
      %v5766 = vsub.s32 5, %v5765
      %v5767 = vrot.slane %v4912, %v5766
      %v5768 = vlaneseq
      %v5769 = vshrl.u32 %v5768, 7
      %v5770 = vsub.s32 5, %v5769
      %v5771 = vrot.slane %v4913, %v5770
      %v5772 = vlaneseq
      %v5773 = vshrl.u32 %v5772, 7
      %v5774 = vsub.s32 5, %v5773
      %v5775 = vrot.slane %v4914, %v5774
      %v5776 = vlaneseq
      %v5777 = vshrl.u32 %v5776, 7
      %v5778 = vsub.s32 5, %v5777
      %v5779 = vrot.slane %v4915, %v5778
      %v5780 = vmul.f32 %v5748, %v5767
      %v5781 = vmul.f32 %v5749, %v5771
      %v5782 = vmul.f32 %v5750, %v5775
      %v5783 = vmul.f32 %v5751, %v5779
      %v5784 = vmul.f32 %v5752, %v5767
      %v5785 = vmul.f32 %v5753, %v5771
      %v5786 = vmul.f32 %v5754, %v5775
      %v5787 = vmul.f32 %v5755, %v5779
      %v5788 = vmul.f32 %v5756, %v5767
      %v5789 = vmul.f32 %v5757, %v5771
      %v5790 = vmul.f32 %v5758, %v5775
      %v5791 = vmul.f32 %v5759, %v5779
      %v5792 = vmul.f32 %v5760, %v5767
      %v5793 = vmul.f32 %v5761, %v5771
      %v5794 = vmul.f32 %v5762, %v5775
      %v5795 = vmul.f32 %v5763, %v5779
      %v5796 = vadd.f32 %v5732, %v5780
      %v5797 = vadd.f32 %v5733, %v5781
      %v5798 = vadd.f32 %v5734, %v5782
      %v5799 = vadd.f32 %v5735, %v5783
      %v5800 = vadd.f32 %v5736, %v5784
      %v5801 = vadd.f32 %v5737, %v5785
      %v5802 = vadd.f32 %v5738, %v5786
      %v5803 = vadd.f32 %v5739, %v5787
      %v5804 = vadd.f32 %v5740, %v5788
      %v5805 = vadd.f32 %v5741, %v5789
      %v5806 = vadd.f32 %v5742, %v5790
      %v5807 = vadd.f32 %v5743, %v5791
      %v5808 = vadd.f32 %v5744, %v5792
      %v5809 = vadd.f32 %v5745, %v5793
      %v5810 = vadd.f32 %v5746, %v5794
      %v5811 = vadd.f32 %v5747, %v5795
      %v5812 = vld [vmem:[%s3357] sm:$0xff]
      %v5813 = vld [vmem:[%s3357 + $0x8] sm:$0xff]
      %v5814 = vld [vmem:[%s3357 + $0x10] sm:$0xff]
      %v5815 = vld [vmem:[%s3357 + $0x18] sm:$0xff]
      %v5816 = vld [vmem:[%s3357 + $0x20] sm:$0xff]
      %v5817 = vld [vmem:[%s3357 + $0x28] sm:$0xff]
      %v5818 = vld [vmem:[%s3357 + $0x30] sm:$0xff]
      %v5819 = vld [vmem:[%s3357 + $0x38] sm:$0xff]
      %v5820 = vld [vmem:[%s3357 + $0x40] sm:$0xff]
      %v5821 = vld [vmem:[%s3357 + $0x48] sm:$0xff]
      %v5822 = vld [vmem:[%s3357 + $0x50] sm:$0xff]
      %v5823 = vld [vmem:[%s3357 + $0x58] sm:$0xff]
      %v5824 = vld [vmem:[%s3357 + $0x60] sm:$0xff]
      %v5825 = vld [vmem:[%s3357 + $0x68] sm:$0xff]
      %v5826 = vld [vmem:[%s3357 + $0x70] sm:$0xff]
      %v5827 = vld [vmem:[%s3357 + $0x78] sm:$0xff]
      %v5828 = vlaneseq
      %v5829 = vshrl.u32 %v5828, 7
      %v5830 = vsub.s32 6, %v5829
      %v5831 = vrot.slane %v4912, %v5830
      %v5832 = vlaneseq
      %v5833 = vshrl.u32 %v5832, 7
      %v5834 = vsub.s32 6, %v5833
      %v5835 = vrot.slane %v4913, %v5834
      %v5836 = vlaneseq
      %v5837 = vshrl.u32 %v5836, 7
      %v5838 = vsub.s32 6, %v5837
      %v5839 = vrot.slane %v4914, %v5838
      %v5840 = vlaneseq
      %v5841 = vshrl.u32 %v5840, 7
      %v5842 = vsub.s32 6, %v5841
      %v5843 = vrot.slane %v4915, %v5842
      %v5844 = vmul.f32 %v5812, %v5831
      %v5845 = vmul.f32 %v5813, %v5835
      %v5846 = vmul.f32 %v5814, %v5839
      %v5847 = vmul.f32 %v5815, %v5843
      %v5848 = vmul.f32 %v5816, %v5831
      %v5849 = vmul.f32 %v5817, %v5835
      %v5850 = vmul.f32 %v5818, %v5839
      %v5851 = vmul.f32 %v5819, %v5843
      %v5852 = vmul.f32 %v5820, %v5831
      %v5853 = vmul.f32 %v5821, %v5835
      %v5854 = vmul.f32 %v5822, %v5839
      %v5855 = vmul.f32 %v5823, %v5843
      %v5856 = vmul.f32 %v5824, %v5831
      %v5857 = vmul.f32 %v5825, %v5835
      %v5858 = vmul.f32 %v5826, %v5839
      %v5859 = vmul.f32 %v5827, %v5843
      %v5860 = vadd.f32 %v5796, %v5844
      %v5861 = vadd.f32 %v5797, %v5845
      %v5862 = vadd.f32 %v5798, %v5846
      %v5863 = vadd.f32 %v5799, %v5847
      %v5864 = vadd.f32 %v5800, %v5848
      %v5865 = vadd.f32 %v5801, %v5849
      %v5866 = vadd.f32 %v5802, %v5850
      %v5867 = vadd.f32 %v5803, %v5851
      %v5868 = vadd.f32 %v5804, %v5852
      %v5869 = vadd.f32 %v5805, %v5853
      %v5870 = vadd.f32 %v5806, %v5854
      %v5871 = vadd.f32 %v5807, %v5855
      %v5872 = vadd.f32 %v5808, %v5856
      %v5873 = vadd.f32 %v5809, %v5857
      %v5874 = vadd.f32 %v5810, %v5858
      %v5875 = vadd.f32 %v5811, %v5859
      %v5876 = vld [vmem:[%s3422] sm:$0xff]
      %v5877 = vld [vmem:[%s3422 + $0x8] sm:$0xff]
      %v5878 = vld [vmem:[%s3422 + $0x10] sm:$0xff]
      %v5879 = vld [vmem:[%s3422 + $0x18] sm:$0xff]
      %v5880 = vld [vmem:[%s3422 + $0x20] sm:$0xff]
      %v5881 = vld [vmem:[%s3422 + $0x28] sm:$0xff]
      %v5882 = vld [vmem:[%s3422 + $0x30] sm:$0xff]
      %v5883 = vld [vmem:[%s3422 + $0x38] sm:$0xff]
      %v5884 = vld [vmem:[%s3422 + $0x40] sm:$0xff]
      %v5885 = vld [vmem:[%s3422 + $0x48] sm:$0xff]
      %v5886 = vld [vmem:[%s3422 + $0x50] sm:$0xff]
      %v5887 = vld [vmem:[%s3422 + $0x58] sm:$0xff]
      %v5888 = vld [vmem:[%s3422 + $0x60] sm:$0xff]
      %v5889 = vld [vmem:[%s3422 + $0x68] sm:$0xff]
      %v5890 = vld [vmem:[%s3422 + $0x70] sm:$0xff]
      %v5891 = vld [vmem:[%s3422 + $0x78] sm:$0xff]
      %v5892 = vlaneseq
      %v5893 = vshrl.u32 %v5892, 7
      %v5894 = vsub.s32 7, %v5893
      %v5895 = vrot.slane %v4912, %v5894
      %v5896 = vlaneseq
      %v5897 = vshrl.u32 %v5896, 7
      %v5898 = vsub.s32 7, %v5897
      %v5899 = vrot.slane %v4913, %v5898
      %v5900 = vlaneseq
      %v5901 = vshrl.u32 %v5900, 7
      %v5902 = vsub.s32 7, %v5901
      %v5903 = vrot.slane %v4914, %v5902
      %v5904 = vlaneseq
      %v5905 = vshrl.u32 %v5904, 7
      %v5906 = vsub.s32 7, %v5905
      %v5907 = vrot.slane %v4915, %v5906
      %v5908 = vmul.f32 %v5876, %v5895
      %v5909 = vmul.f32 %v5877, %v5899
      %v5910 = vmul.f32 %v5878, %v5903
      %v5911 = vmul.f32 %v5879, %v5907
      %v5912 = vmul.f32 %v5880, %v5895
      %v5913 = vmul.f32 %v5881, %v5899
      %v5914 = vmul.f32 %v5882, %v5903
      %v5915 = vmul.f32 %v5883, %v5907
      %v5916 = vmul.f32 %v5884, %v5895
      %v5917 = vmul.f32 %v5885, %v5899
      %v5918 = vmul.f32 %v5886, %v5903
      %v5919 = vmul.f32 %v5887, %v5907
      %v5920 = vmul.f32 %v5888, %v5895
      %v5921 = vmul.f32 %v5889, %v5899
      %v5922 = vmul.f32 %v5890, %v5903
      %v5923 = vmul.f32 %v5891, %v5907
      %v5924 = vadd.f32 %v5860, %v5908
      %v5925 = vadd.f32 %v5861, %v5909
      %v5926 = vadd.f32 %v5862, %v5910
      %v5927 = vadd.f32 %v5863, %v5911
      %v5928 = vadd.f32 %v5864, %v5912
      %v5929 = vadd.f32 %v5865, %v5913
      %v5930 = vadd.f32 %v5866, %v5914
      %v5931 = vadd.f32 %v5867, %v5915
      %v5932 = vadd.f32 %v5868, %v5916
      %v5933 = vadd.f32 %v5869, %v5917
      %v5934 = vadd.f32 %v5870, %v5918
      %v5935 = vadd.f32 %v5871, %v5919
      %v5936 = vadd.f32 %v5872, %v5920
      %v5937 = vadd.f32 %v5873, %v5921
      %v5938 = vadd.f32 %v5874, %v5922
      %v5939 = vadd.f32 %v5875, %v5923
      %v5940 = vsub.f32 %v5924, %v56
      %v5941 = vsub.f32 %v5925, %v57
      %v5942 = vsub.f32 %v5926, %v58
      %v5943 = vsub.f32 %v5927, %v59
      %v5944 = vsub.f32 %v5928, %v60
      %v5945 = vsub.f32 %v5929, %v61
      %v5946 = vsub.f32 %v5930, %v62
      %v5947 = vsub.f32 %v5931, %v63
      %v5948 = vsub.f32 %v5932, %v64
      %v5949 = vsub.f32 %v5933, %v65
      %v5950 = vsub.f32 %v5934, %v66
      %v5951 = vsub.f32 %v5935, %v67
      %v5952 = vsub.f32 %v5936, %v68
      %v5953 = vsub.f32 %v5937, %v69
      %v5954 = vsub.f32 %v5938, %v70
      %v5955 = vsub.f32 %v5939, %v71
      %v5956 = vmul.f32 %v4890, %v5940
      %v5957 = vmul.f32 %v4891, %v5941
      %v5958 = vmul.f32 %v4892, %v5942
      %v5959 = vmul.f32 %v4893, %v5943
      %v5960 = vmul.f32 %v4890, %v5944
      %v5961 = vmul.f32 %v4891, %v5945
      %v5962 = vmul.f32 %v4892, %v5946
      %v5963 = vmul.f32 %v4893, %v5947
      %v5964 = vmul.f32 %v4890, %v5948
      %v5965 = vmul.f32 %v4891, %v5949
      %v5966 = vmul.f32 %v4892, %v5950
      %v5967 = vmul.f32 %v4893, %v5951
      %v5968 = vmul.f32 %v4890, %v5952
      %v5969 = vmul.f32 %v4891, %v5953
      %v5970 = vmul.f32 %v4892, %v5954
      %v5971 = vmul.f32 %v4893, %v5955
      %v5972 = vadd.f32 %v4916, %v5956
      %v5973 = vadd.f32 %v4917, %v5957
      %v5974 = vadd.f32 %v4918, %v5958
      %v5975 = vadd.f32 %v4919, %v5959
      %v5976 = vadd.f32 %v4920, %v5960
      %v5977 = vadd.f32 %v4921, %v5961
      %v5978 = vadd.f32 %v4922, %v5962
      %v5979 = vadd.f32 %v4923, %v5963
      %v5980 = vadd.f32 %v4924, %v5964
      %v5981 = vadd.f32 %v4925, %v5965
      %v5982 = vadd.f32 %v4926, %v5966
      %v5983 = vadd.f32 %v4927, %v5967
      %v5984 = vadd.f32 %v4928, %v5968
      %v5985 = vadd.f32 %v4929, %v5969
      %v5986 = vadd.f32 %v4930, %v5970
      %v5987 = vadd.f32 %v4931, %v5971
      %v5988 = vmax.f32 %v5972, -0.5
      %v5989 = vmax.f32 %v5973, -0.5
      %v5990 = vmax.f32 %v5974, -0.5
      %v5991 = vmax.f32 %v5975, -0.5
      %v5992 = vmax.f32 %v5976, -0.5
      %v5993 = vmax.f32 %v5977, -0.5
      %v5994 = vmax.f32 %v5978, -0.5
      %v5995 = vmax.f32 %v5979, -0.5
      %v5996 = vmax.f32 %v5980, -0.5
      %v5997 = vmax.f32 %v5981, -0.5
      %v5998 = vmax.f32 %v5982, -0.5
      %v5999 = vmax.f32 %v5983, -0.5
      %v6000 = vmax.f32 %v5984, -0.5
      %v6001 = vmax.f32 %v5985, -0.5
      %v6002 = vmax.f32 %v5986, -0.5
      %v6003 = vmax.f32 %v5987, -0.5
      %v6004 = vmin.f32 %v5988, 0.5
      %v6005 = vmin.f32 %v5989, 0.5
      %v6006 = vmin.f32 %v5990, 0.5
      %v6007 = vmin.f32 %v5991, 0.5
      %v6008 = vmin.f32 %v5992, 0.5
      %v6009 = vmin.f32 %v5993, 0.5
      %v6010 = vmin.f32 %v5994, 0.5
      %v6011 = vmin.f32 %v5995, 0.5
      %v6012 = vmin.f32 %v5996, 0.5
      %v6013 = vmin.f32 %v5997, 0.5
      %v6014 = vmin.f32 %v5998, 0.5
      %v6015 = vmin.f32 %v5999, 0.5
      %v6016 = vmin.f32 %v6000, 0.5
      %v6017 = vmin.f32 %v6001, 0.5
      %v6018 = vmin.f32 %v6002, 0.5
      %v6019 = vmin.f32 %v6003, 0.5
      %v6020 = vld [vmem:[#allocation5] sm:$0xff]
      %v6021 = vld [vmem:[#allocation5 + $0x8] sm:$0xff]
      %v6022 = vld [vmem:[#allocation5 + $0x10] sm:$0xff]
      %v6023 = vld [vmem:[#allocation5 + $0x18] sm:$0xff]
      %v6024 = vld [vmem:[#allocation5 + $0x20] sm:$0xff]
      %v6025 = vld [vmem:[#allocation5 + $0x28] sm:$0xff]
      %v6026 = vld [vmem:[#allocation5 + $0x30] sm:$0xff]
      %v6027 = vld [vmem:[#allocation5 + $0x38] sm:$0xff]
      %v6028 = vlaneseq
      %v6029 = vshrl.u32 %v6028, 7
      %v6030 = vsub.s32 0, %v6029
      %v6031 = vrot.slane %v6004, %v6030
      %v6032 = vlaneseq
      %v6033 = vshrl.u32 %v6032, 7
      %v6034 = vsub.s32 0, %v6033
      %v6035 = vrot.slane %v6005, %v6034
      %v6036 = vlaneseq
      %v6037 = vshrl.u32 %v6036, 7
      %v6038 = vsub.s32 0, %v6037
      %v6039 = vrot.slane %v6006, %v6038
      %v6040 = vlaneseq
      %v6041 = vshrl.u32 %v6040, 7
      %v6042 = vsub.s32 0, %v6041
      %v6043 = vrot.slane %v6007, %v6042
      %v6044 = vmul.f32 %v6020, %v6031
      %v6045 = vmul.f32 %v6021, %v6035
      %v6046 = vmul.f32 %v6022, %v6039
      %v6047 = vmul.f32 %v6023, %v6043
      %v6048 = vmul.f32 %v6024, %v6031
      %v6049 = vmul.f32 %v6025, %v6035
      %v6050 = vmul.f32 %v6026, %v6039
      %v6051 = vmul.f32 %v6027, %v6043
      %v6052 = vld [vmem:[%s3519] sm:$0xff]
      %v6053 = vld [vmem:[%s3519 + $0x8] sm:$0xff]
      %v6054 = vld [vmem:[%s3519 + $0x10] sm:$0xff]
      %v6055 = vld [vmem:[%s3519 + $0x18] sm:$0xff]
      %v6056 = vld [vmem:[%s3519 + $0x20] sm:$0xff]
      %v6057 = vld [vmem:[%s3519 + $0x28] sm:$0xff]
      %v6058 = vld [vmem:[%s3519 + $0x30] sm:$0xff]
      %v6059 = vld [vmem:[%s3519 + $0x38] sm:$0xff]
      %v6060 = vlaneseq
      %v6061 = vshrl.u32 %v6060, 7
      %v6062 = vsub.s32 1, %v6061
      %v6063 = vrot.slane %v6004, %v6062
      %v6064 = vlaneseq
      %v6065 = vshrl.u32 %v6064, 7
      %v6066 = vsub.s32 1, %v6065
      %v6067 = vrot.slane %v6005, %v6066
      %v6068 = vlaneseq
      %v6069 = vshrl.u32 %v6068, 7
      %v6070 = vsub.s32 1, %v6069
      %v6071 = vrot.slane %v6006, %v6070
      %v6072 = vlaneseq
      %v6073 = vshrl.u32 %v6072, 7
      %v6074 = vsub.s32 1, %v6073
      %v6075 = vrot.slane %v6007, %v6074
      %v6076 = vmul.f32 %v6052, %v6063
      %v6077 = vmul.f32 %v6053, %v6067
      %v6078 = vmul.f32 %v6054, %v6071
      %v6079 = vmul.f32 %v6055, %v6075
      %v6080 = vmul.f32 %v6056, %v6063
      %v6081 = vmul.f32 %v6057, %v6067
      %v6082 = vmul.f32 %v6058, %v6071
      %v6083 = vmul.f32 %v6059, %v6075
      %v6084 = vadd.f32 %v6044, %v6076
      %v6085 = vadd.f32 %v6045, %v6077
      %v6086 = vadd.f32 %v6046, %v6078
      %v6087 = vadd.f32 %v6047, %v6079
      %v6088 = vadd.f32 %v6048, %v6080
      %v6089 = vadd.f32 %v6049, %v6081
      %v6090 = vadd.f32 %v6050, %v6082
      %v6091 = vadd.f32 %v6051, %v6083
      %v6092 = vld [vmem:[%s3560] sm:$0xff]
      %v6093 = vld [vmem:[%s3560 + $0x8] sm:$0xff]
      %v6094 = vld [vmem:[%s3560 + $0x10] sm:$0xff]
      %v6095 = vld [vmem:[%s3560 + $0x18] sm:$0xff]
      %v6096 = vld [vmem:[%s3560 + $0x20] sm:$0xff]
      %v6097 = vld [vmem:[%s3560 + $0x28] sm:$0xff]
      %v6098 = vld [vmem:[%s3560 + $0x30] sm:$0xff]
      %v6099 = vld [vmem:[%s3560 + $0x38] sm:$0xff]
      %v6100 = vlaneseq
      %v6101 = vshrl.u32 %v6100, 7
      %v6102 = vsub.s32 2, %v6101
      %v6103 = vrot.slane %v6004, %v6102
      %v6104 = vlaneseq
      %v6105 = vshrl.u32 %v6104, 7
      %v6106 = vsub.s32 2, %v6105
      %v6107 = vrot.slane %v6005, %v6106
      %v6108 = vlaneseq
      %v6109 = vshrl.u32 %v6108, 7
      %v6110 = vsub.s32 2, %v6109
      %v6111 = vrot.slane %v6006, %v6110
      %v6112 = vlaneseq
      %v6113 = vshrl.u32 %v6112, 7
      %v6114 = vsub.s32 2, %v6113
      %v6115 = vrot.slane %v6007, %v6114
      %v6116 = vmul.f32 %v6092, %v6103
      %v6117 = vmul.f32 %v6093, %v6107
      %v6118 = vmul.f32 %v6094, %v6111
      %v6119 = vmul.f32 %v6095, %v6115
      %v6120 = vmul.f32 %v6096, %v6103
      %v6121 = vmul.f32 %v6097, %v6107
      %v6122 = vmul.f32 %v6098, %v6111
      %v6123 = vmul.f32 %v6099, %v6115
      %v6124 = vadd.f32 %v6084, %v6116
      %v6125 = vadd.f32 %v6085, %v6117
      %v6126 = vadd.f32 %v6086, %v6118
      %v6127 = vadd.f32 %v6087, %v6119
      %v6128 = vadd.f32 %v6088, %v6120
      %v6129 = vadd.f32 %v6089, %v6121
      %v6130 = vadd.f32 %v6090, %v6122
      %v6131 = vadd.f32 %v6091, %v6123
      %v6132 = vld [vmem:[%s3601] sm:$0xff]
      %v6133 = vld [vmem:[%s3601 + $0x8] sm:$0xff]
      %v6134 = vld [vmem:[%s3601 + $0x10] sm:$0xff]
      %v6135 = vld [vmem:[%s3601 + $0x18] sm:$0xff]
      %v6136 = vld [vmem:[%s3601 + $0x20] sm:$0xff]
      %v6137 = vld [vmem:[%s3601 + $0x28] sm:$0xff]
      %v6138 = vld [vmem:[%s3601 + $0x30] sm:$0xff]
      %v6139 = vld [vmem:[%s3601 + $0x38] sm:$0xff]
      %v6140 = vlaneseq
      %v6141 = vshrl.u32 %v6140, 7
      %v6142 = vsub.s32 3, %v6141
      %v6143 = vrot.slane %v6004, %v6142
      %v6144 = vlaneseq
      %v6145 = vshrl.u32 %v6144, 7
      %v6146 = vsub.s32 3, %v6145
      %v6147 = vrot.slane %v6005, %v6146
      %v6148 = vlaneseq
      %v6149 = vshrl.u32 %v6148, 7
      %v6150 = vsub.s32 3, %v6149
      %v6151 = vrot.slane %v6006, %v6150
      %v6152 = vlaneseq
      %v6153 = vshrl.u32 %v6152, 7
      %v6154 = vsub.s32 3, %v6153
      %v6155 = vrot.slane %v6007, %v6154
      %v6156 = vmul.f32 %v6132, %v6143
      %v6157 = vmul.f32 %v6133, %v6147
      %v6158 = vmul.f32 %v6134, %v6151
      %v6159 = vmul.f32 %v6135, %v6155
      %v6160 = vmul.f32 %v6136, %v6143
      %v6161 = vmul.f32 %v6137, %v6147
      %v6162 = vmul.f32 %v6138, %v6151
      %v6163 = vmul.f32 %v6139, %v6155
      %v6164 = vadd.f32 %v6124, %v6156
      %v6165 = vadd.f32 %v6125, %v6157
      %v6166 = vadd.f32 %v6126, %v6158
      %v6167 = vadd.f32 %v6127, %v6159
      %v6168 = vadd.f32 %v6128, %v6160
      %v6169 = vadd.f32 %v6129, %v6161
      %v6170 = vadd.f32 %v6130, %v6162
      %v6171 = vadd.f32 %v6131, %v6163
      %v6172 = vld [vmem:[%s3642] sm:$0xff]
      %v6173 = vld [vmem:[%s3642 + $0x8] sm:$0xff]
      %v6174 = vld [vmem:[%s3642 + $0x10] sm:$0xff]
      %v6175 = vld [vmem:[%s3642 + $0x18] sm:$0xff]
      %v6176 = vld [vmem:[%s3642 + $0x20] sm:$0xff]
      %v6177 = vld [vmem:[%s3642 + $0x28] sm:$0xff]
      %v6178 = vld [vmem:[%s3642 + $0x30] sm:$0xff]
      %v6179 = vld [vmem:[%s3642 + $0x38] sm:$0xff]
      %v6180 = vlaneseq
      %v6181 = vshrl.u32 %v6180, 7
      %v6182 = vsub.s32 4, %v6181
      %v6183 = vrot.slane %v6004, %v6182
      %v6184 = vlaneseq
      %v6185 = vshrl.u32 %v6184, 7
      %v6186 = vsub.s32 4, %v6185
      %v6187 = vrot.slane %v6005, %v6186
      %v6188 = vlaneseq
      %v6189 = vshrl.u32 %v6188, 7
      %v6190 = vsub.s32 4, %v6189
      %v6191 = vrot.slane %v6006, %v6190
      %v6192 = vlaneseq
      %v6193 = vshrl.u32 %v6192, 7
      %v6194 = vsub.s32 4, %v6193
      %v6195 = vrot.slane %v6007, %v6194
      %v6196 = vmul.f32 %v6172, %v6183
      %v6197 = vmul.f32 %v6173, %v6187
      %v6198 = vmul.f32 %v6174, %v6191
      %v6199 = vmul.f32 %v6175, %v6195
      %v6200 = vmul.f32 %v6176, %v6183
      %v6201 = vmul.f32 %v6177, %v6187
      %v6202 = vmul.f32 %v6178, %v6191
      %v6203 = vmul.f32 %v6179, %v6195
      %v6204 = vadd.f32 %v6164, %v6196
      %v6205 = vadd.f32 %v6165, %v6197
      %v6206 = vadd.f32 %v6166, %v6198
      %v6207 = vadd.f32 %v6167, %v6199
      %v6208 = vadd.f32 %v6168, %v6200
      %v6209 = vadd.f32 %v6169, %v6201
      %v6210 = vadd.f32 %v6170, %v6202
      %v6211 = vadd.f32 %v6171, %v6203
      %v6212 = vld [vmem:[%s3683] sm:$0xff]
      %v6213 = vld [vmem:[%s3683 + $0x8] sm:$0xff]
      %v6214 = vld [vmem:[%s3683 + $0x10] sm:$0xff]
      %v6215 = vld [vmem:[%s3683 + $0x18] sm:$0xff]
      %v6216 = vld [vmem:[%s3683 + $0x20] sm:$0xff]
      %v6217 = vld [vmem:[%s3683 + $0x28] sm:$0xff]
      %v6218 = vld [vmem:[%s3683 + $0x30] sm:$0xff]
      %v6219 = vld [vmem:[%s3683 + $0x38] sm:$0xff]
      %v6220 = vlaneseq
      %v6221 = vshrl.u32 %v6220, 7
      %v6222 = vsub.s32 5, %v6221
      %v6223 = vrot.slane %v6004, %v6222
      %v6224 = vlaneseq
      %v6225 = vshrl.u32 %v6224, 7
      %v6226 = vsub.s32 5, %v6225
      %v6227 = vrot.slane %v6005, %v6226
      %v6228 = vlaneseq
      %v6229 = vshrl.u32 %v6228, 7
      %v6230 = vsub.s32 5, %v6229
      %v6231 = vrot.slane %v6006, %v6230
      %v6232 = vlaneseq
      %v6233 = vshrl.u32 %v6232, 7
      %v6234 = vsub.s32 5, %v6233
      %v6235 = vrot.slane %v6007, %v6234
      %v6236 = vmul.f32 %v6212, %v6223
      %v6237 = vmul.f32 %v6213, %v6227
      %v6238 = vmul.f32 %v6214, %v6231
      %v6239 = vmul.f32 %v6215, %v6235
      %v6240 = vmul.f32 %v6216, %v6223
      %v6241 = vmul.f32 %v6217, %v6227
      %v6242 = vmul.f32 %v6218, %v6231
      %v6243 = vmul.f32 %v6219, %v6235
      %v6244 = vadd.f32 %v6204, %v6236
      %v6245 = vadd.f32 %v6205, %v6237
      %v6246 = vadd.f32 %v6206, %v6238
      %v6247 = vadd.f32 %v6207, %v6239
      %v6248 = vadd.f32 %v6208, %v6240
      %v6249 = vadd.f32 %v6209, %v6241
      %v6250 = vadd.f32 %v6210, %v6242
      %v6251 = vadd.f32 %v6211, %v6243
      %v6252 = vld [vmem:[%s3724] sm:$0xff]
      %v6253 = vld [vmem:[%s3724 + $0x8] sm:$0xff]
      %v6254 = vld [vmem:[%s3724 + $0x10] sm:$0xff]
      %v6255 = vld [vmem:[%s3724 + $0x18] sm:$0xff]
      %v6256 = vld [vmem:[%s3724 + $0x20] sm:$0xff]
      %v6257 = vld [vmem:[%s3724 + $0x28] sm:$0xff]
      %v6258 = vld [vmem:[%s3724 + $0x30] sm:$0xff]
      %v6259 = vld [vmem:[%s3724 + $0x38] sm:$0xff]
      %v6260 = vlaneseq
      %v6261 = vshrl.u32 %v6260, 7
      %v6262 = vsub.s32 6, %v6261
      %v6263 = vrot.slane %v6004, %v6262
      %v6264 = vlaneseq
      %v6265 = vshrl.u32 %v6264, 7
      %v6266 = vsub.s32 6, %v6265
      %v6267 = vrot.slane %v6005, %v6266
      %v6268 = vlaneseq
      %v6269 = vshrl.u32 %v6268, 7
      %v6270 = vsub.s32 6, %v6269
      %v6271 = vrot.slane %v6006, %v6270
      %v6272 = vlaneseq
      %v6273 = vshrl.u32 %v6272, 7
      %v6274 = vsub.s32 6, %v6273
      %v6275 = vrot.slane %v6007, %v6274
      %v6276 = vmul.f32 %v6252, %v6263
      %v6277 = vmul.f32 %v6253, %v6267
      %v6278 = vmul.f32 %v6254, %v6271
      %v6279 = vmul.f32 %v6255, %v6275
      %v6280 = vmul.f32 %v6256, %v6263
      %v6281 = vmul.f32 %v6257, %v6267
      %v6282 = vmul.f32 %v6258, %v6271
      %v6283 = vmul.f32 %v6259, %v6275
      %v6284 = vadd.f32 %v6244, %v6276
      %v6285 = vadd.f32 %v6245, %v6277
      %v6286 = vadd.f32 %v6246, %v6278
      %v6287 = vadd.f32 %v6247, %v6279
      %v6288 = vadd.f32 %v6248, %v6280
      %v6289 = vadd.f32 %v6249, %v6281
      %v6290 = vadd.f32 %v6250, %v6282
      %v6291 = vadd.f32 %v6251, %v6283
      %v6292 = vld [vmem:[%s3765] sm:$0xff]
      %v6293 = vld [vmem:[%s3765 + $0x8] sm:$0xff]
      %v6294 = vld [vmem:[%s3765 + $0x10] sm:$0xff]
      %v6295 = vld [vmem:[%s3765 + $0x18] sm:$0xff]
      %v6296 = vld [vmem:[%s3765 + $0x20] sm:$0xff]
      %v6297 = vld [vmem:[%s3765 + $0x28] sm:$0xff]
      %v6298 = vld [vmem:[%s3765 + $0x30] sm:$0xff]
      %v6299 = vld [vmem:[%s3765 + $0x38] sm:$0xff]
      %v6300 = vlaneseq
      %v6301 = vshrl.u32 %v6300, 7
      %v6302 = vsub.s32 7, %v6301
      %v6303 = vrot.slane %v6004, %v6302
      %v6304 = vlaneseq
      %v6305 = vshrl.u32 %v6304, 7
      %v6306 = vsub.s32 7, %v6305
      %v6307 = vrot.slane %v6005, %v6306
      %v6308 = vlaneseq
      %v6309 = vshrl.u32 %v6308, 7
      %v6310 = vsub.s32 7, %v6309
      %v6311 = vrot.slane %v6006, %v6310
      %v6312 = vlaneseq
      %v6313 = vshrl.u32 %v6312, 7
      %v6314 = vsub.s32 7, %v6313
      %v6315 = vrot.slane %v6007, %v6314
      %v6316 = vmul.f32 %v6292, %v6303
      %v6317 = vmul.f32 %v6293, %v6307
      %v6318 = vmul.f32 %v6294, %v6311
      %v6319 = vmul.f32 %v6295, %v6315
      %v6320 = vmul.f32 %v6296, %v6303
      %v6321 = vmul.f32 %v6297, %v6307
      %v6322 = vmul.f32 %v6298, %v6311
      %v6323 = vmul.f32 %v6299, %v6315
      %v6324 = vadd.f32 %v6284, %v6316
      %v6325 = vadd.f32 %v6285, %v6317
      %v6326 = vadd.f32 %v6286, %v6318
      %v6327 = vadd.f32 %v6287, %v6319
      %v6328 = vadd.f32 %v6288, %v6320
      %v6329 = vadd.f32 %v6289, %v6321
      %v6330 = vadd.f32 %v6290, %v6322
      %v6331 = vadd.f32 %v6291, %v6323
      %v6332 = vld [vmem:[%s3806] sm:$0xff]
      %v6333 = vld [vmem:[%s3806 + $0x8] sm:$0xff]
      %v6334 = vld [vmem:[%s3806 + $0x10] sm:$0xff]
      %v6335 = vld [vmem:[%s3806 + $0x18] sm:$0xff]
      %v6336 = vld [vmem:[%s3806 + $0x20] sm:$0xff]
      %v6337 = vld [vmem:[%s3806 + $0x28] sm:$0xff]
      %v6338 = vld [vmem:[%s3806 + $0x30] sm:$0xff]
      %v6339 = vld [vmem:[%s3806 + $0x38] sm:$0xff]
      %v6340 = vlaneseq
      %v6341 = vshrl.u32 %v6340, 7
      %v6342 = vsub.s32 0, %v6341
      %v6343 = vrot.slane %v6008, %v6342
      %v6344 = vlaneseq
      %v6345 = vshrl.u32 %v6344, 7
      %v6346 = vsub.s32 0, %v6345
      %v6347 = vrot.slane %v6009, %v6346
      %v6348 = vlaneseq
      %v6349 = vshrl.u32 %v6348, 7
      %v6350 = vsub.s32 0, %v6349
      %v6351 = vrot.slane %v6010, %v6350
      %v6352 = vlaneseq
      %v6353 = vshrl.u32 %v6352, 7
      %v6354 = vsub.s32 0, %v6353
      %v6355 = vrot.slane %v6011, %v6354
      %v6356 = vmul.f32 %v6332, %v6343
      %v6357 = vmul.f32 %v6333, %v6347
      %v6358 = vmul.f32 %v6334, %v6351
      %v6359 = vmul.f32 %v6335, %v6355
      %v6360 = vmul.f32 %v6336, %v6343
      %v6361 = vmul.f32 %v6337, %v6347
      %v6362 = vmul.f32 %v6338, %v6351
      %v6363 = vmul.f32 %v6339, %v6355
      %v6364 = vadd.f32 %v6324, %v6356
      %v6365 = vadd.f32 %v6325, %v6357
      %v6366 = vadd.f32 %v6326, %v6358
      %v6367 = vadd.f32 %v6327, %v6359
      %v6368 = vadd.f32 %v6328, %v6360
      %v6369 = vadd.f32 %v6329, %v6361
      %v6370 = vadd.f32 %v6330, %v6362
      %v6371 = vadd.f32 %v6331, %v6363
      %v6372 = vld [vmem:[%s3847] sm:$0xff]
      %v6373 = vld [vmem:[%s3847 + $0x8] sm:$0xff]
      %v6374 = vld [vmem:[%s3847 + $0x10] sm:$0xff]
      %v6375 = vld [vmem:[%s3847 + $0x18] sm:$0xff]
      %v6376 = vld [vmem:[%s3847 + $0x20] sm:$0xff]
      %v6377 = vld [vmem:[%s3847 + $0x28] sm:$0xff]
      %v6378 = vld [vmem:[%s3847 + $0x30] sm:$0xff]
      %v6379 = vld [vmem:[%s3847 + $0x38] sm:$0xff]
      %v6380 = vlaneseq
      %v6381 = vshrl.u32 %v6380, 7
      %v6382 = vsub.s32 1, %v6381
      %v6383 = vrot.slane %v6008, %v6382
      %v6384 = vlaneseq
      %v6385 = vshrl.u32 %v6384, 7
      %v6386 = vsub.s32 1, %v6385
      %v6387 = vrot.slane %v6009, %v6386
      %v6388 = vlaneseq
      %v6389 = vshrl.u32 %v6388, 7
      %v6390 = vsub.s32 1, %v6389
      %v6391 = vrot.slane %v6010, %v6390
      %v6392 = vlaneseq
      %v6393 = vshrl.u32 %v6392, 7
      %v6394 = vsub.s32 1, %v6393
      %v6395 = vrot.slane %v6011, %v6394
      %v6396 = vmul.f32 %v6372, %v6383
      %v6397 = vmul.f32 %v6373, %v6387
      %v6398 = vmul.f32 %v6374, %v6391
      %v6399 = vmul.f32 %v6375, %v6395
      %v6400 = vmul.f32 %v6376, %v6383
      %v6401 = vmul.f32 %v6377, %v6387
      %v6402 = vmul.f32 %v6378, %v6391
      %v6403 = vmul.f32 %v6379, %v6395
      %v6404 = vadd.f32 %v6364, %v6396
      %v6405 = vadd.f32 %v6365, %v6397
      %v6406 = vadd.f32 %v6366, %v6398
      %v6407 = vadd.f32 %v6367, %v6399
      %v6408 = vadd.f32 %v6368, %v6400
      %v6409 = vadd.f32 %v6369, %v6401
      %v6410 = vadd.f32 %v6370, %v6402
      %v6411 = vadd.f32 %v6371, %v6403
      %v6412 = vld [vmem:[%s3888] sm:$0xff]
      %v6413 = vld [vmem:[%s3888 + $0x8] sm:$0xff]
      %v6414 = vld [vmem:[%s3888 + $0x10] sm:$0xff]
      %v6415 = vld [vmem:[%s3888 + $0x18] sm:$0xff]
      %v6416 = vld [vmem:[%s3888 + $0x20] sm:$0xff]
      %v6417 = vld [vmem:[%s3888 + $0x28] sm:$0xff]
      %v6418 = vld [vmem:[%s3888 + $0x30] sm:$0xff]
      %v6419 = vld [vmem:[%s3888 + $0x38] sm:$0xff]
      %v6420 = vlaneseq
      %v6421 = vshrl.u32 %v6420, 7
      %v6422 = vsub.s32 2, %v6421
      %v6423 = vrot.slane %v6008, %v6422
      %v6424 = vlaneseq
      %v6425 = vshrl.u32 %v6424, 7
      %v6426 = vsub.s32 2, %v6425
      %v6427 = vrot.slane %v6009, %v6426
      %v6428 = vlaneseq
      %v6429 = vshrl.u32 %v6428, 7
      %v6430 = vsub.s32 2, %v6429
      %v6431 = vrot.slane %v6010, %v6430
      %v6432 = vlaneseq
      %v6433 = vshrl.u32 %v6432, 7
      %v6434 = vsub.s32 2, %v6433
      %v6435 = vrot.slane %v6011, %v6434
      %v6436 = vmul.f32 %v6412, %v6423
      %v6437 = vmul.f32 %v6413, %v6427
      %v6438 = vmul.f32 %v6414, %v6431
      %v6439 = vmul.f32 %v6415, %v6435
      %v6440 = vmul.f32 %v6416, %v6423
      %v6441 = vmul.f32 %v6417, %v6427
      %v6442 = vmul.f32 %v6418, %v6431
      %v6443 = vmul.f32 %v6419, %v6435
      %v6444 = vadd.f32 %v6404, %v6436
      %v6445 = vadd.f32 %v6405, %v6437
      %v6446 = vadd.f32 %v6406, %v6438
      %v6447 = vadd.f32 %v6407, %v6439
      %v6448 = vadd.f32 %v6408, %v6440
      %v6449 = vadd.f32 %v6409, %v6441
      %v6450 = vadd.f32 %v6410, %v6442
      %v6451 = vadd.f32 %v6411, %v6443
      %v6452 = vld [vmem:[%s3929] sm:$0xff]
      %v6453 = vld [vmem:[%s3929 + $0x8] sm:$0xff]
      %v6454 = vld [vmem:[%s3929 + $0x10] sm:$0xff]
      %v6455 = vld [vmem:[%s3929 + $0x18] sm:$0xff]
      %v6456 = vld [vmem:[%s3929 + $0x20] sm:$0xff]
      %v6457 = vld [vmem:[%s3929 + $0x28] sm:$0xff]
      %v6458 = vld [vmem:[%s3929 + $0x30] sm:$0xff]
      %v6459 = vld [vmem:[%s3929 + $0x38] sm:$0xff]
      %v6460 = vlaneseq
      %v6461 = vshrl.u32 %v6460, 7
      %v6462 = vsub.s32 3, %v6461
      %v6463 = vrot.slane %v6008, %v6462
      %v6464 = vlaneseq
      %v6465 = vshrl.u32 %v6464, 7
      %v6466 = vsub.s32 3, %v6465
      %v6467 = vrot.slane %v6009, %v6466
      %v6468 = vlaneseq
      %v6469 = vshrl.u32 %v6468, 7
      %v6470 = vsub.s32 3, %v6469
      %v6471 = vrot.slane %v6010, %v6470
      %v6472 = vlaneseq
      %v6473 = vshrl.u32 %v6472, 7
      %v6474 = vsub.s32 3, %v6473
      %v6475 = vrot.slane %v6011, %v6474
      %v6476 = vmul.f32 %v6452, %v6463
      %v6477 = vmul.f32 %v6453, %v6467
      %v6478 = vmul.f32 %v6454, %v6471
      %v6479 = vmul.f32 %v6455, %v6475
      %v6480 = vmul.f32 %v6456, %v6463
      %v6481 = vmul.f32 %v6457, %v6467
      %v6482 = vmul.f32 %v6458, %v6471
      %v6483 = vmul.f32 %v6459, %v6475
      %v6484 = vadd.f32 %v6444, %v6476
      %v6485 = vadd.f32 %v6445, %v6477
      %v6486 = vadd.f32 %v6446, %v6478
      %v6487 = vadd.f32 %v6447, %v6479
      %v6488 = vadd.f32 %v6448, %v6480
      %v6489 = vadd.f32 %v6449, %v6481
      %v6490 = vadd.f32 %v6450, %v6482
      %v6491 = vadd.f32 %v6451, %v6483
      %v6492 = vld [vmem:[%s3970] sm:$0xff]
      %v6493 = vld [vmem:[%s3970 + $0x8] sm:$0xff]
      %v6494 = vld [vmem:[%s3970 + $0x10] sm:$0xff]
      %v6495 = vld [vmem:[%s3970 + $0x18] sm:$0xff]
      %v6496 = vld [vmem:[%s3970 + $0x20] sm:$0xff]
      %v6497 = vld [vmem:[%s3970 + $0x28] sm:$0xff]
      %v6498 = vld [vmem:[%s3970 + $0x30] sm:$0xff]
      %v6499 = vld [vmem:[%s3970 + $0x38] sm:$0xff]
      %v6500 = vlaneseq
      %v6501 = vshrl.u32 %v6500, 7
      %v6502 = vsub.s32 4, %v6501
      %v6503 = vrot.slane %v6008, %v6502
      %v6504 = vlaneseq
      %v6505 = vshrl.u32 %v6504, 7
      %v6506 = vsub.s32 4, %v6505
      %v6507 = vrot.slane %v6009, %v6506
      %v6508 = vlaneseq
      %v6509 = vshrl.u32 %v6508, 7
      %v6510 = vsub.s32 4, %v6509
      %v6511 = vrot.slane %v6010, %v6510
      %v6512 = vlaneseq
      %v6513 = vshrl.u32 %v6512, 7
      %v6514 = vsub.s32 4, %v6513
      %v6515 = vrot.slane %v6011, %v6514
      %v6516 = vmul.f32 %v6492, %v6503
      %v6517 = vmul.f32 %v6493, %v6507
      %v6518 = vmul.f32 %v6494, %v6511
      %v6519 = vmul.f32 %v6495, %v6515
      %v6520 = vmul.f32 %v6496, %v6503
      %v6521 = vmul.f32 %v6497, %v6507
      %v6522 = vmul.f32 %v6498, %v6511
      %v6523 = vmul.f32 %v6499, %v6515
      %v6524 = vadd.f32 %v6484, %v6516
      %v6525 = vadd.f32 %v6485, %v6517
      %v6526 = vadd.f32 %v6486, %v6518
      %v6527 = vadd.f32 %v6487, %v6519
      %v6528 = vadd.f32 %v6488, %v6520
      %v6529 = vadd.f32 %v6489, %v6521
      %v6530 = vadd.f32 %v6490, %v6522
      %v6531 = vadd.f32 %v6491, %v6523
      %v6532 = vld [vmem:[%s4011] sm:$0xff]
      %v6533 = vld [vmem:[%s4011 + $0x8] sm:$0xff]
      %v6534 = vld [vmem:[%s4011 + $0x10] sm:$0xff]
      %v6535 = vld [vmem:[%s4011 + $0x18] sm:$0xff]
      %v6536 = vld [vmem:[%s4011 + $0x20] sm:$0xff]
      %v6537 = vld [vmem:[%s4011 + $0x28] sm:$0xff]
      %v6538 = vld [vmem:[%s4011 + $0x30] sm:$0xff]
      %v6539 = vld [vmem:[%s4011 + $0x38] sm:$0xff]
      %v6540 = vlaneseq
      %v6541 = vshrl.u32 %v6540, 7
      %v6542 = vsub.s32 5, %v6541
      %v6543 = vrot.slane %v6008, %v6542
      %v6544 = vlaneseq
      %v6545 = vshrl.u32 %v6544, 7
      %v6546 = vsub.s32 5, %v6545
      %v6547 = vrot.slane %v6009, %v6546
      %v6548 = vlaneseq
      %v6549 = vshrl.u32 %v6548, 7
      %v6550 = vsub.s32 5, %v6549
      %v6551 = vrot.slane %v6010, %v6550
      %v6552 = vlaneseq
      %v6553 = vshrl.u32 %v6552, 7
      %v6554 = vsub.s32 5, %v6553
      %v6555 = vrot.slane %v6011, %v6554
      %v6556 = vmul.f32 %v6532, %v6543
      %v6557 = vmul.f32 %v6533, %v6547
      %v6558 = vmul.f32 %v6534, %v6551
      %v6559 = vmul.f32 %v6535, %v6555
      %v6560 = vmul.f32 %v6536, %v6543
      %v6561 = vmul.f32 %v6537, %v6547
      %v6562 = vmul.f32 %v6538, %v6551
      %v6563 = vmul.f32 %v6539, %v6555
      %v6564 = vadd.f32 %v6524, %v6556
      %v6565 = vadd.f32 %v6525, %v6557
      %v6566 = vadd.f32 %v6526, %v6558
      %v6567 = vadd.f32 %v6527, %v6559
      %v6568 = vadd.f32 %v6528, %v6560
      %v6569 = vadd.f32 %v6529, %v6561
      %v6570 = vadd.f32 %v6530, %v6562
      %v6571 = vadd.f32 %v6531, %v6563
      %v6572 = vld [vmem:[%s4052] sm:$0xff]
      %v6573 = vld [vmem:[%s4052 + $0x8] sm:$0xff]
      %v6574 = vld [vmem:[%s4052 + $0x10] sm:$0xff]
      %v6575 = vld [vmem:[%s4052 + $0x18] sm:$0xff]
      %v6576 = vld [vmem:[%s4052 + $0x20] sm:$0xff]
      %v6577 = vld [vmem:[%s4052 + $0x28] sm:$0xff]
      %v6578 = vld [vmem:[%s4052 + $0x30] sm:$0xff]
      %v6579 = vld [vmem:[%s4052 + $0x38] sm:$0xff]
      %v6580 = vlaneseq
      %v6581 = vshrl.u32 %v6580, 7
      %v6582 = vsub.s32 6, %v6581
      %v6583 = vrot.slane %v6008, %v6582
      %v6584 = vlaneseq
      %v6585 = vshrl.u32 %v6584, 7
      %v6586 = vsub.s32 6, %v6585
      %v6587 = vrot.slane %v6009, %v6586
      %v6588 = vlaneseq
      %v6589 = vshrl.u32 %v6588, 7
      %v6590 = vsub.s32 6, %v6589
      %v6591 = vrot.slane %v6010, %v6590
      %v6592 = vlaneseq
      %v6593 = vshrl.u32 %v6592, 7
      %v6594 = vsub.s32 6, %v6593
      %v6595 = vrot.slane %v6011, %v6594
      %v6596 = vmul.f32 %v6572, %v6583
      %v6597 = vmul.f32 %v6573, %v6587
      %v6598 = vmul.f32 %v6574, %v6591
      %v6599 = vmul.f32 %v6575, %v6595
      %v6600 = vmul.f32 %v6576, %v6583
      %v6601 = vmul.f32 %v6577, %v6587
      %v6602 = vmul.f32 %v6578, %v6591
      %v6603 = vmul.f32 %v6579, %v6595
      %v6604 = vadd.f32 %v6564, %v6596
      %v6605 = vadd.f32 %v6565, %v6597
      %v6606 = vadd.f32 %v6566, %v6598
      %v6607 = vadd.f32 %v6567, %v6599
      %v6608 = vadd.f32 %v6568, %v6600
      %v6609 = vadd.f32 %v6569, %v6601
      %v6610 = vadd.f32 %v6570, %v6602
      %v6611 = vadd.f32 %v6571, %v6603
      %v6612 = vld [vmem:[%s4093] sm:$0xff]
      %v6613 = vld [vmem:[%s4093 + $0x8] sm:$0xff]
      %v6614 = vld [vmem:[%s4093 + $0x10] sm:$0xff]
      %v6615 = vld [vmem:[%s4093 + $0x18] sm:$0xff]
      %v6616 = vld [vmem:[%s4093 + $0x20] sm:$0xff]
      %v6617 = vld [vmem:[%s4093 + $0x28] sm:$0xff]
      %v6618 = vld [vmem:[%s4093 + $0x30] sm:$0xff]
      %v6619 = vld [vmem:[%s4093 + $0x38] sm:$0xff]
      %v6620 = vlaneseq
      %v6621 = vshrl.u32 %v6620, 7
      %v6622 = vsub.s32 7, %v6621
      %v6623 = vrot.slane %v6008, %v6622
      %v6624 = vlaneseq
      %v6625 = vshrl.u32 %v6624, 7
      %v6626 = vsub.s32 7, %v6625
      %v6627 = vrot.slane %v6009, %v6626
      %v6628 = vlaneseq
      %v6629 = vshrl.u32 %v6628, 7
      %v6630 = vsub.s32 7, %v6629
      %v6631 = vrot.slane %v6010, %v6630
      %v6632 = vlaneseq
      %v6633 = vshrl.u32 %v6632, 7
      %v6634 = vsub.s32 7, %v6633
      %v6635 = vrot.slane %v6011, %v6634
      %v6636 = vmul.f32 %v6612, %v6623
      %v6637 = vmul.f32 %v6613, %v6627
      %v6638 = vmul.f32 %v6614, %v6631
      %v6639 = vmul.f32 %v6615, %v6635
      %v6640 = vmul.f32 %v6616, %v6623
      %v6641 = vmul.f32 %v6617, %v6627
      %v6642 = vmul.f32 %v6618, %v6631
      %v6643 = vmul.f32 %v6619, %v6635
      %v6644 = vadd.f32 %v6604, %v6636
      %v6645 = vadd.f32 %v6605, %v6637
      %v6646 = vadd.f32 %v6606, %v6638
      %v6647 = vadd.f32 %v6607, %v6639
      %v6648 = vadd.f32 %v6608, %v6640
      %v6649 = vadd.f32 %v6609, %v6641
      %v6650 = vadd.f32 %v6610, %v6642
      %v6651 = vadd.f32 %v6611, %v6643
      %v6652 = vld [vmem:[%s4134] sm:$0xff]
      %v6653 = vld [vmem:[%s4134 + $0x8] sm:$0xff]
      %v6654 = vld [vmem:[%s4134 + $0x10] sm:$0xff]
      %v6655 = vld [vmem:[%s4134 + $0x18] sm:$0xff]
      %v6656 = vld [vmem:[%s4134 + $0x20] sm:$0xff]
      %v6657 = vld [vmem:[%s4134 + $0x28] sm:$0xff]
      %v6658 = vld [vmem:[%s4134 + $0x30] sm:$0xff]
      %v6659 = vld [vmem:[%s4134 + $0x38] sm:$0xff]
      %v6660 = vlaneseq
      %v6661 = vshrl.u32 %v6660, 7
      %v6662 = vsub.s32 0, %v6661
      %v6663 = vrot.slane %v6012, %v6662
      %v6664 = vlaneseq
      %v6665 = vshrl.u32 %v6664, 7
      %v6666 = vsub.s32 0, %v6665
      %v6667 = vrot.slane %v6013, %v6666
      %v6668 = vlaneseq
      %v6669 = vshrl.u32 %v6668, 7
      %v6670 = vsub.s32 0, %v6669
      %v6671 = vrot.slane %v6014, %v6670
      %v6672 = vlaneseq
      %v6673 = vshrl.u32 %v6672, 7
      %v6674 = vsub.s32 0, %v6673
      %v6675 = vrot.slane %v6015, %v6674
      %v6676 = vmul.f32 %v6652, %v6663
      %v6677 = vmul.f32 %v6653, %v6667
      %v6678 = vmul.f32 %v6654, %v6671
      %v6679 = vmul.f32 %v6655, %v6675
      %v6680 = vmul.f32 %v6656, %v6663
      %v6681 = vmul.f32 %v6657, %v6667
      %v6682 = vmul.f32 %v6658, %v6671
      %v6683 = vmul.f32 %v6659, %v6675
      %v6684 = vadd.f32 %v6644, %v6676
      %v6685 = vadd.f32 %v6645, %v6677
      %v6686 = vadd.f32 %v6646, %v6678
      %v6687 = vadd.f32 %v6647, %v6679
      %v6688 = vadd.f32 %v6648, %v6680
      %v6689 = vadd.f32 %v6649, %v6681
      %v6690 = vadd.f32 %v6650, %v6682
      %v6691 = vadd.f32 %v6651, %v6683
      %v6692 = vld [vmem:[%s4175] sm:$0xff]
      %v6693 = vld [vmem:[%s4175 + $0x8] sm:$0xff]
      %v6694 = vld [vmem:[%s4175 + $0x10] sm:$0xff]
      %v6695 = vld [vmem:[%s4175 + $0x18] sm:$0xff]
      %v6696 = vld [vmem:[%s4175 + $0x20] sm:$0xff]
      %v6697 = vld [vmem:[%s4175 + $0x28] sm:$0xff]
      %v6698 = vld [vmem:[%s4175 + $0x30] sm:$0xff]
      %v6699 = vld [vmem:[%s4175 + $0x38] sm:$0xff]
      %v6700 = vlaneseq
      %v6701 = vshrl.u32 %v6700, 7
      %v6702 = vsub.s32 1, %v6701
      %v6703 = vrot.slane %v6012, %v6702
      %v6704 = vlaneseq
      %v6705 = vshrl.u32 %v6704, 7
      %v6706 = vsub.s32 1, %v6705
      %v6707 = vrot.slane %v6013, %v6706
      %v6708 = vlaneseq
      %v6709 = vshrl.u32 %v6708, 7
      %v6710 = vsub.s32 1, %v6709
      %v6711 = vrot.slane %v6014, %v6710
      %v6712 = vlaneseq
      %v6713 = vshrl.u32 %v6712, 7
      %v6714 = vsub.s32 1, %v6713
      %v6715 = vrot.slane %v6015, %v6714
      %v6716 = vmul.f32 %v6692, %v6703
      %v6717 = vmul.f32 %v6693, %v6707
      %v6718 = vmul.f32 %v6694, %v6711
      %v6719 = vmul.f32 %v6695, %v6715
      %v6720 = vmul.f32 %v6696, %v6703
      %v6721 = vmul.f32 %v6697, %v6707
      %v6722 = vmul.f32 %v6698, %v6711
      %v6723 = vmul.f32 %v6699, %v6715
      %v6724 = vadd.f32 %v6684, %v6716
      %v6725 = vadd.f32 %v6685, %v6717
      %v6726 = vadd.f32 %v6686, %v6718
      %v6727 = vadd.f32 %v6687, %v6719
      %v6728 = vadd.f32 %v6688, %v6720
      %v6729 = vadd.f32 %v6689, %v6721
      %v6730 = vadd.f32 %v6690, %v6722
      %v6731 = vadd.f32 %v6691, %v6723
      %v6732 = vld [vmem:[%s4216] sm:$0xff]
      %v6733 = vld [vmem:[%s4216 + $0x8] sm:$0xff]
      %v6734 = vld [vmem:[%s4216 + $0x10] sm:$0xff]
      %v6735 = vld [vmem:[%s4216 + $0x18] sm:$0xff]
      %v6736 = vld [vmem:[%s4216 + $0x20] sm:$0xff]
      %v6737 = vld [vmem:[%s4216 + $0x28] sm:$0xff]
      %v6738 = vld [vmem:[%s4216 + $0x30] sm:$0xff]
      %v6739 = vld [vmem:[%s4216 + $0x38] sm:$0xff]
      %v6740 = vlaneseq
      %v6741 = vshrl.u32 %v6740, 7
      %v6742 = vsub.s32 2, %v6741
      %v6743 = vrot.slane %v6012, %v6742
      %v6744 = vlaneseq
      %v6745 = vshrl.u32 %v6744, 7
      %v6746 = vsub.s32 2, %v6745
      %v6747 = vrot.slane %v6013, %v6746
      %v6748 = vlaneseq
      %v6749 = vshrl.u32 %v6748, 7
      %v6750 = vsub.s32 2, %v6749
      %v6751 = vrot.slane %v6014, %v6750
      %v6752 = vlaneseq
      %v6753 = vshrl.u32 %v6752, 7
      %v6754 = vsub.s32 2, %v6753
      %v6755 = vrot.slane %v6015, %v6754
      %v6756 = vmul.f32 %v6732, %v6743
      %v6757 = vmul.f32 %v6733, %v6747
      %v6758 = vmul.f32 %v6734, %v6751
      %v6759 = vmul.f32 %v6735, %v6755
      %v6760 = vmul.f32 %v6736, %v6743
      %v6761 = vmul.f32 %v6737, %v6747
      %v6762 = vmul.f32 %v6738, %v6751
      %v6763 = vmul.f32 %v6739, %v6755
      %v6764 = vadd.f32 %v6724, %v6756
      %v6765 = vadd.f32 %v6725, %v6757
      %v6766 = vadd.f32 %v6726, %v6758
      %v6767 = vadd.f32 %v6727, %v6759
      %v6768 = vadd.f32 %v6728, %v6760
      %v6769 = vadd.f32 %v6729, %v6761
      %v6770 = vadd.f32 %v6730, %v6762
      %v6771 = vadd.f32 %v6731, %v6763
      %v6772 = vld [vmem:[%s4257] sm:$0xff]
      %v6773 = vld [vmem:[%s4257 + $0x8] sm:$0xff]
      %v6774 = vld [vmem:[%s4257 + $0x10] sm:$0xff]
      %v6775 = vld [vmem:[%s4257 + $0x18] sm:$0xff]
      %v6776 = vld [vmem:[%s4257 + $0x20] sm:$0xff]
      %v6777 = vld [vmem:[%s4257 + $0x28] sm:$0xff]
      %v6778 = vld [vmem:[%s4257 + $0x30] sm:$0xff]
      %v6779 = vld [vmem:[%s4257 + $0x38] sm:$0xff]
      %v6780 = vlaneseq
      %v6781 = vshrl.u32 %v6780, 7
      %v6782 = vsub.s32 3, %v6781
      %v6783 = vrot.slane %v6012, %v6782
      %v6784 = vlaneseq
      %v6785 = vshrl.u32 %v6784, 7
      %v6786 = vsub.s32 3, %v6785
      %v6787 = vrot.slane %v6013, %v6786
      %v6788 = vlaneseq
      %v6789 = vshrl.u32 %v6788, 7
      %v6790 = vsub.s32 3, %v6789
      %v6791 = vrot.slane %v6014, %v6790
      %v6792 = vlaneseq
      %v6793 = vshrl.u32 %v6792, 7
      %v6794 = vsub.s32 3, %v6793
      %v6795 = vrot.slane %v6015, %v6794
      %v6796 = vmul.f32 %v6772, %v6783
      %v6797 = vmul.f32 %v6773, %v6787
      %v6798 = vmul.f32 %v6774, %v6791
      %v6799 = vmul.f32 %v6775, %v6795
      %v6800 = vmul.f32 %v6776, %v6783
      %v6801 = vmul.f32 %v6777, %v6787
      %v6802 = vmul.f32 %v6778, %v6791
      %v6803 = vmul.f32 %v6779, %v6795
      %v6804 = vadd.f32 %v6764, %v6796
      %v6805 = vadd.f32 %v6765, %v6797
      %v6806 = vadd.f32 %v6766, %v6798
      %v6807 = vadd.f32 %v6767, %v6799
      %v6808 = vadd.f32 %v6768, %v6800
      %v6809 = vadd.f32 %v6769, %v6801
      %v6810 = vadd.f32 %v6770, %v6802
      %v6811 = vadd.f32 %v6771, %v6803
      %v6812 = vld [vmem:[%s4298] sm:$0xff]
      %v6813 = vld [vmem:[%s4298 + $0x8] sm:$0xff]
      %v6814 = vld [vmem:[%s4298 + $0x10] sm:$0xff]
      %v6815 = vld [vmem:[%s4298 + $0x18] sm:$0xff]
      %v6816 = vld [vmem:[%s4298 + $0x20] sm:$0xff]
      %v6817 = vld [vmem:[%s4298 + $0x28] sm:$0xff]
      %v6818 = vld [vmem:[%s4298 + $0x30] sm:$0xff]
      %v6819 = vld [vmem:[%s4298 + $0x38] sm:$0xff]
      %v6820 = vlaneseq
      %v6821 = vshrl.u32 %v6820, 7
      %v6822 = vsub.s32 4, %v6821
      %v6823 = vrot.slane %v6012, %v6822
      %v6824 = vlaneseq
      %v6825 = vshrl.u32 %v6824, 7
      %v6826 = vsub.s32 4, %v6825
      %v6827 = vrot.slane %v6013, %v6826
      %v6828 = vlaneseq
      %v6829 = vshrl.u32 %v6828, 7
      %v6830 = vsub.s32 4, %v6829
      %v6831 = vrot.slane %v6014, %v6830
      %v6832 = vlaneseq
      %v6833 = vshrl.u32 %v6832, 7
      %v6834 = vsub.s32 4, %v6833
      %v6835 = vrot.slane %v6015, %v6834
      %v6836 = vmul.f32 %v6812, %v6823
      %v6837 = vmul.f32 %v6813, %v6827
      %v6838 = vmul.f32 %v6814, %v6831
      %v6839 = vmul.f32 %v6815, %v6835
      %v6840 = vmul.f32 %v6816, %v6823
      %v6841 = vmul.f32 %v6817, %v6827
      %v6842 = vmul.f32 %v6818, %v6831
      %v6843 = vmul.f32 %v6819, %v6835
      %v6844 = vadd.f32 %v6804, %v6836
      %v6845 = vadd.f32 %v6805, %v6837
      %v6846 = vadd.f32 %v6806, %v6838
      %v6847 = vadd.f32 %v6807, %v6839
      %v6848 = vadd.f32 %v6808, %v6840
      %v6849 = vadd.f32 %v6809, %v6841
      %v6850 = vadd.f32 %v6810, %v6842
      %v6851 = vadd.f32 %v6811, %v6843
      %v6852 = vld [vmem:[%s4339] sm:$0xff]
      %v6853 = vld [vmem:[%s4339 + $0x8] sm:$0xff]
      %v6854 = vld [vmem:[%s4339 + $0x10] sm:$0xff]
      %v6855 = vld [vmem:[%s4339 + $0x18] sm:$0xff]
      %v6856 = vld [vmem:[%s4339 + $0x20] sm:$0xff]
      %v6857 = vld [vmem:[%s4339 + $0x28] sm:$0xff]
      %v6858 = vld [vmem:[%s4339 + $0x30] sm:$0xff]
      %v6859 = vld [vmem:[%s4339 + $0x38] sm:$0xff]
      %v6860 = vlaneseq
      %v6861 = vshrl.u32 %v6860, 7
      %v6862 = vsub.s32 5, %v6861
      %v6863 = vrot.slane %v6012, %v6862
      %v6864 = vlaneseq
      %v6865 = vshrl.u32 %v6864, 7
      %v6866 = vsub.s32 5, %v6865
      %v6867 = vrot.slane %v6013, %v6866
      %v6868 = vlaneseq
      %v6869 = vshrl.u32 %v6868, 7
      %v6870 = vsub.s32 5, %v6869
      %v6871 = vrot.slane %v6014, %v6870
      %v6872 = vlaneseq
      %v6873 = vshrl.u32 %v6872, 7
      %v6874 = vsub.s32 5, %v6873
      %v6875 = vrot.slane %v6015, %v6874
      %v6876 = vmul.f32 %v6852, %v6863
      %v6877 = vmul.f32 %v6853, %v6867
      %v6878 = vmul.f32 %v6854, %v6871
      %v6879 = vmul.f32 %v6855, %v6875
      %v6880 = vmul.f32 %v6856, %v6863
      %v6881 = vmul.f32 %v6857, %v6867
      %v6882 = vmul.f32 %v6858, %v6871
      %v6883 = vmul.f32 %v6859, %v6875
      %v6884 = vadd.f32 %v6844, %v6876
      %v6885 = vadd.f32 %v6845, %v6877
      %v6886 = vadd.f32 %v6846, %v6878
      %v6887 = vadd.f32 %v6847, %v6879
      %v6888 = vadd.f32 %v6848, %v6880
      %v6889 = vadd.f32 %v6849, %v6881
      %v6890 = vadd.f32 %v6850, %v6882
      %v6891 = vadd.f32 %v6851, %v6883
      %v6892 = vld [vmem:[%s4380] sm:$0xff]
      %v6893 = vld [vmem:[%s4380 + $0x8] sm:$0xff]
      %v6894 = vld [vmem:[%s4380 + $0x10] sm:$0xff]
      %v6895 = vld [vmem:[%s4380 + $0x18] sm:$0xff]
      %v6896 = vld [vmem:[%s4380 + $0x20] sm:$0xff]
      %v6897 = vld [vmem:[%s4380 + $0x28] sm:$0xff]
      %v6898 = vld [vmem:[%s4380 + $0x30] sm:$0xff]
      %v6899 = vld [vmem:[%s4380 + $0x38] sm:$0xff]
      %v6900 = vlaneseq
      %v6901 = vshrl.u32 %v6900, 7
      %v6902 = vsub.s32 6, %v6901
      %v6903 = vrot.slane %v6012, %v6902
      %v6904 = vlaneseq
      %v6905 = vshrl.u32 %v6904, 7
      %v6906 = vsub.s32 6, %v6905
      %v6907 = vrot.slane %v6013, %v6906
      %v6908 = vlaneseq
      %v6909 = vshrl.u32 %v6908, 7
      %v6910 = vsub.s32 6, %v6909
      %v6911 = vrot.slane %v6014, %v6910
      %v6912 = vlaneseq
      %v6913 = vshrl.u32 %v6912, 7
      %v6914 = vsub.s32 6, %v6913
      %v6915 = vrot.slane %v6015, %v6914
      %v6916 = vmul.f32 %v6892, %v6903
      %v6917 = vmul.f32 %v6893, %v6907
      %v6918 = vmul.f32 %v6894, %v6911
      %v6919 = vmul.f32 %v6895, %v6915
      %v6920 = vmul.f32 %v6896, %v6903
      %v6921 = vmul.f32 %v6897, %v6907
      %v6922 = vmul.f32 %v6898, %v6911
      %v6923 = vmul.f32 %v6899, %v6915
      %v6924 = vadd.f32 %v6884, %v6916
      %v6925 = vadd.f32 %v6885, %v6917
      %v6926 = vadd.f32 %v6886, %v6918
      %v6927 = vadd.f32 %v6887, %v6919
      %v6928 = vadd.f32 %v6888, %v6920
      %v6929 = vadd.f32 %v6889, %v6921
      %v6930 = vadd.f32 %v6890, %v6922
      %v6931 = vadd.f32 %v6891, %v6923
      %v6932 = vld [vmem:[%s4421] sm:$0xff]
      %v6933 = vld [vmem:[%s4421 + $0x8] sm:$0xff]
      %v6934 = vld [vmem:[%s4421 + $0x10] sm:$0xff]
      %v6935 = vld [vmem:[%s4421 + $0x18] sm:$0xff]
      %v6936 = vld [vmem:[%s4421 + $0x20] sm:$0xff]
      %v6937 = vld [vmem:[%s4421 + $0x28] sm:$0xff]
      %v6938 = vld [vmem:[%s4421 + $0x30] sm:$0xff]
      %v6939 = vld [vmem:[%s4421 + $0x38] sm:$0xff]
      %v6940 = vlaneseq
      %v6941 = vshrl.u32 %v6940, 7
      %v6942 = vsub.s32 7, %v6941
      %v6943 = vrot.slane %v6012, %v6942
      %v6944 = vlaneseq
      %v6945 = vshrl.u32 %v6944, 7
      %v6946 = vsub.s32 7, %v6945
      %v6947 = vrot.slane %v6013, %v6946
      %v6948 = vlaneseq
      %v6949 = vshrl.u32 %v6948, 7
      %v6950 = vsub.s32 7, %v6949
      %v6951 = vrot.slane %v6014, %v6950
      %v6952 = vlaneseq
      %v6953 = vshrl.u32 %v6952, 7
      %v6954 = vsub.s32 7, %v6953
      %v6955 = vrot.slane %v6015, %v6954
      %v6956 = vmul.f32 %v6932, %v6943
      %v6957 = vmul.f32 %v6933, %v6947
      %v6958 = vmul.f32 %v6934, %v6951
      %v6959 = vmul.f32 %v6935, %v6955
      %v6960 = vmul.f32 %v6936, %v6943
      %v6961 = vmul.f32 %v6937, %v6947
      %v6962 = vmul.f32 %v6938, %v6951
      %v6963 = vmul.f32 %v6939, %v6955
      %v6964 = vadd.f32 %v6924, %v6956
      %v6965 = vadd.f32 %v6925, %v6957
      %v6966 = vadd.f32 %v6926, %v6958
      %v6967 = vadd.f32 %v6927, %v6959
      %v6968 = vadd.f32 %v6928, %v6960
      %v6969 = vadd.f32 %v6929, %v6961
      %v6970 = vadd.f32 %v6930, %v6962
      %v6971 = vadd.f32 %v6931, %v6963
      %v6972 = vld [vmem:[%s4462] sm:$0xff]
      %v6973 = vld [vmem:[%s4462 + $0x8] sm:$0xff]
      %v6974 = vld [vmem:[%s4462 + $0x10] sm:$0xff]
      %v6975 = vld [vmem:[%s4462 + $0x18] sm:$0xff]
      %v6976 = vld [vmem:[%s4462 + $0x20] sm:$0xff]
      %v6977 = vld [vmem:[%s4462 + $0x28] sm:$0xff]
      %v6978 = vld [vmem:[%s4462 + $0x30] sm:$0xff]
      %v6979 = vld [vmem:[%s4462 + $0x38] sm:$0xff]
      %v6980 = vlaneseq
      %v6981 = vshrl.u32 %v6980, 7
      %v6982 = vsub.s32 0, %v6981
      %v6983 = vrot.slane %v6016, %v6982
      %v6984 = vlaneseq
      %v6985 = vshrl.u32 %v6984, 7
      %v6986 = vsub.s32 0, %v6985
      %v6987 = vrot.slane %v6017, %v6986
      %v6988 = vlaneseq
      %v6989 = vshrl.u32 %v6988, 7
      %v6990 = vsub.s32 0, %v6989
      %v6991 = vrot.slane %v6018, %v6990
      %v6992 = vlaneseq
      %v6993 = vshrl.u32 %v6992, 7
      %v6994 = vsub.s32 0, %v6993
      %v6995 = vrot.slane %v6019, %v6994
      %v6996 = vmul.f32 %v6972, %v6983
      %v6997 = vmul.f32 %v6973, %v6987
      %v6998 = vmul.f32 %v6974, %v6991
      %v6999 = vmul.f32 %v6975, %v6995
      %v7000 = vmul.f32 %v6976, %v6983
      %v7001 = vmul.f32 %v6977, %v6987
      %v7002 = vmul.f32 %v6978, %v6991
      %v7003 = vmul.f32 %v6979, %v6995
      %v7004 = vadd.f32 %v6964, %v6996
      %v7005 = vadd.f32 %v6965, %v6997
      %v7006 = vadd.f32 %v6966, %v6998
      %v7007 = vadd.f32 %v6967, %v6999
      %v7008 = vadd.f32 %v6968, %v7000
      %v7009 = vadd.f32 %v6969, %v7001
      %v7010 = vadd.f32 %v6970, %v7002
      %v7011 = vadd.f32 %v6971, %v7003
      %v7012 = vld [vmem:[%s4503] sm:$0xff]
      %v7013 = vld [vmem:[%s4503 + $0x8] sm:$0xff]
      %v7014 = vld [vmem:[%s4503 + $0x10] sm:$0xff]
      %v7015 = vld [vmem:[%s4503 + $0x18] sm:$0xff]
      %v7016 = vld [vmem:[%s4503 + $0x20] sm:$0xff]
      %v7017 = vld [vmem:[%s4503 + $0x28] sm:$0xff]
      %v7018 = vld [vmem:[%s4503 + $0x30] sm:$0xff]
      %v7019 = vld [vmem:[%s4503 + $0x38] sm:$0xff]
      %v7020 = vlaneseq
      %v7021 = vshrl.u32 %v7020, 7
      %v7022 = vsub.s32 1, %v7021
      %v7023 = vrot.slane %v6016, %v7022
      %v7024 = vlaneseq
      %v7025 = vshrl.u32 %v7024, 7
      %v7026 = vsub.s32 1, %v7025
      %v7027 = vrot.slane %v6017, %v7026
      %v7028 = vlaneseq
      %v7029 = vshrl.u32 %v7028, 7
      %v7030 = vsub.s32 1, %v7029
      %v7031 = vrot.slane %v6018, %v7030
      %v7032 = vlaneseq
      %v7033 = vshrl.u32 %v7032, 7
      %v7034 = vsub.s32 1, %v7033
      %v7035 = vrot.slane %v6019, %v7034
      %v7036 = vmul.f32 %v7012, %v7023
      %v7037 = vmul.f32 %v7013, %v7027
      %v7038 = vmul.f32 %v7014, %v7031
      %v7039 = vmul.f32 %v7015, %v7035
      %v7040 = vmul.f32 %v7016, %v7023
      %v7041 = vmul.f32 %v7017, %v7027
      %v7042 = vmul.f32 %v7018, %v7031
      %v7043 = vmul.f32 %v7019, %v7035
      %v7044 = vadd.f32 %v7004, %v7036
      %v7045 = vadd.f32 %v7005, %v7037
      %v7046 = vadd.f32 %v7006, %v7038
      %v7047 = vadd.f32 %v7007, %v7039
      %v7048 = vadd.f32 %v7008, %v7040
      %v7049 = vadd.f32 %v7009, %v7041
      %v7050 = vadd.f32 %v7010, %v7042
      %v7051 = vadd.f32 %v7011, %v7043
      %v7052 = vld [vmem:[%s4544] sm:$0xff]
      %v7053 = vld [vmem:[%s4544 + $0x8] sm:$0xff]
      %v7054 = vld [vmem:[%s4544 + $0x10] sm:$0xff]
      %v7055 = vld [vmem:[%s4544 + $0x18] sm:$0xff]
      %v7056 = vld [vmem:[%s4544 + $0x20] sm:$0xff]
      %v7057 = vld [vmem:[%s4544 + $0x28] sm:$0xff]
      %v7058 = vld [vmem:[%s4544 + $0x30] sm:$0xff]
      %v7059 = vld [vmem:[%s4544 + $0x38] sm:$0xff]
      %v7060 = vlaneseq
      %v7061 = vshrl.u32 %v7060, 7
      %v7062 = vsub.s32 2, %v7061
      %v7063 = vrot.slane %v6016, %v7062
      %v7064 = vlaneseq
      %v7065 = vshrl.u32 %v7064, 7
      %v7066 = vsub.s32 2, %v7065
      %v7067 = vrot.slane %v6017, %v7066
      %v7068 = vlaneseq
      %v7069 = vshrl.u32 %v7068, 7
      %v7070 = vsub.s32 2, %v7069
      %v7071 = vrot.slane %v6018, %v7070
      %v7072 = vlaneseq
      %v7073 = vshrl.u32 %v7072, 7
      %v7074 = vsub.s32 2, %v7073
      %v7075 = vrot.slane %v6019, %v7074
      %v7076 = vmul.f32 %v7052, %v7063
      %v7077 = vmul.f32 %v7053, %v7067
      %v7078 = vmul.f32 %v7054, %v7071
      %v7079 = vmul.f32 %v7055, %v7075
      %v7080 = vmul.f32 %v7056, %v7063
      %v7081 = vmul.f32 %v7057, %v7067
      %v7082 = vmul.f32 %v7058, %v7071
      %v7083 = vmul.f32 %v7059, %v7075
      %v7084 = vadd.f32 %v7044, %v7076
      %v7085 = vadd.f32 %v7045, %v7077
      %v7086 = vadd.f32 %v7046, %v7078
      %v7087 = vadd.f32 %v7047, %v7079
      %v7088 = vadd.f32 %v7048, %v7080
      %v7089 = vadd.f32 %v7049, %v7081
      %v7090 = vadd.f32 %v7050, %v7082
      %v7091 = vadd.f32 %v7051, %v7083
      %v7092 = vld [vmem:[%s4585] sm:$0xff]
      %v7093 = vld [vmem:[%s4585 + $0x8] sm:$0xff]
      %v7094 = vld [vmem:[%s4585 + $0x10] sm:$0xff]
      %v7095 = vld [vmem:[%s4585 + $0x18] sm:$0xff]
      %v7096 = vld [vmem:[%s4585 + $0x20] sm:$0xff]
      %v7097 = vld [vmem:[%s4585 + $0x28] sm:$0xff]
      %v7098 = vld [vmem:[%s4585 + $0x30] sm:$0xff]
      %v7099 = vld [vmem:[%s4585 + $0x38] sm:$0xff]
      %v7100 = vlaneseq
      %v7101 = vshrl.u32 %v7100, 7
      %v7102 = vsub.s32 3, %v7101
      %v7103 = vrot.slane %v6016, %v7102
      %v7104 = vlaneseq
      %v7105 = vshrl.u32 %v7104, 7
      %v7106 = vsub.s32 3, %v7105
      %v7107 = vrot.slane %v6017, %v7106
      %v7108 = vlaneseq
      %v7109 = vshrl.u32 %v7108, 7
      %v7110 = vsub.s32 3, %v7109
      %v7111 = vrot.slane %v6018, %v7110
      %v7112 = vlaneseq
      %v7113 = vshrl.u32 %v7112, 7
      %v7114 = vsub.s32 3, %v7113
      %v7115 = vrot.slane %v6019, %v7114
      %v7116 = vmul.f32 %v7092, %v7103
      %v7117 = vmul.f32 %v7093, %v7107
      %v7118 = vmul.f32 %v7094, %v7111
      %v7119 = vmul.f32 %v7095, %v7115
      %v7120 = vmul.f32 %v7096, %v7103
      %v7121 = vmul.f32 %v7097, %v7107
      %v7122 = vmul.f32 %v7098, %v7111
      %v7123 = vmul.f32 %v7099, %v7115
      %v7124 = vadd.f32 %v7084, %v7116
      %v7125 = vadd.f32 %v7085, %v7117
      %v7126 = vadd.f32 %v7086, %v7118
      %v7127 = vadd.f32 %v7087, %v7119
      %v7128 = vadd.f32 %v7088, %v7120
      %v7129 = vadd.f32 %v7089, %v7121
      %v7130 = vadd.f32 %v7090, %v7122
      %v7131 = vadd.f32 %v7091, %v7123
      %v7132 = vld [vmem:[%s4626] sm:$0xff]
      %v7133 = vld [vmem:[%s4626 + $0x8] sm:$0xff]
      %v7134 = vld [vmem:[%s4626 + $0x10] sm:$0xff]
      %v7135 = vld [vmem:[%s4626 + $0x18] sm:$0xff]
      %v7136 = vld [vmem:[%s4626 + $0x20] sm:$0xff]
      %v7137 = vld [vmem:[%s4626 + $0x28] sm:$0xff]
      %v7138 = vld [vmem:[%s4626 + $0x30] sm:$0xff]
      %v7139 = vld [vmem:[%s4626 + $0x38] sm:$0xff]
      %v7140 = vlaneseq
      %v7141 = vshrl.u32 %v7140, 7
      %v7142 = vsub.s32 4, %v7141
      %v7143 = vrot.slane %v6016, %v7142
      %v7144 = vlaneseq
      %v7145 = vshrl.u32 %v7144, 7
      %v7146 = vsub.s32 4, %v7145
      %v7147 = vrot.slane %v6017, %v7146
      %v7148 = vlaneseq
      %v7149 = vshrl.u32 %v7148, 7
      %v7150 = vsub.s32 4, %v7149
      %v7151 = vrot.slane %v6018, %v7150
      %v7152 = vlaneseq
      %v7153 = vshrl.u32 %v7152, 7
      %v7154 = vsub.s32 4, %v7153
      %v7155 = vrot.slane %v6019, %v7154
      %v7156 = vmul.f32 %v7132, %v7143
      %v7157 = vmul.f32 %v7133, %v7147
      %v7158 = vmul.f32 %v7134, %v7151
      %v7159 = vmul.f32 %v7135, %v7155
      %v7160 = vmul.f32 %v7136, %v7143
      %v7161 = vmul.f32 %v7137, %v7147
      %v7162 = vmul.f32 %v7138, %v7151
      %v7163 = vmul.f32 %v7139, %v7155
      %v7164 = vadd.f32 %v7124, %v7156
      %v7165 = vadd.f32 %v7125, %v7157
      %v7166 = vadd.f32 %v7126, %v7158
      %v7167 = vadd.f32 %v7127, %v7159
      %v7168 = vadd.f32 %v7128, %v7160
      %v7169 = vadd.f32 %v7129, %v7161
      %v7170 = vadd.f32 %v7130, %v7162
      %v7171 = vadd.f32 %v7131, %v7163
      %v7172 = vld [vmem:[%s4667] sm:$0xff]
      %v7173 = vld [vmem:[%s4667 + $0x8] sm:$0xff]
      %v7174 = vld [vmem:[%s4667 + $0x10] sm:$0xff]
      %v7175 = vld [vmem:[%s4667 + $0x18] sm:$0xff]
      %v7176 = vld [vmem:[%s4667 + $0x20] sm:$0xff]
      %v7177 = vld [vmem:[%s4667 + $0x28] sm:$0xff]
      %v7178 = vld [vmem:[%s4667 + $0x30] sm:$0xff]
      %v7179 = vld [vmem:[%s4667 + $0x38] sm:$0xff]
      %v7180 = vlaneseq
      %v7181 = vshrl.u32 %v7180, 7
      %v7182 = vsub.s32 5, %v7181
      %v7183 = vrot.slane %v6016, %v7182
      %v7184 = vlaneseq
      %v7185 = vshrl.u32 %v7184, 7
      %v7186 = vsub.s32 5, %v7185
      %v7187 = vrot.slane %v6017, %v7186
      %v7188 = vlaneseq
      %v7189 = vshrl.u32 %v7188, 7
      %v7190 = vsub.s32 5, %v7189
      %v7191 = vrot.slane %v6018, %v7190
      %v7192 = vlaneseq
      %v7193 = vshrl.u32 %v7192, 7
      %v7194 = vsub.s32 5, %v7193
      %v7195 = vrot.slane %v6019, %v7194
      %v7196 = vmul.f32 %v7172, %v7183
      %v7197 = vmul.f32 %v7173, %v7187
      %v7198 = vmul.f32 %v7174, %v7191
      %v7199 = vmul.f32 %v7175, %v7195
      %v7200 = vmul.f32 %v7176, %v7183
      %v7201 = vmul.f32 %v7177, %v7187
      %v7202 = vmul.f32 %v7178, %v7191
      %v7203 = vmul.f32 %v7179, %v7195
      %v7204 = vadd.f32 %v7164, %v7196
      %v7205 = vadd.f32 %v7165, %v7197
      %v7206 = vadd.f32 %v7166, %v7198
      %v7207 = vadd.f32 %v7167, %v7199
      %v7208 = vadd.f32 %v7168, %v7200
      %v7209 = vadd.f32 %v7169, %v7201
      %v7210 = vadd.f32 %v7170, %v7202
      %v7211 = vadd.f32 %v7171, %v7203
      %v7212 = vld [vmem:[%s4708] sm:$0xff]
      %v7213 = vld [vmem:[%s4708 + $0x8] sm:$0xff]
      %v7214 = vld [vmem:[%s4708 + $0x10] sm:$0xff]
      %v7215 = vld [vmem:[%s4708 + $0x18] sm:$0xff]
      %v7216 = vld [vmem:[%s4708 + $0x20] sm:$0xff]
      %v7217 = vld [vmem:[%s4708 + $0x28] sm:$0xff]
      %v7218 = vld [vmem:[%s4708 + $0x30] sm:$0xff]
      %v7219 = vld [vmem:[%s4708 + $0x38] sm:$0xff]
      %v7220 = vlaneseq
      %v7221 = vshrl.u32 %v7220, 7
      %v7222 = vsub.s32 6, %v7221
      %v7223 = vrot.slane %v6016, %v7222
      %v7224 = vlaneseq
      %v7225 = vshrl.u32 %v7224, 7
      %v7226 = vsub.s32 6, %v7225
      %v7227 = vrot.slane %v6017, %v7226
      %v7228 = vlaneseq
      %v7229 = vshrl.u32 %v7228, 7
      %v7230 = vsub.s32 6, %v7229
      %v7231 = vrot.slane %v6018, %v7230
      %v7232 = vlaneseq
      %v7233 = vshrl.u32 %v7232, 7
      %v7234 = vsub.s32 6, %v7233
      %v7235 = vrot.slane %v6019, %v7234
      %v7236 = vmul.f32 %v7212, %v7223
      %v7237 = vmul.f32 %v7213, %v7227
      %v7238 = vmul.f32 %v7214, %v7231
      %v7239 = vmul.f32 %v7215, %v7235
      %v7240 = vmul.f32 %v7216, %v7223
      %v7241 = vmul.f32 %v7217, %v7227
      %v7242 = vmul.f32 %v7218, %v7231
      %v7243 = vmul.f32 %v7219, %v7235
      %v7244 = vadd.f32 %v7204, %v7236
      %v7245 = vadd.f32 %v7205, %v7237
      %v7246 = vadd.f32 %v7206, %v7238
      %v7247 = vadd.f32 %v7207, %v7239
      %v7248 = vadd.f32 %v7208, %v7240
      %v7249 = vadd.f32 %v7209, %v7241
      %v7250 = vadd.f32 %v7210, %v7242
      %v7251 = vadd.f32 %v7211, %v7243
      %v7252 = vld [vmem:[%s4749] sm:$0xff]
      %v7253 = vld [vmem:[%s4749 + $0x8] sm:$0xff]
      %v7254 = vld [vmem:[%s4749 + $0x10] sm:$0xff]
      %v7255 = vld [vmem:[%s4749 + $0x18] sm:$0xff]
      %v7256 = vld [vmem:[%s4749 + $0x20] sm:$0xff]
      %v7257 = vld [vmem:[%s4749 + $0x28] sm:$0xff]
      %v7258 = vld [vmem:[%s4749 + $0x30] sm:$0xff]
      %v7259 = vld [vmem:[%s4749 + $0x38] sm:$0xff]
      %v7260 = vlaneseq
      %v7261 = vshrl.u32 %v7260, 7
      %v7262 = vsub.s32 7, %v7261
      %v7263 = vrot.slane %v6016, %v7262
      %v7264 = vlaneseq
      %v7265 = vshrl.u32 %v7264, 7
      %v7266 = vsub.s32 7, %v7265
      %v7267 = vrot.slane %v6017, %v7266
      %v7268 = vlaneseq
      %v7269 = vshrl.u32 %v7268, 7
      %v7270 = vsub.s32 7, %v7269
      %v7271 = vrot.slane %v6018, %v7270
      %v7272 = vlaneseq
      %v7273 = vshrl.u32 %v7272, 7
      %v7274 = vsub.s32 7, %v7273
      %v7275 = vrot.slane %v6019, %v7274
      %v7276 = vmul.f32 %v7252, %v7263
      %v7277 = vmul.f32 %v7253, %v7267
      %v7278 = vmul.f32 %v7254, %v7271
      %v7279 = vmul.f32 %v7255, %v7275
      %v7280 = vmul.f32 %v7256, %v7263
      %v7281 = vmul.f32 %v7257, %v7267
      %v7282 = vmul.f32 %v7258, %v7271
      %v7283 = vmul.f32 %v7259, %v7275
      %v7284 = vadd.f32 %v7244, %v7276
      %v7285 = vadd.f32 %v7245, %v7277
      %v7286 = vadd.f32 %v7246, %v7278
      %v7287 = vadd.f32 %v7247, %v7279
      %v7288 = vadd.f32 %v7248, %v7280
      %v7289 = vadd.f32 %v7249, %v7281
      %v7290 = vadd.f32 %v7250, %v7282
      %v7291 = vadd.f32 %v7251, %v7283
      %v7292 = vmul.f32 %v4890, %v7284
      %v7293 = vmul.f32 %v4891, %v7285
      %v7294 = vmul.f32 %v4892, %v7286
      %v7295 = vmul.f32 %v4893, %v7287
      %v7296 = vmul.f32 %v4890, %v7288
      %v7297 = vmul.f32 %v4891, %v7289
      %v7298 = vmul.f32 %v4892, %v7290
      %v7299 = vmul.f32 %v4893, %v7291
      %v7300 = vsub.f32 %v4900, %v7292
      %v7301 = vsub.f32 %v4901, %v7293
      %v7302 = vsub.f32 %v4902, %v7294
      %v7303 = vsub.f32 %v4903, %v7295
      %v7304 = vsub.f32 %v4904, %v7296
      %v7305 = vsub.f32 %v4905, %v7297
      %v7306 = vsub.f32 %v4906, %v7298
      %v7307 = vsub.f32 %v4907, %v7299
      %v7308 = vmax.f32 %v7300, 0.0
      %v7309 = vmax.f32 %v7301, 0.0
      %v7310 = vmax.f32 %v7302, 0.0
      %v7311 = vmax.f32 %v7303, 0.0
      %v7312 = vmax.f32 %v7304, 0.0
      %v7313 = vmax.f32 %v7305, 0.0
      %v7314 = vmax.f32 %v7306, 0.0
      %v7315 = vmax.f32 %v7307, 0.0
      %v7316 = vmul.f32 %v7308, 2.0
      %v7317 = vmul.f32 %v7309, 2.0
      %v7318 = vmul.f32 %v7310, 2.0
      %v7319 = vmul.f32 %v7311, 2.0
      %v7320 = vmul.f32 %v7312, 2.0
      %v7321 = vmul.f32 %v7313, 2.0
      %v7322 = vmul.f32 %v7314, 2.0
      %v7323 = vmul.f32 %v7315, 2.0
      %v7324 = vsub.f32 %v7316, %v4900
      %v7325 = vsub.f32 %v7317, %v4901
      %v7326 = vsub.f32 %v7318, %v4902
      %v7327 = vsub.f32 %v7319, %v4903
      %v7328 = vsub.f32 %v7320, %v4904
      %v7329 = vsub.f32 %v7321, %v4905
      %v7330 = vsub.f32 %v7322, %v4906
      %v7331 = vsub.f32 %v7323, %v4907
    $region37: #{tpu_custom_call.1} parent=1 // loop_footer
      %s4899 = sadd.s32 1, %s4895
    $region38: #{tpu_custom_call.1} parent=1 // loop_footer_branch
      %4894 = sbr.rel target = $region34
    $region39: #{tpu_custom_call.1} parent=1 // loop_exit
      _
    %7332 = vst [vmem:[#allocation8] sm:$0xff] %v4900
    %7333 = vst [vmem:[#allocation8 + $0x8] sm:$0xff] %v4901
    %7334 = vst [vmem:[#allocation8 + $0x10] sm:$0xff] %v4902
    %7335 = vst [vmem:[#allocation8 + $0x18] sm:$0xff] %v4903
    %7336 = vst [vmem:[#allocation8 + $0x20] sm:$0xff] %v4904
    %7337 = vst [vmem:[#allocation8 + $0x28] sm:$0xff] %v4905
    %7338 = vst [vmem:[#allocation8 + $0x30] sm:$0xff] %v4906
    %7339 = vst [vmem:[#allocation8 + $0x38] sm:$0xff] %v4907
    // Predicated region
    $region40: #{tpu_custom_call.1} parent=1 // pred_check
      _
    $region41: #{tpu_custom_call.1} parent=1 // pred_check_branch
      %7341 = sbr.rel (0) target = $region43
    $region42: #{tpu_custom_call.1} parent=1 // pred_region
      %s7343 = ssub.s32 1024, 1024
      %7344 = vsyncadd [#allocation4], %s7343
      %s7345 = sshll.u32 [#allocation8], 4
      %s7346 = int_to_ptr.vmem [resolvable:$true] %s7345
      %7351 = dma.vmem_to_hbm [thread:$0]  %s7346, 1024, %s3, [#allocation4], 512, 512, 32
    $region43: #{tpu_custom_call.1} parent=1 // pred_fallthru
      _
    // Predicated region
    $region44: #{tpu_custom_call.1} parent=1 // pred_check
      _
    $region45: #{tpu_custom_call.1} parent=1 // pred_check_branch
      %7353 = sbr.rel (0) target = $region47
    $region46: #{tpu_custom_call.1} parent=1 // pred_region
      %7354 = dma.done [#allocation4], 1024
    $region47: #{tpu_custom_call.1} parent=1 // pred_fallthru
      _
    %7355 = vsyncpa [#allocation3], 1
    %7356 = vsyncpa [#allocation6], 1
    %7357 = vsyncpa [#allocation4], 1

</llo_original>
